<compile_context>
chip_gen: v6e
topology: v6e:2x2x1
jax: 0.10.0
libtpu: 0.0.40
codegen_flags: <defaults>
</compile_context>

<pallas_src>
import functools
import math

import jax
import jax.numpy as jnp
from jax.experimental import pallas as pl
from jax.experimental.pallas import tpu as pltpu


_LANE = 128
_VMEM_LIMIT = 32 * 1024 * 1024   # safe on v5e/v6e/v7x; far above our per-step footprint


def _round_up(x, m):
    return (x + m - 1) // m * m


# ------------------------------ im2col (XLA glue, bf16) ------------------------------

def _im2col(x, kh_sz, kw_sz, pooled):
    """Patch gather.  x: (N, Cin, H, W), already bf16.

    Returns ((N, Q, K, M) patches, (out_h, out_w)).  K is ordered (kh, kw, cin).
    pooled=True: Q=4 pool quadrants (dh, dw) and M = pooled spatial size
    (row-major (i, j)); quadrant (dh, dw) holds the patch for conv-output
    position (2i+dh, 2j+dw), so a max over Q == 2x2 maxpool.
    pooled=False: Q=1, M = Ho*Wo row-major.
    """
    n, cin, h, w = x.shape
    ho, wo = h - kh_sz + 1, w - kw_sz + 1
    if pooled:
        h2, w2 = ho // 2, wo // 2
        quads = []
        for dh in range(2):
            for dw in range(2):
                taps = []
                for kh in range(kh_sz):
                    for kw in range(kw_sz):
                        s = jax.lax.slice(
                            x,
                            (0, 0, dh + kh, dw + kw),
                            (n, cin, dh + kh + 2 * h2 - 1, dw + kw + 2 * w2 - 1),
                            (1, 1, 2, 2))                    # (N, Cin, H2, W2)
                        taps.append(s)
                quads.append(jnp.stack(taps, axis=1))        # (N, KH*KW, Cin, H2, W2)
        p = jnp.stack(quads, axis=1)                         # (N, 4, KH*KW, Cin, H2, W2)
        return p.reshape(n, 4, kh_sz * kw_sz * cin, h2 * w2), (h2, w2)
    taps = [x[:, :, kh:kh + ho, kw:kw + wo]
            for kh in range(kh_sz) for kw in range(kw_sz)]   # (N, Cin, Ho, Wo)
    p = jnp.stack(taps, axis=1)                              # (N, KH*KW, Cin, Ho, Wo)
    return p.reshape(n, 1, kh_sz * kw_sz * cin, ho * wo), (ho, wo)


def _pad_lanes(p, tm):
    """Zero-pad the last dim of (N, Q, K, M) up to a multiple of tm."""
    m = p.shape[-1]
    m_pad = _round_up(m, tm)
    if m_pad != m:
        p = jnp.pad(p, ((0, 0), (0, 0), (0, 0), (0, m_pad - m)))
    return p, m_pad // tm


# -------------------- conv (+ fused ReLU / 2x2 maxpool) kernel --------------------

def _conv_relu_maxq_kernel(p_ref, w_ref, b_ref, o_ref, *, n_q):
    # p_ref: (1, Q, K, TM) bf16 | w_ref: (Cout, K) bf16 | b_ref: (Cout, 1) f32
    # o_ref: (1, Cout, TM) bf16
    w = w_ref[...]
    acc = jnp.dot(w, p_ref[0, 0], preferred_element_type=jnp.float32)
    for q in range(1, n_q):                      # fused 2x2 maxpool over pool quadrants
        acc = jnp.maximum(
            acc, jnp.dot(w, p_ref[0, q], preferred_element_type=jnp.float32))
    # f32 epilogue (bias + ReLU), bf16 only at the store.
    o_ref[0] = jnp.maximum(acc + b_ref[...], 0.0).astype(o_ref.dtype)


def conv_relu_block(x, w, b, *, pooled, tm):
    """conv (stride 1, valid) + bias + ReLU, 2x2 maxpool fused when pooled.

    Returns a bf16 (N, Cout, OH, OW) activation.
    """
    n = x.shape[0]
    cout, kh, kw, cin = w.shape
    p, (oh, ow) = _im2col(x.astype(jnp.bfloat16), kh, kw, pooled)   # cast BEFORE im2col
    q_, k_, m_ = p.shape[1], p.shape[2], p.shape[3]
    p, n_tiles = _pad_lanes(p, tm)               # lane-uniform tiles (no masked stores)
    m_pad = n_tiles * tm
    w2 = w.reshape(cout, k_).astype(jnp.bfloat16)
    b2 = b.reshape(cout, 1).astype(jnp.float32)
    cost = pl.CostEstimate(
        flops=2 * n * q_ * cout * k_ * m_pad + 2 * n * q_ * cout * m_pad,
        transcendentals=0,
        bytes_accessed=p.size * 2 + w2.size * 2 + b2.size * 4 + n * cout * m_pad * 2)
    out = pl.pallas_call(
        functools.partial(_conv_relu_maxq_kernel, n_q=q_),
        out_shape=jax.ShapeDtypeStruct((n, cout, m_pad), jnp.bfloat16),
        grid=(n, n_tiles),
        in_specs=[
            pl.BlockSpec((1, q_, k_, tm), lambda i, j: (i, 0, 0, j)),
            pl.BlockSpec((cout, k_), lambda i, j: (0, 0)),
            pl.BlockSpec((cout, 1), lambda i, j: (0, 0)),
        ],
        out_specs=pl.BlockSpec((1, cout, tm), lambda i, j: (i, 0, j)),
        compiler_params=pltpu.CompilerParams(
            dimension_semantics=("parallel", "parallel"),
            vmem_limit_bytes=_VMEM_LIMIT),
        cost_estimate=cost,
    )(p, w2, b2)
    return out[:, :, :m_].reshape(n, cout, oh, ow)


# ---------------- fused tail: conv4 + conv5(1x1) + pool + fc1 + fc2 ----------------

def _tail_kernel(p_ref, w4_ref, b4_ref, w5_ref, b5_ref,
                 fw1_ref, fb1_ref, fw2_ref, fb2_ref, o_ref, *, n_q):
    # p_ref: (1, 4, K, Mt) bf16 | w4: (12, K) bf16 | b4: (12, 1) f32 | w5: (1, 12) f32
    # b5: (1, 1) f32 | fw1: (Mt, 512) bf16 (zero rows past 625) | fb1: (1, 512) f32
    # fw2: (512, 3) bf16 | fb2: (1, 3) f32 | o_ref: (1, 1, 3) f32
    mt = p_ref.shape[3]
    w4 = w4_ref[...]
    b4 = jnp.broadcast_to(b4_ref[...], (w4.shape[0], mt))   # hoisted out of the q loop
    w5 = w5_ref[...]
    z = None
    for q in range(n_q):                                    # 4 quadrants of the last pool
        h4 = jnp.maximum(
            jnp.dot(w4, p_ref[0, q], preferred_element_type=jnp.float32) + b4, 0.0)
        zq = jnp.dot(w5, h4, preferred_element_type=jnp.float32)   # 1x1 conv5 on the MXU
        z = zq if z is None else jnp.maximum(z, zq)
    feat = jnp.maximum(z + b5_ref[...], 0.0)                # (1, Mt) pooled conv5 feature
    h = jnp.dot(feat.astype(jnp.bfloat16), fw1_ref[...],
                preferred_element_type=jnp.float32) + fb1_ref[...]     # fc_out1 (no act.)
    out = jnp.dot(h.astype(jnp.bfloat16), fw2_ref[...],
                  preferred_element_type=jnp.float32) + fb2_ref[...]   # fc_out2
    o_ref[0] = out


def conv45_pool_fc_block(x, w4, b4, w5, b5, fw1, fb1, fw2, fb2):
    n = x.shape[0]
    cout4, kh, kw, _ = w4.shape                             # (12, 3, 3, 24)
    p, _ = _im2col(x.astype(jnp.bfloat16), kh, kw, pooled=True)   # (N, 4, 216, 625)
    q_, k_, m_ = p.shape[1], p.shape[2], p.shape[3]
    mt = _round_up(m_, _LANE)                               # 640: lane-uniform tail
    if mt != m_:
        p = jnp.pad(p, ((0, 0), (0, 0), (0, 0), (0, mt - m_)))
    hid, ncls = fw1.shape[1], fw2.shape[1]
    w4m = w4.reshape(cout4, k_).astype(jnp.bfloat16)
    b4m = b4.reshape(cout4, 1).astype(jnp.float32)
    w5m = w5.reshape(1, cout4).astype(jnp.float32)          # conv5 (1x1, 12->1) row
    b5m = b5.reshape(1, 1).astype(jnp.float32)
    # Zero rows past 625 so the lane padding of `feat` contributes nothing to fc_out1.
    fw1p = jnp.pad(fw1.astype(jnp.bfloat16), ((0, mt - m_), (0, 0)))
    fb1m = fb1.reshape(1, hid).astype(jnp.float32)
    fw2m = fw2.astype(jnp.bfloat16)
    fb2m = fb2.reshape(1, ncls).astype(jnp.float32)
    cost = pl.CostEstimate(
        flops=2 * n * (q_ * cout4 * k_ * mt + q_ * cout4 * mt + mt * hid + hid * ncls),
        transcendentals=0,
        bytes_accessed=(p.size * 2 + w4m.size * 2 + fw1p.size * 2 + fw2m.size * 2
                        + (b4m.size + w5m.size + b5m.size + fb1m.size + fb2m.size) * 4
                        + n * ncls * 4))
    out = pl.pallas_call(
        functools.partial(_tail_kernel, n_q=q_),
        out_shape=jax.ShapeDtypeStruct((n, 1, ncls), jnp.float32),
        grid=(n,),
        in_specs=[
            pl.BlockSpec((1, q_, k_, mt), lambda i: (i, 0, 0, 0)),
            pl.BlockSpec((cout4, k_), lambda i: (0, 0)),
            pl.BlockSpec((cout4, 1), lambda i: (0, 0)),
            pl.BlockSpec((1, cout4), lambda i: (0, 0)),
            pl.BlockSpec((1, 1), lambda i: (0, 0)),
            pl.BlockSpec((mt, hid), lambda i: (0, 0)),
            pl.BlockSpec((1, hid), lambda i: (0, 0)),
            pl.BlockSpec((hid, ncls), lambda i: (0, 0)),
            pl.BlockSpec((1, ncls), lambda i: (0, 0)),
        ],
        out_specs=pl.BlockSpec((1, 1, ncls), lambda i: (i, 0, 0)),
        compiler_params=pltpu.CompilerParams(
            dimension_semantics=("parallel",),
            vmem_limit_bytes=_VMEM_LIMIT),
        cost_estimate=cost,
    )(p, w4m, b4m, w5m, b5m, fw1p, fb1m, fw2m, fb2m)
    return out.reshape(n, ncls)


# ----------------------------------- full model -----------------------------------

def init_params(key):
    def u(k, shape, fan_in):
        bound = 1.0 / math.sqrt(fan_in)
        return jax.random.uniform(k, shape, jnp.float32, -bound, bound)

    keys = jax.random.split(key, 14)
    p = {}
    # conv weights stored as (Cout, KH, KW, Cin)  (PyTorch layout would need .permute(0,2,3,1))
    conv_defs = [(6, 3, 3, 3), (12, 3, 3, 6), (24, 3, 3, 12), (12, 3, 3, 24), (1, 1, 1, 12)]
    for i, (cout, kh, kw, cin) in enumerate(conv_defs, start=1):
        fan_in = kh * kw * cin
        p[f"cw{i}"] = u(keys[2 * (i - 1)], (cout, kh, kw, cin), fan_in)
        p[f"cb{i}"] = u(keys[2 * (i - 1) + 1], (cout,), fan_in)
    p["fw1"] = u(keys[10], (25 * 25, 512), 25 * 25)   # (in, out)
    p["fb1"] = u(keys[11], (512,), 25 * 25)
    p["fw2"] = u(keys[12], (512, 3), 512)
    p["fb2"] = u(keys[13], (3,), 512)
    return p


def simple_cnn5_forward(x_nchw, p):
    # TODO(synk): BatchNorm2d branch (batchnorm=True) not implemented; module default is batchnorm=False.
    x = x_nchw                                                      # (N, 3, 218, 218) f32
    x = conv_relu_block(x, p["cw1"], p["cb1"], pooled=True, tm=1024)   # (N, 6, 108, 108) bf16
    x = conv_relu_block(x, p["cw2"], p["cb2"], pooled=False, tm=1024)  # (N, 12, 106, 106) bf16
    x = conv_relu_block(x, p["cw3"], p["cb3"], pooled=True, tm=512)    # (N, 24, 52, 52) bf16
    return conv45_pool_fc_block(x, p["cw4"], p["cb4"], p["cw5"], p["cb5"],
                                p["fw1"], p["fb1"], p["fw2"], p["fb2"])  # (N, 3) f32


if __name__ == "__main__":
    key = jax.random.PRNGKey(0)
    k_in, k_par = jax.random.split(key)
    # Spatial size 218 is forced by fc_out1 expecting 25*25 features after the conv/pool stack.
    x = jax.random.normal(k_in, (2, 3, 218, 218), jnp.float32)
    params = init_params(k_par)
    fwd = jax.jit(simple_cnn5_forward)
    out = fwd(x, params)
    jax.block_until_ready(out)
    assert out.shape == (2, 3)
    assert bool(jnp.all(jnp.isfinite(out)))
    print("KERNEL_OK")
</pallas_src>

<mosaic_0001>
module attributes {stable_mosaic.version = 11 : i64} {
  func.func @_conv_relu_maxq_kernel(%arg0: i32, %arg1: i32, %arg2: memref<1x4x27x1024xbf16, #tpu.memory_space<vmem>>, %arg3: memref<6x27xbf16, #tpu.memory_space<vmem>>, %arg4: memref<6x1xf32, #tpu.memory_space<vmem>>, %arg5: memref<1x6x1024xbf16, #tpu.memory_space<vmem>>) attributes {dimension_semantics = [#tpu.dimension_semantics<parallel>, #tpu.dimension_semantics<parallel>], iteration_bounds = array<i64: 2, 12>, scalar_prefetch = 0 : i64, scratch_operands = 0 : i64, tpu.core_type = #tpu.core_type<tc>, window_params = [{transform_indices = @transform_0, window_bounds = array<i64: 1, 4, 27, 1024>}, {pipeline_mode = #tpu.pipeline_mode<synchronous>, transform_indices = @transform_1, window_bounds = array<i64: 6, 27>}, {pipeline_mode = #tpu.pipeline_mode<synchronous>, transform_indices = @transform_2, window_bounds = array<i64: 6, 1>}, {transform_indices = @transform_3, window_bounds = array<i64: 1, 6, 1024>}]} {
    %c0 = arith.constant 0 : index
    %c0_0 = arith.constant 0 : index
    %0 = vector.load %arg3[%c0, %c0_0] : memref<6x27xbf16, #tpu.memory_space<vmem>>, vector<6x27xbf16>
    %c0_1 = arith.constant 0 : index
    %c0_2 = arith.constant 0 : index
    %c0_3 = arith.constant 0 : index
    %c0_4 = arith.constant 0 : index
    %1 = vector.load %arg2[%c0_1, %c0_2, %c0_3, %c0_4] : memref<1x4x27x1024xbf16, #tpu.memory_space<vmem>>, vector<1x1x27x1024xbf16>
    %2 = vector.shape_cast %1 : vector<1x1x27x1024xbf16> to vector<27x1024xbf16>
    %cst = arith.constant dense<0.000000e+00> : vector<6x1024xf32>
    %3 = tpu.matmul %0, %2, %cst {dimension_numbers = #tpu.dot_dimension_numbers<[1], [0], [0], [1], [0, 0, 1, 1], [], []>} : vector<6x27xbf16>, vector<27x1024xbf16>, vector<6x1024xf32> -> vector<6x1024xf32>
    %c0_5 = arith.constant 0 : index
    %c1 = arith.constant 1 : index
    %c0_6 = arith.constant 0 : index
    %c0_7 = arith.constant 0 : index
    %4 = vector.load %arg2[%c0_5, %c1, %c0_6, %c0_7] : memref<1x4x27x1024xbf16, #tpu.memory_space<vmem>>, vector<1x1x27x1024xbf16>
    %5 = vector.shape_cast %4 : vector<1x1x27x1024xbf16> to vector<27x1024xbf16>
    %cst_8 = arith.constant dense<0.000000e+00> : vector<6x1024xf32>
    %6 = tpu.matmul %0, %5, %cst_8 {dimension_numbers = #tpu.dot_dimension_numbers<[1], [0], [0], [1], [0, 0, 1, 1], [], []>} : vector<6x27xbf16>, vector<27x1024xbf16>, vector<6x1024xf32> -> vector<6x1024xf32>
    %7 = arith.maximumf %3, %6 : vector<6x1024xf32>
    %c0_9 = arith.constant 0 : index
    %c2 = arith.constant 2 : index
    %c0_10 = arith.constant 0 : index
    %c0_11 = arith.constant 0 : index
    %8 = vector.load %arg2[%c0_9, %c2, %c0_10, %c0_11] : memref<1x4x27x1024xbf16, #tpu.memory_space<vmem>>, vector<1x1x27x1024xbf16>
    %9 = vector.shape_cast %8 : vector<1x1x27x1024xbf16> to vector<27x1024xbf16>
    %cst_12 = arith.constant dense<0.000000e+00> : vector<6x1024xf32>
    %10 = tpu.matmul %0, %9, %cst_12 {dimension_numbers = #tpu.dot_dimension_numbers<[1], [0], [0], [1], [0, 0, 1, 1], [], []>} : vector<6x27xbf16>, vector<27x1024xbf16>, vector<6x1024xf32> -> vector<6x1024xf32>
    %11 = arith.maximumf %7, %10 : vector<6x1024xf32>
    %c0_13 = arith.constant 0 : index
    %c3 = arith.constant 3 : index
    %c0_14 = arith.constant 0 : index
    %c0_15 = arith.constant 0 : index
    %12 = vector.load %arg2[%c0_13, %c3, %c0_14, %c0_15] : memref<1x4x27x1024xbf16, #tpu.memory_space<vmem>>, vector<1x1x27x1024xbf16>
    %13 = vector.shape_cast %12 : vector<1x1x27x1024xbf16> to vector<27x1024xbf16>
    %cst_16 = arith.constant dense<0.000000e+00> : vector<6x1024xf32>
    %14 = tpu.matmul %0, %13, %cst_16 {dimension_numbers = #tpu.dot_dimension_numbers<[1], [0], [0], [1], [0, 0, 1, 1], [], []>} : vector<6x27xbf16>, vector<27x1024xbf16>, vector<6x1024xf32> -> vector<6x1024xf32>
    %15 = arith.maximumf %11, %14 : vector<6x1024xf32>
    %c0_17 = arith.constant 0 : index
    %c0_18 = arith.constant 0 : index
    %16 = vector.load %arg4[%c0_17, %c0_18] : memref<6x1xf32, #tpu.memory_space<vmem>>, vector<6x1xf32>
    %17 = vector.broadcast %16 : vector<6x1xf32> to vector<6x1024xf32>
    %18 = arith.addf %15, %17 : vector<6x1024xf32>
    %cst_19 = arith.constant 0.000000e+00 : f32
    %19 = vector.broadcast %cst_19 : f32 to vector<6x1024xf32>
    %20 = arith.maximumf %18, %19 : vector<6x1024xf32>
    %21 = arith.truncf %20 : vector<6x1024xf32> to vector<6x1024xbf16>
    %c0_20 = arith.constant 0 : index
    %c0_21 = arith.constant 0 : index
    %c0_22 = arith.constant 0 : index
    %22 = vector.load %arg5[%c0_20, %c0_21, %c0_22] : memref<1x6x1024xbf16, #tpu.memory_space<vmem>>, vector<1x6x1024xbf16>
    %23 = vector.shape_cast %22 : vector<1x6x1024xbf16> to vector<6x1024xbf16>
    %24 = vector.shape_cast %21 : vector<6x1024xbf16> to vector<1x6x1024xbf16>
    tpu.vector_store %arg5[%c0_20, %c0_21, %c0_22], %24 {strides = array<i32>} : memref<1x6x1024xbf16, #tpu.memory_space<vmem>>, vector<1x6x1024xbf16>,
    return
  }
  func.func @transform_0(%arg0: i32, %arg1: i32) -> (i32, i32, i32, i32) {
    %c0_i32 = arith.constant 0 : i32
    %c0_i32_0 = arith.constant 0 : i32
    %c0_i32_1 = arith.constant 0 : i32
    return %arg0, %c0_i32, %c0_i32_0, %arg1 : i32, i32, i32, i32
  }
  func.func @transform_1(%arg0: i32, %arg1: i32) -> (i32, i32) {
    %c0_i32 = arith.constant 0 : i32
    %c0_i32_0 = arith.constant 0 : i32
    %c0_i32_1 = arith.constant 0 : i32
    return %c0_i32, %c0_i32_0 : i32, i32
  }
  func.func @transform_2(%arg0: i32, %arg1: i32) -> (i32, i32) {
    %c0_i32 = arith.constant 0 : i32
    %c0_i32_0 = arith.constant 0 : i32
    %c0_i32_1 = arith.constant 0 : i32
    return %c0_i32, %c0_i32_0 : i32, i32
  }
  func.func @transform_3(%arg0: i32, %arg1: i32) -> (i32, i32, i32) {
    %c0_i32 = arith.constant 0 : i32
    %c0_i32_0 = arith.constant 0 : i32
    return %arg0, %c0_i32, %arg1 : i32, i32, i32
  }
}

module attributes {stable_mosaic.version = 11 : i64} {
  func.func @_conv_relu_maxq_kernel(%arg0: i32, %arg1: i32, %arg2: memref<1x1x54x1024xbf16, #tpu.memory_space<vmem>>, %arg3: memref<12x54xbf16, #tpu.memory_space<vmem>>, %arg4: memref<12x1xf32, #tpu.memory_space<vmem>>, %arg5: memref<1x12x1024xbf16, #tpu.memory_space<vmem>>) attributes {dimension_semantics = [#tpu.dimension_semantics<parallel>, #tpu.dimension_semantics<parallel>], iteration_bounds = array<i64: 2, 11>, scalar_prefetch = 0 : i64, scratch_operands = 0 : i64, tpu.core_type = #tpu.core_type<tc>, window_params = [{transform_indices = @transform_0, window_bounds = array<i64: 1, 1, 54, 1024>}, {pipeline_mode = #tpu.pipeline_mode<synchronous>, transform_indices = @transform_1, window_bounds = array<i64: 12, 54>}, {pipeline_mode = #tpu.pipeline_mode<synchronous>, transform_indices = @transform_2, window_bounds = array<i64: 12, 1>}, {transform_indices = @transform_3, window_bounds = array<i64: 1, 12, 1024>}]} {
    %c0 = arith.constant 0 : index
    %c0_0 = arith.constant 0 : index
    %0 = vector.load %arg3[%c0, %c0_0] : memref<12x54xbf16, #tpu.memory_space<vmem>>, vector<12x54xbf16>
    %c0_1 = arith.constant 0 : index
    %c0_2 = arith.constant 0 : index
    %c0_3 = arith.constant 0 : index
    %c0_4 = arith.constant 0 : index
    %1 = vector.load %arg2[%c0_1, %c0_2, %c0_3, %c0_4] : memref<1x1x54x1024xbf16, #tpu.memory_space<vmem>>, vector<1x1x54x1024xbf16>
    %2 = vector.shape_cast %1 : vector<1x1x54x1024xbf16> to vector<54x1024xbf16>
    %cst = arith.constant dense<0.000000e+00> : vector<12x1024xf32>
    %3 = tpu.matmul %0, %2, %cst {dimension_numbers = #tpu.dot_dimension_numbers<[1], [0], [0], [1], [0, 0, 1, 1], [], []>} : vector<12x54xbf16>, vector<54x1024xbf16>, vector<12x1024xf32> -> vector<12x1024xf32>
    %c0_5 = arith.constant 0 : index
    %c0_6 = arith.constant 0 : index
    %4 = vector.load %arg4[%c0_5, %c0_6] : memref<12x1xf32, #tpu.memory_space<vmem>>, vector<12x1xf32>
    %5 = vector.broadcast %4 : vector<12x1xf32> to vector<12x1024xf32>
    %6 = arith.addf %3, %5 : vector<12x1024xf32>
    %cst_7 = arith.constant 0.000000e+00 : f32
    %7 = vector.broadcast %cst_7 : f32 to vector<12x1024xf32>
    %8 = arith.maximumf %6, %7 : vector<12x1024xf32>
    %9 = arith.truncf %8 : vector<12x1024xf32> to vector<12x1024xbf16>
    %c0_8 = arith.constant 0 : index
    %c0_9 = arith.constant 0 : index
    %c0_10 = arith.constant 0 : index
    %10 = vector.load %arg5[%c0_8, %c0_9, %c0_10] : memref<1x12x1024xbf16, #tpu.memory_space<vmem>>, vector<1x12x1024xbf16>
    %11 = vector.shape_cast %10 : vector<1x12x1024xbf16> to vector<12x1024xbf16>
    %12 = vector.shape_cast %9 : vector<12x1024xbf16> to vector<1x12x1024xbf16>
    tpu.vector_store %arg5[%c0_8, %c0_9, %c0_10], %12 {strides = array<i32>} : memref<1x12x1024xbf16, #tpu.memory_space<vmem>>, vector<1x12x1024xbf16>,
    return
  }
  func.func @transform_0(%arg0: i32, %arg1: i32) -> (i32, i32, i32, i32) {
    %c0_i32 = arith.constant 0 : i32
    %c0_i32_0 = arith.constant 0 : i32
    %c0_i32_1 = arith.constant 0 : i32
    return %arg0, %c0_i32, %c0_i32_0, %arg1 : i32, i32, i32, i32
  }
  func.func @transform_1(%arg0: i32, %arg1: i32) -> (i32, i32) {
    %c0_i32 = arith.constant 0 : i32
    %c0_i32_0 = arith.constant 0 : i32
    %c0_i32_1 = arith.constant 0 : i32
    return %c0_i32, %c0_i32_0 : i32, i32
  }
  func.func @transform_2(%arg0: i32, %arg1: i32) -> (i32, i32) {
    %c0_i32 = arith.constant 0 : i32
    %c0_i32_0 = arith.constant 0 : i32
    %c0_i32_1 = arith.constant 0 : i32
    return %c0_i32, %c0_i32_0 : i32, i32
  }
  func.func @transform_3(%arg0: i32, %arg1: i32) -> (i32, i32, i32) {
    %c0_i32 = arith.constant 0 : i32
    %c0_i32_0 = arith.constant 0 : i32
    return %arg0, %c0_i32, %arg1 : i32, i32, i32
  }
}

module attributes {stable_mosaic.version = 11 : i64} {
  func.func @_conv_relu_maxq_kernel(%arg0: i32, %arg1: i32, %arg2: memref<1x4x108x512xbf16, #tpu.memory_space<vmem>>, %arg3: memref<24x108xbf16, #tpu.memory_space<vmem>>, %arg4: memref<24x1xf32, #tpu.memory_space<vmem>>, %arg5: memref<1x24x512xbf16, #tpu.memory_space<vmem>>) attributes {dimension_semantics = [#tpu.dimension_semantics<parallel>, #tpu.dimension_semantics<parallel>], iteration_bounds = array<i64: 2, 6>, scalar_prefetch = 0 : i64, scratch_operands = 0 : i64, tpu.core_type = #tpu.core_type<tc>, window_params = [{transform_indices = @transform_0, window_bounds = array<i64: 1, 4, 108, 512>}, {pipeline_mode = #tpu.pipeline_mode<synchronous>, transform_indices = @transform_1, window_bounds = array<i64: 24, 108>}, {pipeline_mode = #tpu.pipeline_mode<synchronous>, transform_indices = @transform_2, window_bounds = array<i64: 24, 1>}, {transform_indices = @transform_3, window_bounds = array<i64: 1, 24, 512>}]} {
    %c0 = arith.constant 0 : index
    %c0_0 = arith.constant 0 : index
    %0 = vector.load %arg3[%c0, %c0_0] : memref<24x108xbf16, #tpu.memory_space<vmem>>, vector<24x108xbf16>
    %c0_1 = arith.constant 0 : index
    %c0_2 = arith.constant 0 : index
    %c0_3 = arith.constant 0 : index
    %c0_4 = arith.constant 0 : index
    %1 = vector.load %arg2[%c0_1, %c0_2, %c0_3, %c0_4] : memref<1x4x108x512xbf16, #tpu.memory_space<vmem>>, vector<1x1x108x512xbf16>
    %2 = vector.shape_cast %1 : vector<1x1x108x512xbf16> to vector<108x512xbf16>
    %cst = arith.constant dense<0.000000e+00> : vector<24x512xf32>
    %3 = tpu.matmul %0, %2, %cst {dimension_numbers = #tpu.dot_dimension_numbers<[1], [0], [0], [1], [0, 0, 1, 1], [], []>} : vector<24x108xbf16>, vector<108x512xbf16>, vector<24x512xf32> -> vector<24x512xf32>
    %c0_5 = arith.constant 0 : index
    %c1 = arith.constant 1 : index
    %c0_6 = arith.constant 0 : index
    %c0_7 = arith.constant 0 : index
    %4 = vector.load %arg2[%c0_5, %c1, %c0_6, %c0_7] : memref<1x4x108x512xbf16, #tpu.memory_space<vmem>>, vector<1x1x108x512xbf16>
    %5 = vector.shape_cast %4 : vector<1x1x108x512xbf16> to vector<108x512xbf16>
    %cst_8 = arith.constant dense<0.000000e+00> : vector<24x512xf32>
    %6 = tpu.matmul %0, %5, %cst_8 {dimension_numbers = #tpu.dot_dimension_numbers<[1], [0], [0], [1], [0, 0, 1, 1], [], []>} : vector<24x108xbf16>, vector<108x512xbf16>, vector<24x512xf32> -> vector<24x512xf32>
    %7 = arith.maximumf %3, %6 : vector<24x512xf32>
    %c0_9 = arith.constant 0 : index
    %c2 = arith.constant 2 : index
    %c0_10 = arith.constant 0 : index
    %c0_11 = arith.constant 0 : index
    %8 = vector.load %arg2[%c0_9, %c2, %c0_10, %c0_11] : memref<1x4x108x512xbf16, #tpu.memory_space<vmem>>, vector<1x1x108x512xbf16>
    %9 = vector.shape_cast %8 : vector<1x1x108x512xbf16> to vector<108x512xbf16>
    %cst_12 = arith.constant dense<0.000000e+00> : vector<24x512xf32>
    %10 = tpu.matmul %0, %9, %cst_12 {dimension_numbers = #tpu.dot_dimension_numbers<[1], [0], [0], [1], [0, 0, 1, 1], [], []>} : vector<24x108xbf16>, vector<108x512xbf16>, vector<24x512xf32> -> vector<24x512xf32>
    %11 = arith.maximumf %7, %10 : vector<24x512xf32>
    %c0_13 = arith.constant 0 : index
    %c3 = arith.constant 3 : index
    %c0_14 = arith.constant 0 : index
    %c0_15 = arith.constant 0 : index
    %12 = vector.load %arg2[%c0_13, %c3, %c0_14, %c0_15] : memref<1x4x108x512xbf16, #tpu.memory_space<vmem>>, vector<1x1x108x512xbf16>
    %13 = vector.shape_cast %12 : vector<1x1x108x512xbf16> to vector<108x512xbf16>
    %cst_16 = arith.constant dense<0.000000e+00> : vector<24x512xf32>
    %14 = tpu.matmul %0, %13, %cst_16 {dimension_numbers = #tpu.dot_dimension_numbers<[1], [0], [0], [1], [0, 0, 1, 1], [], []>} : vector<24x108xbf16>, vector<108x512xbf16>, vector<24x512xf32> -> vector<24x512xf32>
    %15 = arith.maximumf %11, %14 : vector<24x512xf32>
    %c0_17 = arith.constant 0 : index
    %c0_18 = arith.constant 0 : index
    %16 = vector.load %arg4[%c0_17, %c0_18] : memref<24x1xf32, #tpu.memory_space<vmem>>, vector<24x1xf32>
    %17 = vector.broadcast %16 : vector<24x1xf32> to vector<24x512xf32>
    %18 = arith.addf %15, %17 : vector<24x512xf32>
    %cst_19 = arith.constant 0.000000e+00 : f32
    %19 = vector.broadcast %cst_19 : f32 to vector<24x512xf32>
    %20 = arith.maximumf %18, %19 : vector<24x512xf32>
    %21 = arith.truncf %20 : vector<24x512xf32> to vector<24x512xbf16>
    %c0_20 = arith.constant 0 : index
    %c0_21 = arith.constant 0 : index
    %c0_22 = arith.constant 0 : index
    %22 = vector.load %arg5[%c0_20, %c0_21, %c0_22] : memref<1x24x512xbf16, #tpu.memory_space<vmem>>, vector<1x24x512xbf16>
    %23 = vector.shape_cast %22 : vector<1x24x512xbf16> to vector<24x512xbf16>
    %24 = vector.shape_cast %21 : vector<24x512xbf16> to vector<1x24x512xbf16>
    tpu.vector_store %arg5[%c0_20, %c0_21, %c0_22], %24 {strides = array<i32>} : memref<1x24x512xbf16, #tpu.memory_space<vmem>>, vector<1x24x512xbf16>,
    return
  }
  func.func @transform_0(%arg0: i32, %arg1: i32) -> (i32, i32, i32, i32) {
    %c0_i32 = arith.constant 0 : i32
    %c0_i32_0 = arith.constant 0 : i32
    %c0_i32_1 = arith.constant 0 : i32
    return %arg0, %c0_i32, %c0_i32_0, %arg1 : i32, i32, i32, i32
  }
  func.func @transform_1(%arg0: i32, %arg1: i32) -> (i32, i32) {
    %c0_i32 = arith.constant 0 : i32
    %c0_i32_0 = arith.constant 0 : i32
    %c0_i32_1 = arith.constant 0 : i32
    return %c0_i32, %c0_i32_0 : i32, i32
  }
  func.func @transform_2(%arg0: i32, %arg1: i32) -> (i32, i32) {
    %c0_i32 = arith.constant 0 : i32
    %c0_i32_0 = arith.constant 0 : i32
    %c0_i32_1 = arith.constant 0 : i32
    return %c0_i32, %c0_i32_0 : i32, i32
  }
  func.func @transform_3(%arg0: i32, %arg1: i32) -> (i32, i32, i32) {
    %c0_i32 = arith.constant 0 : i32
    %c0_i32_0 = arith.constant 0 : i32
    return %arg0, %c0_i32, %arg1 : i32, i32, i32
  }
}

module attributes {stable_mosaic.version = 11 : i64} {
  func.func @_tail_kernel(%arg0: i32, %arg1: memref<1x4x216x640xbf16, #tpu.memory_space<vmem>>, %arg2: memref<12x216xbf16, #tpu.memory_space<vmem>>, %arg3: memref<12x1xf32, #tpu.memory_space<vmem>>, %arg4: memref<1x12xf32, #tpu.memory_space<vmem>>, %arg5: memref<1x1xf32, #tpu.memory_space<vmem>>, %arg6: memref<640x512xbf16, #tpu.memory_space<vmem>>, %arg7: memref<1x512xf32, #tpu.memory_space<vmem>>, %arg8: memref<512x3xbf16, #tpu.memory_space<vmem>>, %arg9: memref<1x3xf32, #tpu.memory_space<vmem>>, %arg10: memref<1x1x3xf32, #tpu.memory_space<vmem>>) attributes {dimension_semantics = [#tpu.dimension_semantics<parallel>], iteration_bounds = array<i64: 2>, scalar_prefetch = 0 : i64, scratch_operands = 0 : i64, tpu.core_type = #tpu.core_type<tc>, window_params = [{transform_indices = @transform_0, window_bounds = array<i64: 1, 4, 216, 640>}, {pipeline_mode = #tpu.pipeline_mode<synchronous>, transform_indices = @transform_1, window_bounds = array<i64: 12, 216>}, {pipeline_mode = #tpu.pipeline_mode<synchronous>, transform_indices = @transform_2, window_bounds = array<i64: 12, 1>}, {pipeline_mode = #tpu.pipeline_mode<synchronous>, transform_indices = @transform_3, window_bounds = array<i64: 1, 12>}, {pipeline_mode = #tpu.pipeline_mode<synchronous>, transform_indices = @transform_4, window_bounds = array<i64: 1, 1>}, {pipeline_mode = #tpu.pipeline_mode<synchronous>, transform_indices = @transform_5, window_bounds = array<i64: 640, 512>}, {pipeline_mode = #tpu.pipeline_mode<synchronous>, transform_indices = @transform_6, window_bounds = array<i64: 1, 512>}, {pipeline_mode = #tpu.pipeline_mode<synchronous>, transform_indices = @transform_7, window_bounds = array<i64: 512, 3>}, {pipeline_mode = #tpu.pipeline_mode<synchronous>, transform_indices = @transform_8, window_bounds = array<i64: 1, 3>}, {transform_indices = @transform_9, window_bounds = array<i64: 1, 1, 3>}]} {
    %c0 = arith.constant 0 : index
    %c0_0 = arith.constant 0 : index
    %0 = vector.load %arg2[%c0, %c0_0] : memref<12x216xbf16, #tpu.memory_space<vmem>>, vector<12x216xbf16>
    %c0_1 = arith.constant 0 : index
    %c0_2 = arith.constant 0 : index
    %1 = vector.load %arg3[%c0_1, %c0_2] : memref<12x1xf32, #tpu.memory_space<vmem>>, vector<12x1xf32>
    %2 = vector.shape_cast %1 : vector<12x1xf32> to vector<12x1xf32>
    %3 = vector.broadcast %2 : vector<12x1xf32> to vector<12x640xf32>
    %c0_3 = arith.constant 0 : index
    %c0_4 = arith.constant 0 : index
    %4 = vector.load %arg4[%c0_3, %c0_4] : memref<1x12xf32, #tpu.memory_space<vmem>>, vector<1x12xf32>
    %c0_5 = arith.constant 0 : index
    %c0_6 = arith.constant 0 : index
    %c0_7 = arith.constant 0 : index
    %c0_8 = arith.constant 0 : index
    %5 = vector.load %arg1[%c0_5, %c0_6, %c0_7, %c0_8] : memref<1x4x216x640xbf16, #tpu.memory_space<vmem>>, vector<1x1x216x640xbf16>
    %6 = vector.shape_cast %5 : vector<1x1x216x640xbf16> to vector<216x640xbf16>
    %cst = arith.constant dense<0.000000e+00> : vector<12x640xf32>
    %7 = tpu.matmul %0, %6, %cst {dimension_numbers = #tpu.dot_dimension_numbers<[1], [0], [0], [1], [0, 0, 1, 1], [], []>} : vector<12x216xbf16>, vector<216x640xbf16>, vector<12x640xf32> -> vector<12x640xf32>
    %8 = arith.addf %7, %3 : vector<12x640xf32>
    %cst_9 = arith.constant 0.000000e+00 : f32
    %9 = vector.broadcast %cst_9 : f32 to vector<12x640xf32>
    %10 = arith.maximumf %8, %9 : vector<12x640xf32>
    %cst_10 = arith.constant dense<0.000000e+00> : vector<1x640xf32>
    %11 = tpu.matmul %4, %10, %cst_10 {dimension_numbers = #tpu.dot_dimension_numbers<[1], [0], [0], [1], [0, 0, 1, 1], [], []>} : vector<1x12xf32>, vector<12x640xf32>, vector<1x640xf32> -> vector<1x640xf32>
    %c0_11 = arith.constant 0 : index
    %c1 = arith.constant 1 : index
    %c0_12 = arith.constant 0 : index
    %c0_13 = arith.constant 0 : index
    %12 = vector.load %arg1[%c0_11, %c1, %c0_12, %c0_13] : memref<1x4x216x640xbf16, #tpu.memory_space<vmem>>, vector<1x1x216x640xbf16>
    %13 = vector.shape_cast %12 : vector<1x1x216x640xbf16> to vector<216x640xbf16>
    %cst_14 = arith.constant dense<0.000000e+00> : vector<12x640xf32>
    %14 = tpu.matmul %0, %13, %cst_14 {dimension_numbers = #tpu.dot_dimension_numbers<[1], [0], [0], [1], [0, 0, 1, 1], [], []>} : vector<12x216xbf16>, vector<216x640xbf16>, vector<12x640xf32> -> vector<12x640xf32>
    %15 = arith.addf %14, %3 : vector<12x640xf32>
    %cst_15 = arith.constant 0.000000e+00 : f32
    %16 = vector.broadcast %cst_15 : f32 to vector<12x640xf32>
    %17 = arith.maximumf %15, %16 : vector<12x640xf32>
    %cst_16 = arith.constant dense<0.000000e+00> : vector<1x640xf32>
    %18 = tpu.matmul %4, %17, %cst_16 {dimension_numbers = #tpu.dot_dimension_numbers<[1], [0], [0], [1], [0, 0, 1, 1], [], []>} : vector<1x12xf32>, vector<12x640xf32>, vector<1x640xf32> -> vector<1x640xf32>
    %19 = arith.maximumf %11, %18 : vector<1x640xf32>
    %c0_17 = arith.constant 0 : index
    %c2 = arith.constant 2 : index
    %c0_18 = arith.constant 0 : index
    %c0_19 = arith.constant 0 : index
    %20 = vector.load %arg1[%c0_17, %c2, %c0_18, %c0_19] : memref<1x4x216x640xbf16, #tpu.memory_space<vmem>>, vector<1x1x216x640xbf16>
    %21 = vector.shape_cast %20 : vector<1x1x216x640xbf16> to vector<216x640xbf16>
    %cst_20 = arith.constant dense<0.000000e+00> : vector<12x640xf32>
    %22 = tpu.matmul %0, %21, %cst_20 {dimension_numbers = #tpu.dot_dimension_numbers<[1], [0], [0], [1], [0, 0, 1, 1], [], []>} : vector<12x216xbf16>, vector<216x640xbf16>, vector<12x640xf32> -> vector<12x640xf32>
    %23 = arith.addf %22, %3 : vector<12x640xf32>
    %cst_21 = arith.constant 0.000000e+00 : f32
    %24 = vector.broadcast %cst_21 : f32 to vector<12x640xf32>
    %25 = arith.maximumf %23, %24 : vector<12x640xf32>
    %cst_22 = arith.constant dense<0.000000e+00> : vector<1x640xf32>
    %26 = tpu.matmul %4, %25, %cst_22 {dimension_numbers = #tpu.dot_dimension_numbers<[1], [0], [0], [1], [0, 0, 1, 1], [], []>} : vector<1x12xf32>, vector<12x640xf32>, vector<1x640xf32> -> vector<1x640xf32>
    %27 = arith.maximumf %19, %26 : vector<1x640xf32>
    %c0_23 = arith.constant 0 : index
    %c3 = arith.constant 3 : index
    %c0_24 = arith.constant 0 : index
    %c0_25 = arith.constant 0 : index
    %28 = vector.load %arg1[%c0_23, %c3, %c0_24, %c0_25] : memref<1x4x216x640xbf16, #tpu.memory_space<vmem>>, vector<1x1x216x640xbf16>
    %29 = vector.shape_cast %28 : vector<1x1x216x640xbf16> to vector<216x640xbf16>
    %cst_26 = arith.constant dense<0.000000e+00> : vector<12x640xf32>
    %30 = tpu.matmul %0, %29, %cst_26 {dimension_numbers = #tpu.dot_dimension_numbers<[1], [0], [0], [1], [0, 0, 1, 1], [], []>} : vector<12x216xbf16>, vector<216x640xbf16>, vector<12x640xf32> -> vector<12x640xf32>
    %31 = arith.addf %30, %3 : vector<12x640xf32>
    %cst_27 = arith.constant 0.000000e+00 : f32
    %32 = vector.broadcast %cst_27 : f32 to vector<12x640xf32>
    %33 = arith.maximumf %31, %32 : vector<12x640xf32>
    %cst_28 = arith.constant dense<0.000000e+00> : vector<1x640xf32>
    %34 = tpu.matmul %4, %33, %cst_28 {dimension_numbers = #tpu.dot_dimension_numbers<[1], [0], [0], [1], [0, 0, 1, 1], [], []>} : vector<1x12xf32>, vector<12x640xf32>, vector<1x640xf32> -> vector<1x640xf32>
    %35 = arith.maximumf %27, %34 : vector<1x640xf32>
    %c0_29 = arith.constant 0 : index
    %c0_30 = arith.constant 0 : index
    %36 = vector.load %arg5[%c0_29, %c0_30] : memref<1x1xf32, #tpu.memory_space<vmem>>, vector<1x1xf32>
    %37 = vector.broadcast %36 : vector<1x1xf32> to vector<1x640xf32>
    %38 = arith.addf %35, %37 : vector<1x640xf32>
    %cst_31 = arith.constant 0.000000e+00 : f32
    %39 = vector.broadcast %cst_31 : f32 to vector<1x640xf32>
    %40 = arith.maximumf %38, %39 : vector<1x640xf32>
    %41 = arith.truncf %40 : vector<1x640xf32> to vector<1x640xbf16>
    %c0_32 = arith.constant 0 : index
    %c0_33 = arith.constant 0 : index
    %42 = vector.load %arg6[%c0_32, %c0_33] : memref<640x512xbf16, #tpu.memory_space<vmem>>, vector<640x512xbf16>
    %cst_34 = arith.constant dense<0.000000e+00> : vector<1x512xf32>
    %43 = tpu.matmul %41, %42, %cst_34 {dimension_numbers = #tpu.dot_dimension_numbers<[1], [0], [0], [1], [0, 0, 1, 1], [], []>} : vector<1x640xbf16>, vector<640x512xbf16>, vector<1x512xf32> -> vector<1x512xf32>
    %c0_35 = arith.constant 0 : index
    %c0_36 = arith.constant 0 : index
    %44 = vector.load %arg7[%c0_35, %c0_36] : memref<1x512xf32, #tpu.memory_space<vmem>>, vector<1x512xf32>
    %45 = arith.addf %43, %44 : vector<1x512xf32>
    %46 = arith.truncf %45 : vector<1x512xf32> to vector<1x512xbf16>
    %c0_37 = arith.constant 0 : index
    %c0_38 = arith.constant 0 : index
    %47 = vector.load %arg8[%c0_37, %c0_38] : memref<512x3xbf16, #tpu.memory_space<vmem>>, vector<512x3xbf16>
    %cst_39 = arith.constant dense<0.000000e+00> : vector<1x3xf32>
    %48 = tpu.matmul %46, %47, %cst_39 {dimension_numbers = #tpu.dot_dimension_numbers<[1], [0], [0], [1], [0, 0, 1, 1], [], []>} : vector<1x512xbf16>, vector<512x3xbf16>, vector<1x3xf32> -> vector<1x3xf32>
    %c0_40 = arith.constant 0 : index
    %c0_41 = arith.constant 0 : index
    %49 = vector.load %arg9[%c0_40, %c0_41] : memref<1x3xf32, #tpu.memory_space<vmem>>, vector<1x3xf32>
    %50 = arith.addf %48, %49 : vector<1x3xf32>
    %c0_42 = arith.constant 0 : index
    %c0_43 = arith.constant 0 : index
    %c0_44 = arith.constant 0 : index
    %51 = vector.load %arg10[%c0_42, %c0_43, %c0_44] : memref<1x1x3xf32, #tpu.memory_space<vmem>>, vector<1x1x3xf32>
    %52 = vector.shape_cast %51 : vector<1x1x3xf32> to vector<1x3xf32>
    %53 = vector.shape_cast %50 : vector<1x3xf32> to vector<1x1x3xf32>
    tpu.vector_store %arg10[%c0_42, %c0_43, %c0_44], %53 {strides = array<i32>} : memref<1x1x3xf32, #tpu.memory_space<vmem>>, vector<1x1x3xf32>,
    return
  }
  func.func @transform_0(%arg0: i32) -> (i32, i32, i32, i32) {
    %c0_i32 = arith.constant 0 : i32
    %c0_i32_0 = arith.constant 0 : i32
    %c0_i32_1 = arith.constant 0 : i32
    %c0_i32_2 = arith.constant 0 : i32
    return %arg0, %c0_i32, %c0_i32_0, %c0_i32_1 : i32, i32, i32, i32
  }
  func.func @transform_1(%arg0: i32) -> (i32, i32) {
    %c0_i32 = arith.constant 0 : i32
    %c0_i32_0 = arith.constant 0 : i32
    %c0_i32_1 = arith.constant 0 : i32
    return %c0_i32, %c0_i32_0 : i32, i32
  }
  func.func @transform_2(%arg0: i32) -> (i32, i32) {
    %c0_i32 = arith.constant 0 : i32
    %c0_i32_0 = arith.constant 0 : i32
    %c0_i32_1 = arith.constant 0 : i32
    return %c0_i32, %c0_i32_0 : i32, i32
  }
  func.func @transform_3(%arg0: i32) -> (i32, i32) {
    %c0_i32 = arith.constant 0 : i32
    %c0_i32_0 = arith.constant 0 : i32
    %c0_i32_1 = arith.constant 0 : i32
    return %c0_i32, %c0_i32_0 : i32, i32
  }
  func.func @transform_4(%arg0: i32) -> (i32, i32) {
    %c0_i32 = arith.constant 0 : i32
    %c0_i32_0 = arith.constant 0 : i32
    %c0_i32_1 = arith.constant 0 : i32
    return %c0_i32, %c0_i32_0 : i32, i32
  }
  func.func @transform_5(%arg0: i32) -> (i32, i32) {
    %c0_i32 = arith.constant 0 : i32
    %c0_i32_0 = arith.constant 0 : i32
    %c0_i32_1 = arith.constant 0 : i32
    return %c0_i32, %c0_i32_0 : i32, i32
  }
  func.func @transform_6(%arg0: i32) -> (i32, i32) {
    %c0_i32 = arith.constant 0 : i32
    %c0_i32_0 = arith.constant 0 : i32
    %c0_i32_1 = arith.constant 0 : i32
    return %c0_i32, %c0_i32_0 : i32, i32
  }
  func.func @transform_7(%arg0: i32) -> (i32, i32) {
    %c0_i32 = arith.constant 0 : i32
    %c0_i32_0 = arith.constant 0 : i32
    %c0_i32_1 = arith.constant 0 : i32
    return %c0_i32, %c0_i32_0 : i32, i32
  }
  func.func @transform_8(%arg0: i32) -> (i32, i32) {
    %c0_i32 = arith.constant 0 : i32
    %c0_i32_0 = arith.constant 0 : i32
    %c0_i32_1 = arith.constant 0 : i32
    return %c0_i32, %c0_i32_0 : i32, i32
  }
  func.func @transform_9(%arg0: i32) -> (i32, i32, i32) {
    %c0_i32 = arith.constant 0 : i32
    %c0_i32_0 = arith.constant 0 : i32
    %c0_i32_1 = arith.constant 0 : i32
    return %arg0, %c0_i32, %c0_i32_0 : i32, i32, i32
  }
}

</mosaic_0001>

<llo_original>
// kernel: simple_cnn5_forward.4
$region0: #{simple_cnn5_forward.4}
  #allocation0 [shape = 'u32[]', space=smem, size = 0x4, offset = 0x4, fixed_abs, tag = 'smem constant byte address 0x4 - core index']
  #allocation1 [shape = 'u32[144,128]{1,0:T(1,128)}', space=vmem, size = 0x12000, scoped, tag = 'internal scratch']
  %s0 = inlined_call_operand.vmem [shape: bf16[2,4,27,12288], index: 0, kind: input, shape index: {}]
  %s1 = inlined_call_operand.vmem [shape: bf16[6,27], index: 1, kind: input, shape index: {}]
  %s2 = inlined_call_operand.vmem [shape: f32[6,1], index: 2, kind: input, shape index: {}]
  %s3 = inlined_call_operand.vmem [shape: bf16[2,6,12288], index: 3, kind: output, shape index: {}]
  %s4 = sld [smem:[#allocation0]]
  $region68: #{simple_cnn5_forward.4} parent=0
    _
  %s6 = ssub.s32 1, %s4
  %s7 = scalar_select 0, %s6, %s4
  $region1: #{simple_cnn5_forward.4} parent=0
    #allocation2 [shape = 'u8[524288]{0}', space=vmem, size = 0x80000, scoped, tag = 'input window, operand 0']
    loop: start=0, step=1, limit=26
    $region2: #{simple_cnn5_forward.4} parent=1 // loop_pre_header
      _
    $region3: #{simple_cnn5_forward.4} parent=1 // loop_header
      %s9 = sphi 0, %s13
      %p10 = scmp.ge.s32.totalorder %s9, 26
      %s16 = sphi 0, %s28
      %s17 = sphi 0, %s24
      %s18 = sphi 0, %s16
      %s19 = sphi 0, %s17
      %s20 = sphi 0, %s18
      %s21 = sphi 0, %s19
      %s33 = sphi 0, %s35
      %s36 = sphi 0, %s33
      %s37 = sphi 0, %s36
      %s53 = sphi 0, %s37
      %s57 = sphi 0, %s57
      %s59 = sphi 0, %s57
      %s60 = sphi 0, %s59
      %s74 = sphi 0, %s60
      %s78 = sphi 0, %s78
      %s80 = sphi 0, %s78
      %s81 = sphi 0, %s80
      %s95 = sphi 0, %s81
      %s103 = sphi 0, %s105
      %s106 = sphi 0, %s103
      %s107 = sphi 0, %s106
      %s123 = sphi 0, %s107
    $region4: #{simple_cnn5_forward.4} parent=1 // loop_header_branch
      %12 = sbr.rel (%p10) target = $region8
    $region5: #{simple_cnn5_forward.4} parent=1 // loop_body
      %s14 = ssub.s32 %s9, 1
      %s15 = ssub.s32 %s9, 2
      %s22 = sadd.s32 1, %s17
      %p23 = scmp.ge.s32.totalorder %s22, 12
      %s24 = scalar_select %p23, 0, %s22
      %s25 = sadd.s32 1, %s16
      %s26 = scalar_select %p23, %s25, %s16
      %p27 = scmp.ge.s32.totalorder %s26, 2
      %s28 = scalar_select %p27, 0, %s26
      %s29 = ssub.s32 %s16, %s28
      %s30 = ssub.s32 %s17, %s24
      %s31 = sor.u32 %s29, %s30
      %p32 = scmp.eq.s32.totalorder %s31, 0
      %s34 = sadd.s32 %s33, 1
      %s35 = scalar_select %p32, %s33, %s34
      %p38 = pneg %p32
      %p39 = scmp.eq.s32.totalorder %s9, 23
      %p40 = por %p38, %p39
      %p41 = scmp.ne.s32.totalorder %s33, %s36
      %p42 = scmp.eq.s32.totalorder %s9, 0
      %p43 = por %p41, %p42
      %p44 = scmp.ne.s32.totalorder %s33, %s36
      %p45 = scmp.eq.s32.totalorder %s14, 23
      %p46 = por %p44, %p45
      %p47 = scmp.ne.s32.totalorder %s36, %s37
      %p48 = scmp.eq.s32.totalorder %s14, 0
      %p49 = por %p47, %p48
      %p50 = scmp.ne.s32.totalorder %s36, %s37
      %p51 = scmp.eq.s32.totalorder %s15, 23
      %p52 = por %p50, %p51
      %p54 = scmp.ne.s32.totalorder %s37, %s53
      %p55 = scmp.eq.s32.totalorder %s15, 0
      %p56 = por %p54, %p55
      %s58 = sadd.s32 %s57, 1
      %p61 = scmp.eq.s32.totalorder %s9, 23
      %p62 = scmp.ne.s32.totalorder %s57, %s59
      %p63 = scmp.eq.s32.totalorder %s9, 0
      %p64 = por %p62, %p63
      %p65 = scmp.ne.s32.totalorder %s57, %s59
      %p66 = scmp.eq.s32.totalorder %s14, 23
      %p67 = por %p65, %p66
      %p68 = scmp.ne.s32.totalorder %s59, %s60
      %p69 = scmp.eq.s32.totalorder %s14, 0
      %p70 = por %p68, %p69
      %p71 = scmp.ne.s32.totalorder %s59, %s60
      %p72 = scmp.eq.s32.totalorder %s15, 23
      %p73 = por %p71, %p72
      %p75 = scmp.ne.s32.totalorder %s60, %s74
      %p76 = scmp.eq.s32.totalorder %s15, 0
      %p77 = por %p75, %p76
      %s79 = sadd.s32 %s78, 1
      %p82 = scmp.eq.s32.totalorder %s9, 23
      %p83 = scmp.ne.s32.totalorder %s78, %s80
      %p84 = scmp.eq.s32.totalorder %s9, 0
      %p85 = por %p83, %p84
      %p86 = scmp.ne.s32.totalorder %s78, %s80
      %p87 = scmp.eq.s32.totalorder %s14, 23
      %p88 = por %p86, %p87
      %p89 = scmp.ne.s32.totalorder %s80, %s81
      %p90 = scmp.eq.s32.totalorder %s14, 0
      %p91 = por %p89, %p90
      %p92 = scmp.ne.s32.totalorder %s80, %s81
      %p93 = scmp.eq.s32.totalorder %s15, 23
      %p94 = por %p92, %p93
      %p96 = scmp.ne.s32.totalorder %s81, %s95
      %p97 = scmp.eq.s32.totalorder %s15, 0
      %p98 = por %p96, %p97
      %s99 = ssub.s32 %s16, %s28
      %s100 = ssub.s32 %s17, %s24
      %s101 = sor.u32 %s99, %s100
      %p102 = scmp.eq.s32.totalorder %s101, 0
      %s104 = sadd.s32 %s103, 1
      %s105 = scalar_select %p102, %s103, %s104
      %p108 = pneg %p102
      %p109 = scmp.eq.s32.totalorder %s9, 23
      %p110 = por %p108, %p109
      %p111 = scmp.ne.s32.totalorder %s103, %s106
      %p112 = scmp.eq.s32.totalorder %s9, 0
      %p113 = por %p111, %p112
      %p114 = scmp.ne.s32.totalorder %s103, %s106
      %p115 = scmp.eq.s32.totalorder %s14, 23
      %p116 = por %p114, %p115
      %p117 = scmp.ne.s32.totalorder %s106, %s107
      %p118 = scmp.eq.s32.totalorder %s14, 0
      %p119 = por %p117, %p118
      %p120 = scmp.ne.s32.totalorder %s106, %s107
      %p121 = scmp.eq.s32.totalorder %s15, 23
      %p122 = por %p120, %p121
      %p124 = scmp.ne.s32.totalorder %s107, %s123
      %p125 = scmp.eq.s32.totalorder %s15, 0
      %p126 = por %p124, %p125
      %p127 = scmp.le.s32.totalorder 1, %s9
      %p128 = scmp.lt.s32.totalorder %s9, 25
      %p129 = pnand %p127, %p128
      %p130 = pneg %p129
      // Predicated region
      $region9: #{simple_cnn5_forward.4} parent=5 // pred_check
        _
      $region10: #{simple_cnn5_forward.4} parent=5 // pred_check_branch
        %132 = sbr.rel (%p129) target = $region12
      $region11: #{simple_cnn5_forward.4} parent=5 // pred_region
        %s133 = ssub.s32 %s9, 1
        // Predicated region
        $region13: #{simple_cnn5_forward.4} parent=11 // pred_check
          %p134 = pneg %p70
        $region14: #{simple_cnn5_forward.4} parent=11 // pred_check_branch
          %136 = sbr.rel (%p134) target = $region16
        $region15: #{simple_cnn5_forward.4} parent=11 // pred_region
          _
        $region16: #{simple_cnn5_forward.4} parent=11 // pred_fallthru
          _
        // Predicated region
        $region17: #{simple_cnn5_forward.4} parent=11 // pred_check
          %p137 = pneg %p91
        $region18: #{simple_cnn5_forward.4} parent=11 // pred_check_branch
          %139 = sbr.rel (%p137) target = $region20
        $region19: #{simple_cnn5_forward.4} parent=11 // pred_region
          _
        $region20: #{simple_cnn5_forward.4} parent=11 // pred_fallthru
          _
      $region12: #{simple_cnn5_forward.4} parent=5 // pred_fallthru
        _
      %p140 = scmp.lt.s32.totalorder %s9, 24
      // Predicated region
      $region21: #{simple_cnn5_forward.4} parent=5 // pred_check
        %p141 = pneg %p140
      $region22: #{simple_cnn5_forward.4} parent=5 // pred_check_branch
        %143 = sbr.rel (%p141) target = $region24
      $region23: #{simple_cnn5_forward.4} parent=5 // pred_region
        // Predicated region
        $region25: #{simple_cnn5_forward.4} parent=23 // pred_check
          %p144 = pneg %p43
        $region26: #{simple_cnn5_forward.4} parent=23 // pred_check_branch
          %146 = sbr.rel (%p144) target = $region28
        $region27: #{simple_cnn5_forward.4} parent=23 // pred_region
          %s147 = sand.u32 %s33, 1
          %s148 = sand.u32 %s33, 1
          %s149 = smul.addr %s148, 512
          %s150 = scalar_lea.vmem [#allocation2], %s149
          %s151 = smul.u32 8, %s17
          %s152 = smul.addr %s16, 1536
          %s153 = sadd.s32 %s151, %s152
          %s154 = smul.addr %s153, 4
          %s155 = scalar_lea.vmem %s0, %s154
          // Predicated region
          $region29: #{simple_cnn5_forward.4} parent=27 // pred_check
            _
          $region30: #{simple_cnn5_forward.4} parent=27 // pred_check_branch
            %157 = sbr.rel (0) target = $region32
          $region31: #{simple_cnn5_forward.4} parent=27 // pred_region
            // Predicated region
            $region33: #{simple_cnn5_forward.4} parent=31 // pred_check
              _
            $region34: #{simple_cnn5_forward.4} parent=31 // pred_check_branch
              %159 = sbr.rel (0) target = $region36
            $region35: #{simple_cnn5_forward.4} parent=31 // pred_region
              loop: start=0, step=1, limit=1
              $region37: #{simple_cnn5_forward.4} parent=35 // loop_pre_header
                _
              $region38: #{simple_cnn5_forward.4} parent=35 // loop_header
                %s161 = sphi 0, %s165
                %p162 = scmp.ge.s32.totalorder %s161, 1
                %s166 = sphi %s155, %s155
                %s167 = sphi %s150, %s150
              $region39: #{simple_cnn5_forward.4} parent=35 // loop_header_branch
                %164 = sbr.rel (%p162) target = $region43
              $region40: #{simple_cnn5_forward.4} parent=35 // loop_body
                %v168 = vld [vmem:[%s166] sm:$0xff]
                %169 = vst [vmem:[%s167] sm:$0xff] %v168
                %v170 = vld [vmem:[%s166 + $0x8] sm:$0xff]
                %171 = vst [vmem:[%s167 + $0x8] sm:$0xff] %v170
                %v172 = vld [vmem:[%s166 + $0x10] sm:$0xff]
                %173 = vst [vmem:[%s167 + $0x10] sm:$0xff] %v172
                %v174 = vld [vmem:[%s166 + $0x18] sm:$0xff]
                %175 = vst [vmem:[%s167 + $0x18] sm:$0xff] %v174
                %v176 = vld [vmem:[%s166 + $0x180] sm:$0xff]
                %177 = vst [vmem:[%s167 + $0x20] sm:$0xff] %v176
                %v178 = vld [vmem:[%s166 + $0x188] sm:$0xff]
                %179 = vst [vmem:[%s167 + $0x28] sm:$0xff] %v178
                %v180 = vld [vmem:[%s166 + $0x190] sm:$0xff]
                %181 = vst [vmem:[%s167 + $0x30] sm:$0xff] %v180
                %v182 = vld [vmem:[%s166 + $0x198] sm:$0xff]
                %183 = vst [vmem:[%s167 + $0x38] sm:$0xff] %v182
                %v184 = vld [vmem:[%s166 + $0x300] sm:$0xff]
                %185 = vst [vmem:[%s167 + $0x40] sm:$0xff] %v184
                %v186 = vld [vmem:[%s166 + $0x308] sm:$0xff]
                %187 = vst [vmem:[%s167 + $0x48] sm:$0xff] %v186
                %v188 = vld [vmem:[%s166 + $0x310] sm:$0xff]
                %189 = vst [vmem:[%s167 + $0x50] sm:$0xff] %v188
                %v190 = vld [vmem:[%s166 + $0x318] sm:$0xff]
                %191 = vst [vmem:[%s167 + $0x58] sm:$0xff] %v190
                %v192 = vld [vmem:[%s166 + $0x480] sm:$0xff]
                %193 = vst [vmem:[%s167 + $0x60] sm:$0xff] %v192
                %v194 = vld [vmem:[%s166 + $0x488] sm:$0xff]
                %195 = vst [vmem:[%s167 + $0x68] sm:$0xff] %v194
                %v196 = vld [vmem:[%s166 + $0x490] sm:$0xff]
                %197 = vst [vmem:[%s167 + $0x70] sm:$0xff] %v196
                %v198 = vld [vmem:[%s166 + $0x498] sm:$0xff]
                %199 = vst [vmem:[%s167 + $0x78] sm:$0xff] %v198
                %v200 = vld [vmem:[%s166 + $0x600] sm:$0xff]
                %201 = vst [vmem:[%s167 + $0x80] sm:$0xff] %v200
                %v202 = vld [vmem:[%s166 + $0x608] sm:$0xff]
                %203 = vst [vmem:[%s167 + $0x88] sm:$0xff] %v202
                %v204 = vld [vmem:[%s166 + $0x610] sm:$0xff]
                %205 = vst [vmem:[%s167 + $0x90] sm:$0xff] %v204
                %v206 = vld [vmem:[%s166 + $0x618] sm:$0xff]
                %207 = vst [vmem:[%s167 + $0x98] sm:$0xff] %v206
                %v208 = vld [vmem:[%s166 + $0x780] sm:$0xff]
                %209 = vst [vmem:[%s167 + $0xa0] sm:$0xff] %v208
                %v210 = vld [vmem:[%s166 + $0x788] sm:$0xff]
                %211 = vst [vmem:[%s167 + $0xa8] sm:$0xff] %v210
                %v212 = vld [vmem:[%s166 + $0x790] sm:$0xff]
                %213 = vst [vmem:[%s167 + $0xb0] sm:$0xff] %v212
                %v214 = vld [vmem:[%s166 + $0x798] sm:$0xff]
                %215 = vst [vmem:[%s167 + $0xb8] sm:$0xff] %v214
                %v216 = vld [vmem:[%s166 + $0x900] sm:$0xff]
                %217 = vst [vmem:[%s167 + $0xc0] sm:$0xff] %v216
                %v218 = vld [vmem:[%s166 + $0x908] sm:$0xff]
                %219 = vst [vmem:[%s167 + $0xc8] sm:$0xff] %v218
                %v220 = vld [vmem:[%s166 + $0x910] sm:$0xff]
                %221 = vst [vmem:[%s167 + $0xd0] sm:$0xff] %v220
                %v222 = vld [vmem:[%s166 + $0x918] sm:$0xff]
                %223 = vst [vmem:[%s167 + $0xd8] sm:$0xff] %v222
                %v224 = vld [vmem:[%s166 + $0xa80] sm:$0xff]
                %225 = vst [vmem:[%s167 + $0xe0] sm:$0xff] %v224
                %v226 = vld [vmem:[%s166 + $0xa88] sm:$0xff]
                %227 = vst [vmem:[%s167 + $0xe8] sm:$0xff] %v226
                %v228 = vld [vmem:[%s166 + $0xa90] sm:$0xff]
                %229 = vst [vmem:[%s167 + $0xf0] sm:$0xff] %v228
                %v230 = vld [vmem:[%s166 + $0xa98] sm:$0xff]
                %231 = vst [vmem:[%s167 + $0xf8] sm:$0xff] %v230
                %v232 = vld [vmem:[%s166 + $0xc00] sm:$0xff]
                %233 = vst [vmem:[%s167 + $0x100] sm:$0xff] %v232
                %v234 = vld [vmem:[%s166 + $0xc08] sm:$0xff]
                %235 = vst [vmem:[%s167 + $0x108] sm:$0xff] %v234
                %v236 = vld [vmem:[%s166 + $0xc10] sm:$0xff]
                %237 = vst [vmem:[%s167 + $0x110] sm:$0xff] %v236
                %v238 = vld [vmem:[%s166 + $0xc18] sm:$0xff]
                %239 = vst [vmem:[%s167 + $0x118] sm:$0xff] %v238
                %v240 = vld [vmem:[%s166 + $0xd80] sm:$0xff]
                %241 = vst [vmem:[%s167 + $0x120] sm:$0xff] %v240
                %v242 = vld [vmem:[%s166 + $0xd88] sm:$0xff]
                %243 = vst [vmem:[%s167 + $0x128] sm:$0xff] %v242
                %v244 = vld [vmem:[%s166 + $0xd90] sm:$0xff]
                %245 = vst [vmem:[%s167 + $0x130] sm:$0xff] %v244
                %v246 = vld [vmem:[%s166 + $0xd98] sm:$0xff]
                %247 = vst [vmem:[%s167 + $0x138] sm:$0xff] %v246
                %v248 = vld [vmem:[%s166 + $0xf00] sm:$0xff]
                %249 = vst [vmem:[%s167 + $0x140] sm:$0xff] %v248
                %v250 = vld [vmem:[%s166 + $0xf08] sm:$0xff]
                %251 = vst [vmem:[%s167 + $0x148] sm:$0xff] %v250
                %v252 = vld [vmem:[%s166 + $0xf10] sm:$0xff]
                %253 = vst [vmem:[%s167 + $0x150] sm:$0xff] %v252
                %v254 = vld [vmem:[%s166 + $0xf18] sm:$0xff]
                %255 = vst [vmem:[%s167 + $0x158] sm:$0xff] %v254
                %v256 = vld [vmem:[%s166 + $0x1080] sm:$0xff]
                %257 = vst [vmem:[%s167 + $0x160] sm:$0xff] %v256
                %v258 = vld [vmem:[%s166 + $0x1088] sm:$0xff]
                %259 = vst [vmem:[%s167 + $0x168] sm:$0xff] %v258
                %v260 = vld [vmem:[%s166 + $0x1090] sm:$0xff]
                %261 = vst [vmem:[%s167 + $0x170] sm:$0xff] %v260
                %v262 = vld [vmem:[%s166 + $0x1098] sm:$0xff]
                %263 = vst [vmem:[%s167 + $0x178] sm:$0xff] %v262
                %v264 = vld [vmem:[%s166 + $0x1200] sm:$0xff]
                %265 = vst [vmem:[%s167 + $0x180] sm:$0xff] %v264
                %v266 = vld [vmem:[%s166 + $0x1208] sm:$0xff]
                %267 = vst [vmem:[%s167 + $0x188] sm:$0xff] %v266
                %v268 = vld [vmem:[%s166 + $0x1210] sm:$0xff]
                %269 = vst [vmem:[%s167 + $0x190] sm:$0xff] %v268
                %v270 = vld [vmem:[%s166 + $0x1218] sm:$0xff]
                %271 = vst [vmem:[%s167 + $0x198] sm:$0xff] %v270
                %v272 = vld [vmem:[%s166 + $0x1380] sm:$0xff]
                %273 = vst [vmem:[%s167 + $0x1a0] sm:$0xff] %v272
                %v274 = vld [vmem:[%s166 + $0x1388] sm:$0xff]
                %275 = vst [vmem:[%s167 + $0x1a8] sm:$0xff] %v274
                %v276 = vld [vmem:[%s166 + $0x1390] sm:$0xff]
                %277 = vst [vmem:[%s167 + $0x1b0] sm:$0xff] %v276
                %v278 = vld [vmem:[%s166 + $0x1398] sm:$0xff]
                %279 = vst [vmem:[%s167 + $0x1b8] sm:$0xff] %v278
                %v280 = vld [vmem:[%s166 + $0x1500] sm:$0xff]
                %281 = vst [vmem:[%s167 + $0x1c0] sm:$0xff] %v280
                %v282 = vld [vmem:[%s166 + $0x1508] sm:$0xff]
                %283 = vst [vmem:[%s167 + $0x1c8] sm:$0xff] %v282
                %v284 = vld [vmem:[%s166 + $0x1510] sm:$0xff]
                %285 = vst [vmem:[%s167 + $0x1d0] sm:$0xff] %v284
                %v286 = vld [vmem:[%s166 + $0x1518] sm:$0xff]
                %287 = vst [vmem:[%s167 + $0x1d8] sm:$0xff] %v286
                %v288 = vld [vmem:[%s166 + $0x1680] sm:$0xff]
                %289 = vst [vmem:[%s167 + $0x1e0] sm:$0xff] %v288
                %v290 = vld [vmem:[%s166 + $0x1688] sm:$0xff]
                %291 = vst [vmem:[%s167 + $0x1e8] sm:$0xff] %v290
                %v292 = vld [vmem:[%s166 + $0x1690] sm:$0xff]
                %293 = vst [vmem:[%s167 + $0x1f0] sm:$0xff] %v292
                %v294 = vld [vmem:[%s166 + $0x1698] sm:$0xff]
                %295 = vst [vmem:[%s167 + $0x1f8] sm:$0xff] %v294
              $region41: #{simple_cnn5_forward.4} parent=35 // loop_footer
                %s165 = sadd.s32 1, %s161
              $region42: #{simple_cnn5_forward.4} parent=35 // loop_footer_branch
                %160 = sbr.rel target = $region38
              $region43: #{simple_cnn5_forward.4} parent=35 // loop_exit
                _
            $region36: #{simple_cnn5_forward.4} parent=31 // pred_fallthru
              _
            // Predicated region
            $region44: #{simple_cnn5_forward.4} parent=31 // pred_check
              _
            $region45: #{simple_cnn5_forward.4} parent=31 // pred_check_branch
              %297 = sbr.rel target = $region47
            $region46: #{simple_cnn5_forward.4} parent=31 // pred_region
              _
            $region47: #{simple_cnn5_forward.4} parent=31 // pred_fallthru
              _
          $region32: #{simple_cnn5_forward.4} parent=27 // pred_fallthru
            _
          %298 = vnop
        $region28: #{simple_cnn5_forward.4} parent=23 // pred_fallthru
          _
      $region24: #{simple_cnn5_forward.4} parent=5 // pred_fallthru
        _
      %p299 = scmp.le.s32.totalorder 1, %s9
      %p300 = scmp.lt.s32.totalorder %s9, 25
      %p301 = pnand %p299, %p300
      %p302 = pneg %p301
      // Predicated region
      $region48: #{simple_cnn5_forward.4} parent=5 // pred_check
        _
      $region49: #{simple_cnn5_forward.4} parent=5 // pred_check_branch
        %304 = sbr.rel (%p301) target = $region51
      $region50: #{simple_cnn5_forward.4} parent=5 // pred_region
        %s305 = ssub.s32 %s9, 1
        %s306 = sand.u32 %s36, 1
        %s307 = sand.u32 %s36, 1
        %s308 = smul.addr %s307, 512
        %s309 = scalar_lea.vmem [#allocation2], %s308
        // Predicated region
        $region52: #{simple_cnn5_forward.4} parent=50 // pred_check
          %p310 = pneg %p49
        $region53: #{simple_cnn5_forward.4} parent=50 // pred_check_branch
          %312 = sbr.rel (%p310) target = $region55
        $region54: #{simple_cnn5_forward.4} parent=50 // pred_region
          _
        $region55: #{simple_cnn5_forward.4} parent=50 // pred_fallthru
          _
        %s313 = sand.u32 %s36, 1
        %s314 = sand.u32 %s36, 1
        %s315 = smul.addr %s314, 512
        %s316 = scalar_lea.vmem [#allocation2], %s315
        %p317 = pneg %p49
        %p318 = pneg %p46
        %p319 = pneg %p70
        %p320 = pneg %p67
        %p321 = pneg %p91
        %p322 = pneg %p88
        %p323 = pneg %p119
        %p324 = pneg %p116
        %s325 = smul.u32 8, %s19
        %p326 = scmp.lt.s32.totalorder %s18, 1
        %s327 = scalar_select %p326, %s18, 1
        %p328 = scmp.lt.s32.totalorder %s325, 95
        %s329 = scalar_select %p328, %s325, 95
        %s330 = smul.addr %s327, 96
        %s331 = sadd.s32 %s329, %s330
        %s332 = smul.addr %s331, 4
        %s333 = scalar_lea.vmem %s3, %s332
        %s334 = smul.u32 8, %s19
        %s335 = smul.u32 8, %s19
        %p336 = scmp.lt.s32.totalorder %s18, 1
        %s337 = scalar_select %p336, %s18, 1
        %p338 = scmp.lt.s32.totalorder %s335, 95
        %s339 = scalar_select %p338, %s335, 95
        %s340 = smul.addr %s337, 96
        %s341 = sadd.s32 %s339, %s340
        %s342 = smul.addr %s341, 4
        %s343 = scalar_lea.vmem %s3, %s342
        %s344 = smul.u32 8, %s19
        %v346 = vld [vmem:[%s1] sm:$0x7]
        %v347 = vld [vmem:[%s309] sm:$0xff]
        %v348 = vld [vmem:[%s309 + $0x8] sm:$0xff]
        %v349 = vld [vmem:[%s309 + $0x10] sm:$0xff]
        %v350 = vld [vmem:[%s309 + $0x18] sm:$0xff]
        %v351 = vld [vmem:[%s309 + $0x20] sm:$0xff]
        %v352 = vld [vmem:[%s309 + $0x28] sm:$0xff]
        %v353 = vld [vmem:[%s309 + $0x30] sm:$0xff]
        %v354 = vld [vmem:[%s309 + $0x38] sm:$0xff]
        %v355 = vld [vmem:[%s309 + $0x40] sm:$0xff]
        %v356 = vld [vmem:[%s309 + $0x48] sm:$0xff]
        %v357 = vld [vmem:[%s309 + $0x50] sm:$0xff]
        %v358 = vld [vmem:[%s309 + $0x58] sm:$0xff]
        %v359 = vld [vmem:[%s309 + $0x60] sm:$0x33]
        %v360 = vld [vmem:[%s309 + $0x68] sm:$0x33]
        %v361 = vld [vmem:[%s309 + $0x70] sm:$0x33]
        %v362 = vld [vmem:[%s309 + $0x78] sm:$0x33]
        %v379 = vunpack.c.l.b16 %v347
        %v380 = vunpack.c.h.b16 %v347
        %v381 = vunpack.c.l.b16 %v348
        %v382 = vunpack.c.h.b16 %v348
        %v383 = vunpack.c.l.b16 %v349
        %v384 = vunpack.c.h.b16 %v349
        %v385 = vunpack.c.l.b16 %v350
        %v386 = vunpack.c.h.b16 %v350
        %v387 = vunpack.c.l.b16 %v351
        %v388 = vunpack.c.h.b16 %v351
        %v389 = vunpack.c.l.b16 %v352
        %v390 = vunpack.c.h.b16 %v352
        %v391 = vunpack.c.l.b16 %v353
        %v392 = vunpack.c.h.b16 %v353
        %v393 = vunpack.c.l.b16 %v354
        %v394 = vunpack.c.h.b16 %v354
        %v395 = vunpack.c.l.b16 %v355
        %v396 = vunpack.c.h.b16 %v355
        %v397 = vunpack.c.l.b16 %v356
        %v398 = vunpack.c.h.b16 %v356
        %v399 = vunpack.c.l.b16 %v357
        %v400 = vunpack.c.h.b16 %v357
        %v401 = vunpack.c.l.b16 %v358
        %v402 = vunpack.c.h.b16 %v358
        %v403 = vunpack.c.l.b16 %v359
        %v404 = vunpack.c.h.b16 %v359
        %v405 = vunpack.c.l.b16 %v360
        %v406 = vunpack.c.h.b16 %v360
        %v407 = vunpack.c.l.b16 %v361
        %v408 = vunpack.c.h.b16 %v361
        %v409 = vunpack.c.l.b16 %v362
        %v410 = vunpack.c.h.b16 %v362
        %v411 = vpack.c.b16 %v387, %v379
        %v412 = vpack.c.b16 %v388, %v380
        %v413 = vpack.c.b16 %v389, %v381
        %v414 = vpack.c.b16 %v390, %v382
        %v415 = vpack.c.b16 %v391, %v383
        %v416 = vpack.c.b16 %v392, %v384
        %v417 = vpack.c.b16 %v393, %v385
        %v418 = vpack.c.b16 %v394, %v386
        %v419 = vpack.c.b16 %v403, %v395
        %v420 = vpack.c.b16 %v404, %v396
        %v421 = vpack.c.b16 %v405, %v397
        %v422 = vpack.c.b16 %v406, %v398
        %v423 = vpack.c.b16 %v407, %v399
        %v424 = vpack.c.b16 %v408, %v400
        %v425 = vpack.c.b16 %v409, %v401
        %v426 = vpack.c.b16 %v410, %v402
        %vm435 = vcmask 220160
        %v437 = vsel %vm435, %v346, 0
        %vm439 = vcmask 1044480
        %vm440 = vcmask 1045504
        %v441 = vsel %vm439, 4294967295, 65535
        %v442 = vsel %vm440, %v441, 0
        %v444 = vand.u32 %v419, %v442
        %v447 = vand.u32 %v420, %v442
        %v450 = vand.u32 %v421, %v442
        %v453 = vand.u32 %v422, %v442
        %v456 = vand.u32 %v423, %v442
        %v459 = vand.u32 %v424, %v442
        %v462 = vand.u32 %v425, %v442
        %v465 = vand.u32 %v426, %v442
        %467 = vmatprep.subr.bf16.mxu0 0
        %468 = vmatpush1.bf16.msra.mxu0 0
        %469 = vmatprep.subr.bf16.mxu0 0
        %470 = vmatpush1.bf16.msra.mxu0 0
        %471 = vmatprep.subr.bf16.mxu0 0
        %472 = vmatpush1.bf16.msra.mxu0 0
        %473 = vmatprep.subr.bf16.mxu0 0
        %474 = vmatpush1.bf16.msra.mxu0 0
        %475 = vmatprep.subr.bf16.mxu0 0
        %476 = vmatpush1.bf16.msra.mxu0 0
        %477 = vmatprep.subr.bf16.mxu0 0
        %478 = vmatpush1.bf16.msra.mxu0 0
        %479 = vmatprep.subr.bf16.mxu0 %v447
        %480 = vmatpush1.bf16.msra.mxu0 %v444
        %481 = vmatprep.subr.bf16.mxu0 %v412
        %482 = vmatpush1.bf16.msra.mxu0 %v411
        %483 = vmatprep.subr.bf16.mxu0 0
        %484 = vmatpush2.bf16.msra.mxu0 0
        %485 = vmatprep.subr.bf16.mxu0 0
        %486 = vmatpush2.bf16.msra.mxu0 0
        %487 = vmatprep.subr.bf16.mxu0 0
        %488 = vmatpush2.bf16.msra.mxu0 0
        %489 = vmatprep.subr.bf16.mxu0 0
        %490 = vmatpush2.bf16.msra.mxu0 0
        %491 = vmatprep.subr.bf16.mxu0 0
        %492 = vmatpush2.bf16.msra.mxu0 0
        %493 = vmatprep.subr.bf16.mxu0 0
        %494 = vmatpush2.bf16.msra.mxu0 0
        %495 = vmatprep.subr.bf16.mxu0 0
        %496 = vmatpush2.bf16.msra.mxu0 0
        %497 = vmatprep.subr.bf16.mxu0 0
        %498 = vmatpush2.bf16.msra.mxu0 0
        %499 = vmatprep.mubr.bf16.mxu0 0
        %500 = vmatmul.mubr.bf16.gmra.mxu0 %v437
        %v501 = vpop.f32.mrf.mxu0
        %v502 = vadd.f32 0.0, %v501
        %v503 = vpop.f32.mrf.mxu0
        %v504 = vadd.f32 0.0, %v503
        %v505 = vpop.f32.mrf.mxu0
        %v506 = vpop.f32.mrf.mxu0
        %507 = vdwg.mxu0
        %508 = vmatprep.subr.bf16.mxu0 0
        %509 = vmatpush1.bf16.msra.mxu0 0
        %510 = vmatprep.subr.bf16.mxu0 0
        %511 = vmatpush1.bf16.msra.mxu0 0
        %512 = vmatprep.subr.bf16.mxu0 0
        %513 = vmatpush1.bf16.msra.mxu0 0
        %514 = vmatprep.subr.bf16.mxu0 0
        %515 = vmatpush1.bf16.msra.mxu0 0
        %516 = vmatprep.subr.bf16.mxu0 0
        %517 = vmatpush1.bf16.msra.mxu0 0
        %518 = vmatprep.subr.bf16.mxu0 0
        %519 = vmatpush1.bf16.msra.mxu0 0
        %520 = vmatprep.subr.bf16.mxu0 %v453
        %521 = vmatpush1.bf16.msra.mxu0 %v450
        %522 = vmatprep.subr.bf16.mxu0 %v414
        %523 = vmatpush1.bf16.msra.mxu0 %v413
        %524 = vmatprep.subr.bf16.mxu0 0
        %525 = vmatpush2.bf16.msra.mxu0 0
        %526 = vmatprep.subr.bf16.mxu0 0
        %527 = vmatpush2.bf16.msra.mxu0 0
        %528 = vmatprep.subr.bf16.mxu0 0
        %529 = vmatpush2.bf16.msra.mxu0 0
        %530 = vmatprep.subr.bf16.mxu0 0
        %531 = vmatpush2.bf16.msra.mxu0 0
        %532 = vmatprep.subr.bf16.mxu0 0
        %533 = vmatpush2.bf16.msra.mxu0 0
        %534 = vmatprep.subr.bf16.mxu0 0
        %535 = vmatpush2.bf16.msra.mxu0 0
        %536 = vmatprep.subr.bf16.mxu0 0
        %537 = vmatpush2.bf16.msra.mxu0 0
        %538 = vmatprep.subr.bf16.mxu0 0
        %539 = vmatpush2.bf16.msra.mxu0 0
        %540 = vmatprep.mubr.bf16.mxu0 0
        %541 = vmatmul.mubr.bf16.gmra.mxu0 %v437
        %v542 = vpop.f32.mrf.mxu0
        %v543 = vadd.f32 0.0, %v542
        %v544 = vpop.f32.mrf.mxu0
        %v545 = vadd.f32 0.0, %v544
        %v546 = vpop.f32.mrf.mxu0
        %v547 = vpop.f32.mrf.mxu0
        %548 = vdwg.mxu0
        %549 = vmatprep.subr.bf16.mxu0 0
        %550 = vmatpush1.bf16.msra.mxu0 0
        %551 = vmatprep.subr.bf16.mxu0 0
        %552 = vmatpush1.bf16.msra.mxu0 0
        %553 = vmatprep.subr.bf16.mxu0 0
        %554 = vmatpush1.bf16.msra.mxu0 0
        %555 = vmatprep.subr.bf16.mxu0 0
        %556 = vmatpush1.bf16.msra.mxu0 0
        %557 = vmatprep.subr.bf16.mxu0 0
        %558 = vmatpush1.bf16.msra.mxu0 0
        %559 = vmatprep.subr.bf16.mxu0 0
        %560 = vmatpush1.bf16.msra.mxu0 0
        %561 = vmatprep.subr.bf16.mxu0 %v459
        %562 = vmatpush1.bf16.msra.mxu0 %v456
        %563 = vmatprep.subr.bf16.mxu0 %v416
        %564 = vmatpush1.bf16.msra.mxu0 %v415
        %565 = vmatprep.subr.bf16.mxu0 0
        %566 = vmatpush2.bf16.msra.mxu0 0
        %567 = vmatprep.subr.bf16.mxu0 0
        %568 = vmatpush2.bf16.msra.mxu0 0
        %569 = vmatprep.subr.bf16.mxu0 0
        %570 = vmatpush2.bf16.msra.mxu0 0
        %571 = vmatprep.subr.bf16.mxu0 0
        %572 = vmatpush2.bf16.msra.mxu0 0
        %573 = vmatprep.subr.bf16.mxu0 0
        %574 = vmatpush2.bf16.msra.mxu0 0
        %575 = vmatprep.subr.bf16.mxu0 0
        %576 = vmatpush2.bf16.msra.mxu0 0
        %577 = vmatprep.subr.bf16.mxu0 0
        %578 = vmatpush2.bf16.msra.mxu0 0
        %579 = vmatprep.subr.bf16.mxu0 0
        %580 = vmatpush2.bf16.msra.mxu0 0
        %581 = vmatprep.mubr.bf16.mxu0 0
        %582 = vmatmul.mubr.bf16.gmra.mxu0 %v437
        %v583 = vpop.f32.mrf.mxu0
        %v584 = vadd.f32 0.0, %v583
        %v585 = vpop.f32.mrf.mxu0
        %v586 = vadd.f32 0.0, %v585
        %v587 = vpop.f32.mrf.mxu0
        %v588 = vpop.f32.mrf.mxu0
        %589 = vdwg.mxu0
        %590 = vmatprep.subr.bf16.mxu0 0
        %591 = vmatpush1.bf16.msra.mxu0 0
        %592 = vmatprep.subr.bf16.mxu0 0
        %593 = vmatpush1.bf16.msra.mxu0 0
        %594 = vmatprep.subr.bf16.mxu0 0
        %595 = vmatpush1.bf16.msra.mxu0 0
        %596 = vmatprep.subr.bf16.mxu0 0
        %597 = vmatpush1.bf16.msra.mxu0 0
        %598 = vmatprep.subr.bf16.mxu0 0
        %599 = vmatpush1.bf16.msra.mxu0 0
        %600 = vmatprep.subr.bf16.mxu0 0
        %601 = vmatpush1.bf16.msra.mxu0 0
        %602 = vmatprep.subr.bf16.mxu0 %v465
        %603 = vmatpush1.bf16.msra.mxu0 %v462
        %604 = vmatprep.subr.bf16.mxu0 %v418
        %605 = vmatpush1.bf16.msra.mxu0 %v417
        %606 = vmatprep.subr.bf16.mxu0 0
        %607 = vmatpush2.bf16.msra.mxu0 0
        %608 = vmatprep.subr.bf16.mxu0 0
        %609 = vmatpush2.bf16.msra.mxu0 0
        %610 = vmatprep.subr.bf16.mxu0 0
        %611 = vmatpush2.bf16.msra.mxu0 0
        %612 = vmatprep.subr.bf16.mxu0 0
        %613 = vmatpush2.bf16.msra.mxu0 0
        %614 = vmatprep.subr.bf16.mxu0 0
        %615 = vmatpush2.bf16.msra.mxu0 0
        %616 = vmatprep.subr.bf16.mxu0 0
        %617 = vmatpush2.bf16.msra.mxu0 0
        %618 = vmatprep.subr.bf16.mxu0 0
        %619 = vmatpush2.bf16.msra.mxu0 0
        %620 = vmatprep.subr.bf16.mxu0 0
        %621 = vmatpush2.bf16.msra.mxu0 0
        %622 = vmatprep.mubr.bf16.mxu0 0
        %623 = vmatmul.mubr.bf16.gmra.mxu0 %v437
        %v624 = vpop.f32.mrf.mxu0
        %v625 = vadd.f32 0.0, %v624
        %v626 = vpop.f32.mrf.mxu0
        %v627 = vadd.f32 0.0, %v626
        %v628 = vpop.f32.mrf.mxu0
        %v629 = vpop.f32.mrf.mxu0
        %630 = vdwg.mxu0
        %s631 = scalar_lea.vmem %s309, 128 [#allocation2]
        %v632 = vld [vmem:[%s631] sm:$0xff]
        %v633 = vld [vmem:[%s631 + $0x8] sm:$0xff]
        %v634 = vld [vmem:[%s631 + $0x10] sm:$0xff]
        %v635 = vld [vmem:[%s631 + $0x18] sm:$0xff]
        %v636 = vld [vmem:[%s631 + $0x20] sm:$0xff]
        %v637 = vld [vmem:[%s631 + $0x28] sm:$0xff]
        %v638 = vld [vmem:[%s631 + $0x30] sm:$0xff]
        %v639 = vld [vmem:[%s631 + $0x38] sm:$0xff]
        %v640 = vld [vmem:[%s631 + $0x40] sm:$0xff]
        %v641 = vld [vmem:[%s631 + $0x48] sm:$0xff]
        %v642 = vld [vmem:[%s631 + $0x50] sm:$0xff]
        %v643 = vld [vmem:[%s631 + $0x58] sm:$0xff]
        %v644 = vld [vmem:[%s631 + $0x60] sm:$0x33]
        %v645 = vld [vmem:[%s631 + $0x68] sm:$0x33]
        %v646 = vld [vmem:[%s631 + $0x70] sm:$0x33]
        %v647 = vld [vmem:[%s631 + $0x78] sm:$0x33]
        %v664 = vunpack.c.l.b16 %v632
        %v665 = vunpack.c.h.b16 %v632
        %v666 = vunpack.c.l.b16 %v633
        %v667 = vunpack.c.h.b16 %v633
        %v668 = vunpack.c.l.b16 %v634
        %v669 = vunpack.c.h.b16 %v634
        %v670 = vunpack.c.l.b16 %v635
        %v671 = vunpack.c.h.b16 %v635
        %v672 = vunpack.c.l.b16 %v636
        %v673 = vunpack.c.h.b16 %v636
        %v674 = vunpack.c.l.b16 %v637
        %v675 = vunpack.c.h.b16 %v637
        %v676 = vunpack.c.l.b16 %v638
        %v677 = vunpack.c.h.b16 %v638
        %v678 = vunpack.c.l.b16 %v639
        %v679 = vunpack.c.h.b16 %v639
        %v680 = vunpack.c.l.b16 %v640
        %v681 = vunpack.c.h.b16 %v640
        %v682 = vunpack.c.l.b16 %v641
        %v683 = vunpack.c.h.b16 %v641
        %v684 = vunpack.c.l.b16 %v642
        %v685 = vunpack.c.h.b16 %v642
        %v686 = vunpack.c.l.b16 %v643
        %v687 = vunpack.c.h.b16 %v643
        %v688 = vunpack.c.l.b16 %v644
        %v689 = vunpack.c.h.b16 %v644
        %v690 = vunpack.c.l.b16 %v645
        %v691 = vunpack.c.h.b16 %v645
        %v692 = vunpack.c.l.b16 %v646
        %v693 = vunpack.c.h.b16 %v646
        %v694 = vunpack.c.l.b16 %v647
        %v695 = vunpack.c.h.b16 %v647
        %v696 = vpack.c.b16 %v672, %v664
        %v697 = vpack.c.b16 %v673, %v665
        %v698 = vpack.c.b16 %v674, %v666
        %v699 = vpack.c.b16 %v675, %v667
        %v700 = vpack.c.b16 %v676, %v668
        %v701 = vpack.c.b16 %v677, %v669
        %v702 = vpack.c.b16 %v678, %v670
        %v703 = vpack.c.b16 %v679, %v671
        %v704 = vpack.c.b16 %v688, %v680
        %v705 = vpack.c.b16 %v689, %v681
        %v706 = vpack.c.b16 %v690, %v682
        %v707 = vpack.c.b16 %v691, %v683
        %v708 = vpack.c.b16 %v692, %v684
        %v709 = vpack.c.b16 %v693, %v685
        %v710 = vpack.c.b16 %v694, %v686
        %v711 = vpack.c.b16 %v695, %v687
        %v721 = vand.u32 %v704, %v442
        %v724 = vand.u32 %v705, %v442
        %v727 = vand.u32 %v706, %v442
        %v730 = vand.u32 %v707, %v442
        %v733 = vand.u32 %v708, %v442
        %v736 = vand.u32 %v709, %v442
        %v739 = vand.u32 %v710, %v442
        %v742 = vand.u32 %v711, %v442
        %744 = vmatprep.subr.bf16.mxu0 0
        %745 = vmatpush1.bf16.msra.mxu0 0
        %746 = vmatprep.subr.bf16.mxu0 0
        %747 = vmatpush1.bf16.msra.mxu0 0
        %748 = vmatprep.subr.bf16.mxu0 0
        %749 = vmatpush1.bf16.msra.mxu0 0
        %750 = vmatprep.subr.bf16.mxu0 0
        %751 = vmatpush1.bf16.msra.mxu0 0
        %752 = vmatprep.subr.bf16.mxu0 0
        %753 = vmatpush1.bf16.msra.mxu0 0
        %754 = vmatprep.subr.bf16.mxu0 0
        %755 = vmatpush1.bf16.msra.mxu0 0
        %756 = vmatprep.subr.bf16.mxu0 %v724
        %757 = vmatpush1.bf16.msra.mxu0 %v721
        %758 = vmatprep.subr.bf16.mxu0 %v697
        %759 = vmatpush1.bf16.msra.mxu0 %v696
        %760 = vmatprep.subr.bf16.mxu0 0
        %761 = vmatpush2.bf16.msra.mxu0 0
        %762 = vmatprep.subr.bf16.mxu0 0
        %763 = vmatpush2.bf16.msra.mxu0 0
        %764 = vmatprep.subr.bf16.mxu0 0
        %765 = vmatpush2.bf16.msra.mxu0 0
        %766 = vmatprep.subr.bf16.mxu0 0
        %767 = vmatpush2.bf16.msra.mxu0 0
        %768 = vmatprep.subr.bf16.mxu0 0
        %769 = vmatpush2.bf16.msra.mxu0 0
        %770 = vmatprep.subr.bf16.mxu0 0
        %771 = vmatpush2.bf16.msra.mxu0 0
        %772 = vmatprep.subr.bf16.mxu0 0
        %773 = vmatpush2.bf16.msra.mxu0 0
        %774 = vmatprep.subr.bf16.mxu0 0
        %775 = vmatpush2.bf16.msra.mxu0 0
        %776 = vmatprep.mubr.bf16.mxu0 0
        %777 = vmatmul.mubr.bf16.gmra.mxu0 %v437
        %v778 = vpop.f32.mrf.mxu0
        %v779 = vadd.f32 0.0, %v778
        %v780 = vpop.f32.mrf.mxu0
        %v781 = vadd.f32 0.0, %v780
        %v782 = vpop.f32.mrf.mxu0
        %v783 = vpop.f32.mrf.mxu0
        %784 = vdwg.mxu0
        %785 = vmatprep.subr.bf16.mxu0 0
        %786 = vmatpush1.bf16.msra.mxu0 0
        %787 = vmatprep.subr.bf16.mxu0 0
        %788 = vmatpush1.bf16.msra.mxu0 0
        %789 = vmatprep.subr.bf16.mxu0 0
        %790 = vmatpush1.bf16.msra.mxu0 0
        %791 = vmatprep.subr.bf16.mxu0 0
        %792 = vmatpush1.bf16.msra.mxu0 0
        %793 = vmatprep.subr.bf16.mxu0 0
        %794 = vmatpush1.bf16.msra.mxu0 0
        %795 = vmatprep.subr.bf16.mxu0 0
        %796 = vmatpush1.bf16.msra.mxu0 0
        %797 = vmatprep.subr.bf16.mxu0 %v730
        %798 = vmatpush1.bf16.msra.mxu0 %v727
        %799 = vmatprep.subr.bf16.mxu0 %v699
        %800 = vmatpush1.bf16.msra.mxu0 %v698
        %801 = vmatprep.subr.bf16.mxu0 0
        %802 = vmatpush2.bf16.msra.mxu0 0
        %803 = vmatprep.subr.bf16.mxu0 0
        %804 = vmatpush2.bf16.msra.mxu0 0
        %805 = vmatprep.subr.bf16.mxu0 0
        %806 = vmatpush2.bf16.msra.mxu0 0
        %807 = vmatprep.subr.bf16.mxu0 0
        %808 = vmatpush2.bf16.msra.mxu0 0
        %809 = vmatprep.subr.bf16.mxu0 0
        %810 = vmatpush2.bf16.msra.mxu0 0
        %811 = vmatprep.subr.bf16.mxu0 0
        %812 = vmatpush2.bf16.msra.mxu0 0
        %813 = vmatprep.subr.bf16.mxu0 0
        %814 = vmatpush2.bf16.msra.mxu0 0
        %815 = vmatprep.subr.bf16.mxu0 0
        %816 = vmatpush2.bf16.msra.mxu0 0
        %817 = vmatprep.mubr.bf16.mxu0 0
        %818 = vmatmul.mubr.bf16.gmra.mxu0 %v437
        %v819 = vpop.f32.mrf.mxu0
        %v820 = vadd.f32 0.0, %v819
        %v821 = vpop.f32.mrf.mxu0
        %v822 = vadd.f32 0.0, %v821
        %v823 = vpop.f32.mrf.mxu0
        %v824 = vpop.f32.mrf.mxu0
        %825 = vdwg.mxu0
        %826 = vmatprep.subr.bf16.mxu0 0
        %827 = vmatpush1.bf16.msra.mxu0 0
        %828 = vmatprep.subr.bf16.mxu0 0
        %829 = vmatpush1.bf16.msra.mxu0 0
        %830 = vmatprep.subr.bf16.mxu0 0
        %831 = vmatpush1.bf16.msra.mxu0 0
        %832 = vmatprep.subr.bf16.mxu0 0
        %833 = vmatpush1.bf16.msra.mxu0 0
        %834 = vmatprep.subr.bf16.mxu0 0
        %835 = vmatpush1.bf16.msra.mxu0 0
        %836 = vmatprep.subr.bf16.mxu0 0
        %837 = vmatpush1.bf16.msra.mxu0 0
        %838 = vmatprep.subr.bf16.mxu0 %v736
        %839 = vmatpush1.bf16.msra.mxu0 %v733
        %840 = vmatprep.subr.bf16.mxu0 %v701
        %841 = vmatpush1.bf16.msra.mxu0 %v700
        %842 = vmatprep.subr.bf16.mxu0 0
        %843 = vmatpush2.bf16.msra.mxu0 0
        %844 = vmatprep.subr.bf16.mxu0 0
        %845 = vmatpush2.bf16.msra.mxu0 0
        %846 = vmatprep.subr.bf16.mxu0 0
        %847 = vmatpush2.bf16.msra.mxu0 0
        %848 = vmatprep.subr.bf16.mxu0 0
        %849 = vmatpush2.bf16.msra.mxu0 0
        %850 = vmatprep.subr.bf16.mxu0 0
        %851 = vmatpush2.bf16.msra.mxu0 0
        %852 = vmatprep.subr.bf16.mxu0 0
        %853 = vmatpush2.bf16.msra.mxu0 0
        %854 = vmatprep.subr.bf16.mxu0 0
        %855 = vmatpush2.bf16.msra.mxu0 0
        %856 = vmatprep.subr.bf16.mxu0 0
        %857 = vmatpush2.bf16.msra.mxu0 0
        %858 = vmatprep.mubr.bf16.mxu0 0
        %859 = vmatmul.mubr.bf16.gmra.mxu0 %v437
        %v860 = vpop.f32.mrf.mxu0
        %v861 = vadd.f32 0.0, %v860
        %v862 = vpop.f32.mrf.mxu0
        %v863 = vadd.f32 0.0, %v862
        %v864 = vpop.f32.mrf.mxu0
        %v865 = vpop.f32.mrf.mxu0
        %866 = vdwg.mxu0
        %867 = vmatprep.subr.bf16.mxu0 0
        %868 = vmatpush1.bf16.msra.mxu0 0
        %869 = vmatprep.subr.bf16.mxu0 0
        %870 = vmatpush1.bf16.msra.mxu0 0
        %871 = vmatprep.subr.bf16.mxu0 0
        %872 = vmatpush1.bf16.msra.mxu0 0
        %873 = vmatprep.subr.bf16.mxu0 0
        %874 = vmatpush1.bf16.msra.mxu0 0
        %875 = vmatprep.subr.bf16.mxu0 0
        %876 = vmatpush1.bf16.msra.mxu0 0
        %877 = vmatprep.subr.bf16.mxu0 0
        %878 = vmatpush1.bf16.msra.mxu0 0
        %879 = vmatprep.subr.bf16.mxu0 %v742
        %880 = vmatpush1.bf16.msra.mxu0 %v739
        %881 = vmatprep.subr.bf16.mxu0 %v703
        %882 = vmatpush1.bf16.msra.mxu0 %v702
        %883 = vmatprep.subr.bf16.mxu0 0
        %884 = vmatpush2.bf16.msra.mxu0 0
        %885 = vmatprep.subr.bf16.mxu0 0
        %886 = vmatpush2.bf16.msra.mxu0 0
        %887 = vmatprep.subr.bf16.mxu0 0
        %888 = vmatpush2.bf16.msra.mxu0 0
        %889 = vmatprep.subr.bf16.mxu0 0
        %890 = vmatpush2.bf16.msra.mxu0 0
        %891 = vmatprep.subr.bf16.mxu0 0
        %892 = vmatpush2.bf16.msra.mxu0 0
        %893 = vmatprep.subr.bf16.mxu0 0
        %894 = vmatpush2.bf16.msra.mxu0 0
        %895 = vmatprep.subr.bf16.mxu0 0
        %896 = vmatpush2.bf16.msra.mxu0 0
        %897 = vmatprep.subr.bf16.mxu0 0
        %898 = vmatpush2.bf16.msra.mxu0 0
        %899 = vmatprep.mubr.bf16.mxu0 0
        %900 = vmatmul.mubr.bf16.gmra.mxu0 %v437
        %v901 = vpop.f32.mrf.mxu0
        %v902 = vadd.f32 0.0, %v901
        %v903 = vpop.f32.mrf.mxu0
        %v904 = vadd.f32 0.0, %v903
        %v905 = vpop.f32.mrf.mxu0
        %v906 = vpop.f32.mrf.mxu0
        %907 = vdwg.mxu0
        %v908 = vmax.f32 %v502, %v779
        %v909 = vmax.f32 %v504, %v781
        %v910 = vmax.f32 %v543, %v820
        %v911 = vmax.f32 %v545, %v822
        %v912 = vmax.f32 %v584, %v861
        %v913 = vmax.f32 %v586, %v863
        %v914 = vmax.f32 %v625, %v902
        %v915 = vmax.f32 %v627, %v904
        %s916 = scalar_lea.vmem %s309, 256 [#allocation2]
        %v917 = vld [vmem:[%s916] sm:$0xff]
        %v918 = vld [vmem:[%s916 + $0x8] sm:$0xff]
        %v919 = vld [vmem:[%s916 + $0x10] sm:$0xff]
        %v920 = vld [vmem:[%s916 + $0x18] sm:$0xff]
        %v921 = vld [vmem:[%s916 + $0x20] sm:$0xff]
        %v922 = vld [vmem:[%s916 + $0x28] sm:$0xff]
        %v923 = vld [vmem:[%s916 + $0x30] sm:$0xff]
        %v924 = vld [vmem:[%s916 + $0x38] sm:$0xff]
        %v925 = vld [vmem:[%s916 + $0x40] sm:$0xff]
        %v926 = vld [vmem:[%s916 + $0x48] sm:$0xff]
        %v927 = vld [vmem:[%s916 + $0x50] sm:$0xff]
        %v928 = vld [vmem:[%s916 + $0x58] sm:$0xff]
        %v929 = vld [vmem:[%s916 + $0x60] sm:$0x33]
        %v930 = vld [vmem:[%s916 + $0x68] sm:$0x33]
        %v931 = vld [vmem:[%s916 + $0x70] sm:$0x33]
        %v932 = vld [vmem:[%s916 + $0x78] sm:$0x33]
        %v949 = vunpack.c.l.b16 %v917
        %v950 = vunpack.c.h.b16 %v917
        %v951 = vunpack.c.l.b16 %v918
        %v952 = vunpack.c.h.b16 %v918
        %v953 = vunpack.c.l.b16 %v919
        %v954 = vunpack.c.h.b16 %v919
        %v955 = vunpack.c.l.b16 %v920
        %v956 = vunpack.c.h.b16 %v920
        %v957 = vunpack.c.l.b16 %v921
        %v958 = vunpack.c.h.b16 %v921
        %v959 = vunpack.c.l.b16 %v922
        %v960 = vunpack.c.h.b16 %v922
        %v961 = vunpack.c.l.b16 %v923
        %v962 = vunpack.c.h.b16 %v923
        %v963 = vunpack.c.l.b16 %v924
        %v964 = vunpack.c.h.b16 %v924
        %v965 = vunpack.c.l.b16 %v925
        %v966 = vunpack.c.h.b16 %v925
        %v967 = vunpack.c.l.b16 %v926
        %v968 = vunpack.c.h.b16 %v926
        %v969 = vunpack.c.l.b16 %v927
        %v970 = vunpack.c.h.b16 %v927
        %v971 = vunpack.c.l.b16 %v928
        %v972 = vunpack.c.h.b16 %v928
        %v973 = vunpack.c.l.b16 %v929
        %v974 = vunpack.c.h.b16 %v929
        %v975 = vunpack.c.l.b16 %v930
        %v976 = vunpack.c.h.b16 %v930
        %v977 = vunpack.c.l.b16 %v931
        %v978 = vunpack.c.h.b16 %v931
        %v979 = vunpack.c.l.b16 %v932
        %v980 = vunpack.c.h.b16 %v932
        %v981 = vpack.c.b16 %v957, %v949
        %v982 = vpack.c.b16 %v958, %v950
        %v983 = vpack.c.b16 %v959, %v951
        %v984 = vpack.c.b16 %v960, %v952
        %v985 = vpack.c.b16 %v961, %v953
        %v986 = vpack.c.b16 %v962, %v954
        %v987 = vpack.c.b16 %v963, %v955
        %v988 = vpack.c.b16 %v964, %v956
        %v989 = vpack.c.b16 %v973, %v965
        %v990 = vpack.c.b16 %v974, %v966
        %v991 = vpack.c.b16 %v975, %v967
        %v992 = vpack.c.b16 %v976, %v968
        %v993 = vpack.c.b16 %v977, %v969
        %v994 = vpack.c.b16 %v978, %v970
        %v995 = vpack.c.b16 %v979, %v971
        %v996 = vpack.c.b16 %v980, %v972
        %v1006 = vand.u32 %v989, %v442
        %v1009 = vand.u32 %v990, %v442
        %v1012 = vand.u32 %v991, %v442
        %v1015 = vand.u32 %v992, %v442
        %v1018 = vand.u32 %v993, %v442
        %v1021 = vand.u32 %v994, %v442
        %v1024 = vand.u32 %v995, %v442
        %v1027 = vand.u32 %v996, %v442
        %1029 = vmatprep.subr.bf16.mxu0 0
        %1030 = vmatpush1.bf16.msra.mxu0 0
        %1031 = vmatprep.subr.bf16.mxu0 0
        %1032 = vmatpush1.bf16.msra.mxu0 0
        %1033 = vmatprep.subr.bf16.mxu0 0
        %1034 = vmatpush1.bf16.msra.mxu0 0
        %1035 = vmatprep.subr.bf16.mxu0 0
        %1036 = vmatpush1.bf16.msra.mxu0 0
        %1037 = vmatprep.subr.bf16.mxu0 0
        %1038 = vmatpush1.bf16.msra.mxu0 0
        %1039 = vmatprep.subr.bf16.mxu0 0
        %1040 = vmatpush1.bf16.msra.mxu0 0
        %1041 = vmatprep.subr.bf16.mxu0 %v1009
        %1042 = vmatpush1.bf16.msra.mxu0 %v1006
        %1043 = vmatprep.subr.bf16.mxu0 %v982
        %1044 = vmatpush1.bf16.msra.mxu0 %v981
        %1045 = vmatprep.subr.bf16.mxu0 0
        %1046 = vmatpush2.bf16.msra.mxu0 0
        %1047 = vmatprep.subr.bf16.mxu0 0
        %1048 = vmatpush2.bf16.msra.mxu0 0
        %1049 = vmatprep.subr.bf16.mxu0 0
        %1050 = vmatpush2.bf16.msra.mxu0 0
        %1051 = vmatprep.subr.bf16.mxu0 0
        %1052 = vmatpush2.bf16.msra.mxu0 0
        %1053 = vmatprep.subr.bf16.mxu0 0
        %1054 = vmatpush2.bf16.msra.mxu0 0
        %1055 = vmatprep.subr.bf16.mxu0 0
        %1056 = vmatpush2.bf16.msra.mxu0 0
        %1057 = vmatprep.subr.bf16.mxu0 0
        %1058 = vmatpush2.bf16.msra.mxu0 0
        %1059 = vmatprep.subr.bf16.mxu0 0
        %1060 = vmatpush2.bf16.msra.mxu0 0
        %1061 = vmatprep.mubr.bf16.mxu0 0
        %1062 = vmatmul.mubr.bf16.gmra.mxu0 %v437
        %v1063 = vpop.f32.mrf.mxu0
        %v1064 = vadd.f32 0.0, %v1063
        %v1065 = vpop.f32.mrf.mxu0
        %v1066 = vadd.f32 0.0, %v1065
        %v1067 = vpop.f32.mrf.mxu0
        %v1068 = vpop.f32.mrf.mxu0
        %1069 = vdwg.mxu0
        %1070 = vmatprep.subr.bf16.mxu0 0
        %1071 = vmatpush1.bf16.msra.mxu0 0
        %1072 = vmatprep.subr.bf16.mxu0 0
        %1073 = vmatpush1.bf16.msra.mxu0 0
        %1074 = vmatprep.subr.bf16.mxu0 0
        %1075 = vmatpush1.bf16.msra.mxu0 0
        %1076 = vmatprep.subr.bf16.mxu0 0
        %1077 = vmatpush1.bf16.msra.mxu0 0
        %1078 = vmatprep.subr.bf16.mxu0 0
        %1079 = vmatpush1.bf16.msra.mxu0 0
        %1080 = vmatprep.subr.bf16.mxu0 0
        %1081 = vmatpush1.bf16.msra.mxu0 0
        %1082 = vmatprep.subr.bf16.mxu0 %v1015
        %1083 = vmatpush1.bf16.msra.mxu0 %v1012
        %1084 = vmatprep.subr.bf16.mxu0 %v984
        %1085 = vmatpush1.bf16.msra.mxu0 %v983
        %1086 = vmatprep.subr.bf16.mxu0 0
        %1087 = vmatpush2.bf16.msra.mxu0 0
        %1088 = vmatprep.subr.bf16.mxu0 0
        %1089 = vmatpush2.bf16.msra.mxu0 0
        %1090 = vmatprep.subr.bf16.mxu0 0
        %1091 = vmatpush2.bf16.msra.mxu0 0
        %1092 = vmatprep.subr.bf16.mxu0 0
        %1093 = vmatpush2.bf16.msra.mxu0 0
        %1094 = vmatprep.subr.bf16.mxu0 0
        %1095 = vmatpush2.bf16.msra.mxu0 0
        %1096 = vmatprep.subr.bf16.mxu0 0
        %1097 = vmatpush2.bf16.msra.mxu0 0
        %1098 = vmatprep.subr.bf16.mxu0 0
        %1099 = vmatpush2.bf16.msra.mxu0 0
        %1100 = vmatprep.subr.bf16.mxu0 0
        %1101 = vmatpush2.bf16.msra.mxu0 0
        %1102 = vmatprep.mubr.bf16.mxu0 0
        %1103 = vmatmul.mubr.bf16.gmra.mxu0 %v437
        %v1104 = vpop.f32.mrf.mxu0
        %v1105 = vadd.f32 0.0, %v1104
        %v1106 = vpop.f32.mrf.mxu0
        %v1107 = vadd.f32 0.0, %v1106
        %v1108 = vpop.f32.mrf.mxu0
        %v1109 = vpop.f32.mrf.mxu0
        %1110 = vdwg.mxu0
        %1111 = vmatprep.subr.bf16.mxu0 0
        %1112 = vmatpush1.bf16.msra.mxu0 0
        %1113 = vmatprep.subr.bf16.mxu0 0
        %1114 = vmatpush1.bf16.msra.mxu0 0
        %1115 = vmatprep.subr.bf16.mxu0 0
        %1116 = vmatpush1.bf16.msra.mxu0 0
        %1117 = vmatprep.subr.bf16.mxu0 0
        %1118 = vmatpush1.bf16.msra.mxu0 0
        %1119 = vmatprep.subr.bf16.mxu0 0
        %1120 = vmatpush1.bf16.msra.mxu0 0
        %1121 = vmatprep.subr.bf16.mxu0 0
        %1122 = vmatpush1.bf16.msra.mxu0 0
        %1123 = vmatprep.subr.bf16.mxu0 %v1021
        %1124 = vmatpush1.bf16.msra.mxu0 %v1018
        %1125 = vmatprep.subr.bf16.mxu0 %v986
        %1126 = vmatpush1.bf16.msra.mxu0 %v985
        %1127 = vmatprep.subr.bf16.mxu0 0
        %1128 = vmatpush2.bf16.msra.mxu0 0
        %1129 = vmatprep.subr.bf16.mxu0 0
        %1130 = vmatpush2.bf16.msra.mxu0 0
        %1131 = vmatprep.subr.bf16.mxu0 0
        %1132 = vmatpush2.bf16.msra.mxu0 0
        %1133 = vmatprep.subr.bf16.mxu0 0
        %1134 = vmatpush2.bf16.msra.mxu0 0
        %1135 = vmatprep.subr.bf16.mxu0 0
        %1136 = vmatpush2.bf16.msra.mxu0 0
        %1137 = vmatprep.subr.bf16.mxu0 0
        %1138 = vmatpush2.bf16.msra.mxu0 0
        %1139 = vmatprep.subr.bf16.mxu0 0
        %1140 = vmatpush2.bf16.msra.mxu0 0
        %1141 = vmatprep.subr.bf16.mxu0 0
        %1142 = vmatpush2.bf16.msra.mxu0 0
        %1143 = vmatprep.mubr.bf16.mxu0 0
        %1144 = vmatmul.mubr.bf16.gmra.mxu0 %v437
        %v1145 = vpop.f32.mrf.mxu0
        %v1146 = vadd.f32 0.0, %v1145
        %v1147 = vpop.f32.mrf.mxu0
        %v1148 = vadd.f32 0.0, %v1147
        %v1149 = vpop.f32.mrf.mxu0
        %v1150 = vpop.f32.mrf.mxu0
        %1151 = vdwg.mxu0
        %1152 = vmatprep.subr.bf16.mxu0 0
        %1153 = vmatpush1.bf16.msra.mxu0 0
        %1154 = vmatprep.subr.bf16.mxu0 0
        %1155 = vmatpush1.bf16.msra.mxu0 0
        %1156 = vmatprep.subr.bf16.mxu0 0
        %1157 = vmatpush1.bf16.msra.mxu0 0
        %1158 = vmatprep.subr.bf16.mxu0 0
        %1159 = vmatpush1.bf16.msra.mxu0 0
        %1160 = vmatprep.subr.bf16.mxu0 0
        %1161 = vmatpush1.bf16.msra.mxu0 0
        %1162 = vmatprep.subr.bf16.mxu0 0
        %1163 = vmatpush1.bf16.msra.mxu0 0
        %1164 = vmatprep.subr.bf16.mxu0 %v1027
        %1165 = vmatpush1.bf16.msra.mxu0 %v1024
        %1166 = vmatprep.subr.bf16.mxu0 %v988
        %1167 = vmatpush1.bf16.msra.mxu0 %v987
        %1168 = vmatprep.subr.bf16.mxu0 0
        %1169 = vmatpush2.bf16.msra.mxu0 0
        %1170 = vmatprep.subr.bf16.mxu0 0
        %1171 = vmatpush2.bf16.msra.mxu0 0
        %1172 = vmatprep.subr.bf16.mxu0 0
        %1173 = vmatpush2.bf16.msra.mxu0 0
        %1174 = vmatprep.subr.bf16.mxu0 0
        %1175 = vmatpush2.bf16.msra.mxu0 0
        %1176 = vmatprep.subr.bf16.mxu0 0
        %1177 = vmatpush2.bf16.msra.mxu0 0
        %1178 = vmatprep.subr.bf16.mxu0 0
        %1179 = vmatpush2.bf16.msra.mxu0 0
        %1180 = vmatprep.subr.bf16.mxu0 0
        %1181 = vmatpush2.bf16.msra.mxu0 0
        %1182 = vmatprep.subr.bf16.mxu0 0
        %1183 = vmatpush2.bf16.msra.mxu0 0
        %1184 = vmatprep.mubr.bf16.mxu0 0
        %1185 = vmatmul.mubr.bf16.gmra.mxu0 %v437
        %v1186 = vpop.f32.mrf.mxu0
        %v1187 = vadd.f32 0.0, %v1186
        %v1188 = vpop.f32.mrf.mxu0
        %v1189 = vadd.f32 0.0, %v1188
        %v1190 = vpop.f32.mrf.mxu0
        %v1191 = vpop.f32.mrf.mxu0
        %1192 = vdwg.mxu0
        %v1193 = vmax.f32 %v908, %v1064
        %v1194 = vmax.f32 %v909, %v1066
        %v1195 = vmax.f32 %v910, %v1105
        %v1196 = vmax.f32 %v911, %v1107
        %v1197 = vmax.f32 %v912, %v1146
        %v1198 = vmax.f32 %v913, %v1148
        %v1199 = vmax.f32 %v914, %v1187
        %v1200 = vmax.f32 %v915, %v1189
        %s1201 = scalar_lea.vmem %s309, 384 [#allocation2]
        %v1202 = vld [vmem:[%s1201] sm:$0xff]
        %v1203 = vld [vmem:[%s1201 + $0x8] sm:$0xff]
        %v1204 = vld [vmem:[%s1201 + $0x10] sm:$0xff]
        %v1205 = vld [vmem:[%s1201 + $0x18] sm:$0xff]
        %v1206 = vld [vmem:[%s1201 + $0x20] sm:$0xff]
        %v1207 = vld [vmem:[%s1201 + $0x28] sm:$0xff]
        %v1208 = vld [vmem:[%s1201 + $0x30] sm:$0xff]
        %v1209 = vld [vmem:[%s1201 + $0x38] sm:$0xff]
        %v1210 = vld [vmem:[%s1201 + $0x40] sm:$0xff]
        %v1211 = vld [vmem:[%s1201 + $0x48] sm:$0xff]
        %v1212 = vld [vmem:[%s1201 + $0x50] sm:$0xff]
        %v1213 = vld [vmem:[%s1201 + $0x58] sm:$0xff]
        %v1214 = vld [vmem:[%s1201 + $0x60] sm:$0x33]
        %v1215 = vld [vmem:[%s1201 + $0x68] sm:$0x33]
        %v1216 = vld [vmem:[%s1201 + $0x70] sm:$0x33]
        %v1217 = vld [vmem:[%s1201 + $0x78] sm:$0x33]
        %v1234 = vunpack.c.l.b16 %v1202
        %v1235 = vunpack.c.h.b16 %v1202
        %v1236 = vunpack.c.l.b16 %v1203
        %v1237 = vunpack.c.h.b16 %v1203
        %v1238 = vunpack.c.l.b16 %v1204
        %v1239 = vunpack.c.h.b16 %v1204
        %v1240 = vunpack.c.l.b16 %v1205
        %v1241 = vunpack.c.h.b16 %v1205
        %v1242 = vunpack.c.l.b16 %v1206
        %v1243 = vunpack.c.h.b16 %v1206
        %v1244 = vunpack.c.l.b16 %v1207
        %v1245 = vunpack.c.h.b16 %v1207
        %v1246 = vunpack.c.l.b16 %v1208
        %v1247 = vunpack.c.h.b16 %v1208
        %v1248 = vunpack.c.l.b16 %v1209
        %v1249 = vunpack.c.h.b16 %v1209
        %v1250 = vunpack.c.l.b16 %v1210
        %v1251 = vunpack.c.h.b16 %v1210
        %v1252 = vunpack.c.l.b16 %v1211
        %v1253 = vunpack.c.h.b16 %v1211
        %v1254 = vunpack.c.l.b16 %v1212
        %v1255 = vunpack.c.h.b16 %v1212
        %v1256 = vunpack.c.l.b16 %v1213
        %v1257 = vunpack.c.h.b16 %v1213
        %v1258 = vunpack.c.l.b16 %v1214
        %v1259 = vunpack.c.h.b16 %v1214
        %v1260 = vunpack.c.l.b16 %v1215
        %v1261 = vunpack.c.h.b16 %v1215
        %v1262 = vunpack.c.l.b16 %v1216
        %v1263 = vunpack.c.h.b16 %v1216
        %v1264 = vunpack.c.l.b16 %v1217
        %v1265 = vunpack.c.h.b16 %v1217
        %v1266 = vpack.c.b16 %v1242, %v1234
        %v1267 = vpack.c.b16 %v1243, %v1235
        %v1268 = vpack.c.b16 %v1244, %v1236
        %v1269 = vpack.c.b16 %v1245, %v1237
        %v1270 = vpack.c.b16 %v1246, %v1238
        %v1271 = vpack.c.b16 %v1247, %v1239
        %v1272 = vpack.c.b16 %v1248, %v1240
        %v1273 = vpack.c.b16 %v1249, %v1241
        %v1274 = vpack.c.b16 %v1258, %v1250
        %v1275 = vpack.c.b16 %v1259, %v1251
        %v1276 = vpack.c.b16 %v1260, %v1252
        %v1277 = vpack.c.b16 %v1261, %v1253
        %v1278 = vpack.c.b16 %v1262, %v1254
        %v1279 = vpack.c.b16 %v1263, %v1255
        %v1280 = vpack.c.b16 %v1264, %v1256
        %v1281 = vpack.c.b16 %v1265, %v1257
        %v1291 = vand.u32 %v1274, %v442
        %v1294 = vand.u32 %v1275, %v442
        %v1297 = vand.u32 %v1276, %v442
        %v1300 = vand.u32 %v1277, %v442
        %v1303 = vand.u32 %v1278, %v442
        %v1306 = vand.u32 %v1279, %v442
        %v1309 = vand.u32 %v1280, %v442
        %v1312 = vand.u32 %v1281, %v442
        %1314 = vmatprep.subr.bf16.mxu0 0
        %1315 = vmatpush1.bf16.msra.mxu0 0
        %1316 = vmatprep.subr.bf16.mxu0 0
        %1317 = vmatpush1.bf16.msra.mxu0 0
        %1318 = vmatprep.subr.bf16.mxu0 0
        %1319 = vmatpush1.bf16.msra.mxu0 0
        %1320 = vmatprep.subr.bf16.mxu0 0
        %1321 = vmatpush1.bf16.msra.mxu0 0
        %1322 = vmatprep.subr.bf16.mxu0 0
        %1323 = vmatpush1.bf16.msra.mxu0 0
        %1324 = vmatprep.subr.bf16.mxu0 0
        %1325 = vmatpush1.bf16.msra.mxu0 0
        %1326 = vmatprep.subr.bf16.mxu0 %v1294
        %1327 = vmatpush1.bf16.msra.mxu0 %v1291
        %1328 = vmatprep.subr.bf16.mxu0 %v1267
        %1329 = vmatpush1.bf16.msra.mxu0 %v1266
        %1330 = vmatprep.subr.bf16.mxu0 0
        %1331 = vmatpush2.bf16.msra.mxu0 0
        %1332 = vmatprep.subr.bf16.mxu0 0
        %1333 = vmatpush2.bf16.msra.mxu0 0
        %1334 = vmatprep.subr.bf16.mxu0 0
        %1335 = vmatpush2.bf16.msra.mxu0 0
        %1336 = vmatprep.subr.bf16.mxu0 0
        %1337 = vmatpush2.bf16.msra.mxu0 0
        %1338 = vmatprep.subr.bf16.mxu0 0
        %1339 = vmatpush2.bf16.msra.mxu0 0
        %1340 = vmatprep.subr.bf16.mxu0 0
        %1341 = vmatpush2.bf16.msra.mxu0 0
        %1342 = vmatprep.subr.bf16.mxu0 0
        %1343 = vmatpush2.bf16.msra.mxu0 0
        %1344 = vmatprep.subr.bf16.mxu0 0
        %1345 = vmatpush2.bf16.msra.mxu0 0
        %1346 = vmatprep.mubr.bf16.mxu0 0
        %1347 = vmatmul.mubr.bf16.gmra.mxu0 %v437
        %v1348 = vpop.f32.mrf.mxu0
        %v1349 = vadd.f32 0.0, %v1348
        %v1350 = vpop.f32.mrf.mxu0
        %v1351 = vadd.f32 0.0, %v1350
        %v1352 = vpop.f32.mrf.mxu0
        %v1353 = vpop.f32.mrf.mxu0
        %1354 = vdwg.mxu0
        %1355 = vmatprep.subr.bf16.mxu0 0
        %1356 = vmatpush1.bf16.msra.mxu0 0
        %1357 = vmatprep.subr.bf16.mxu0 0
        %1358 = vmatpush1.bf16.msra.mxu0 0
        %1359 = vmatprep.subr.bf16.mxu0 0
        %1360 = vmatpush1.bf16.msra.mxu0 0
        %1361 = vmatprep.subr.bf16.mxu0 0
        %1362 = vmatpush1.bf16.msra.mxu0 0
        %1363 = vmatprep.subr.bf16.mxu0 0
        %1364 = vmatpush1.bf16.msra.mxu0 0
        %1365 = vmatprep.subr.bf16.mxu0 0
        %1366 = vmatpush1.bf16.msra.mxu0 0
        %1367 = vmatprep.subr.bf16.mxu0 %v1300
        %1368 = vmatpush1.bf16.msra.mxu0 %v1297
        %1369 = vmatprep.subr.bf16.mxu0 %v1269
        %1370 = vmatpush1.bf16.msra.mxu0 %v1268
        %1371 = vmatprep.subr.bf16.mxu0 0
        %1372 = vmatpush2.bf16.msra.mxu0 0
        %1373 = vmatprep.subr.bf16.mxu0 0
        %1374 = vmatpush2.bf16.msra.mxu0 0
        %1375 = vmatprep.subr.bf16.mxu0 0
        %1376 = vmatpush2.bf16.msra.mxu0 0
        %1377 = vmatprep.subr.bf16.mxu0 0
        %1378 = vmatpush2.bf16.msra.mxu0 0
        %1379 = vmatprep.subr.bf16.mxu0 0
        %1380 = vmatpush2.bf16.msra.mxu0 0
        %1381 = vmatprep.subr.bf16.mxu0 0
        %1382 = vmatpush2.bf16.msra.mxu0 0
        %1383 = vmatprep.subr.bf16.mxu0 0
        %1384 = vmatpush2.bf16.msra.mxu0 0
        %1385 = vmatprep.subr.bf16.mxu0 0
        %1386 = vmatpush2.bf16.msra.mxu0 0
        %1387 = vmatprep.mubr.bf16.mxu0 0
        %1388 = vmatmul.mubr.bf16.gmra.mxu0 %v437
        %v1389 = vpop.f32.mrf.mxu0
        %v1390 = vadd.f32 0.0, %v1389
        %v1391 = vpop.f32.mrf.mxu0
        %v1392 = vadd.f32 0.0, %v1391
        %v1393 = vpop.f32.mrf.mxu0
        %v1394 = vpop.f32.mrf.mxu0
        %1395 = vdwg.mxu0
        %1396 = vmatprep.subr.bf16.mxu0 0
        %1397 = vmatpush1.bf16.msra.mxu0 0
        %1398 = vmatprep.subr.bf16.mxu0 0
        %1399 = vmatpush1.bf16.msra.mxu0 0
        %1400 = vmatprep.subr.bf16.mxu0 0
        %1401 = vmatpush1.bf16.msra.mxu0 0
        %1402 = vmatprep.subr.bf16.mxu0 0
        %1403 = vmatpush1.bf16.msra.mxu0 0
        %1404 = vmatprep.subr.bf16.mxu0 0
        %1405 = vmatpush1.bf16.msra.mxu0 0
        %1406 = vmatprep.subr.bf16.mxu0 0
        %1407 = vmatpush1.bf16.msra.mxu0 0
        %1408 = vmatprep.subr.bf16.mxu0 %v1306
        %1409 = vmatpush1.bf16.msra.mxu0 %v1303
        %1410 = vmatprep.subr.bf16.mxu0 %v1271
        %1411 = vmatpush1.bf16.msra.mxu0 %v1270
        %1412 = vmatprep.subr.bf16.mxu0 0
        %1413 = vmatpush2.bf16.msra.mxu0 0
        %1414 = vmatprep.subr.bf16.mxu0 0
        %1415 = vmatpush2.bf16.msra.mxu0 0
        %1416 = vmatprep.subr.bf16.mxu0 0
        %1417 = vmatpush2.bf16.msra.mxu0 0
        %1418 = vmatprep.subr.bf16.mxu0 0
        %1419 = vmatpush2.bf16.msra.mxu0 0
        %1420 = vmatprep.subr.bf16.mxu0 0
        %1421 = vmatpush2.bf16.msra.mxu0 0
        %1422 = vmatprep.subr.bf16.mxu0 0
        %1423 = vmatpush2.bf16.msra.mxu0 0
        %1424 = vmatprep.subr.bf16.mxu0 0
        %1425 = vmatpush2.bf16.msra.mxu0 0
        %1426 = vmatprep.subr.bf16.mxu0 0
        %1427 = vmatpush2.bf16.msra.mxu0 0
        %1428 = vmatprep.mubr.bf16.mxu0 0
        %1429 = vmatmul.mubr.bf16.gmra.mxu0 %v437
        %v1430 = vpop.f32.mrf.mxu0
        %v1431 = vadd.f32 0.0, %v1430
        %v1432 = vpop.f32.mrf.mxu0
        %v1433 = vadd.f32 0.0, %v1432
        %v1434 = vpop.f32.mrf.mxu0
        %v1435 = vpop.f32.mrf.mxu0
        %1436 = vdwg.mxu0
        %1437 = vmatprep.subr.bf16.mxu0 0
        %1438 = vmatpush1.bf16.msra.mxu0 0
        %1439 = vmatprep.subr.bf16.mxu0 0
        %1440 = vmatpush1.bf16.msra.mxu0 0
        %1441 = vmatprep.subr.bf16.mxu0 0
        %1442 = vmatpush1.bf16.msra.mxu0 0
        %1443 = vmatprep.subr.bf16.mxu0 0
        %1444 = vmatpush1.bf16.msra.mxu0 0
        %1445 = vmatprep.subr.bf16.mxu0 0
        %1446 = vmatpush1.bf16.msra.mxu0 0
        %1447 = vmatprep.subr.bf16.mxu0 0
        %1448 = vmatpush1.bf16.msra.mxu0 0
        %1449 = vmatprep.subr.bf16.mxu0 %v1312
        %1450 = vmatpush1.bf16.msra.mxu0 %v1309
        %1451 = vmatprep.subr.bf16.mxu0 %v1273
        %1452 = vmatpush1.bf16.msra.mxu0 %v1272
        %1453 = vmatprep.subr.bf16.mxu0 0
        %1454 = vmatpush2.bf16.msra.mxu0 0
        %1455 = vmatprep.subr.bf16.mxu0 0
        %1456 = vmatpush2.bf16.msra.mxu0 0
        %1457 = vmatprep.subr.bf16.mxu0 0
        %1458 = vmatpush2.bf16.msra.mxu0 0
        %1459 = vmatprep.subr.bf16.mxu0 0
        %1460 = vmatpush2.bf16.msra.mxu0 0
        %1461 = vmatprep.subr.bf16.mxu0 0
        %1462 = vmatpush2.bf16.msra.mxu0 0
        %1463 = vmatprep.subr.bf16.mxu0 0
        %1464 = vmatpush2.bf16.msra.mxu0 0
        %1465 = vmatprep.subr.bf16.mxu0 0
        %1466 = vmatpush2.bf16.msra.mxu0 0
        %1467 = vmatprep.subr.bf16.mxu0 0
        %1468 = vmatpush2.bf16.msra.mxu0 0
        %1469 = vmatprep.mubr.bf16.mxu0 0
        %1470 = vmatmul.mubr.bf16.gmra.mxu0 %v437
        %v1471 = vpop.f32.mrf.mxu0
        %v1472 = vadd.f32 0.0, %v1471
        %v1473 = vpop.f32.mrf.mxu0
        %v1474 = vadd.f32 0.0, %v1473
        %v1475 = vpop.f32.mrf.mxu0
        %v1476 = vpop.f32.mrf.mxu0
        %1477 = vdwg.mxu0
        %v1478 = vmax.f32 %v1193, %v1349
        %v1479 = vmax.f32 %v1194, %v1351
        %v1480 = vmax.f32 %v1195, %v1390
        %v1481 = vmax.f32 %v1196, %v1392
        %v1482 = vmax.f32 %v1197, %v1431
        %v1483 = vmax.f32 %v1198, %v1433
        %v1484 = vmax.f32 %v1199, %v1472
        %v1485 = vmax.f32 %v1200, %v1474
        %v1486 = vld [vmem:[%s2] sm:$0x3f]
        %1488 = vset.pattern.permute.xlu0 0
        %1489 = vperm.xlu0 %1488, %v1486
        %v1490 = vpop.permute.xlu0 %1489
        %v1492 = vadd.f32 %v1478, %v1490
        %v1493 = vadd.f32 %v1479, %v1490
        %v1494 = vadd.f32 %v1480, %v1490
        %v1495 = vadd.f32 %v1481, %v1490
        %v1496 = vadd.f32 %v1482, %v1490
        %v1497 = vadd.f32 %v1483, %v1490
        %v1498 = vadd.f32 %v1484, %v1490
        %v1499 = vadd.f32 %v1485, %v1490
        %v1500 = vmax.f32 %v1492, 0.0
        %v1501 = vmax.f32 %v1493, 0.0
        %v1502 = vmax.f32 %v1494, 0.0
        %v1503 = vmax.f32 %v1495, 0.0
        %v1504 = vmax.f32 %v1496, 0.0
        %v1505 = vmax.f32 %v1497, 0.0
        %v1506 = vmax.f32 %v1498, 0.0
        %v1507 = vmax.f32 %v1499, 0.0
        %v1508 = vpack.c.bf16 %v1500, %v1500
        %v1509 = vpack.c.bf16 %v1501, %v1501
        %v1510 = vpack.c.bf16 %v1502, %v1502
        %v1511 = vpack.c.bf16 %v1503, %v1503
        %v1512 = vpack.c.bf16 %v1504, %v1504
        %v1513 = vpack.c.bf16 %v1505, %v1505
        %v1514 = vpack.c.bf16 %v1506, %v1506
        %v1515 = vpack.c.bf16 %v1507, %v1507
        %v1524 = vunpack.c.l.b16 %v1508
        %v1525 = vunpack.c.l.b16 %v1509
        %v1526 = vunpack.c.l.b16 %v1510
        %v1527 = vunpack.c.l.b16 %v1511
        %v1528 = vunpack.c.l.b16 %v1512
        %v1529 = vunpack.c.l.b16 %v1513
        %v1530 = vunpack.c.l.b16 %v1514
        %v1531 = vunpack.c.l.b16 %v1515
        %v1532 = vpack.c.b16 %v1525, %v1524
        %v1533 = vpack.c.b16 %v1527, %v1526
        %v1534 = vpack.c.b16 %v1529, %v1528
        %v1535 = vpack.c.b16 %v1531, %v1530
        %1540 = vst [vmem:[%s343] sm:$0x77] %v1532
        %1541 = vst [vmem:[%s343 + $0x8] sm:$0x77] %v1533
        %1542 = vst [vmem:[%s343 + $0x10] sm:$0x77] %v1534
        %1543 = vst [vmem:[%s343 + $0x18] sm:$0x77] %v1535
        %s1544 = smul.u32 8, %s19
        %p1545 = scmp.lt.s32.totalorder %s18, 1
        %s1546 = scalar_select %p1545, %s18, 1
        %p1547 = scmp.lt.s32.totalorder %s1544, 95
        %s1548 = scalar_select %p1547, %s1544, 95
        %s1549 = smul.addr %s1546, 96
        %s1550 = sadd.s32 %s1548, %s1549
        %s1551 = smul.addr %s1550, 4
        %s1552 = scalar_lea.vmem %s3, %s1551
        // Predicated region
        $region56: #{simple_cnn5_forward.4} parent=50 // pred_check
          %p1553 = pneg %p116
        $region57: #{simple_cnn5_forward.4} parent=50 // pred_check_branch
          %1555 = sbr.rel (%p1553) target = $region59
        $region58: #{simple_cnn5_forward.4} parent=50 // pred_region
          %s1556 = smul.u32 8, %s19
        $region59: #{simple_cnn5_forward.4} parent=50 // pred_fallthru
          _
      $region51: #{simple_cnn5_forward.4} parent=5 // pred_fallthru
        _
      %p1557 = scmp.le.s32.totalorder 2, %s9
      // Predicated region
      $region60: #{simple_cnn5_forward.4} parent=5 // pred_check
        %p1558 = pneg %p1557
      $region61: #{simple_cnn5_forward.4} parent=5 // pred_check_branch
        %1560 = sbr.rel (%p1558) target = $region63
      $region62: #{simple_cnn5_forward.4} parent=5 // pred_region
        %s1561 = ssub.s32 %s9, 2
        // Predicated region
        $region64: #{simple_cnn5_forward.4} parent=62 // pred_check
          %p1562 = pneg %p122
        $region65: #{simple_cnn5_forward.4} parent=62 // pred_check_branch
          %1564 = sbr.rel (%p1562) target = $region67
        $region66: #{simple_cnn5_forward.4} parent=62 // pred_region
          %s1565 = smul.u32 8, %s21
          %p1566 = scmp.lt.s32.totalorder %s20, 1
          %s1567 = scalar_select %p1566, %s20, 1
          %p1568 = scmp.lt.s32.totalorder %s1565, 95
          %s1569 = scalar_select %p1568, %s1565, 95
          %s1570 = smul.addr %s1567, 96
          %s1571 = sadd.s32 %s1569, %s1570
          %s1572 = smul.addr %s1571, 4
          %s1573 = scalar_lea.vmem %s3, %s1572
        $region67: #{simple_cnn5_forward.4} parent=62 // pred_fallthru
          _
      $region63: #{simple_cnn5_forward.4} parent=5 // pred_fallthru
        _
    $region6: #{simple_cnn5_forward.4} parent=1 // loop_footer
      %s13 = sadd.s32 1, %s9
    $region7: #{simple_cnn5_forward.4} parent=1 // loop_footer_branch
      %8 = sbr.rel target = $region3
    $region8: #{simple_cnn5_forward.4} parent=1 // loop_exit
      _

// kernel: simple_cnn5_forward.5
$region0: #{simple_cnn5_forward.5}
  #allocation0 [shape = 'u32[]', space=smem, size = 0x4, offset = 0x4, fixed_abs, tag = 'smem constant byte address 0x4 - core index']
  #allocation1 [shape = 'u32[144,128]{1,0:T(1,128)}', space=vmem, size = 0x12000, scoped, tag = 'internal scratch']
  %s0 = inlined_call_operand.vmem [shape: bf16[2,1,54,11264], index: 0, kind: input, shape index: {}]
  %s1 = inlined_call_operand.vmem [shape: bf16[12,54], index: 1, kind: input, shape index: {}]
  %s2 = inlined_call_operand.vmem [shape: f32[12,1], index: 2, kind: input, shape index: {}]
  %s3 = inlined_call_operand.vmem [shape: bf16[2,12,11264], index: 3, kind: output, shape index: {}]
  %s4 = sld [smem:[#allocation0]]
  $region87: #{simple_cnn5_forward.5} parent=0
    _
  %s6 = ssub.s32 1, %s4
  %s7 = scalar_select 0, %s6, %s4
  $region1: #{simple_cnn5_forward.5} parent=0
    #allocation2 [shape = 'u8[229376]{0}', space=vmem, size = 0x38000, scoped, tag = 'input window, operand 0']
    #allocation3 [shape = 'u8[65536]{0}', space=vmem, size = 0x10000, scoped, tag = 'output window, operand 0']
    loop: start=0, step=1, limit=24
    $region2: #{simple_cnn5_forward.5} parent=1 // loop_pre_header
      _
    $region3: #{simple_cnn5_forward.5} parent=1 // loop_header
      %s9 = sphi 0, %s13
      %p10 = scmp.ge.s32.totalorder %s9, 24
      %s16 = sphi 0, %s28
      %s17 = sphi 0, %s24
      %s18 = sphi 0, %s16
      %s19 = sphi 0, %s17
      %s20 = sphi 0, %s18
      %s21 = sphi 0, %s19
      %s33 = sphi 0, %s35
      %s36 = sphi 0, %s33
      %s37 = sphi 0, %s36
      %s53 = sphi 0, %s37
      %s57 = sphi 0, %s57
      %s59 = sphi 0, %s57
      %s60 = sphi 0, %s59
      %s74 = sphi 0, %s60
      %s78 = sphi 0, %s78
      %s80 = sphi 0, %s78
      %s81 = sphi 0, %s80
      %s95 = sphi 0, %s81
      %s103 = sphi 0, %s105
      %s106 = sphi 0, %s103
      %s107 = sphi 0, %s106
      %s123 = sphi 0, %s107
    $region4: #{simple_cnn5_forward.5} parent=1 // loop_header_branch
      %12 = sbr.rel (%p10) target = $region8
    $region5: #{simple_cnn5_forward.5} parent=1 // loop_body
      %s14 = ssub.s32 %s9, 1
      %s15 = ssub.s32 %s9, 2
      %s22 = sadd.s32 1, %s17
      %p23 = scmp.ge.s32.totalorder %s22, 11
      %s24 = scalar_select %p23, 0, %s22
      %s25 = sadd.s32 1, %s16
      %s26 = scalar_select %p23, %s25, %s16
      %p27 = scmp.ge.s32.totalorder %s26, 2
      %s28 = scalar_select %p27, 0, %s26
      %s29 = ssub.s32 %s16, %s28
      %s30 = ssub.s32 %s17, %s24
      %s31 = sor.u32 %s29, %s30
      %p32 = scmp.eq.s32.totalorder %s31, 0
      %s34 = sadd.s32 %s33, 1
      %s35 = scalar_select %p32, %s33, %s34
      %p38 = pneg %p32
      %p39 = scmp.eq.s32.totalorder %s9, 21
      %p40 = por %p38, %p39
      %p41 = scmp.ne.s32.totalorder %s33, %s36
      %p42 = scmp.eq.s32.totalorder %s9, 0
      %p43 = por %p41, %p42
      %p44 = scmp.ne.s32.totalorder %s33, %s36
      %p45 = scmp.eq.s32.totalorder %s14, 21
      %p46 = por %p44, %p45
      %p47 = scmp.ne.s32.totalorder %s36, %s37
      %p48 = scmp.eq.s32.totalorder %s14, 0
      %p49 = por %p47, %p48
      %p50 = scmp.ne.s32.totalorder %s36, %s37
      %p51 = scmp.eq.s32.totalorder %s15, 21
      %p52 = por %p50, %p51
      %p54 = scmp.ne.s32.totalorder %s37, %s53
      %p55 = scmp.eq.s32.totalorder %s15, 0
      %p56 = por %p54, %p55
      %s58 = sadd.s32 %s57, 1
      %p61 = scmp.eq.s32.totalorder %s9, 21
      %p62 = scmp.ne.s32.totalorder %s57, %s59
      %p63 = scmp.eq.s32.totalorder %s9, 0
      %p64 = por %p62, %p63
      %p65 = scmp.ne.s32.totalorder %s57, %s59
      %p66 = scmp.eq.s32.totalorder %s14, 21
      %p67 = por %p65, %p66
      %p68 = scmp.ne.s32.totalorder %s59, %s60
      %p69 = scmp.eq.s32.totalorder %s14, 0
      %p70 = por %p68, %p69
      %p71 = scmp.ne.s32.totalorder %s59, %s60
      %p72 = scmp.eq.s32.totalorder %s15, 21
      %p73 = por %p71, %p72
      %p75 = scmp.ne.s32.totalorder %s60, %s74
      %p76 = scmp.eq.s32.totalorder %s15, 0
      %p77 = por %p75, %p76
      %s79 = sadd.s32 %s78, 1
      %p82 = scmp.eq.s32.totalorder %s9, 21
      %p83 = scmp.ne.s32.totalorder %s78, %s80
      %p84 = scmp.eq.s32.totalorder %s9, 0
      %p85 = por %p83, %p84
      %p86 = scmp.ne.s32.totalorder %s78, %s80
      %p87 = scmp.eq.s32.totalorder %s14, 21
      %p88 = por %p86, %p87
      %p89 = scmp.ne.s32.totalorder %s80, %s81
      %p90 = scmp.eq.s32.totalorder %s14, 0
      %p91 = por %p89, %p90
      %p92 = scmp.ne.s32.totalorder %s80, %s81
      %p93 = scmp.eq.s32.totalorder %s15, 21
      %p94 = por %p92, %p93
      %p96 = scmp.ne.s32.totalorder %s81, %s95
      %p97 = scmp.eq.s32.totalorder %s15, 0
      %p98 = por %p96, %p97
      %s99 = ssub.s32 %s16, %s28
      %s100 = ssub.s32 %s17, %s24
      %s101 = sor.u32 %s99, %s100
      %p102 = scmp.eq.s32.totalorder %s101, 0
      %s104 = sadd.s32 %s103, 1
      %s105 = scalar_select %p102, %s103, %s104
      %p108 = pneg %p102
      %p109 = scmp.eq.s32.totalorder %s9, 21
      %p110 = por %p108, %p109
      %p111 = scmp.ne.s32.totalorder %s103, %s106
      %p112 = scmp.eq.s32.totalorder %s9, 0
      %p113 = por %p111, %p112
      %p114 = scmp.ne.s32.totalorder %s103, %s106
      %p115 = scmp.eq.s32.totalorder %s14, 21
      %p116 = por %p114, %p115
      %p117 = scmp.ne.s32.totalorder %s106, %s107
      %p118 = scmp.eq.s32.totalorder %s14, 0
      %p119 = por %p117, %p118
      %p120 = scmp.ne.s32.totalorder %s106, %s107
      %p121 = scmp.eq.s32.totalorder %s15, 21
      %p122 = por %p120, %p121
      %p124 = scmp.ne.s32.totalorder %s107, %s123
      %p125 = scmp.eq.s32.totalorder %s15, 0
      %p126 = por %p124, %p125
      %p127 = scmp.le.s32.totalorder 1, %s9
      %p128 = scmp.lt.s32.totalorder %s9, 23
      %p129 = pnand %p127, %p128
      %p130 = pneg %p129
      // Predicated region
      $region9: #{simple_cnn5_forward.5} parent=5 // pred_check
        _
      $region10: #{simple_cnn5_forward.5} parent=5 // pred_check_branch
        %132 = sbr.rel (%p129) target = $region12
      $region11: #{simple_cnn5_forward.5} parent=5 // pred_region
        %s133 = ssub.s32 %s9, 1
        // Predicated region
        $region13: #{simple_cnn5_forward.5} parent=11 // pred_check
          %p134 = pneg %p70
        $region14: #{simple_cnn5_forward.5} parent=11 // pred_check_branch
          %136 = sbr.rel (%p134) target = $region16
        $region15: #{simple_cnn5_forward.5} parent=11 // pred_region
          _
        $region16: #{simple_cnn5_forward.5} parent=11 // pred_fallthru
          _
        // Predicated region
        $region17: #{simple_cnn5_forward.5} parent=11 // pred_check
          %p137 = pneg %p91
        $region18: #{simple_cnn5_forward.5} parent=11 // pred_check_branch
          %139 = sbr.rel (%p137) target = $region20
        $region19: #{simple_cnn5_forward.5} parent=11 // pred_region
          _
        $region20: #{simple_cnn5_forward.5} parent=11 // pred_fallthru
          _
      $region12: #{simple_cnn5_forward.5} parent=5 // pred_fallthru
        _
      %p140 = scmp.lt.s32.totalorder %s9, 22
      // Predicated region
      $region21: #{simple_cnn5_forward.5} parent=5 // pred_check
        %p141 = pneg %p140
      $region22: #{simple_cnn5_forward.5} parent=5 // pred_check_branch
        %143 = sbr.rel (%p141) target = $region24
      $region23: #{simple_cnn5_forward.5} parent=5 // pred_region
        // Predicated region
        $region25: #{simple_cnn5_forward.5} parent=23 // pred_check
          %p144 = pneg %p43
        $region26: #{simple_cnn5_forward.5} parent=23 // pred_check_branch
          %146 = sbr.rel (%p144) target = $region28
        $region27: #{simple_cnn5_forward.5} parent=23 // pred_region
          %s147 = sand.u32 %s33, 1
          %s148 = sand.u32 %s33, 1
          %s149 = smul.addr %s148, 224
          %s150 = scalar_lea.vmem [#allocation2], %s149
          %s151 = smul.u32 8, %s17
          %s152 = smul.addr %s16, 616
          %s153 = sadd.s32 %s151, %s152
          %s154 = smul.addr %s153, 4
          %s155 = scalar_lea.vmem %s0, %s154
          // Predicated region
          $region29: #{simple_cnn5_forward.5} parent=27 // pred_check
            _
          $region30: #{simple_cnn5_forward.5} parent=27 // pred_check_branch
            %157 = sbr.rel (0) target = $region32
          $region31: #{simple_cnn5_forward.5} parent=27 // pred_region
            // Predicated region
            $region33: #{simple_cnn5_forward.5} parent=31 // pred_check
              _
            $region34: #{simple_cnn5_forward.5} parent=31 // pred_check_branch
              %159 = sbr.rel (0) target = $region36
            $region35: #{simple_cnn5_forward.5} parent=31 // pred_region
              loop: start=0, step=1, limit=1
              $region37: #{simple_cnn5_forward.5} parent=35 // loop_pre_header
                _
              $region38: #{simple_cnn5_forward.5} parent=35 // loop_header
                %s161 = sphi 0, %s165
                %p162 = scmp.ge.s32.totalorder %s161, 1
                %s166 = sphi %s155, %s155
                %s167 = sphi %s150, %s150
              $region39: #{simple_cnn5_forward.5} parent=35 // loop_header_branch
                %164 = sbr.rel (%p162) target = $region43
              $region40: #{simple_cnn5_forward.5} parent=35 // loop_body
                %v168 = vld [vmem:[%s166] sm:$0xff]
                %169 = vst [vmem:[%s167] sm:$0xff] %v168
                %v170 = vld [vmem:[%s166 + $0x8] sm:$0xff]
                %171 = vst [vmem:[%s167 + $0x8] sm:$0xff] %v170
                %v172 = vld [vmem:[%s166 + $0x10] sm:$0xff]
                %173 = vst [vmem:[%s167 + $0x10] sm:$0xff] %v172
                %v174 = vld [vmem:[%s166 + $0x18] sm:$0xff]
                %175 = vst [vmem:[%s167 + $0x18] sm:$0xff] %v174
                %v176 = vld [vmem:[%s166 + $0x160] sm:$0xff]
                %177 = vst [vmem:[%s167 + $0x20] sm:$0xff] %v176
                %v178 = vld [vmem:[%s166 + $0x168] sm:$0xff]
                %179 = vst [vmem:[%s167 + $0x28] sm:$0xff] %v178
                %v180 = vld [vmem:[%s166 + $0x170] sm:$0xff]
                %181 = vst [vmem:[%s167 + $0x30] sm:$0xff] %v180
                %v182 = vld [vmem:[%s166 + $0x178] sm:$0xff]
                %183 = vst [vmem:[%s167 + $0x38] sm:$0xff] %v182
                %v184 = vld [vmem:[%s166 + $0x2c0] sm:$0xff]
                %185 = vst [vmem:[%s167 + $0x40] sm:$0xff] %v184
                %v186 = vld [vmem:[%s166 + $0x2c8] sm:$0xff]
                %187 = vst [vmem:[%s167 + $0x48] sm:$0xff] %v186
                %v188 = vld [vmem:[%s166 + $0x2d0] sm:$0xff]
                %189 = vst [vmem:[%s167 + $0x50] sm:$0xff] %v188
                %v190 = vld [vmem:[%s166 + $0x2d8] sm:$0xff]
                %191 = vst [vmem:[%s167 + $0x58] sm:$0xff] %v190
                %v192 = vld [vmem:[%s166 + $0x420] sm:$0xff]
                %193 = vst [vmem:[%s167 + $0x60] sm:$0xff] %v192
                %v194 = vld [vmem:[%s166 + $0x428] sm:$0xff]
                %195 = vst [vmem:[%s167 + $0x68] sm:$0xff] %v194
                %v196 = vld [vmem:[%s166 + $0x430] sm:$0xff]
                %197 = vst [vmem:[%s167 + $0x70] sm:$0xff] %v196
                %v198 = vld [vmem:[%s166 + $0x438] sm:$0xff]
                %199 = vst [vmem:[%s167 + $0x78] sm:$0xff] %v198
                %v200 = vld [vmem:[%s166 + $0x580] sm:$0xff]
                %201 = vst [vmem:[%s167 + $0x80] sm:$0xff] %v200
                %v202 = vld [vmem:[%s166 + $0x588] sm:$0xff]
                %203 = vst [vmem:[%s167 + $0x88] sm:$0xff] %v202
                %v204 = vld [vmem:[%s166 + $0x590] sm:$0xff]
                %205 = vst [vmem:[%s167 + $0x90] sm:$0xff] %v204
                %v206 = vld [vmem:[%s166 + $0x598] sm:$0xff]
                %207 = vst [vmem:[%s167 + $0x98] sm:$0xff] %v206
                %v208 = vld [vmem:[%s166 + $0x6e0] sm:$0xff]
                %209 = vst [vmem:[%s167 + $0xa0] sm:$0xff] %v208
                %v210 = vld [vmem:[%s166 + $0x6e8] sm:$0xff]
                %211 = vst [vmem:[%s167 + $0xa8] sm:$0xff] %v210
                %v212 = vld [vmem:[%s166 + $0x6f0] sm:$0xff]
                %213 = vst [vmem:[%s167 + $0xb0] sm:$0xff] %v212
                %v214 = vld [vmem:[%s166 + $0x6f8] sm:$0xff]
                %215 = vst [vmem:[%s167 + $0xb8] sm:$0xff] %v214
                %v216 = vld [vmem:[%s166 + $0x840] sm:$0xff]
                %217 = vst [vmem:[%s167 + $0xc0] sm:$0xff] %v216
                %v218 = vld [vmem:[%s166 + $0x848] sm:$0xff]
                %219 = vst [vmem:[%s167 + $0xc8] sm:$0xff] %v218
                %v220 = vld [vmem:[%s166 + $0x850] sm:$0xff]
                %221 = vst [vmem:[%s167 + $0xd0] sm:$0xff] %v220
                %v222 = vld [vmem:[%s166 + $0x858] sm:$0xff]
                %223 = vst [vmem:[%s167 + $0xd8] sm:$0xff] %v222
              $region41: #{simple_cnn5_forward.5} parent=35 // loop_footer
                %s165 = sadd.s32 1, %s161
              $region42: #{simple_cnn5_forward.5} parent=35 // loop_footer_branch
                %160 = sbr.rel target = $region38
              $region43: #{simple_cnn5_forward.5} parent=35 // loop_exit
                _
            $region36: #{simple_cnn5_forward.5} parent=31 // pred_fallthru
              _
            // Predicated region
            $region44: #{simple_cnn5_forward.5} parent=31 // pred_check
              _
            $region45: #{simple_cnn5_forward.5} parent=31 // pred_check_branch
              %225 = sbr.rel target = $region47
            $region46: #{simple_cnn5_forward.5} parent=31 // pred_region
              _
            $region47: #{simple_cnn5_forward.5} parent=31 // pred_fallthru
              _
          $region32: #{simple_cnn5_forward.5} parent=27 // pred_fallthru
            _
          %226 = vnop
        $region28: #{simple_cnn5_forward.5} parent=23 // pred_fallthru
          _
      $region24: #{simple_cnn5_forward.5} parent=5 // pred_fallthru
        _
      %p227 = scmp.le.s32.totalorder 1, %s9
      %p228 = scmp.lt.s32.totalorder %s9, 23
      %p229 = pnand %p227, %p228
      %p230 = pneg %p229
      // Predicated region
      $region48: #{simple_cnn5_forward.5} parent=5 // pred_check
        _
      $region49: #{simple_cnn5_forward.5} parent=5 // pred_check_branch
        %232 = sbr.rel (%p229) target = $region51
      $region50: #{simple_cnn5_forward.5} parent=5 // pred_region
        %s233 = ssub.s32 %s9, 1
        %s234 = sand.u32 %s36, 1
        %s235 = sand.u32 %s36, 1
        %s236 = smul.addr %s235, 224
        %s237 = scalar_lea.vmem [#allocation2], %s236
        // Predicated region
        $region52: #{simple_cnn5_forward.5} parent=50 // pred_check
          %p238 = pneg %p49
        $region53: #{simple_cnn5_forward.5} parent=50 // pred_check_branch
          %240 = sbr.rel (%p238) target = $region55
        $region54: #{simple_cnn5_forward.5} parent=50 // pred_region
          _
        $region55: #{simple_cnn5_forward.5} parent=50 // pred_fallthru
          _
        %s241 = sand.u32 %s36, 1
        %s242 = sand.u32 %s36, 1
        %s243 = smul.addr %s242, 224
        %s244 = scalar_lea.vmem [#allocation2], %s243
        %p245 = pneg %p49
        %p246 = pneg %p46
        %p247 = pneg %p70
        %p248 = pneg %p67
        %p249 = pneg %p91
        %p250 = pneg %p88
        %p251 = pneg %p119
        %p252 = pneg %p116
        %s253 = sand.u32 %s106, 1
        %s254 = sand.u32 %s106, 1
        %s255 = smul.addr %s254, 64
        %s256 = scalar_lea.vmem [#allocation3], %s255
        %s257 = smul.u32 8, %s19
        %s258 = smul.u32 8, %s19
        %v260 = vld [vmem:[%s1] sm:$0xf]
        %v261 = vld [vmem:[%s1 + $0x4] sm:$0x3]
        %v262 = vld [vmem:[%s237] sm:$0xff]
        %v263 = vld [vmem:[%s237 + $0x8] sm:$0xff]
        %v264 = vld [vmem:[%s237 + $0x10] sm:$0xff]
        %v265 = vld [vmem:[%s237 + $0x18] sm:$0xff]
        %v266 = vld [vmem:[%s237 + $0x20] sm:$0xff]
        %v267 = vld [vmem:[%s237 + $0x28] sm:$0xff]
        %v268 = vld [vmem:[%s237 + $0x30] sm:$0xff]
        %v269 = vld [vmem:[%s237 + $0x38] sm:$0xff]
        %v270 = vld [vmem:[%s237 + $0x40] sm:$0xff]
        %v271 = vld [vmem:[%s237 + $0x48] sm:$0xff]
        %v272 = vld [vmem:[%s237 + $0x50] sm:$0xff]
        %v273 = vld [vmem:[%s237 + $0x58] sm:$0xff]
        %v274 = vld [vmem:[%s237 + $0x60] sm:$0xff]
        %v275 = vld [vmem:[%s237 + $0x68] sm:$0xff]
        %v276 = vld [vmem:[%s237 + $0x70] sm:$0xff]
        %v277 = vld [vmem:[%s237 + $0x78] sm:$0xff]
        %v278 = vld [vmem:[%s237 + $0x80] sm:$0xff]
        %v279 = vld [vmem:[%s237 + $0x88] sm:$0xff]
        %v280 = vld [vmem:[%s237 + $0x90] sm:$0xff]
        %v281 = vld [vmem:[%s237 + $0x98] sm:$0xff]
        %v282 = vld [vmem:[%s237 + $0xa0] sm:$0xff]
        %v283 = vld [vmem:[%s237 + $0xa8] sm:$0xff]
        %v284 = vld [vmem:[%s237 + $0xb0] sm:$0xff]
        %v285 = vld [vmem:[%s237 + $0xb8] sm:$0xff]
        %v286 = vld [vmem:[%s237 + $0xc0] sm:$0x77]
        %v287 = vld [vmem:[%s237 + $0xc8] sm:$0x77]
        %v288 = vld [vmem:[%s237 + $0xd0] sm:$0x77]
        %v289 = vld [vmem:[%s237 + $0xd8] sm:$0x77]
        %v290 = vld [vmem:[%s2] sm:$0xff]
        %v291 = vld [vmem:[%s2 + $0x8] sm:$0xf]
        %293 = vset.pattern.permute.xlu0 0
        %294 = vperm.xlu0 %293, %v290
        %v295 = vpop.permute.xlu0 %294
        %298 = vset.pattern.permute.xlu0 0
        %299 = vperm.xlu0 %298, %v291
        %v300 = vpop.permute.xlu0 %299
        %v304 = vunpack.c.l.b16 %v260
        %v305 = vunpack.c.l.b16 %v261
        %v306 = vpack.c.b16 %v305, %v304
        %v335 = vunpack.c.l.b16 %v262
        %v336 = vunpack.c.h.b16 %v262
        %v337 = vunpack.c.l.b16 %v263
        %v338 = vunpack.c.h.b16 %v263
        %v339 = vunpack.c.l.b16 %v264
        %v340 = vunpack.c.h.b16 %v264
        %v341 = vunpack.c.l.b16 %v265
        %v342 = vunpack.c.h.b16 %v265
        %v343 = vunpack.c.l.b16 %v266
        %v344 = vunpack.c.h.b16 %v266
        %v345 = vunpack.c.l.b16 %v267
        %v346 = vunpack.c.h.b16 %v267
        %v347 = vunpack.c.l.b16 %v268
        %v348 = vunpack.c.h.b16 %v268
        %v349 = vunpack.c.l.b16 %v269
        %v350 = vunpack.c.h.b16 %v269
        %v351 = vunpack.c.l.b16 %v270
        %v352 = vunpack.c.h.b16 %v270
        %v353 = vunpack.c.l.b16 %v271
        %v354 = vunpack.c.h.b16 %v271
        %v355 = vunpack.c.l.b16 %v272
        %v356 = vunpack.c.h.b16 %v272
        %v357 = vunpack.c.l.b16 %v273
        %v358 = vunpack.c.h.b16 %v273
        %v359 = vunpack.c.l.b16 %v274
        %v360 = vunpack.c.h.b16 %v274
        %v361 = vunpack.c.l.b16 %v275
        %v362 = vunpack.c.h.b16 %v275
        %v363 = vunpack.c.l.b16 %v276
        %v364 = vunpack.c.h.b16 %v276
        %v365 = vunpack.c.l.b16 %v277
        %v366 = vunpack.c.h.b16 %v277
        %v367 = vunpack.c.l.b16 %v278
        %v368 = vunpack.c.h.b16 %v278
        %v369 = vunpack.c.l.b16 %v279
        %v370 = vunpack.c.h.b16 %v279
        %v371 = vunpack.c.l.b16 %v280
        %v372 = vunpack.c.h.b16 %v280
        %v373 = vunpack.c.l.b16 %v281
        %v374 = vunpack.c.h.b16 %v281
        %v375 = vunpack.c.l.b16 %v282
        %v376 = vunpack.c.h.b16 %v282
        %v377 = vunpack.c.l.b16 %v283
        %v378 = vunpack.c.h.b16 %v283
        %v379 = vunpack.c.l.b16 %v284
        %v380 = vunpack.c.h.b16 %v284
        %v381 = vunpack.c.l.b16 %v285
        %v382 = vunpack.c.h.b16 %v285
        %v383 = vunpack.c.l.b16 %v286
        %v384 = vunpack.c.h.b16 %v286
        %v385 = vunpack.c.l.b16 %v287
        %v386 = vunpack.c.h.b16 %v287
        %v387 = vunpack.c.l.b16 %v288
        %v388 = vunpack.c.h.b16 %v288
        %v389 = vunpack.c.l.b16 %v289
        %v390 = vunpack.c.h.b16 %v289
        %v391 = vpack.c.b16 %v343, %v335
        %v392 = vpack.c.b16 %v344, %v336
        %v393 = vpack.c.b16 %v345, %v337
        %v394 = vpack.c.b16 %v346, %v338
        %v395 = vpack.c.b16 %v347, %v339
        %v396 = vpack.c.b16 %v348, %v340
        %v397 = vpack.c.b16 %v349, %v341
        %v398 = vpack.c.b16 %v350, %v342
        %v399 = vpack.c.b16 %v359, %v351
        %v400 = vpack.c.b16 %v360, %v352
        %v401 = vpack.c.b16 %v361, %v353
        %v402 = vpack.c.b16 %v362, %v354
        %v403 = vpack.c.b16 %v363, %v355
        %v404 = vpack.c.b16 %v364, %v356
        %v405 = vpack.c.b16 %v365, %v357
        %v406 = vpack.c.b16 %v366, %v358
        %v407 = vpack.c.b16 %v375, %v367
        %v408 = vpack.c.b16 %v376, %v368
        %v409 = vpack.c.b16 %v377, %v369
        %v410 = vpack.c.b16 %v378, %v370
        %v411 = vpack.c.b16 %v379, %v371
        %v412 = vpack.c.b16 %v380, %v372
        %v413 = vpack.c.b16 %v381, %v373
        %v414 = vpack.c.b16 %v382, %v374
        %v415 = vpack.c.b16 %v383, %v383
        %v416 = vpack.c.b16 %v384, %v384
        %v417 = vpack.c.b16 %v385, %v385
        %v418 = vpack.c.b16 %v386, %v386
        %v419 = vpack.c.b16 %v387, %v387
        %v420 = vpack.c.b16 %v388, %v388
        %v421 = vpack.c.b16 %v389, %v389
        %v422 = vpack.c.b16 %v390, %v390
        %vm447 = vcmask 441344
        %v449 = vsel %vm447, %v306, 0
        %vm451 = vcmask 1042432
        %v453 = vsel %vm451, %v415, 0
        %v456 = vsel %vm451, %v416, 0
        %v459 = vsel %vm451, %v417, 0
        %v462 = vsel %vm451, %v418, 0
        %v465 = vsel %vm451, %v419, 0
        %v468 = vsel %vm451, %v420, 0
        %v471 = vsel %vm451, %v421, 0
        %v474 = vsel %vm451, %v422, 0
        %476 = vmatprep.subr.bf16.mxu0 0
        %477 = vmatpush1.bf16.msra.mxu0 0
        %478 = vmatprep.subr.bf16.mxu0 0
        %479 = vmatpush1.bf16.msra.mxu0 0
        %480 = vmatprep.subr.bf16.mxu0 0
        %481 = vmatpush1.bf16.msra.mxu0 0
        %482 = vmatprep.subr.bf16.mxu0 0
        %483 = vmatpush1.bf16.msra.mxu0 0
        %484 = vmatprep.subr.bf16.mxu0 %v456
        %485 = vmatpush1.bf16.msra.mxu0 %v453
        %486 = vmatprep.subr.bf16.mxu0 %v408
        %487 = vmatpush1.bf16.msra.mxu0 %v407
        %488 = vmatprep.subr.bf16.mxu0 %v400
        %489 = vmatpush1.bf16.msra.mxu0 %v399
        %490 = vmatprep.subr.bf16.mxu0 %v392
        %491 = vmatpush1.bf16.msra.mxu0 %v391
        %492 = vmatprep.subr.bf16.mxu0 0
        %493 = vmatpush2.bf16.msra.mxu0 0
        %494 = vmatprep.subr.bf16.mxu0 0
        %495 = vmatpush2.bf16.msra.mxu0 0
        %496 = vmatprep.subr.bf16.mxu0 0
        %497 = vmatpush2.bf16.msra.mxu0 0
        %498 = vmatprep.subr.bf16.mxu0 0
        %499 = vmatpush2.bf16.msra.mxu0 0
        %500 = vmatprep.subr.bf16.mxu0 0
        %501 = vmatpush2.bf16.msra.mxu0 0
        %502 = vmatprep.subr.bf16.mxu0 0
        %503 = vmatpush2.bf16.msra.mxu0 0
        %504 = vmatprep.subr.bf16.mxu0 0
        %505 = vmatpush2.bf16.msra.mxu0 0
        %506 = vmatprep.subr.bf16.mxu0 0
        %507 = vmatpush2.bf16.msra.mxu0 0
        %508 = vmatprep.mubr.bf16.mxu0 0
        %509 = vmatmul.mubr.bf16.gmra.mxu0 %v449
        %v510 = vpop.f32.mrf.mxu0
        %v511 = vadd.f32 %v295, %v510
        %v512 = vpop.f32.mrf.mxu0
        %v513 = vadd.f32 %v295, %v512
        %v514 = vpop.f32.mrf.mxu0
        %v515 = vadd.f32 %v300, %v514
        %v516 = vpop.f32.mrf.mxu0
        %v517 = vadd.f32 %v300, %v516
        %518 = vdwg.mxu0
        %519 = vmatprep.subr.bf16.mxu0 0
        %520 = vmatpush1.bf16.msra.mxu0 0
        %521 = vmatprep.subr.bf16.mxu0 0
        %522 = vmatpush1.bf16.msra.mxu0 0
        %523 = vmatprep.subr.bf16.mxu0 0
        %524 = vmatpush1.bf16.msra.mxu0 0
        %525 = vmatprep.subr.bf16.mxu0 0
        %526 = vmatpush1.bf16.msra.mxu0 0
        %527 = vmatprep.subr.bf16.mxu0 %v462
        %528 = vmatpush1.bf16.msra.mxu0 %v459
        %529 = vmatprep.subr.bf16.mxu0 %v410
        %530 = vmatpush1.bf16.msra.mxu0 %v409
        %531 = vmatprep.subr.bf16.mxu0 %v402
        %532 = vmatpush1.bf16.msra.mxu0 %v401
        %533 = vmatprep.subr.bf16.mxu0 %v394
        %534 = vmatpush1.bf16.msra.mxu0 %v393
        %535 = vmatprep.subr.bf16.mxu0 0
        %536 = vmatpush2.bf16.msra.mxu0 0
        %537 = vmatprep.subr.bf16.mxu0 0
        %538 = vmatpush2.bf16.msra.mxu0 0
        %539 = vmatprep.subr.bf16.mxu0 0
        %540 = vmatpush2.bf16.msra.mxu0 0
        %541 = vmatprep.subr.bf16.mxu0 0
        %542 = vmatpush2.bf16.msra.mxu0 0
        %543 = vmatprep.subr.bf16.mxu0 0
        %544 = vmatpush2.bf16.msra.mxu0 0
        %545 = vmatprep.subr.bf16.mxu0 0
        %546 = vmatpush2.bf16.msra.mxu0 0
        %547 = vmatprep.subr.bf16.mxu0 0
        %548 = vmatpush2.bf16.msra.mxu0 0
        %549 = vmatprep.subr.bf16.mxu0 0
        %550 = vmatpush2.bf16.msra.mxu0 0
        %551 = vmatprep.mubr.bf16.mxu0 0
        %552 = vmatmul.mubr.bf16.gmra.mxu0 %v449
        %v553 = vpop.f32.mrf.mxu0
        %v554 = vadd.f32 %v295, %v553
        %v555 = vpop.f32.mrf.mxu0
        %v556 = vadd.f32 %v295, %v555
        %v557 = vpop.f32.mrf.mxu0
        %v558 = vadd.f32 %v300, %v557
        %v559 = vpop.f32.mrf.mxu0
        %v560 = vadd.f32 %v300, %v559
        %561 = vdwg.mxu0
        %562 = vmatprep.subr.bf16.mxu0 0
        %563 = vmatpush1.bf16.msra.mxu0 0
        %564 = vmatprep.subr.bf16.mxu0 0
        %565 = vmatpush1.bf16.msra.mxu0 0
        %566 = vmatprep.subr.bf16.mxu0 0
        %567 = vmatpush1.bf16.msra.mxu0 0
        %568 = vmatprep.subr.bf16.mxu0 0
        %569 = vmatpush1.bf16.msra.mxu0 0
        %570 = vmatprep.subr.bf16.mxu0 %v468
        %571 = vmatpush1.bf16.msra.mxu0 %v465
        %572 = vmatprep.subr.bf16.mxu0 %v412
        %573 = vmatpush1.bf16.msra.mxu0 %v411
        %574 = vmatprep.subr.bf16.mxu0 %v404
        %575 = vmatpush1.bf16.msra.mxu0 %v403
        %576 = vmatprep.subr.bf16.mxu0 %v396
        %577 = vmatpush1.bf16.msra.mxu0 %v395
        %578 = vmatprep.subr.bf16.mxu0 0
        %579 = vmatpush2.bf16.msra.mxu0 0
        %580 = vmatprep.subr.bf16.mxu0 0
        %581 = vmatpush2.bf16.msra.mxu0 0
        %582 = vmatprep.subr.bf16.mxu0 0
        %583 = vmatpush2.bf16.msra.mxu0 0
        %584 = vmatprep.subr.bf16.mxu0 0
        %585 = vmatpush2.bf16.msra.mxu0 0
        %586 = vmatprep.subr.bf16.mxu0 0
        %587 = vmatpush2.bf16.msra.mxu0 0
        %588 = vmatprep.subr.bf16.mxu0 0
        %589 = vmatpush2.bf16.msra.mxu0 0
        %590 = vmatprep.subr.bf16.mxu0 0
        %591 = vmatpush2.bf16.msra.mxu0 0
        %592 = vmatprep.subr.bf16.mxu0 0
        %593 = vmatpush2.bf16.msra.mxu0 0
        %594 = vmatprep.mubr.bf16.mxu0 0
        %595 = vmatmul.mubr.bf16.gmra.mxu0 %v449
        %v596 = vpop.f32.mrf.mxu0
        %v597 = vadd.f32 %v295, %v596
        %v598 = vpop.f32.mrf.mxu0
        %v599 = vadd.f32 %v295, %v598
        %v600 = vpop.f32.mrf.mxu0
        %v601 = vadd.f32 %v300, %v600
        %v602 = vpop.f32.mrf.mxu0
        %v603 = vadd.f32 %v300, %v602
        %604 = vdwg.mxu0
        %605 = vmatprep.subr.bf16.mxu0 0
        %606 = vmatpush1.bf16.msra.mxu0 0
        %607 = vmatprep.subr.bf16.mxu0 0
        %608 = vmatpush1.bf16.msra.mxu0 0
        %609 = vmatprep.subr.bf16.mxu0 0
        %610 = vmatpush1.bf16.msra.mxu0 0
        %611 = vmatprep.subr.bf16.mxu0 0
        %612 = vmatpush1.bf16.msra.mxu0 0
        %613 = vmatprep.subr.bf16.mxu0 %v474
        %614 = vmatpush1.bf16.msra.mxu0 %v471
        %615 = vmatprep.subr.bf16.mxu0 %v414
        %616 = vmatpush1.bf16.msra.mxu0 %v413
        %617 = vmatprep.subr.bf16.mxu0 %v406
        %618 = vmatpush1.bf16.msra.mxu0 %v405
        %619 = vmatprep.subr.bf16.mxu0 %v398
        %620 = vmatpush1.bf16.msra.mxu0 %v397
        %621 = vmatprep.subr.bf16.mxu0 0
        %622 = vmatpush2.bf16.msra.mxu0 0
        %623 = vmatprep.subr.bf16.mxu0 0
        %624 = vmatpush2.bf16.msra.mxu0 0
        %625 = vmatprep.subr.bf16.mxu0 0
        %626 = vmatpush2.bf16.msra.mxu0 0
        %627 = vmatprep.subr.bf16.mxu0 0
        %628 = vmatpush2.bf16.msra.mxu0 0
        %629 = vmatprep.subr.bf16.mxu0 0
        %630 = vmatpush2.bf16.msra.mxu0 0
        %631 = vmatprep.subr.bf16.mxu0 0
        %632 = vmatpush2.bf16.msra.mxu0 0
        %633 = vmatprep.subr.bf16.mxu0 0
        %634 = vmatpush2.bf16.msra.mxu0 0
        %635 = vmatprep.subr.bf16.mxu0 0
        %636 = vmatpush2.bf16.msra.mxu0 0
        %637 = vmatprep.mubr.bf16.mxu0 0
        %638 = vmatmul.mubr.bf16.gmra.mxu0 %v449
        %v639 = vpop.f32.mrf.mxu0
        %v640 = vadd.f32 %v295, %v639
        %v641 = vpop.f32.mrf.mxu0
        %v642 = vadd.f32 %v295, %v641
        %v643 = vpop.f32.mrf.mxu0
        %v644 = vadd.f32 %v300, %v643
        %v645 = vpop.f32.mrf.mxu0
        %v646 = vadd.f32 %v300, %v645
        %647 = vdwg.mxu0
        %v648 = vmax.f32 %v511, 0.0
        %v649 = vmax.f32 %v513, 0.0
        %v650 = vmax.f32 %v554, 0.0
        %v651 = vmax.f32 %v556, 0.0
        %v652 = vmax.f32 %v597, 0.0
        %v653 = vmax.f32 %v599, 0.0
        %v654 = vmax.f32 %v640, 0.0
        %v655 = vmax.f32 %v642, 0.0
        %v656 = vmax.f32 %v515, 0.0
        %v657 = vmax.f32 %v517, 0.0
        %v658 = vmax.f32 %v558, 0.0
        %v659 = vmax.f32 %v560, 0.0
        %v660 = vmax.f32 %v601, 0.0
        %v661 = vmax.f32 %v603, 0.0
        %v662 = vmax.f32 %v644, 0.0
        %v663 = vmax.f32 %v646, 0.0
        %v664 = vpack.c.bf16 %v656, %v648
        %v665 = vpack.c.bf16 %v657, %v649
        %v666 = vpack.c.bf16 %v658, %v650
        %v667 = vpack.c.bf16 %v659, %v651
        %v668 = vpack.c.bf16 %v660, %v652
        %v669 = vpack.c.bf16 %v661, %v653
        %v670 = vpack.c.bf16 %v662, %v654
        %v671 = vpack.c.bf16 %v663, %v655
        %v680 = vunpack.c.l.b16 %v664
        %v681 = vunpack.c.l.b16 %v665
        %v682 = vunpack.c.l.b16 %v666
        %v683 = vunpack.c.l.b16 %v667
        %v684 = vunpack.c.l.b16 %v668
        %v685 = vunpack.c.l.b16 %v669
        %v686 = vunpack.c.l.b16 %v670
        %v687 = vunpack.c.l.b16 %v671
        %v688 = vunpack.c.h.b16 %v664
        %v689 = vunpack.c.h.b16 %v665
        %v690 = vunpack.c.h.b16 %v666
        %v691 = vunpack.c.h.b16 %v667
        %v692 = vunpack.c.h.b16 %v668
        %v693 = vunpack.c.h.b16 %v669
        %v694 = vunpack.c.h.b16 %v670
        %v695 = vunpack.c.h.b16 %v671
        %v696 = vpack.c.b16 %v681, %v680
        %v697 = vpack.c.b16 %v683, %v682
        %v698 = vpack.c.b16 %v685, %v684
        %v699 = vpack.c.b16 %v687, %v686
        %v700 = vpack.c.b16 %v689, %v688
        %v701 = vpack.c.b16 %v691, %v690
        %v702 = vpack.c.b16 %v693, %v692
        %v703 = vpack.c.b16 %v695, %v694
        %712 = vst [vmem:[%s256] sm:$0xff] %v696
        %713 = vst [vmem:[%s256 + $0x8] sm:$0xff] %v697
        %714 = vst [vmem:[%s256 + $0x10] sm:$0xff] %v698
        %715 = vst [vmem:[%s256 + $0x18] sm:$0xff] %v699
        %716 = vst [vmem:[%s256 + $0x20] sm:$0x33] %v700
        %717 = vst [vmem:[%s256 + $0x28] sm:$0x33] %v701
        %718 = vst [vmem:[%s256 + $0x30] sm:$0x33] %v702
        %719 = vst [vmem:[%s256 + $0x38] sm:$0x33] %v703
        %s720 = sand.u32 %s106, 1
        %s721 = sand.u32 %s106, 1
        %s722 = smul.addr %s721, 64
        %s723 = scalar_lea.vmem [#allocation3], %s722
        // Predicated region
        $region56: #{simple_cnn5_forward.5} parent=50 // pred_check
          %p724 = pneg %p116
        $region57: #{simple_cnn5_forward.5} parent=50 // pred_check_branch
          %726 = sbr.rel (%p724) target = $region59
        $region58: #{simple_cnn5_forward.5} parent=50 // pred_region
          %s727 = smul.u32 8, %s19
          %s728 = smul.addr %s18, 176
          %s729 = sadd.s32 %s727, %s728
          %s730 = smul.addr %s729, 4
          %s731 = scalar_lea.vmem %s3, %s730
          // Predicated region
          $region60: #{simple_cnn5_forward.5} parent=58 // pred_check
            _
          $region61: #{simple_cnn5_forward.5} parent=58 // pred_check_branch
            %733 = sbr.rel (0) target = $region63
          $region62: #{simple_cnn5_forward.5} parent=58 // pred_region
            // Predicated region
            $region64: #{simple_cnn5_forward.5} parent=62 // pred_check
              _
            $region65: #{simple_cnn5_forward.5} parent=62 // pred_check_branch
              %735 = sbr.rel (0) target = $region67
            $region66: #{simple_cnn5_forward.5} parent=62 // pred_region
              loop: start=0, step=1, limit=1
              $region68: #{simple_cnn5_forward.5} parent=66 // loop_pre_header
                _
              $region69: #{simple_cnn5_forward.5} parent=66 // loop_header
                %s737 = sphi 0, %s741
                %p738 = scmp.ge.s32.totalorder %s737, 1
                %s742 = sphi %s723, %s723
                %s743 = sphi %s731, %s731
              $region70: #{simple_cnn5_forward.5} parent=66 // loop_header_branch
                %740 = sbr.rel (%p738) target = $region74
              $region71: #{simple_cnn5_forward.5} parent=66 // loop_body
                %v744 = vld [vmem:[%s742] sm:$0xff]
                %745 = vst [vmem:[%s743] sm:$0xff] %v744
                %v746 = vld [vmem:[%s742 + $0x8] sm:$0xff]
                %747 = vst [vmem:[%s743 + $0x8] sm:$0xff] %v746
                %v748 = vld [vmem:[%s742 + $0x10] sm:$0xff]
                %749 = vst [vmem:[%s743 + $0x10] sm:$0xff] %v748
                %v750 = vld [vmem:[%s742 + $0x18] sm:$0xff]
                %751 = vst [vmem:[%s743 + $0x18] sm:$0xff] %v750
                %v752 = vld [vmem:[%s742 + $0x20] sm:$0xff]
                %753 = vst [vmem:[%s743 + $0x160] sm:$0xff] %v752
                %v754 = vld [vmem:[%s742 + $0x28] sm:$0xff]
                %755 = vst [vmem:[%s743 + $0x168] sm:$0xff] %v754
                %v756 = vld [vmem:[%s742 + $0x30] sm:$0xff]
                %757 = vst [vmem:[%s743 + $0x170] sm:$0xff] %v756
                %v758 = vld [vmem:[%s742 + $0x38] sm:$0xff]
                %759 = vst [vmem:[%s743 + $0x178] sm:$0xff] %v758
              $region72: #{simple_cnn5_forward.5} parent=66 // loop_footer
                %s741 = sadd.s32 1, %s737
              $region73: #{simple_cnn5_forward.5} parent=66 // loop_footer_branch
                %736 = sbr.rel target = $region69
              $region74: #{simple_cnn5_forward.5} parent=66 // loop_exit
                _
            $region67: #{simple_cnn5_forward.5} parent=62 // pred_fallthru
              _
            // Predicated region
            $region75: #{simple_cnn5_forward.5} parent=62 // pred_check
              _
            $region76: #{simple_cnn5_forward.5} parent=62 // pred_check_branch
              %761 = sbr.rel target = $region78
            $region77: #{simple_cnn5_forward.5} parent=62 // pred_region
              _
            $region78: #{simple_cnn5_forward.5} parent=62 // pred_fallthru
              _
          $region63: #{simple_cnn5_forward.5} parent=58 // pred_fallthru
            _
          %762 = vnop
        $region59: #{simple_cnn5_forward.5} parent=50 // pred_fallthru
          _
      $region51: #{simple_cnn5_forward.5} parent=5 // pred_fallthru
        _
      %p763 = scmp.le.s32.totalorder 2, %s9
      // Predicated region
      $region79: #{simple_cnn5_forward.5} parent=5 // pred_check
        %p764 = pneg %p763
      $region80: #{simple_cnn5_forward.5} parent=5 // pred_check_branch
        %766 = sbr.rel (%p764) target = $region82
      $region81: #{simple_cnn5_forward.5} parent=5 // pred_region
        %s767 = ssub.s32 %s9, 2
        // Predicated region
        $region83: #{simple_cnn5_forward.5} parent=81 // pred_check
          %p768 = pneg %p122
        $region84: #{simple_cnn5_forward.5} parent=81 // pred_check_branch
          %770 = sbr.rel (%p768) target = $region86
        $region85: #{simple_cnn5_forward.5} parent=81 // pred_region
          %s771 = sand.u32 %s107, 1
          %s772 = sand.u32 %s107, 1
          %s773 = smul.addr %s772, 64
          %s774 = scalar_lea.vmem [#allocation3], %s773
        $region86: #{simple_cnn5_forward.5} parent=81 // pred_fallthru
          _
      $region82: #{simple_cnn5_forward.5} parent=5 // pred_fallthru
        _
    $region6: #{simple_cnn5_forward.5} parent=1 // loop_footer
      %s13 = sadd.s32 1, %s9
    $region7: #{simple_cnn5_forward.5} parent=1 // loop_footer_branch
      %8 = sbr.rel target = $region3
    $region8: #{simple_cnn5_forward.5} parent=1 // loop_exit
      _

// kernel: simple_cnn5_forward.6
$region0: #{simple_cnn5_forward.6}
  #allocation0 [shape = 'u32[]', space=smem, size = 0x4, offset = 0x4, fixed_abs, tag = 'smem constant byte address 0x4 - core index']
  #allocation1 [shape = 'u32[144,128]{1,0:T(1,128)}', space=vmem, size = 0x12000, scoped, tag = 'internal scratch']
  %s0 = inlined_call_operand.vmem [shape: bf16[2,4,108,3072], index: 0, kind: input, shape index: {}]
  %s1 = inlined_call_operand.vmem [shape: bf16[24,108], index: 1, kind: input, shape index: {}]
  %s2 = inlined_call_operand.vmem [shape: f32[24,1], index: 2, kind: input, shape index: {}]
  %s3 = inlined_call_operand.vmem [shape: bf16[2,24,3072], index: 3, kind: output, shape index: {}]
  %s4 = sld [smem:[#allocation0]]
  $region87: #{simple_cnn5_forward.6} parent=0
    _
  %s6 = ssub.s32 1, %s4
  %s7 = scalar_select 0, %s6, %s4
  $region1: #{simple_cnn5_forward.6} parent=0
    #allocation2 [shape = 'u8[917504]{0}', space=vmem, size = 0xe0000, scoped, tag = 'input window, operand 0']
    #allocation3 [shape = 'u8[49152]{0}', space=vmem, size = 0xc000, scoped, tag = 'output window, operand 0']
    loop: start=0, step=1, limit=14
    $region2: #{simple_cnn5_forward.6} parent=1 // loop_pre_header
      _
    $region3: #{simple_cnn5_forward.6} parent=1 // loop_header
      %s9 = sphi 0, %s13
      %p10 = scmp.ge.s32.totalorder %s9, 14
      %s16 = sphi 0, %s28
      %s17 = sphi 0, %s24
      %s18 = sphi 0, %s16
      %s19 = sphi 0, %s17
      %s20 = sphi 0, %s18
      %s21 = sphi 0, %s19
      %s33 = sphi 0, %s35
      %s36 = sphi 0, %s33
      %s37 = sphi 0, %s36
      %s53 = sphi 0, %s37
      %s57 = sphi 0, %s57
      %s59 = sphi 0, %s57
      %s60 = sphi 0, %s59
      %s74 = sphi 0, %s60
      %s78 = sphi 0, %s78
      %s80 = sphi 0, %s78
      %s81 = sphi 0, %s80
      %s95 = sphi 0, %s81
      %s103 = sphi 0, %s105
      %s106 = sphi 0, %s103
      %s107 = sphi 0, %s106
      %s123 = sphi 0, %s107
    $region4: #{simple_cnn5_forward.6} parent=1 // loop_header_branch
      %12 = sbr.rel (%p10) target = $region8
    $region5: #{simple_cnn5_forward.6} parent=1 // loop_body
      %s14 = ssub.s32 %s9, 1
      %s15 = ssub.s32 %s9, 2
      %s22 = sadd.s32 1, %s17
      %p23 = scmp.ge.s32.totalorder %s22, 6
      %s24 = scalar_select %p23, 0, %s22
      %s25 = sadd.s32 1, %s16
      %s26 = scalar_select %p23, %s25, %s16
      %p27 = scmp.ge.s32.totalorder %s26, 2
      %s28 = scalar_select %p27, 0, %s26
      %s29 = ssub.s32 %s16, %s28
      %s30 = ssub.s32 %s17, %s24
      %s31 = sor.u32 %s29, %s30
      %p32 = scmp.eq.s32.totalorder %s31, 0
      %s34 = sadd.s32 %s33, 1
      %s35 = scalar_select %p32, %s33, %s34
      %p38 = pneg %p32
      %p39 = scmp.eq.s32.totalorder %s9, 11
      %p40 = por %p38, %p39
      %p41 = scmp.ne.s32.totalorder %s33, %s36
      %p42 = scmp.eq.s32.totalorder %s9, 0
      %p43 = por %p41, %p42
      %p44 = scmp.ne.s32.totalorder %s33, %s36
      %p45 = scmp.eq.s32.totalorder %s14, 11
      %p46 = por %p44, %p45
      %p47 = scmp.ne.s32.totalorder %s36, %s37
      %p48 = scmp.eq.s32.totalorder %s14, 0
      %p49 = por %p47, %p48
      %p50 = scmp.ne.s32.totalorder %s36, %s37
      %p51 = scmp.eq.s32.totalorder %s15, 11
      %p52 = por %p50, %p51
      %p54 = scmp.ne.s32.totalorder %s37, %s53
      %p55 = scmp.eq.s32.totalorder %s15, 0
      %p56 = por %p54, %p55
      %s58 = sadd.s32 %s57, 1
      %p61 = scmp.eq.s32.totalorder %s9, 11
      %p62 = scmp.ne.s32.totalorder %s57, %s59
      %p63 = scmp.eq.s32.totalorder %s9, 0
      %p64 = por %p62, %p63
      %p65 = scmp.ne.s32.totalorder %s57, %s59
      %p66 = scmp.eq.s32.totalorder %s14, 11
      %p67 = por %p65, %p66
      %p68 = scmp.ne.s32.totalorder %s59, %s60
      %p69 = scmp.eq.s32.totalorder %s14, 0
      %p70 = por %p68, %p69
      %p71 = scmp.ne.s32.totalorder %s59, %s60
      %p72 = scmp.eq.s32.totalorder %s15, 11
      %p73 = por %p71, %p72
      %p75 = scmp.ne.s32.totalorder %s60, %s74
      %p76 = scmp.eq.s32.totalorder %s15, 0
      %p77 = por %p75, %p76
      %s79 = sadd.s32 %s78, 1
      %p82 = scmp.eq.s32.totalorder %s9, 11
      %p83 = scmp.ne.s32.totalorder %s78, %s80
      %p84 = scmp.eq.s32.totalorder %s9, 0
      %p85 = por %p83, %p84
      %p86 = scmp.ne.s32.totalorder %s78, %s80
      %p87 = scmp.eq.s32.totalorder %s14, 11
      %p88 = por %p86, %p87
      %p89 = scmp.ne.s32.totalorder %s80, %s81
      %p90 = scmp.eq.s32.totalorder %s14, 0
      %p91 = por %p89, %p90
      %p92 = scmp.ne.s32.totalorder %s80, %s81
      %p93 = scmp.eq.s32.totalorder %s15, 11
      %p94 = por %p92, %p93
      %p96 = scmp.ne.s32.totalorder %s81, %s95
      %p97 = scmp.eq.s32.totalorder %s15, 0
      %p98 = por %p96, %p97
      %s99 = ssub.s32 %s16, %s28
      %s100 = ssub.s32 %s17, %s24
      %s101 = sor.u32 %s99, %s100
      %p102 = scmp.eq.s32.totalorder %s101, 0
      %s104 = sadd.s32 %s103, 1
      %s105 = scalar_select %p102, %s103, %s104
      %p108 = pneg %p102
      %p109 = scmp.eq.s32.totalorder %s9, 11
      %p110 = por %p108, %p109
      %p111 = scmp.ne.s32.totalorder %s103, %s106
      %p112 = scmp.eq.s32.totalorder %s9, 0
      %p113 = por %p111, %p112
      %p114 = scmp.ne.s32.totalorder %s103, %s106
      %p115 = scmp.eq.s32.totalorder %s14, 11
      %p116 = por %p114, %p115
      %p117 = scmp.ne.s32.totalorder %s106, %s107
      %p118 = scmp.eq.s32.totalorder %s14, 0
      %p119 = por %p117, %p118
      %p120 = scmp.ne.s32.totalorder %s106, %s107
      %p121 = scmp.eq.s32.totalorder %s15, 11
      %p122 = por %p120, %p121
      %p124 = scmp.ne.s32.totalorder %s107, %s123
      %p125 = scmp.eq.s32.totalorder %s15, 0
      %p126 = por %p124, %p125
      %p127 = scmp.le.s32.totalorder 1, %s9
      %p128 = scmp.lt.s32.totalorder %s9, 13
      %p129 = pnand %p127, %p128
      %p130 = pneg %p129
      // Predicated region
      $region9: #{simple_cnn5_forward.6} parent=5 // pred_check
        _
      $region10: #{simple_cnn5_forward.6} parent=5 // pred_check_branch
        %132 = sbr.rel (%p129) target = $region12
      $region11: #{simple_cnn5_forward.6} parent=5 // pred_region
        %s133 = ssub.s32 %s9, 1
        // Predicated region
        $region13: #{simple_cnn5_forward.6} parent=11 // pred_check
          %p134 = pneg %p70
        $region14: #{simple_cnn5_forward.6} parent=11 // pred_check_branch
          %136 = sbr.rel (%p134) target = $region16
        $region15: #{simple_cnn5_forward.6} parent=11 // pred_region
          _
        $region16: #{simple_cnn5_forward.6} parent=11 // pred_fallthru
          _
        // Predicated region
        $region17: #{simple_cnn5_forward.6} parent=11 // pred_check
          %p137 = pneg %p91
        $region18: #{simple_cnn5_forward.6} parent=11 // pred_check_branch
          %139 = sbr.rel (%p137) target = $region20
        $region19: #{simple_cnn5_forward.6} parent=11 // pred_region
          _
        $region20: #{simple_cnn5_forward.6} parent=11 // pred_fallthru
          _
      $region12: #{simple_cnn5_forward.6} parent=5 // pred_fallthru
        _
      %p140 = scmp.lt.s32.totalorder %s9, 12
      // Predicated region
      $region21: #{simple_cnn5_forward.6} parent=5 // pred_check
        %p141 = pneg %p140
      $region22: #{simple_cnn5_forward.6} parent=5 // pred_check_branch
        %143 = sbr.rel (%p141) target = $region24
      $region23: #{simple_cnn5_forward.6} parent=5 // pred_region
        // Predicated region
        $region25: #{simple_cnn5_forward.6} parent=23 // pred_check
          %p144 = pneg %p43
        $region26: #{simple_cnn5_forward.6} parent=23 // pred_check_branch
          %146 = sbr.rel (%p144) target = $region28
        $region27: #{simple_cnn5_forward.6} parent=23 // pred_region
          %s147 = sand.u32 %s33, 1
          %s148 = sand.u32 %s33, 1
          %s149 = smul.addr %s148, 896
          %s150 = scalar_lea.vmem [#allocation2], %s149
          %s151 = smul.u32 4, %s17
          %s152 = smul.addr %s16, 1344
          %s153 = sadd.s32 %s151, %s152
          %s154 = smul.addr %s153, 4
          %s155 = scalar_lea.vmem %s0, %s154
          // Predicated region
          $region29: #{simple_cnn5_forward.6} parent=27 // pred_check
            _
          $region30: #{simple_cnn5_forward.6} parent=27 // pred_check_branch
            %157 = sbr.rel (0) target = $region32
          $region31: #{simple_cnn5_forward.6} parent=27 // pred_region
            // Predicated region
            $region33: #{simple_cnn5_forward.6} parent=31 // pred_check
              _
            $region34: #{simple_cnn5_forward.6} parent=31 // pred_check_branch
              %159 = sbr.rel (0) target = $region36
            $region35: #{simple_cnn5_forward.6} parent=31 // pred_region
              loop: start=0, step=1, limit=1
              $region37: #{simple_cnn5_forward.6} parent=35 // loop_pre_header
                _
              $region38: #{simple_cnn5_forward.6} parent=35 // loop_header
                %s161 = sphi 0, %s165
                %p162 = scmp.ge.s32.totalorder %s161, 1
                %s166 = sphi %s155, %s155
                %s167 = sphi %s150, %s150
              $region39: #{simple_cnn5_forward.6} parent=35 // loop_header_branch
                %164 = sbr.rel (%p162) target = $region43
              $region40: #{simple_cnn5_forward.6} parent=35 // loop_body
                %v168 = vld [vmem:[%s166] sm:$0xff]
                %169 = vst [vmem:[%s167] sm:$0xff] %v168
                %v170 = vld [vmem:[%s166 + $0x8] sm:$0xff]
                %171 = vst [vmem:[%s167 + $0x8] sm:$0xff] %v170
                %v172 = vld [vmem:[%s166 + $0x60] sm:$0xff]
                %173 = vst [vmem:[%s167 + $0x10] sm:$0xff] %v172
                %v174 = vld [vmem:[%s166 + $0x68] sm:$0xff]
                %175 = vst [vmem:[%s167 + $0x18] sm:$0xff] %v174
                %v176 = vld [vmem:[%s166 + $0xc0] sm:$0xff]
                %177 = vst [vmem:[%s167 + $0x20] sm:$0xff] %v176
                %v178 = vld [vmem:[%s166 + $0xc8] sm:$0xff]
                %179 = vst [vmem:[%s167 + $0x28] sm:$0xff] %v178
                %v180 = vld [vmem:[%s166 + $0x120] sm:$0xff]
                %181 = vst [vmem:[%s167 + $0x30] sm:$0xff] %v180
                %v182 = vld [vmem:[%s166 + $0x128] sm:$0xff]
                %183 = vst [vmem:[%s167 + $0x38] sm:$0xff] %v182
                %v184 = vld [vmem:[%s166 + $0x180] sm:$0xff]
                %185 = vst [vmem:[%s167 + $0x40] sm:$0xff] %v184
                %v186 = vld [vmem:[%s166 + $0x188] sm:$0xff]
                %187 = vst [vmem:[%s167 + $0x48] sm:$0xff] %v186
                %v188 = vld [vmem:[%s166 + $0x1e0] sm:$0xff]
                %189 = vst [vmem:[%s167 + $0x50] sm:$0xff] %v188
                %v190 = vld [vmem:[%s166 + $0x1e8] sm:$0xff]
                %191 = vst [vmem:[%s167 + $0x58] sm:$0xff] %v190
                %v192 = vld [vmem:[%s166 + $0x240] sm:$0xff]
                %193 = vst [vmem:[%s167 + $0x60] sm:$0xff] %v192
                %v194 = vld [vmem:[%s166 + $0x248] sm:$0xff]
                %195 = vst [vmem:[%s167 + $0x68] sm:$0xff] %v194
                %v196 = vld [vmem:[%s166 + $0x2a0] sm:$0xff]
                %197 = vst [vmem:[%s167 + $0x70] sm:$0xff] %v196
                %v198 = vld [vmem:[%s166 + $0x2a8] sm:$0xff]
                %199 = vst [vmem:[%s167 + $0x78] sm:$0xff] %v198
                %v200 = vld [vmem:[%s166 + $0x300] sm:$0xff]
                %201 = vst [vmem:[%s167 + $0x80] sm:$0xff] %v200
                %v202 = vld [vmem:[%s166 + $0x308] sm:$0xff]
                %203 = vst [vmem:[%s167 + $0x88] sm:$0xff] %v202
                %v204 = vld [vmem:[%s166 + $0x360] sm:$0xff]
                %205 = vst [vmem:[%s167 + $0x90] sm:$0xff] %v204
                %v206 = vld [vmem:[%s166 + $0x368] sm:$0xff]
                %207 = vst [vmem:[%s167 + $0x98] sm:$0xff] %v206
                %v208 = vld [vmem:[%s166 + $0x3c0] sm:$0xff]
                %209 = vst [vmem:[%s167 + $0xa0] sm:$0xff] %v208
                %v210 = vld [vmem:[%s166 + $0x3c8] sm:$0xff]
                %211 = vst [vmem:[%s167 + $0xa8] sm:$0xff] %v210
                %v212 = vld [vmem:[%s166 + $0x420] sm:$0xff]
                %213 = vst [vmem:[%s167 + $0xb0] sm:$0xff] %v212
                %v214 = vld [vmem:[%s166 + $0x428] sm:$0xff]
                %215 = vst [vmem:[%s167 + $0xb8] sm:$0xff] %v214
                %v216 = vld [vmem:[%s166 + $0x480] sm:$0xff]
                %217 = vst [vmem:[%s167 + $0xc0] sm:$0xff] %v216
                %v218 = vld [vmem:[%s166 + $0x488] sm:$0xff]
                %219 = vst [vmem:[%s167 + $0xc8] sm:$0xff] %v218
                %v220 = vld [vmem:[%s166 + $0x4e0] sm:$0xff]
                %221 = vst [vmem:[%s167 + $0xd0] sm:$0xff] %v220
                %v222 = vld [vmem:[%s166 + $0x4e8] sm:$0xff]
                %223 = vst [vmem:[%s167 + $0xd8] sm:$0xff] %v222
                %v224 = vld [vmem:[%s166 + $0x540] sm:$0xff]
                %225 = vst [vmem:[%s167 + $0xe0] sm:$0xff] %v224
                %v226 = vld [vmem:[%s166 + $0x548] sm:$0xff]
                %227 = vst [vmem:[%s167 + $0xe8] sm:$0xff] %v226
                %v228 = vld [vmem:[%s166 + $0x5a0] sm:$0xff]
                %229 = vst [vmem:[%s167 + $0xf0] sm:$0xff] %v228
                %v230 = vld [vmem:[%s166 + $0x5a8] sm:$0xff]
                %231 = vst [vmem:[%s167 + $0xf8] sm:$0xff] %v230
                %v232 = vld [vmem:[%s166 + $0x600] sm:$0xff]
                %233 = vst [vmem:[%s167 + $0x100] sm:$0xff] %v232
                %v234 = vld [vmem:[%s166 + $0x608] sm:$0xff]
                %235 = vst [vmem:[%s167 + $0x108] sm:$0xff] %v234
                %v236 = vld [vmem:[%s166 + $0x660] sm:$0xff]
                %237 = vst [vmem:[%s167 + $0x110] sm:$0xff] %v236
                %v238 = vld [vmem:[%s166 + $0x668] sm:$0xff]
                %239 = vst [vmem:[%s167 + $0x118] sm:$0xff] %v238
                %v240 = vld [vmem:[%s166 + $0x6c0] sm:$0xff]
                %241 = vst [vmem:[%s167 + $0x120] sm:$0xff] %v240
                %v242 = vld [vmem:[%s166 + $0x6c8] sm:$0xff]
                %243 = vst [vmem:[%s167 + $0x128] sm:$0xff] %v242
                %v244 = vld [vmem:[%s166 + $0x720] sm:$0xff]
                %245 = vst [vmem:[%s167 + $0x130] sm:$0xff] %v244
                %v246 = vld [vmem:[%s166 + $0x728] sm:$0xff]
                %247 = vst [vmem:[%s167 + $0x138] sm:$0xff] %v246
                %v248 = vld [vmem:[%s166 + $0x780] sm:$0xff]
                %249 = vst [vmem:[%s167 + $0x140] sm:$0xff] %v248
                %v250 = vld [vmem:[%s166 + $0x788] sm:$0xff]
                %251 = vst [vmem:[%s167 + $0x148] sm:$0xff] %v250
                %v252 = vld [vmem:[%s166 + $0x7e0] sm:$0xff]
                %253 = vst [vmem:[%s167 + $0x150] sm:$0xff] %v252
                %v254 = vld [vmem:[%s166 + $0x7e8] sm:$0xff]
                %255 = vst [vmem:[%s167 + $0x158] sm:$0xff] %v254
                %v256 = vld [vmem:[%s166 + $0x840] sm:$0xff]
                %257 = vst [vmem:[%s167 + $0x160] sm:$0xff] %v256
                %v258 = vld [vmem:[%s166 + $0x848] sm:$0xff]
                %259 = vst [vmem:[%s167 + $0x168] sm:$0xff] %v258
                %v260 = vld [vmem:[%s166 + $0x8a0] sm:$0xff]
                %261 = vst [vmem:[%s167 + $0x170] sm:$0xff] %v260
                %v262 = vld [vmem:[%s166 + $0x8a8] sm:$0xff]
                %263 = vst [vmem:[%s167 + $0x178] sm:$0xff] %v262
                %v264 = vld [vmem:[%s166 + $0x900] sm:$0xff]
                %265 = vst [vmem:[%s167 + $0x180] sm:$0xff] %v264
                %v266 = vld [vmem:[%s166 + $0x908] sm:$0xff]
                %267 = vst [vmem:[%s167 + $0x188] sm:$0xff] %v266
                %v268 = vld [vmem:[%s166 + $0x960] sm:$0xff]
                %269 = vst [vmem:[%s167 + $0x190] sm:$0xff] %v268
                %v270 = vld [vmem:[%s166 + $0x968] sm:$0xff]
                %271 = vst [vmem:[%s167 + $0x198] sm:$0xff] %v270
                %v272 = vld [vmem:[%s166 + $0x9c0] sm:$0xff]
                %273 = vst [vmem:[%s167 + $0x1a0] sm:$0xff] %v272
                %v274 = vld [vmem:[%s166 + $0x9c8] sm:$0xff]
                %275 = vst [vmem:[%s167 + $0x1a8] sm:$0xff] %v274
                %v276 = vld [vmem:[%s166 + $0xa20] sm:$0xff]
                %277 = vst [vmem:[%s167 + $0x1b0] sm:$0xff] %v276
                %v278 = vld [vmem:[%s166 + $0xa28] sm:$0xff]
                %279 = vst [vmem:[%s167 + $0x1b8] sm:$0xff] %v278
                %v280 = vld [vmem:[%s166 + $0xa80] sm:$0xff]
                %281 = vst [vmem:[%s167 + $0x1c0] sm:$0xff] %v280
                %v282 = vld [vmem:[%s166 + $0xa88] sm:$0xff]
                %283 = vst [vmem:[%s167 + $0x1c8] sm:$0xff] %v282
                %v284 = vld [vmem:[%s166 + $0xae0] sm:$0xff]
                %285 = vst [vmem:[%s167 + $0x1d0] sm:$0xff] %v284
                %v286 = vld [vmem:[%s166 + $0xae8] sm:$0xff]
                %287 = vst [vmem:[%s167 + $0x1d8] sm:$0xff] %v286
                %v288 = vld [vmem:[%s166 + $0xb40] sm:$0xff]
                %289 = vst [vmem:[%s167 + $0x1e0] sm:$0xff] %v288
                %v290 = vld [vmem:[%s166 + $0xb48] sm:$0xff]
                %291 = vst [vmem:[%s167 + $0x1e8] sm:$0xff] %v290
                %v292 = vld [vmem:[%s166 + $0xba0] sm:$0xff]
                %293 = vst [vmem:[%s167 + $0x1f0] sm:$0xff] %v292
                %v294 = vld [vmem:[%s166 + $0xba8] sm:$0xff]
                %295 = vst [vmem:[%s167 + $0x1f8] sm:$0xff] %v294
                %v296 = vld [vmem:[%s166 + $0xc00] sm:$0xff]
                %297 = vst [vmem:[%s167 + $0x200] sm:$0xff] %v296
                %v298 = vld [vmem:[%s166 + $0xc08] sm:$0xff]
                %299 = vst [vmem:[%s167 + $0x208] sm:$0xff] %v298
                %v300 = vld [vmem:[%s166 + $0xc60] sm:$0xff]
                %301 = vst [vmem:[%s167 + $0x210] sm:$0xff] %v300
                %v302 = vld [vmem:[%s166 + $0xc68] sm:$0xff]
                %303 = vst [vmem:[%s167 + $0x218] sm:$0xff] %v302
                %v304 = vld [vmem:[%s166 + $0xcc0] sm:$0xff]
                %305 = vst [vmem:[%s167 + $0x220] sm:$0xff] %v304
                %v306 = vld [vmem:[%s166 + $0xcc8] sm:$0xff]
                %307 = vst [vmem:[%s167 + $0x228] sm:$0xff] %v306
                %v308 = vld [vmem:[%s166 + $0xd20] sm:$0xff]
                %309 = vst [vmem:[%s167 + $0x230] sm:$0xff] %v308
                %v310 = vld [vmem:[%s166 + $0xd28] sm:$0xff]
                %311 = vst [vmem:[%s167 + $0x238] sm:$0xff] %v310
                %v312 = vld [vmem:[%s166 + $0xd80] sm:$0xff]
                %313 = vst [vmem:[%s167 + $0x240] sm:$0xff] %v312
                %v314 = vld [vmem:[%s166 + $0xd88] sm:$0xff]
                %315 = vst [vmem:[%s167 + $0x248] sm:$0xff] %v314
                %v316 = vld [vmem:[%s166 + $0xde0] sm:$0xff]
                %317 = vst [vmem:[%s167 + $0x250] sm:$0xff] %v316
                %v318 = vld [vmem:[%s166 + $0xde8] sm:$0xff]
                %319 = vst [vmem:[%s167 + $0x258] sm:$0xff] %v318
                %v320 = vld [vmem:[%s166 + $0xe40] sm:$0xff]
                %321 = vst [vmem:[%s167 + $0x260] sm:$0xff] %v320
                %v322 = vld [vmem:[%s166 + $0xe48] sm:$0xff]
                %323 = vst [vmem:[%s167 + $0x268] sm:$0xff] %v322
                %v324 = vld [vmem:[%s166 + $0xea0] sm:$0xff]
                %325 = vst [vmem:[%s167 + $0x270] sm:$0xff] %v324
                %v326 = vld [vmem:[%s166 + $0xea8] sm:$0xff]
                %327 = vst [vmem:[%s167 + $0x278] sm:$0xff] %v326
                %v328 = vld [vmem:[%s166 + $0xf00] sm:$0xff]
                %329 = vst [vmem:[%s167 + $0x280] sm:$0xff] %v328
                %v330 = vld [vmem:[%s166 + $0xf08] sm:$0xff]
                %331 = vst [vmem:[%s167 + $0x288] sm:$0xff] %v330
                %v332 = vld [vmem:[%s166 + $0xf60] sm:$0xff]
                %333 = vst [vmem:[%s167 + $0x290] sm:$0xff] %v332
                %v334 = vld [vmem:[%s166 + $0xf68] sm:$0xff]
                %335 = vst [vmem:[%s167 + $0x298] sm:$0xff] %v334
                %v336 = vld [vmem:[%s166 + $0xfc0] sm:$0xff]
                %337 = vst [vmem:[%s167 + $0x2a0] sm:$0xff] %v336
                %v338 = vld [vmem:[%s166 + $0xfc8] sm:$0xff]
                %339 = vst [vmem:[%s167 + $0x2a8] sm:$0xff] %v338
                %v340 = vld [vmem:[%s166 + $0x1020] sm:$0xff]
                %341 = vst [vmem:[%s167 + $0x2b0] sm:$0xff] %v340
                %v342 = vld [vmem:[%s166 + $0x1028] sm:$0xff]
                %343 = vst [vmem:[%s167 + $0x2b8] sm:$0xff] %v342
                %v344 = vld [vmem:[%s166 + $0x1080] sm:$0xff]
                %345 = vst [vmem:[%s167 + $0x2c0] sm:$0xff] %v344
                %v346 = vld [vmem:[%s166 + $0x1088] sm:$0xff]
                %347 = vst [vmem:[%s167 + $0x2c8] sm:$0xff] %v346
                %v348 = vld [vmem:[%s166 + $0x10e0] sm:$0xff]
                %349 = vst [vmem:[%s167 + $0x2d0] sm:$0xff] %v348
                %v350 = vld [vmem:[%s166 + $0x10e8] sm:$0xff]
                %351 = vst [vmem:[%s167 + $0x2d8] sm:$0xff] %v350
                %v352 = vld [vmem:[%s166 + $0x1140] sm:$0xff]
                %353 = vst [vmem:[%s167 + $0x2e0] sm:$0xff] %v352
                %v354 = vld [vmem:[%s166 + $0x1148] sm:$0xff]
                %355 = vst [vmem:[%s167 + $0x2e8] sm:$0xff] %v354
                %v356 = vld [vmem:[%s166 + $0x11a0] sm:$0xff]
                %357 = vst [vmem:[%s167 + $0x2f0] sm:$0xff] %v356
                %v358 = vld [vmem:[%s166 + $0x11a8] sm:$0xff]
                %359 = vst [vmem:[%s167 + $0x2f8] sm:$0xff] %v358
                %v360 = vld [vmem:[%s166 + $0x1200] sm:$0xff]
                %361 = vst [vmem:[%s167 + $0x300] sm:$0xff] %v360
                %v362 = vld [vmem:[%s166 + $0x1208] sm:$0xff]
                %363 = vst [vmem:[%s167 + $0x308] sm:$0xff] %v362
                %v364 = vld [vmem:[%s166 + $0x1260] sm:$0xff]
                %365 = vst [vmem:[%s167 + $0x310] sm:$0xff] %v364
                %v366 = vld [vmem:[%s166 + $0x1268] sm:$0xff]
                %367 = vst [vmem:[%s167 + $0x318] sm:$0xff] %v366
                %v368 = vld [vmem:[%s166 + $0x12c0] sm:$0xff]
                %369 = vst [vmem:[%s167 + $0x320] sm:$0xff] %v368
                %v370 = vld [vmem:[%s166 + $0x12c8] sm:$0xff]
                %371 = vst [vmem:[%s167 + $0x328] sm:$0xff] %v370
                %v372 = vld [vmem:[%s166 + $0x1320] sm:$0xff]
                %373 = vst [vmem:[%s167 + $0x330] sm:$0xff] %v372
                %v374 = vld [vmem:[%s166 + $0x1328] sm:$0xff]
                %375 = vst [vmem:[%s167 + $0x338] sm:$0xff] %v374
                %v376 = vld [vmem:[%s166 + $0x1380] sm:$0xff]
                %377 = vst [vmem:[%s167 + $0x340] sm:$0xff] %v376
                %v378 = vld [vmem:[%s166 + $0x1388] sm:$0xff]
                %379 = vst [vmem:[%s167 + $0x348] sm:$0xff] %v378
                %v380 = vld [vmem:[%s166 + $0x13e0] sm:$0xff]
                %381 = vst [vmem:[%s167 + $0x350] sm:$0xff] %v380
                %v382 = vld [vmem:[%s166 + $0x13e8] sm:$0xff]
                %383 = vst [vmem:[%s167 + $0x358] sm:$0xff] %v382
                %v384 = vld [vmem:[%s166 + $0x1440] sm:$0xff]
                %385 = vst [vmem:[%s167 + $0x360] sm:$0xff] %v384
                %v386 = vld [vmem:[%s166 + $0x1448] sm:$0xff]
                %387 = vst [vmem:[%s167 + $0x368] sm:$0xff] %v386
                %v388 = vld [vmem:[%s166 + $0x14a0] sm:$0xff]
                %389 = vst [vmem:[%s167 + $0x370] sm:$0xff] %v388
                %v390 = vld [vmem:[%s166 + $0x14a8] sm:$0xff]
                %391 = vst [vmem:[%s167 + $0x378] sm:$0xff] %v390
              $region41: #{simple_cnn5_forward.6} parent=35 // loop_footer
                %s165 = sadd.s32 1, %s161
              $region42: #{simple_cnn5_forward.6} parent=35 // loop_footer_branch
                %160 = sbr.rel target = $region38
              $region43: #{simple_cnn5_forward.6} parent=35 // loop_exit
                _
            $region36: #{simple_cnn5_forward.6} parent=31 // pred_fallthru
              _
            // Predicated region
            $region44: #{simple_cnn5_forward.6} parent=31 // pred_check
              _
            $region45: #{simple_cnn5_forward.6} parent=31 // pred_check_branch
              %393 = sbr.rel target = $region47
            $region46: #{simple_cnn5_forward.6} parent=31 // pred_region
              _
            $region47: #{simple_cnn5_forward.6} parent=31 // pred_fallthru
              _
          $region32: #{simple_cnn5_forward.6} parent=27 // pred_fallthru
            _
          %394 = vnop
        $region28: #{simple_cnn5_forward.6} parent=23 // pred_fallthru
          _
      $region24: #{simple_cnn5_forward.6} parent=5 // pred_fallthru
        _
      %p395 = scmp.le.s32.totalorder 1, %s9
      %p396 = scmp.lt.s32.totalorder %s9, 13
      %p397 = pnand %p395, %p396
      %p398 = pneg %p397
      // Predicated region
      $region48: #{simple_cnn5_forward.6} parent=5 // pred_check
        _
      $region49: #{simple_cnn5_forward.6} parent=5 // pred_check_branch
        %400 = sbr.rel (%p397) target = $region51
      $region50: #{simple_cnn5_forward.6} parent=5 // pred_region
        %s401 = ssub.s32 %s9, 1
        %s402 = sand.u32 %s36, 1
        %s403 = sand.u32 %s36, 1
        %s404 = smul.addr %s403, 896
        %s405 = scalar_lea.vmem [#allocation2], %s404
        // Predicated region
        $region52: #{simple_cnn5_forward.6} parent=50 // pred_check
          %p406 = pneg %p49
        $region53: #{simple_cnn5_forward.6} parent=50 // pred_check_branch
          %408 = sbr.rel (%p406) target = $region55
        $region54: #{simple_cnn5_forward.6} parent=50 // pred_region
          _
        $region55: #{simple_cnn5_forward.6} parent=50 // pred_fallthru
          _
        %s409 = sand.u32 %s36, 1
        %s410 = sand.u32 %s36, 1
        %s411 = smul.addr %s410, 896
        %s412 = scalar_lea.vmem [#allocation2], %s411
        %p413 = pneg %p49
        %p414 = pneg %p46
        %p415 = pneg %p70
        %p416 = pneg %p67
        %p417 = pneg %p91
        %p418 = pneg %p88
        %p419 = pneg %p119
        %p420 = pneg %p116
        %s421 = sand.u32 %s106, 1
        %s422 = sand.u32 %s106, 1
        %s423 = smul.addr %s422, 48
        %s424 = scalar_lea.vmem [#allocation3], %s423
        %s425 = smul.u32 4, %s19
        %s426 = smul.u32 4, %s19
        %v428 = vld [vmem:[%s1] sm:$0xf]
        %v429 = vld [vmem:[%s1 + $0x4] sm:$0xf]
        %v430 = vld [vmem:[%s1 + $0x8] sm:$0xf]
        %v431 = vld [vmem:[%s405] sm:$0xff]
        %v432 = vld [vmem:[%s405 + $0x8] sm:$0xff]
        %v433 = vld [vmem:[%s405 + $0x10] sm:$0xff]
        %v434 = vld [vmem:[%s405 + $0x18] sm:$0xff]
        %v435 = vld [vmem:[%s405 + $0x20] sm:$0xff]
        %v436 = vld [vmem:[%s405 + $0x28] sm:$0xff]
        %v437 = vld [vmem:[%s405 + $0x30] sm:$0xff]
        %v438 = vld [vmem:[%s405 + $0x38] sm:$0xff]
        %v439 = vld [vmem:[%s405 + $0x40] sm:$0xff]
        %v440 = vld [vmem:[%s405 + $0x48] sm:$0xff]
        %v441 = vld [vmem:[%s405 + $0x50] sm:$0xff]
        %v442 = vld [vmem:[%s405 + $0x58] sm:$0xff]
        %v443 = vld [vmem:[%s405 + $0x60] sm:$0xff]
        %v444 = vld [vmem:[%s405 + $0x68] sm:$0xff]
        %v445 = vld [vmem:[%s405 + $0x70] sm:$0xff]
        %v446 = vld [vmem:[%s405 + $0x78] sm:$0xff]
        %v447 = vld [vmem:[%s405 + $0x80] sm:$0xff]
        %v448 = vld [vmem:[%s405 + $0x88] sm:$0xff]
        %v449 = vld [vmem:[%s405 + $0x90] sm:$0xff]
        %v450 = vld [vmem:[%s405 + $0x98] sm:$0xff]
        %v451 = vld [vmem:[%s405 + $0xa0] sm:$0xff]
        %v452 = vld [vmem:[%s405 + $0xa8] sm:$0xff]
        %v453 = vld [vmem:[%s405 + $0xb0] sm:$0xff]
        %v454 = vld [vmem:[%s405 + $0xb8] sm:$0xff]
        %v455 = vld [vmem:[%s405 + $0xc0] sm:$0xff]
        %v456 = vld [vmem:[%s405 + $0xc8] sm:$0xff]
        %v457 = vld [vmem:[%s405 + $0xd0] sm:$0x33]
        %v458 = vld [vmem:[%s405 + $0xd8] sm:$0x33]
        %v462 = vunpack.c.l.b16 %v428
        %v463 = vunpack.c.l.b16 %v429
        %v464 = vunpack.c.l.b16 %v430
        %v465 = vpack.c.b16 %v463, %v462
        %v466 = vpack.c.b16 %v464, %v464
        %v495 = vunpack.c.l.b16 %v431
        %v496 = vunpack.c.h.b16 %v431
        %v497 = vunpack.c.l.b16 %v432
        %v498 = vunpack.c.h.b16 %v432
        %v499 = vunpack.c.l.b16 %v433
        %v500 = vunpack.c.h.b16 %v433
        %v501 = vunpack.c.l.b16 %v434
        %v502 = vunpack.c.h.b16 %v434
        %v503 = vunpack.c.l.b16 %v435
        %v504 = vunpack.c.h.b16 %v435
        %v505 = vunpack.c.l.b16 %v436
        %v506 = vunpack.c.h.b16 %v436
        %v507 = vunpack.c.l.b16 %v437
        %v508 = vunpack.c.h.b16 %v437
        %v509 = vunpack.c.l.b16 %v438
        %v510 = vunpack.c.h.b16 %v438
        %v511 = vunpack.c.l.b16 %v439
        %v512 = vunpack.c.h.b16 %v439
        %v513 = vunpack.c.l.b16 %v440
        %v514 = vunpack.c.h.b16 %v440
        %v515 = vunpack.c.l.b16 %v441
        %v516 = vunpack.c.h.b16 %v441
        %v517 = vunpack.c.l.b16 %v442
        %v518 = vunpack.c.h.b16 %v442
        %v519 = vunpack.c.l.b16 %v443
        %v520 = vunpack.c.h.b16 %v443
        %v521 = vunpack.c.l.b16 %v444
        %v522 = vunpack.c.h.b16 %v444
        %v523 = vunpack.c.l.b16 %v445
        %v524 = vunpack.c.h.b16 %v445
        %v525 = vunpack.c.l.b16 %v446
        %v526 = vunpack.c.h.b16 %v446
        %v527 = vunpack.c.l.b16 %v447
        %v528 = vunpack.c.h.b16 %v447
        %v529 = vunpack.c.l.b16 %v448
        %v530 = vunpack.c.h.b16 %v448
        %v531 = vunpack.c.l.b16 %v449
        %v532 = vunpack.c.h.b16 %v449
        %v533 = vunpack.c.l.b16 %v450
        %v534 = vunpack.c.h.b16 %v450
        %v535 = vunpack.c.l.b16 %v451
        %v536 = vunpack.c.h.b16 %v451
        %v537 = vunpack.c.l.b16 %v452
        %v538 = vunpack.c.h.b16 %v452
        %v539 = vunpack.c.l.b16 %v453
        %v540 = vunpack.c.h.b16 %v453
        %v541 = vunpack.c.l.b16 %v454
        %v542 = vunpack.c.h.b16 %v454
        %v543 = vunpack.c.l.b16 %v455
        %v544 = vunpack.c.h.b16 %v455
        %v545 = vunpack.c.l.b16 %v456
        %v546 = vunpack.c.h.b16 %v456
        %v547 = vunpack.c.l.b16 %v457
        %v548 = vunpack.c.h.b16 %v457
        %v549 = vunpack.c.l.b16 %v458
        %v550 = vunpack.c.h.b16 %v458
        %v551 = vpack.c.b16 %v499, %v495
        %v552 = vpack.c.b16 %v500, %v496
        %v553 = vpack.c.b16 %v501, %v497
        %v554 = vpack.c.b16 %v502, %v498
        %v555 = vpack.c.b16 %v507, %v503
        %v556 = vpack.c.b16 %v508, %v504
        %v557 = vpack.c.b16 %v509, %v505
        %v558 = vpack.c.b16 %v510, %v506
        %v559 = vpack.c.b16 %v515, %v511
        %v560 = vpack.c.b16 %v516, %v512
        %v561 = vpack.c.b16 %v517, %v513
        %v562 = vpack.c.b16 %v518, %v514
        %v563 = vpack.c.b16 %v523, %v519
        %v564 = vpack.c.b16 %v524, %v520
        %v565 = vpack.c.b16 %v525, %v521
        %v566 = vpack.c.b16 %v526, %v522
        %v567 = vpack.c.b16 %v531, %v527
        %v568 = vpack.c.b16 %v532, %v528
        %v569 = vpack.c.b16 %v533, %v529
        %v570 = vpack.c.b16 %v534, %v530
        %v571 = vpack.c.b16 %v539, %v535
        %v572 = vpack.c.b16 %v540, %v536
        %v573 = vpack.c.b16 %v541, %v537
        %v574 = vpack.c.b16 %v542, %v538
        %v575 = vpack.c.b16 %v547, %v543
        %v576 = vpack.c.b16 %v548, %v544
        %v577 = vpack.c.b16 %v549, %v545
        %v578 = vpack.c.b16 %v550, %v546
        %vm603 = vcmask 883712
        %v605 = vsel %vm603, %v465, 0
        %v608 = vsel %vm603, %v466, 0
        %vm610 = vcmask 1045504
        %v612 = vsel %vm610, %v575, 0
        %v615 = vsel %vm610, %v576, 0
        %v618 = vsel %vm610, %v577, 0
        %v621 = vsel %vm610, %v578, 0
        %623 = vmatprep.subr.bf16.mxu0 0
        %624 = vmatpush1.bf16.msra.mxu0 0
        %625 = vmatprep.subr.bf16.mxu0 %v615
        %626 = vmatpush1.bf16.msra.mxu0 %v612
        %627 = vmatprep.subr.bf16.mxu0 %v572
        %628 = vmatpush1.bf16.msra.mxu0 %v571
        %629 = vmatprep.subr.bf16.mxu0 %v568
        %630 = vmatpush1.bf16.msra.mxu0 %v567
        %631 = vmatprep.subr.bf16.mxu0 %v564
        %632 = vmatpush1.bf16.msra.mxu0 %v563
        %633 = vmatprep.subr.bf16.mxu0 %v560
        %634 = vmatpush1.bf16.msra.mxu0 %v559
        %635 = vmatprep.subr.bf16.mxu0 %v556
        %636 = vmatpush1.bf16.msra.mxu0 %v555
        %637 = vmatprep.subr.bf16.mxu0 %v552
        %638 = vmatpush1.bf16.msra.mxu0 %v551
        %639 = vmatprep.subr.bf16.mxu0 0
        %640 = vmatpush2.bf16.msra.mxu0 0
        %641 = vmatprep.subr.bf16.mxu0 0
        %642 = vmatpush2.bf16.msra.mxu0 0
        %643 = vmatprep.subr.bf16.mxu0 0
        %644 = vmatpush2.bf16.msra.mxu0 0
        %645 = vmatprep.subr.bf16.mxu0 0
        %646 = vmatpush2.bf16.msra.mxu0 0
        %647 = vmatprep.subr.bf16.mxu0 0
        %648 = vmatpush2.bf16.msra.mxu0 0
        %649 = vmatprep.subr.bf16.mxu0 0
        %650 = vmatpush2.bf16.msra.mxu0 0
        %651 = vmatprep.subr.bf16.mxu0 0
        %652 = vmatpush2.bf16.msra.mxu0 0
        %653 = vmatprep.subr.bf16.mxu0 0
        %654 = vmatpush2.bf16.msra.mxu0 0
        %655 = vmatprep.mubr.bf16.mxu0 0
        %656 = vmatmul.mubr.bf16.gmra.mxu0 %v605
        %v657 = vpop.f32.mrf.mxu0
        %v658 = vadd.f32 0.0, %v657
        %v659 = vpop.f32.mrf.mxu0
        %v660 = vadd.f32 0.0, %v659
        %v661 = vpop.f32.mrf.mxu0
        %v662 = vadd.f32 0.0, %v661
        %v663 = vpop.f32.mrf.mxu0
        %v664 = vadd.f32 0.0, %v663
        %665 = vmatprep.mubr.bf16.mxu0 0
        %666 = vmatmul.mubr.bf16.gmra.mxu0 %v608
        %v667 = vpop.f32.mrf.mxu0
        %v668 = vadd.f32 0.0, %v667
        %v669 = vpop.f32.mrf.mxu0
        %v670 = vadd.f32 0.0, %v669
        %v671 = vpop.f32.mrf.mxu0
        %v672 = vpop.f32.mrf.mxu0
        %673 = vdwg.mxu0
        %674 = vmatprep.subr.bf16.mxu0 0
        %675 = vmatpush1.bf16.msra.mxu0 0
        %676 = vmatprep.subr.bf16.mxu0 %v621
        %677 = vmatpush1.bf16.msra.mxu0 %v618
        %678 = vmatprep.subr.bf16.mxu0 %v574
        %679 = vmatpush1.bf16.msra.mxu0 %v573
        %680 = vmatprep.subr.bf16.mxu0 %v570
        %681 = vmatpush1.bf16.msra.mxu0 %v569
        %682 = vmatprep.subr.bf16.mxu0 %v566
        %683 = vmatpush1.bf16.msra.mxu0 %v565
        %684 = vmatprep.subr.bf16.mxu0 %v562
        %685 = vmatpush1.bf16.msra.mxu0 %v561
        %686 = vmatprep.subr.bf16.mxu0 %v558
        %687 = vmatpush1.bf16.msra.mxu0 %v557
        %688 = vmatprep.subr.bf16.mxu0 %v554
        %689 = vmatpush1.bf16.msra.mxu0 %v553
        %690 = vmatprep.subr.bf16.mxu0 0
        %691 = vmatpush2.bf16.msra.mxu0 0
        %692 = vmatprep.subr.bf16.mxu0 0
        %693 = vmatpush2.bf16.msra.mxu0 0
        %694 = vmatprep.subr.bf16.mxu0 0
        %695 = vmatpush2.bf16.msra.mxu0 0
        %696 = vmatprep.subr.bf16.mxu0 0
        %697 = vmatpush2.bf16.msra.mxu0 0
        %698 = vmatprep.subr.bf16.mxu0 0
        %699 = vmatpush2.bf16.msra.mxu0 0
        %700 = vmatprep.subr.bf16.mxu0 0
        %701 = vmatpush2.bf16.msra.mxu0 0
        %702 = vmatprep.subr.bf16.mxu0 0
        %703 = vmatpush2.bf16.msra.mxu0 0
        %704 = vmatprep.subr.bf16.mxu0 0
        %705 = vmatpush2.bf16.msra.mxu0 0
        %706 = vmatprep.mubr.bf16.mxu0 0
        %707 = vmatmul.mubr.bf16.gmra.mxu0 %v605
        %v708 = vpop.f32.mrf.mxu0
        %v709 = vadd.f32 0.0, %v708
        %v710 = vpop.f32.mrf.mxu0
        %v711 = vadd.f32 0.0, %v710
        %v712 = vpop.f32.mrf.mxu0
        %v713 = vadd.f32 0.0, %v712
        %v714 = vpop.f32.mrf.mxu0
        %v715 = vadd.f32 0.0, %v714
        %716 = vmatprep.mubr.bf16.mxu0 0
        %717 = vmatmul.mubr.bf16.gmra.mxu0 %v608
        %v718 = vpop.f32.mrf.mxu0
        %v719 = vadd.f32 0.0, %v718
        %v720 = vpop.f32.mrf.mxu0
        %v721 = vadd.f32 0.0, %v720
        %v722 = vpop.f32.mrf.mxu0
        %v723 = vpop.f32.mrf.mxu0
        %724 = vdwg.mxu0
        %s725 = scalar_lea.vmem %s405, 224 [#allocation2]
        %v726 = vld [vmem:[%s725] sm:$0xff]
        %v727 = vld [vmem:[%s725 + $0x8] sm:$0xff]
        %v728 = vld [vmem:[%s725 + $0x10] sm:$0xff]
        %v729 = vld [vmem:[%s725 + $0x18] sm:$0xff]
        %v730 = vld [vmem:[%s725 + $0x20] sm:$0xff]
        %v731 = vld [vmem:[%s725 + $0x28] sm:$0xff]
        %v732 = vld [vmem:[%s725 + $0x30] sm:$0xff]
        %v733 = vld [vmem:[%s725 + $0x38] sm:$0xff]
        %v734 = vld [vmem:[%s725 + $0x40] sm:$0xff]
        %v735 = vld [vmem:[%s725 + $0x48] sm:$0xff]
        %v736 = vld [vmem:[%s725 + $0x50] sm:$0xff]
        %v737 = vld [vmem:[%s725 + $0x58] sm:$0xff]
        %v738 = vld [vmem:[%s725 + $0x60] sm:$0xff]
        %v739 = vld [vmem:[%s725 + $0x68] sm:$0xff]
        %v740 = vld [vmem:[%s725 + $0x70] sm:$0xff]
        %v741 = vld [vmem:[%s725 + $0x78] sm:$0xff]
        %v742 = vld [vmem:[%s725 + $0x80] sm:$0xff]
        %v743 = vld [vmem:[%s725 + $0x88] sm:$0xff]
        %v744 = vld [vmem:[%s725 + $0x90] sm:$0xff]
        %v745 = vld [vmem:[%s725 + $0x98] sm:$0xff]
        %v746 = vld [vmem:[%s725 + $0xa0] sm:$0xff]
        %v747 = vld [vmem:[%s725 + $0xa8] sm:$0xff]
        %v748 = vld [vmem:[%s725 + $0xb0] sm:$0xff]
        %v749 = vld [vmem:[%s725 + $0xb8] sm:$0xff]
        %v750 = vld [vmem:[%s725 + $0xc0] sm:$0xff]
        %v751 = vld [vmem:[%s725 + $0xc8] sm:$0xff]
        %v752 = vld [vmem:[%s725 + $0xd0] sm:$0x33]
        %v753 = vld [vmem:[%s725 + $0xd8] sm:$0x33]
        %v782 = vunpack.c.l.b16 %v726
        %v783 = vunpack.c.h.b16 %v726
        %v784 = vunpack.c.l.b16 %v727
        %v785 = vunpack.c.h.b16 %v727
        %v786 = vunpack.c.l.b16 %v728
        %v787 = vunpack.c.h.b16 %v728
        %v788 = vunpack.c.l.b16 %v729
        %v789 = vunpack.c.h.b16 %v729
        %v790 = vunpack.c.l.b16 %v730
        %v791 = vunpack.c.h.b16 %v730
        %v792 = vunpack.c.l.b16 %v731
        %v793 = vunpack.c.h.b16 %v731
        %v794 = vunpack.c.l.b16 %v732
        %v795 = vunpack.c.h.b16 %v732
        %v796 = vunpack.c.l.b16 %v733
        %v797 = vunpack.c.h.b16 %v733
        %v798 = vunpack.c.l.b16 %v734
        %v799 = vunpack.c.h.b16 %v734
        %v800 = vunpack.c.l.b16 %v735
        %v801 = vunpack.c.h.b16 %v735
        %v802 = vunpack.c.l.b16 %v736
        %v803 = vunpack.c.h.b16 %v736
        %v804 = vunpack.c.l.b16 %v737
        %v805 = vunpack.c.h.b16 %v737
        %v806 = vunpack.c.l.b16 %v738
        %v807 = vunpack.c.h.b16 %v738
        %v808 = vunpack.c.l.b16 %v739
        %v809 = vunpack.c.h.b16 %v739
        %v810 = vunpack.c.l.b16 %v740
        %v811 = vunpack.c.h.b16 %v740
        %v812 = vunpack.c.l.b16 %v741
        %v813 = vunpack.c.h.b16 %v741
        %v814 = vunpack.c.l.b16 %v742
        %v815 = vunpack.c.h.b16 %v742
        %v816 = vunpack.c.l.b16 %v743
        %v817 = vunpack.c.h.b16 %v743
        %v818 = vunpack.c.l.b16 %v744
        %v819 = vunpack.c.h.b16 %v744
        %v820 = vunpack.c.l.b16 %v745
        %v821 = vunpack.c.h.b16 %v745
        %v822 = vunpack.c.l.b16 %v746
        %v823 = vunpack.c.h.b16 %v746
        %v824 = vunpack.c.l.b16 %v747
        %v825 = vunpack.c.h.b16 %v747
        %v826 = vunpack.c.l.b16 %v748
        %v827 = vunpack.c.h.b16 %v748
        %v828 = vunpack.c.l.b16 %v749
        %v829 = vunpack.c.h.b16 %v749
        %v830 = vunpack.c.l.b16 %v750
        %v831 = vunpack.c.h.b16 %v750
        %v832 = vunpack.c.l.b16 %v751
        %v833 = vunpack.c.h.b16 %v751
        %v834 = vunpack.c.l.b16 %v752
        %v835 = vunpack.c.h.b16 %v752
        %v836 = vunpack.c.l.b16 %v753
        %v837 = vunpack.c.h.b16 %v753
        %v838 = vpack.c.b16 %v786, %v782
        %v839 = vpack.c.b16 %v787, %v783
        %v840 = vpack.c.b16 %v788, %v784
        %v841 = vpack.c.b16 %v789, %v785
        %v842 = vpack.c.b16 %v794, %v790
        %v843 = vpack.c.b16 %v795, %v791
        %v844 = vpack.c.b16 %v796, %v792
        %v845 = vpack.c.b16 %v797, %v793
        %v846 = vpack.c.b16 %v802, %v798
        %v847 = vpack.c.b16 %v803, %v799
        %v848 = vpack.c.b16 %v804, %v800
        %v849 = vpack.c.b16 %v805, %v801
        %v850 = vpack.c.b16 %v810, %v806
        %v851 = vpack.c.b16 %v811, %v807
        %v852 = vpack.c.b16 %v812, %v808
        %v853 = vpack.c.b16 %v813, %v809
        %v854 = vpack.c.b16 %v818, %v814
        %v855 = vpack.c.b16 %v819, %v815
        %v856 = vpack.c.b16 %v820, %v816
        %v857 = vpack.c.b16 %v821, %v817
        %v858 = vpack.c.b16 %v826, %v822
        %v859 = vpack.c.b16 %v827, %v823
        %v860 = vpack.c.b16 %v828, %v824
        %v861 = vpack.c.b16 %v829, %v825
        %v862 = vpack.c.b16 %v834, %v830
        %v863 = vpack.c.b16 %v835, %v831
        %v864 = vpack.c.b16 %v836, %v832
        %v865 = vpack.c.b16 %v837, %v833
        %v891 = vsel %vm610, %v862, 0
        %v894 = vsel %vm610, %v863, 0
        %v897 = vsel %vm610, %v864, 0
        %v900 = vsel %vm610, %v865, 0
        %902 = vmatprep.subr.bf16.mxu0 0
        %903 = vmatpush1.bf16.msra.mxu0 0
        %904 = vmatprep.subr.bf16.mxu0 %v894
        %905 = vmatpush1.bf16.msra.mxu0 %v891
        %906 = vmatprep.subr.bf16.mxu0 %v859
        %907 = vmatpush1.bf16.msra.mxu0 %v858
        %908 = vmatprep.subr.bf16.mxu0 %v855
        %909 = vmatpush1.bf16.msra.mxu0 %v854
        %910 = vmatprep.subr.bf16.mxu0 %v851
        %911 = vmatpush1.bf16.msra.mxu0 %v850
        %912 = vmatprep.subr.bf16.mxu0 %v847
        %913 = vmatpush1.bf16.msra.mxu0 %v846
        %914 = vmatprep.subr.bf16.mxu0 %v843
        %915 = vmatpush1.bf16.msra.mxu0 %v842
        %916 = vmatprep.subr.bf16.mxu0 %v839
        %917 = vmatpush1.bf16.msra.mxu0 %v838
        %918 = vmatprep.subr.bf16.mxu0 0
        %919 = vmatpush2.bf16.msra.mxu0 0
        %920 = vmatprep.subr.bf16.mxu0 0
        %921 = vmatpush2.bf16.msra.mxu0 0
        %922 = vmatprep.subr.bf16.mxu0 0
        %923 = vmatpush2.bf16.msra.mxu0 0
        %924 = vmatprep.subr.bf16.mxu0 0
        %925 = vmatpush2.bf16.msra.mxu0 0
        %926 = vmatprep.subr.bf16.mxu0 0
        %927 = vmatpush2.bf16.msra.mxu0 0
        %928 = vmatprep.subr.bf16.mxu0 0
        %929 = vmatpush2.bf16.msra.mxu0 0
        %930 = vmatprep.subr.bf16.mxu0 0
        %931 = vmatpush2.bf16.msra.mxu0 0
        %932 = vmatprep.subr.bf16.mxu0 0
        %933 = vmatpush2.bf16.msra.mxu0 0
        %934 = vmatprep.mubr.bf16.mxu0 0
        %935 = vmatmul.mubr.bf16.gmra.mxu0 %v605
        %v936 = vpop.f32.mrf.mxu0
        %v937 = vadd.f32 0.0, %v936
        %v938 = vpop.f32.mrf.mxu0
        %v939 = vadd.f32 0.0, %v938
        %v940 = vpop.f32.mrf.mxu0
        %v941 = vadd.f32 0.0, %v940
        %v942 = vpop.f32.mrf.mxu0
        %v943 = vadd.f32 0.0, %v942
        %944 = vmatprep.mubr.bf16.mxu0 0
        %945 = vmatmul.mubr.bf16.gmra.mxu0 %v608
        %v946 = vpop.f32.mrf.mxu0
        %v947 = vadd.f32 0.0, %v946
        %v948 = vpop.f32.mrf.mxu0
        %v949 = vadd.f32 0.0, %v948
        %v950 = vpop.f32.mrf.mxu0
        %v951 = vpop.f32.mrf.mxu0
        %952 = vdwg.mxu0
        %953 = vmatprep.subr.bf16.mxu0 0
        %954 = vmatpush1.bf16.msra.mxu0 0
        %955 = vmatprep.subr.bf16.mxu0 %v900
        %956 = vmatpush1.bf16.msra.mxu0 %v897
        %957 = vmatprep.subr.bf16.mxu0 %v861
        %958 = vmatpush1.bf16.msra.mxu0 %v860
        %959 = vmatprep.subr.bf16.mxu0 %v857
        %960 = vmatpush1.bf16.msra.mxu0 %v856
        %961 = vmatprep.subr.bf16.mxu0 %v853
        %962 = vmatpush1.bf16.msra.mxu0 %v852
        %963 = vmatprep.subr.bf16.mxu0 %v849
        %964 = vmatpush1.bf16.msra.mxu0 %v848
        %965 = vmatprep.subr.bf16.mxu0 %v845
        %966 = vmatpush1.bf16.msra.mxu0 %v844
        %967 = vmatprep.subr.bf16.mxu0 %v841
        %968 = vmatpush1.bf16.msra.mxu0 %v840
        %969 = vmatprep.subr.bf16.mxu0 0
        %970 = vmatpush2.bf16.msra.mxu0 0
        %971 = vmatprep.subr.bf16.mxu0 0
        %972 = vmatpush2.bf16.msra.mxu0 0
        %973 = vmatprep.subr.bf16.mxu0 0
        %974 = vmatpush2.bf16.msra.mxu0 0
        %975 = vmatprep.subr.bf16.mxu0 0
        %976 = vmatpush2.bf16.msra.mxu0 0
        %977 = vmatprep.subr.bf16.mxu0 0
        %978 = vmatpush2.bf16.msra.mxu0 0
        %979 = vmatprep.subr.bf16.mxu0 0
        %980 = vmatpush2.bf16.msra.mxu0 0
        %981 = vmatprep.subr.bf16.mxu0 0
        %982 = vmatpush2.bf16.msra.mxu0 0
        %983 = vmatprep.subr.bf16.mxu0 0
        %984 = vmatpush2.bf16.msra.mxu0 0
        %985 = vmatprep.mubr.bf16.mxu0 0
        %986 = vmatmul.mubr.bf16.gmra.mxu0 %v605
        %v987 = vpop.f32.mrf.mxu0
        %v988 = vadd.f32 0.0, %v987
        %v989 = vpop.f32.mrf.mxu0
        %v990 = vadd.f32 0.0, %v989
        %v991 = vpop.f32.mrf.mxu0
        %v992 = vadd.f32 0.0, %v991
        %v993 = vpop.f32.mrf.mxu0
        %v994 = vadd.f32 0.0, %v993
        %995 = vmatprep.mubr.bf16.mxu0 0
        %996 = vmatmul.mubr.bf16.gmra.mxu0 %v608
        %v997 = vpop.f32.mrf.mxu0
        %v998 = vadd.f32 0.0, %v997
        %v999 = vpop.f32.mrf.mxu0
        %v1000 = vadd.f32 0.0, %v999
        %v1001 = vpop.f32.mrf.mxu0
        %v1002 = vpop.f32.mrf.mxu0
        %1003 = vdwg.mxu0
        %v1004 = vmax.f32 %v658, %v937
        %v1005 = vmax.f32 %v660, %v939
        %v1006 = vmax.f32 %v709, %v988
        %v1007 = vmax.f32 %v711, %v990
        %v1008 = vmax.f32 %v662, %v941
        %v1009 = vmax.f32 %v664, %v943
        %v1010 = vmax.f32 %v713, %v992
        %v1011 = vmax.f32 %v715, %v994
        %v1012 = vmax.f32 %v668, %v947
        %v1013 = vmax.f32 %v670, %v949
        %v1014 = vmax.f32 %v719, %v998
        %v1015 = vmax.f32 %v721, %v1000
        %s1016 = scalar_lea.vmem %s405, 448 [#allocation2]
        %v1017 = vld [vmem:[%s1016] sm:$0xff]
        %v1018 = vld [vmem:[%s1016 + $0x8] sm:$0xff]
        %v1019 = vld [vmem:[%s1016 + $0x10] sm:$0xff]
        %v1020 = vld [vmem:[%s1016 + $0x18] sm:$0xff]
        %v1021 = vld [vmem:[%s1016 + $0x20] sm:$0xff]
        %v1022 = vld [vmem:[%s1016 + $0x28] sm:$0xff]
        %v1023 = vld [vmem:[%s1016 + $0x30] sm:$0xff]
        %v1024 = vld [vmem:[%s1016 + $0x38] sm:$0xff]
        %v1025 = vld [vmem:[%s1016 + $0x40] sm:$0xff]
        %v1026 = vld [vmem:[%s1016 + $0x48] sm:$0xff]
        %v1027 = vld [vmem:[%s1016 + $0x50] sm:$0xff]
        %v1028 = vld [vmem:[%s1016 + $0x58] sm:$0xff]
        %v1029 = vld [vmem:[%s1016 + $0x60] sm:$0xff]
        %v1030 = vld [vmem:[%s1016 + $0x68] sm:$0xff]
        %v1031 = vld [vmem:[%s1016 + $0x70] sm:$0xff]
        %v1032 = vld [vmem:[%s1016 + $0x78] sm:$0xff]
        %v1033 = vld [vmem:[%s1016 + $0x80] sm:$0xff]
        %v1034 = vld [vmem:[%s1016 + $0x88] sm:$0xff]
        %v1035 = vld [vmem:[%s1016 + $0x90] sm:$0xff]
        %v1036 = vld [vmem:[%s1016 + $0x98] sm:$0xff]
        %v1037 = vld [vmem:[%s1016 + $0xa0] sm:$0xff]
        %v1038 = vld [vmem:[%s1016 + $0xa8] sm:$0xff]
        %v1039 = vld [vmem:[%s1016 + $0xb0] sm:$0xff]
        %v1040 = vld [vmem:[%s1016 + $0xb8] sm:$0xff]
        %v1041 = vld [vmem:[%s1016 + $0xc0] sm:$0xff]
        %v1042 = vld [vmem:[%s1016 + $0xc8] sm:$0xff]
        %v1043 = vld [vmem:[%s1016 + $0xd0] sm:$0x33]
        %v1044 = vld [vmem:[%s1016 + $0xd8] sm:$0x33]
        %v1073 = vunpack.c.l.b16 %v1017
        %v1074 = vunpack.c.h.b16 %v1017
        %v1075 = vunpack.c.l.b16 %v1018
        %v1076 = vunpack.c.h.b16 %v1018
        %v1077 = vunpack.c.l.b16 %v1019
        %v1078 = vunpack.c.h.b16 %v1019
        %v1079 = vunpack.c.l.b16 %v1020
        %v1080 = vunpack.c.h.b16 %v1020
        %v1081 = vunpack.c.l.b16 %v1021
        %v1082 = vunpack.c.h.b16 %v1021
        %v1083 = vunpack.c.l.b16 %v1022
        %v1084 = vunpack.c.h.b16 %v1022
        %v1085 = vunpack.c.l.b16 %v1023
        %v1086 = vunpack.c.h.b16 %v1023
        %v1087 = vunpack.c.l.b16 %v1024
        %v1088 = vunpack.c.h.b16 %v1024
        %v1089 = vunpack.c.l.b16 %v1025
        %v1090 = vunpack.c.h.b16 %v1025
        %v1091 = vunpack.c.l.b16 %v1026
        %v1092 = vunpack.c.h.b16 %v1026
        %v1093 = vunpack.c.l.b16 %v1027
        %v1094 = vunpack.c.h.b16 %v1027
        %v1095 = vunpack.c.l.b16 %v1028
        %v1096 = vunpack.c.h.b16 %v1028
        %v1097 = vunpack.c.l.b16 %v1029
        %v1098 = vunpack.c.h.b16 %v1029
        %v1099 = vunpack.c.l.b16 %v1030
        %v1100 = vunpack.c.h.b16 %v1030
        %v1101 = vunpack.c.l.b16 %v1031
        %v1102 = vunpack.c.h.b16 %v1031
        %v1103 = vunpack.c.l.b16 %v1032
        %v1104 = vunpack.c.h.b16 %v1032
        %v1105 = vunpack.c.l.b16 %v1033
        %v1106 = vunpack.c.h.b16 %v1033
        %v1107 = vunpack.c.l.b16 %v1034
        %v1108 = vunpack.c.h.b16 %v1034
        %v1109 = vunpack.c.l.b16 %v1035
        %v1110 = vunpack.c.h.b16 %v1035
        %v1111 = vunpack.c.l.b16 %v1036
        %v1112 = vunpack.c.h.b16 %v1036
        %v1113 = vunpack.c.l.b16 %v1037
        %v1114 = vunpack.c.h.b16 %v1037
        %v1115 = vunpack.c.l.b16 %v1038
        %v1116 = vunpack.c.h.b16 %v1038
        %v1117 = vunpack.c.l.b16 %v1039
        %v1118 = vunpack.c.h.b16 %v1039
        %v1119 = vunpack.c.l.b16 %v1040
        %v1120 = vunpack.c.h.b16 %v1040
        %v1121 = vunpack.c.l.b16 %v1041
        %v1122 = vunpack.c.h.b16 %v1041
        %v1123 = vunpack.c.l.b16 %v1042
        %v1124 = vunpack.c.h.b16 %v1042
        %v1125 = vunpack.c.l.b16 %v1043
        %v1126 = vunpack.c.h.b16 %v1043
        %v1127 = vunpack.c.l.b16 %v1044
        %v1128 = vunpack.c.h.b16 %v1044
        %v1129 = vpack.c.b16 %v1077, %v1073
        %v1130 = vpack.c.b16 %v1078, %v1074
        %v1131 = vpack.c.b16 %v1079, %v1075
        %v1132 = vpack.c.b16 %v1080, %v1076
        %v1133 = vpack.c.b16 %v1085, %v1081
        %v1134 = vpack.c.b16 %v1086, %v1082
        %v1135 = vpack.c.b16 %v1087, %v1083
        %v1136 = vpack.c.b16 %v1088, %v1084
        %v1137 = vpack.c.b16 %v1093, %v1089
        %v1138 = vpack.c.b16 %v1094, %v1090
        %v1139 = vpack.c.b16 %v1095, %v1091
        %v1140 = vpack.c.b16 %v1096, %v1092
        %v1141 = vpack.c.b16 %v1101, %v1097
        %v1142 = vpack.c.b16 %v1102, %v1098
        %v1143 = vpack.c.b16 %v1103, %v1099
        %v1144 = vpack.c.b16 %v1104, %v1100
        %v1145 = vpack.c.b16 %v1109, %v1105
        %v1146 = vpack.c.b16 %v1110, %v1106
        %v1147 = vpack.c.b16 %v1111, %v1107
        %v1148 = vpack.c.b16 %v1112, %v1108
        %v1149 = vpack.c.b16 %v1117, %v1113
        %v1150 = vpack.c.b16 %v1118, %v1114
        %v1151 = vpack.c.b16 %v1119, %v1115
        %v1152 = vpack.c.b16 %v1120, %v1116
        %v1153 = vpack.c.b16 %v1125, %v1121
        %v1154 = vpack.c.b16 %v1126, %v1122
        %v1155 = vpack.c.b16 %v1127, %v1123
        %v1156 = vpack.c.b16 %v1128, %v1124
        %v1182 = vsel %vm610, %v1153, 0
        %v1185 = vsel %vm610, %v1154, 0
        %v1188 = vsel %vm610, %v1155, 0
        %v1191 = vsel %vm610, %v1156, 0
        %1193 = vmatprep.subr.bf16.mxu0 0
        %1194 = vmatpush1.bf16.msra.mxu0 0
        %1195 = vmatprep.subr.bf16.mxu0 %v1185
        %1196 = vmatpush1.bf16.msra.mxu0 %v1182
        %1197 = vmatprep.subr.bf16.mxu0 %v1150
        %1198 = vmatpush1.bf16.msra.mxu0 %v1149
        %1199 = vmatprep.subr.bf16.mxu0 %v1146
        %1200 = vmatpush1.bf16.msra.mxu0 %v1145
        %1201 = vmatprep.subr.bf16.mxu0 %v1142
        %1202 = vmatpush1.bf16.msra.mxu0 %v1141
        %1203 = vmatprep.subr.bf16.mxu0 %v1138
        %1204 = vmatpush1.bf16.msra.mxu0 %v1137
        %1205 = vmatprep.subr.bf16.mxu0 %v1134
        %1206 = vmatpush1.bf16.msra.mxu0 %v1133
        %1207 = vmatprep.subr.bf16.mxu0 %v1130
        %1208 = vmatpush1.bf16.msra.mxu0 %v1129
        %1209 = vmatprep.subr.bf16.mxu0 0
        %1210 = vmatpush2.bf16.msra.mxu0 0
        %1211 = vmatprep.subr.bf16.mxu0 0
        %1212 = vmatpush2.bf16.msra.mxu0 0
        %1213 = vmatprep.subr.bf16.mxu0 0
        %1214 = vmatpush2.bf16.msra.mxu0 0
        %1215 = vmatprep.subr.bf16.mxu0 0
        %1216 = vmatpush2.bf16.msra.mxu0 0
        %1217 = vmatprep.subr.bf16.mxu0 0
        %1218 = vmatpush2.bf16.msra.mxu0 0
        %1219 = vmatprep.subr.bf16.mxu0 0
        %1220 = vmatpush2.bf16.msra.mxu0 0
        %1221 = vmatprep.subr.bf16.mxu0 0
        %1222 = vmatpush2.bf16.msra.mxu0 0
        %1223 = vmatprep.subr.bf16.mxu0 0
        %1224 = vmatpush2.bf16.msra.mxu0 0
        %1225 = vmatprep.mubr.bf16.mxu0 0
        %1226 = vmatmul.mubr.bf16.gmra.mxu0 %v605
        %v1227 = vpop.f32.mrf.mxu0
        %v1228 = vadd.f32 0.0, %v1227
        %v1229 = vpop.f32.mrf.mxu0
        %v1230 = vadd.f32 0.0, %v1229
        %v1231 = vpop.f32.mrf.mxu0
        %v1232 = vadd.f32 0.0, %v1231
        %v1233 = vpop.f32.mrf.mxu0
        %v1234 = vadd.f32 0.0, %v1233
        %1235 = vmatprep.mubr.bf16.mxu0 0
        %1236 = vmatmul.mubr.bf16.gmra.mxu0 %v608
        %v1237 = vpop.f32.mrf.mxu0
        %v1238 = vadd.f32 0.0, %v1237
        %v1239 = vpop.f32.mrf.mxu0
        %v1240 = vadd.f32 0.0, %v1239
        %v1241 = vpop.f32.mrf.mxu0
        %v1242 = vpop.f32.mrf.mxu0
        %1243 = vdwg.mxu0
        %1244 = vmatprep.subr.bf16.mxu0 0
        %1245 = vmatpush1.bf16.msra.mxu0 0
        %1246 = vmatprep.subr.bf16.mxu0 %v1191
        %1247 = vmatpush1.bf16.msra.mxu0 %v1188
        %1248 = vmatprep.subr.bf16.mxu0 %v1152
        %1249 = vmatpush1.bf16.msra.mxu0 %v1151
        %1250 = vmatprep.subr.bf16.mxu0 %v1148
        %1251 = vmatpush1.bf16.msra.mxu0 %v1147
        %1252 = vmatprep.subr.bf16.mxu0 %v1144
        %1253 = vmatpush1.bf16.msra.mxu0 %v1143
        %1254 = vmatprep.subr.bf16.mxu0 %v1140
        %1255 = vmatpush1.bf16.msra.mxu0 %v1139
        %1256 = vmatprep.subr.bf16.mxu0 %v1136
        %1257 = vmatpush1.bf16.msra.mxu0 %v1135
        %1258 = vmatprep.subr.bf16.mxu0 %v1132
        %1259 = vmatpush1.bf16.msra.mxu0 %v1131
        %1260 = vmatprep.subr.bf16.mxu0 0
        %1261 = vmatpush2.bf16.msra.mxu0 0
        %1262 = vmatprep.subr.bf16.mxu0 0
        %1263 = vmatpush2.bf16.msra.mxu0 0
        %1264 = vmatprep.subr.bf16.mxu0 0
        %1265 = vmatpush2.bf16.msra.mxu0 0
        %1266 = vmatprep.subr.bf16.mxu0 0
        %1267 = vmatpush2.bf16.msra.mxu0 0
        %1268 = vmatprep.subr.bf16.mxu0 0
        %1269 = vmatpush2.bf16.msra.mxu0 0
        %1270 = vmatprep.subr.bf16.mxu0 0
        %1271 = vmatpush2.bf16.msra.mxu0 0
        %1272 = vmatprep.subr.bf16.mxu0 0
        %1273 = vmatpush2.bf16.msra.mxu0 0
        %1274 = vmatprep.subr.bf16.mxu0 0
        %1275 = vmatpush2.bf16.msra.mxu0 0
        %1276 = vmatprep.mubr.bf16.mxu0 0
        %1277 = vmatmul.mubr.bf16.gmra.mxu0 %v605
        %v1278 = vpop.f32.mrf.mxu0
        %v1279 = vadd.f32 0.0, %v1278
        %v1280 = vpop.f32.mrf.mxu0
        %v1281 = vadd.f32 0.0, %v1280
        %v1282 = vpop.f32.mrf.mxu0
        %v1283 = vadd.f32 0.0, %v1282
        %v1284 = vpop.f32.mrf.mxu0
        %v1285 = vadd.f32 0.0, %v1284
        %1286 = vmatprep.mubr.bf16.mxu0 0
        %1287 = vmatmul.mubr.bf16.gmra.mxu0 %v608
        %v1288 = vpop.f32.mrf.mxu0
        %v1289 = vadd.f32 0.0, %v1288
        %v1290 = vpop.f32.mrf.mxu0
        %v1291 = vadd.f32 0.0, %v1290
        %v1292 = vpop.f32.mrf.mxu0
        %v1293 = vpop.f32.mrf.mxu0
        %1294 = vdwg.mxu0
        %v1295 = vmax.f32 %v1004, %v1228
        %v1296 = vmax.f32 %v1005, %v1230
        %v1297 = vmax.f32 %v1006, %v1279
        %v1298 = vmax.f32 %v1007, %v1281
        %v1299 = vmax.f32 %v1008, %v1232
        %v1300 = vmax.f32 %v1009, %v1234
        %v1301 = vmax.f32 %v1010, %v1283
        %v1302 = vmax.f32 %v1011, %v1285
        %v1303 = vmax.f32 %v1012, %v1238
        %v1304 = vmax.f32 %v1013, %v1240
        %v1305 = vmax.f32 %v1014, %v1289
        %v1306 = vmax.f32 %v1015, %v1291
        %s1307 = scalar_lea.vmem %s405, 672 [#allocation2]
        %v1308 = vld [vmem:[%s1307] sm:$0xff]
        %v1309 = vld [vmem:[%s1307 + $0x8] sm:$0xff]
        %v1310 = vld [vmem:[%s1307 + $0x10] sm:$0xff]
        %v1311 = vld [vmem:[%s1307 + $0x18] sm:$0xff]
        %v1312 = vld [vmem:[%s1307 + $0x20] sm:$0xff]
        %v1313 = vld [vmem:[%s1307 + $0x28] sm:$0xff]
        %v1314 = vld [vmem:[%s1307 + $0x30] sm:$0xff]
        %v1315 = vld [vmem:[%s1307 + $0x38] sm:$0xff]
        %v1316 = vld [vmem:[%s1307 + $0x40] sm:$0xff]
        %v1317 = vld [vmem:[%s1307 + $0x48] sm:$0xff]
        %v1318 = vld [vmem:[%s1307 + $0x50] sm:$0xff]
        %v1319 = vld [vmem:[%s1307 + $0x58] sm:$0xff]
        %v1320 = vld [vmem:[%s1307 + $0x60] sm:$0xff]
        %v1321 = vld [vmem:[%s1307 + $0x68] sm:$0xff]
        %v1322 = vld [vmem:[%s1307 + $0x70] sm:$0xff]
        %v1323 = vld [vmem:[%s1307 + $0x78] sm:$0xff]
        %v1324 = vld [vmem:[%s1307 + $0x80] sm:$0xff]
        %v1325 = vld [vmem:[%s1307 + $0x88] sm:$0xff]
        %v1326 = vld [vmem:[%s1307 + $0x90] sm:$0xff]
        %v1327 = vld [vmem:[%s1307 + $0x98] sm:$0xff]
        %v1328 = vld [vmem:[%s1307 + $0xa0] sm:$0xff]
        %v1329 = vld [vmem:[%s1307 + $0xa8] sm:$0xff]
        %v1330 = vld [vmem:[%s1307 + $0xb0] sm:$0xff]
        %v1331 = vld [vmem:[%s1307 + $0xb8] sm:$0xff]
        %v1332 = vld [vmem:[%s1307 + $0xc0] sm:$0xff]
        %v1333 = vld [vmem:[%s1307 + $0xc8] sm:$0xff]
        %v1334 = vld [vmem:[%s1307 + $0xd0] sm:$0x33]
        %v1335 = vld [vmem:[%s1307 + $0xd8] sm:$0x33]
        %v1364 = vunpack.c.l.b16 %v1308
        %v1365 = vunpack.c.h.b16 %v1308
        %v1366 = vunpack.c.l.b16 %v1309
        %v1367 = vunpack.c.h.b16 %v1309
        %v1368 = vunpack.c.l.b16 %v1310
        %v1369 = vunpack.c.h.b16 %v1310
        %v1370 = vunpack.c.l.b16 %v1311
        %v1371 = vunpack.c.h.b16 %v1311
        %v1372 = vunpack.c.l.b16 %v1312
        %v1373 = vunpack.c.h.b16 %v1312
        %v1374 = vunpack.c.l.b16 %v1313
        %v1375 = vunpack.c.h.b16 %v1313
        %v1376 = vunpack.c.l.b16 %v1314
        %v1377 = vunpack.c.h.b16 %v1314
        %v1378 = vunpack.c.l.b16 %v1315
        %v1379 = vunpack.c.h.b16 %v1315
        %v1380 = vunpack.c.l.b16 %v1316
        %v1381 = vunpack.c.h.b16 %v1316
        %v1382 = vunpack.c.l.b16 %v1317
        %v1383 = vunpack.c.h.b16 %v1317
        %v1384 = vunpack.c.l.b16 %v1318
        %v1385 = vunpack.c.h.b16 %v1318
        %v1386 = vunpack.c.l.b16 %v1319
        %v1387 = vunpack.c.h.b16 %v1319
        %v1388 = vunpack.c.l.b16 %v1320
        %v1389 = vunpack.c.h.b16 %v1320
        %v1390 = vunpack.c.l.b16 %v1321
        %v1391 = vunpack.c.h.b16 %v1321
        %v1392 = vunpack.c.l.b16 %v1322
        %v1393 = vunpack.c.h.b16 %v1322
        %v1394 = vunpack.c.l.b16 %v1323
        %v1395 = vunpack.c.h.b16 %v1323
        %v1396 = vunpack.c.l.b16 %v1324
        %v1397 = vunpack.c.h.b16 %v1324
        %v1398 = vunpack.c.l.b16 %v1325
        %v1399 = vunpack.c.h.b16 %v1325
        %v1400 = vunpack.c.l.b16 %v1326
        %v1401 = vunpack.c.h.b16 %v1326
        %v1402 = vunpack.c.l.b16 %v1327
        %v1403 = vunpack.c.h.b16 %v1327
        %v1404 = vunpack.c.l.b16 %v1328
        %v1405 = vunpack.c.h.b16 %v1328
        %v1406 = vunpack.c.l.b16 %v1329
        %v1407 = vunpack.c.h.b16 %v1329
        %v1408 = vunpack.c.l.b16 %v1330
        %v1409 = vunpack.c.h.b16 %v1330
        %v1410 = vunpack.c.l.b16 %v1331
        %v1411 = vunpack.c.h.b16 %v1331
        %v1412 = vunpack.c.l.b16 %v1332
        %v1413 = vunpack.c.h.b16 %v1332
        %v1414 = vunpack.c.l.b16 %v1333
        %v1415 = vunpack.c.h.b16 %v1333
        %v1416 = vunpack.c.l.b16 %v1334
        %v1417 = vunpack.c.h.b16 %v1334
        %v1418 = vunpack.c.l.b16 %v1335
        %v1419 = vunpack.c.h.b16 %v1335
        %v1420 = vpack.c.b16 %v1368, %v1364
        %v1421 = vpack.c.b16 %v1369, %v1365
        %v1422 = vpack.c.b16 %v1370, %v1366
        %v1423 = vpack.c.b16 %v1371, %v1367
        %v1424 = vpack.c.b16 %v1376, %v1372
        %v1425 = vpack.c.b16 %v1377, %v1373
        %v1426 = vpack.c.b16 %v1378, %v1374
        %v1427 = vpack.c.b16 %v1379, %v1375
        %v1428 = vpack.c.b16 %v1384, %v1380
        %v1429 = vpack.c.b16 %v1385, %v1381
        %v1430 = vpack.c.b16 %v1386, %v1382
        %v1431 = vpack.c.b16 %v1387, %v1383
        %v1432 = vpack.c.b16 %v1392, %v1388
        %v1433 = vpack.c.b16 %v1393, %v1389
        %v1434 = vpack.c.b16 %v1394, %v1390
        %v1435 = vpack.c.b16 %v1395, %v1391
        %v1436 = vpack.c.b16 %v1400, %v1396
        %v1437 = vpack.c.b16 %v1401, %v1397
        %v1438 = vpack.c.b16 %v1402, %v1398
        %v1439 = vpack.c.b16 %v1403, %v1399
        %v1440 = vpack.c.b16 %v1408, %v1404
        %v1441 = vpack.c.b16 %v1409, %v1405
        %v1442 = vpack.c.b16 %v1410, %v1406
        %v1443 = vpack.c.b16 %v1411, %v1407
        %v1444 = vpack.c.b16 %v1416, %v1412
        %v1445 = vpack.c.b16 %v1417, %v1413
        %v1446 = vpack.c.b16 %v1418, %v1414
        %v1447 = vpack.c.b16 %v1419, %v1415
        %v1473 = vsel %vm610, %v1444, 0
        %v1476 = vsel %vm610, %v1445, 0
        %v1479 = vsel %vm610, %v1446, 0
        %v1482 = vsel %vm610, %v1447, 0
        %1484 = vmatprep.subr.bf16.mxu0 0
        %1485 = vmatpush1.bf16.msra.mxu0 0
        %1486 = vmatprep.subr.bf16.mxu0 %v1476
        %1487 = vmatpush1.bf16.msra.mxu0 %v1473
        %1488 = vmatprep.subr.bf16.mxu0 %v1441
        %1489 = vmatpush1.bf16.msra.mxu0 %v1440
        %1490 = vmatprep.subr.bf16.mxu0 %v1437
        %1491 = vmatpush1.bf16.msra.mxu0 %v1436
        %1492 = vmatprep.subr.bf16.mxu0 %v1433
        %1493 = vmatpush1.bf16.msra.mxu0 %v1432
        %1494 = vmatprep.subr.bf16.mxu0 %v1429
        %1495 = vmatpush1.bf16.msra.mxu0 %v1428
        %1496 = vmatprep.subr.bf16.mxu0 %v1425
        %1497 = vmatpush1.bf16.msra.mxu0 %v1424
        %1498 = vmatprep.subr.bf16.mxu0 %v1421
        %1499 = vmatpush1.bf16.msra.mxu0 %v1420
        %1500 = vmatprep.subr.bf16.mxu0 0
        %1501 = vmatpush2.bf16.msra.mxu0 0
        %1502 = vmatprep.subr.bf16.mxu0 0
        %1503 = vmatpush2.bf16.msra.mxu0 0
        %1504 = vmatprep.subr.bf16.mxu0 0
        %1505 = vmatpush2.bf16.msra.mxu0 0
        %1506 = vmatprep.subr.bf16.mxu0 0
        %1507 = vmatpush2.bf16.msra.mxu0 0
        %1508 = vmatprep.subr.bf16.mxu0 0
        %1509 = vmatpush2.bf16.msra.mxu0 0
        %1510 = vmatprep.subr.bf16.mxu0 0
        %1511 = vmatpush2.bf16.msra.mxu0 0
        %1512 = vmatprep.subr.bf16.mxu0 0
        %1513 = vmatpush2.bf16.msra.mxu0 0
        %1514 = vmatprep.subr.bf16.mxu0 0
        %1515 = vmatpush2.bf16.msra.mxu0 0
        %1516 = vmatprep.mubr.bf16.mxu0 0
        %1517 = vmatmul.mubr.bf16.gmra.mxu0 %v605
        %v1518 = vpop.f32.mrf.mxu0
        %v1519 = vadd.f32 0.0, %v1518
        %v1520 = vpop.f32.mrf.mxu0
        %v1521 = vadd.f32 0.0, %v1520
        %v1522 = vpop.f32.mrf.mxu0
        %v1523 = vadd.f32 0.0, %v1522
        %v1524 = vpop.f32.mrf.mxu0
        %v1525 = vadd.f32 0.0, %v1524
        %1526 = vmatprep.mubr.bf16.mxu0 0
        %1527 = vmatmul.mubr.bf16.gmra.mxu0 %v608
        %v1528 = vpop.f32.mrf.mxu0
        %v1529 = vadd.f32 0.0, %v1528
        %v1530 = vpop.f32.mrf.mxu0
        %v1531 = vadd.f32 0.0, %v1530
        %v1532 = vpop.f32.mrf.mxu0
        %v1533 = vpop.f32.mrf.mxu0
        %1534 = vdwg.mxu0
        %1535 = vmatprep.subr.bf16.mxu0 0
        %1536 = vmatpush1.bf16.msra.mxu0 0
        %1537 = vmatprep.subr.bf16.mxu0 %v1482
        %1538 = vmatpush1.bf16.msra.mxu0 %v1479
        %1539 = vmatprep.subr.bf16.mxu0 %v1443
        %1540 = vmatpush1.bf16.msra.mxu0 %v1442
        %1541 = vmatprep.subr.bf16.mxu0 %v1439
        %1542 = vmatpush1.bf16.msra.mxu0 %v1438
        %1543 = vmatprep.subr.bf16.mxu0 %v1435
        %1544 = vmatpush1.bf16.msra.mxu0 %v1434
        %1545 = vmatprep.subr.bf16.mxu0 %v1431
        %1546 = vmatpush1.bf16.msra.mxu0 %v1430
        %1547 = vmatprep.subr.bf16.mxu0 %v1427
        %1548 = vmatpush1.bf16.msra.mxu0 %v1426
        %1549 = vmatprep.subr.bf16.mxu0 %v1423
        %1550 = vmatpush1.bf16.msra.mxu0 %v1422
        %1551 = vmatprep.subr.bf16.mxu0 0
        %1552 = vmatpush2.bf16.msra.mxu0 0
        %1553 = vmatprep.subr.bf16.mxu0 0
        %1554 = vmatpush2.bf16.msra.mxu0 0
        %1555 = vmatprep.subr.bf16.mxu0 0
        %1556 = vmatpush2.bf16.msra.mxu0 0
        %1557 = vmatprep.subr.bf16.mxu0 0
        %1558 = vmatpush2.bf16.msra.mxu0 0
        %1559 = vmatprep.subr.bf16.mxu0 0
        %1560 = vmatpush2.bf16.msra.mxu0 0
        %1561 = vmatprep.subr.bf16.mxu0 0
        %1562 = vmatpush2.bf16.msra.mxu0 0
        %1563 = vmatprep.subr.bf16.mxu0 0
        %1564 = vmatpush2.bf16.msra.mxu0 0
        %1565 = vmatprep.subr.bf16.mxu0 0
        %1566 = vmatpush2.bf16.msra.mxu0 0
        %1567 = vmatprep.mubr.bf16.mxu0 0
        %1568 = vmatmul.mubr.bf16.gmra.mxu0 %v605
        %v1569 = vpop.f32.mrf.mxu0
        %v1570 = vadd.f32 0.0, %v1569
        %v1571 = vpop.f32.mrf.mxu0
        %v1572 = vadd.f32 0.0, %v1571
        %v1573 = vpop.f32.mrf.mxu0
        %v1574 = vadd.f32 0.0, %v1573
        %v1575 = vpop.f32.mrf.mxu0
        %v1576 = vadd.f32 0.0, %v1575
        %1577 = vmatprep.mubr.bf16.mxu0 0
        %1578 = vmatmul.mubr.bf16.gmra.mxu0 %v608
        %v1579 = vpop.f32.mrf.mxu0
        %v1580 = vadd.f32 0.0, %v1579
        %v1581 = vpop.f32.mrf.mxu0
        %v1582 = vadd.f32 0.0, %v1581
        %v1583 = vpop.f32.mrf.mxu0
        %v1584 = vpop.f32.mrf.mxu0
        %1585 = vdwg.mxu0
        %v1586 = vmax.f32 %v1295, %v1519
        %v1587 = vmax.f32 %v1296, %v1521
        %v1588 = vmax.f32 %v1297, %v1570
        %v1589 = vmax.f32 %v1298, %v1572
        %v1590 = vmax.f32 %v1299, %v1523
        %v1591 = vmax.f32 %v1300, %v1525
        %v1592 = vmax.f32 %v1301, %v1574
        %v1593 = vmax.f32 %v1302, %v1576
        %v1594 = vmax.f32 %v1303, %v1529
        %v1595 = vmax.f32 %v1304, %v1531
        %v1596 = vmax.f32 %v1305, %v1580
        %v1597 = vmax.f32 %v1306, %v1582
        %v1598 = vld [vmem:[%s2] sm:$0xff]
        %v1599 = vld [vmem:[%s2 + $0x8] sm:$0xff]
        %v1600 = vld [vmem:[%s2 + $0x10] sm:$0xff]
        %1602 = vset.pattern.permute.xlu0 0
        %1603 = vperm.xlu0 %1602, %v1598
        %v1604 = vpop.permute.xlu0 %1603
        %1607 = vset.pattern.permute.xlu0 0
        %1608 = vperm.xlu0 %1607, %v1599
        %v1609 = vpop.permute.xlu0 %1608
        %1612 = vset.pattern.permute.xlu0 0
        %1613 = vperm.xlu0 %1612, %v1600
        %v1614 = vpop.permute.xlu0 %1613
        %v1616 = vadd.f32 %v1586, %v1604
        %v1617 = vadd.f32 %v1587, %v1604
        %v1618 = vadd.f32 %v1588, %v1604
        %v1619 = vadd.f32 %v1589, %v1604
        %v1620 = vadd.f32 %v1590, %v1609
        %v1621 = vadd.f32 %v1591, %v1609
        %v1622 = vadd.f32 %v1592, %v1609
        %v1623 = vadd.f32 %v1593, %v1609
        %v1624 = vadd.f32 %v1594, %v1614
        %v1625 = vadd.f32 %v1595, %v1614
        %v1626 = vadd.f32 %v1596, %v1614
        %v1627 = vadd.f32 %v1597, %v1614
        %v1628 = vmax.f32 %v1616, 0.0
        %v1629 = vmax.f32 %v1617, 0.0
        %v1630 = vmax.f32 %v1618, 0.0
        %v1631 = vmax.f32 %v1619, 0.0
        %v1632 = vmax.f32 %v1620, 0.0
        %v1633 = vmax.f32 %v1621, 0.0
        %v1634 = vmax.f32 %v1622, 0.0
        %v1635 = vmax.f32 %v1623, 0.0
        %v1636 = vmax.f32 %v1624, 0.0
        %v1637 = vmax.f32 %v1625, 0.0
        %v1638 = vmax.f32 %v1626, 0.0
        %v1639 = vmax.f32 %v1627, 0.0
        %v1640 = vpack.c.bf16 %v1632, %v1628
        %v1641 = vpack.c.bf16 %v1633, %v1629
        %v1642 = vpack.c.bf16 %v1634, %v1630
        %v1643 = vpack.c.bf16 %v1635, %v1631
        %v1644 = vpack.c.bf16 %v1636, %v1636
        %v1645 = vpack.c.bf16 %v1637, %v1637
        %v1646 = vpack.c.bf16 %v1638, %v1638
        %v1647 = vpack.c.bf16 %v1639, %v1639
        %v1656 = vunpack.c.l.b16 %v1640
        %v1657 = vunpack.c.l.b16 %v1641
        %v1658 = vunpack.c.l.b16 %v1642
        %v1659 = vunpack.c.l.b16 %v1643
        %v1660 = vunpack.c.h.b16 %v1640
        %v1661 = vunpack.c.h.b16 %v1641
        %v1662 = vunpack.c.h.b16 %v1642
        %v1663 = vunpack.c.h.b16 %v1643
        %v1664 = vunpack.c.l.b16 %v1644
        %v1665 = vunpack.c.l.b16 %v1645
        %v1666 = vunpack.c.l.b16 %v1646
        %v1667 = vunpack.c.l.b16 %v1647
        %v1668 = vpack.c.b16 %v1657, %v1656
        %v1669 = vpack.c.b16 %v1659, %v1658
        %v1670 = vpack.c.b16 %v1661, %v1660
        %v1671 = vpack.c.b16 %v1663, %v1662
        %v1672 = vpack.c.b16 %v1665, %v1664
        %v1673 = vpack.c.b16 %v1667, %v1666
        %1680 = vst [vmem:[%s424] sm:$0xff] %v1668
        %1681 = vst [vmem:[%s424 + $0x8] sm:$0xff] %v1669
        %1682 = vst [vmem:[%s424 + $0x10] sm:$0xff] %v1670
        %1683 = vst [vmem:[%s424 + $0x18] sm:$0xff] %v1671
        %1684 = vst [vmem:[%s424 + $0x20] sm:$0xff] %v1672
        %1685 = vst [vmem:[%s424 + $0x28] sm:$0xff] %v1673
        %s1686 = sand.u32 %s106, 1
        %s1687 = sand.u32 %s106, 1
        %s1688 = smul.addr %s1687, 48
        %s1689 = scalar_lea.vmem [#allocation3], %s1688
        // Predicated region
        $region56: #{simple_cnn5_forward.6} parent=50 // pred_check
          %p1690 = pneg %p116
        $region57: #{simple_cnn5_forward.6} parent=50 // pred_check_branch
          %1692 = sbr.rel (%p1690) target = $region59
        $region58: #{simple_cnn5_forward.6} parent=50 // pred_region
          %s1693 = smul.u32 4, %s19
          %s1694 = smul.addr %s18, 72
          %s1695 = sadd.s32 %s1693, %s1694
          %s1696 = smul.addr %s1695, 4
          %s1697 = scalar_lea.vmem %s3, %s1696
          // Predicated region
          $region60: #{simple_cnn5_forward.6} parent=58 // pred_check
            _
          $region61: #{simple_cnn5_forward.6} parent=58 // pred_check_branch
            %1699 = sbr.rel (0) target = $region63
          $region62: #{simple_cnn5_forward.6} parent=58 // pred_region
            // Predicated region
            $region64: #{simple_cnn5_forward.6} parent=62 // pred_check
              _
            $region65: #{simple_cnn5_forward.6} parent=62 // pred_check_branch
              %1701 = sbr.rel (0) target = $region67
            $region66: #{simple_cnn5_forward.6} parent=62 // pred_region
              loop: start=0, step=1, limit=1
              $region68: #{simple_cnn5_forward.6} parent=66 // loop_pre_header
                _
              $region69: #{simple_cnn5_forward.6} parent=66 // loop_header
                %s1703 = sphi 0, %s1707
                %p1704 = scmp.ge.s32.totalorder %s1703, 1
                %s1708 = sphi %s1689, %s1689
                %s1709 = sphi %s1697, %s1697
              $region70: #{simple_cnn5_forward.6} parent=66 // loop_header_branch
                %1706 = sbr.rel (%p1704) target = $region74
              $region71: #{simple_cnn5_forward.6} parent=66 // loop_body
                %v1710 = vld [vmem:[%s1708] sm:$0xff]
                %1711 = vst [vmem:[%s1709] sm:$0xff] %v1710
                %v1712 = vld [vmem:[%s1708 + $0x8] sm:$0xff]
                %1713 = vst [vmem:[%s1709 + $0x8] sm:$0xff] %v1712
                %v1714 = vld [vmem:[%s1708 + $0x10] sm:$0xff]
                %1715 = vst [vmem:[%s1709 + $0x60] sm:$0xff] %v1714
                %v1716 = vld [vmem:[%s1708 + $0x18] sm:$0xff]
                %1717 = vst [vmem:[%s1709 + $0x68] sm:$0xff] %v1716
                %v1718 = vld [vmem:[%s1708 + $0x20] sm:$0xff]
                %1719 = vst [vmem:[%s1709 + $0xc0] sm:$0xff] %v1718
                %v1720 = vld [vmem:[%s1708 + $0x28] sm:$0xff]
                %1721 = vst [vmem:[%s1709 + $0xc8] sm:$0xff] %v1720
              $region72: #{simple_cnn5_forward.6} parent=66 // loop_footer
                %s1707 = sadd.s32 1, %s1703
              $region73: #{simple_cnn5_forward.6} parent=66 // loop_footer_branch
                %1702 = sbr.rel target = $region69
              $region74: #{simple_cnn5_forward.6} parent=66 // loop_exit
                _
            $region67: #{simple_cnn5_forward.6} parent=62 // pred_fallthru
              _
            // Predicated region
            $region75: #{simple_cnn5_forward.6} parent=62 // pred_check
              _
            $region76: #{simple_cnn5_forward.6} parent=62 // pred_check_branch
              %1723 = sbr.rel target = $region78
            $region77: #{simple_cnn5_forward.6} parent=62 // pred_region
              _
            $region78: #{simple_cnn5_forward.6} parent=62 // pred_fallthru
              _
          $region63: #{simple_cnn5_forward.6} parent=58 // pred_fallthru
            _
          %1724 = vnop
        $region59: #{simple_cnn5_forward.6} parent=50 // pred_fallthru
          _
      $region51: #{simple_cnn5_forward.6} parent=5 // pred_fallthru
        _
      %p1725 = scmp.le.s32.totalorder 2, %s9
      // Predicated region
      $region79: #{simple_cnn5_forward.6} parent=5 // pred_check
        %p1726 = pneg %p1725
      $region80: #{simple_cnn5_forward.6} parent=5 // pred_check_branch
        %1728 = sbr.rel (%p1726) target = $region82
      $region81: #{simple_cnn5_forward.6} parent=5 // pred_region
        %s1729 = ssub.s32 %s9, 2
        // Predicated region
        $region83: #{simple_cnn5_forward.6} parent=81 // pred_check
          %p1730 = pneg %p122
        $region84: #{simple_cnn5_forward.6} parent=81 // pred_check_branch
          %1732 = sbr.rel (%p1730) target = $region86
        $region85: #{simple_cnn5_forward.6} parent=81 // pred_region
          %s1733 = sand.u32 %s107, 1
          %s1734 = sand.u32 %s107, 1
          %s1735 = smul.addr %s1734, 48
          %s1736 = scalar_lea.vmem [#allocation3], %s1735
        $region86: #{simple_cnn5_forward.6} parent=81 // pred_fallthru
          _
      $region82: #{simple_cnn5_forward.6} parent=5 // pred_fallthru
        _
    $region6: #{simple_cnn5_forward.6} parent=1 // loop_footer
      %s13 = sadd.s32 1, %s9
    $region7: #{simple_cnn5_forward.6} parent=1 // loop_footer_branch
      %8 = sbr.rel target = $region3
    $region8: #{simple_cnn5_forward.6} parent=1 // loop_exit
      _

// kernel: simple_cnn5_forward.7
$region0: #{simple_cnn5_forward.7}
  #allocation0 [shape = 'u32[]', space=smem, size = 0x4, offset = 0x4, fixed_abs, tag = 'smem constant byte address 0x4 - core index']
  #allocation1 [shape = 'u32[144,128]{1,0:T(1,128)}', space=vmem, size = 0x12000, scoped, tag = 'internal scratch']
  #allocation2 [shape = 'f32[1,1]{1,0:T(1,128)S(1)}', space=vmem, size = 0x200, scoped, tag = 'scoped memory for simple_cnn5_forward.7']
  %s0 = inlined_call_operand.vmem [shape: bf16[2,4,216,640], index: 0, kind: input, shape index: {}]
  %s1 = inlined_call_operand.vmem [shape: bf16[12,216], index: 1, kind: input, shape index: {}]
  %s2 = inlined_call_operand.vmem [shape: f32[12,1], index: 2, kind: input, shape index: {}]
  %s3 = inlined_call_operand.vmem [shape: f32[1,12], index: 3, kind: input, shape index: {}]
  %s4 = inlined_call_operand.<no memory space> [shape: f32[1,1], index: 4, kind: input, shape index: {}]
  %s5 = inlined_call_operand.vmem [shape: bf16[640,512], index: 5, kind: input, shape index: {}]
  %s6 = inlined_call_operand.vmem [shape: f32[1,512], index: 6, kind: input, shape index: {}]
  %s7 = inlined_call_operand.vmem [shape: bf16[512,3], index: 7, kind: input, shape index: {}]
  %s8 = inlined_call_operand.vmem [shape: f32[1,3], index: 8, kind: input, shape index: {}]
  %s9 = inlined_call_operand.hbm [shape: f32[2,1,3], index: 9, kind: output, shape index: {}]
  %s10 = sld [smem:[#allocation0]]
  $region69: #{simple_cnn5_forward.7} parent=0
    _
  %s12 = ssub.s32 1, %s10
  %s13 = scalar_select 0, %s12, %s10
  %v14 = vstv %s4
  %15 = vst [vmem:[#allocation2] sm:$0x1] %v14
  $region1: #{simple_cnn5_forward.7} parent=0
    #allocation3 [shape = 'u8[1024]{0}', space=vmem, size = 0x400, scoped, tag = 'output window, operand 0']
    #allocation4 [shape = 's32[2]{0}', space=sflag, size = 0x8, scoped, tag = 'scoped memory for simple_cnn5_forward.7']
    %16 = vsyncpa [#allocation4], 0
    %s17 = scalar_lea.sflag [#allocation4], 1
    %18 = vsyncpa %s17, 0
    loop: start=0, step=1, limit=4
    $region2: #{simple_cnn5_forward.7} parent=1 // loop_pre_header
      _
    $region3: #{simple_cnn5_forward.7} parent=1 // loop_header
      %s20 = sphi 0, %s24
      %p21 = scmp.ge.s32.totalorder %s20, 4
      %s30 = sphi 0, %s32
      %s33 = sphi 0, %s30
      %s34 = sphi 0, %s33
      %s50 = sphi 0, %s34
      %s54 = sphi 0, %s54
      %s56 = sphi 0, %s54
      %s57 = sphi 0, %s56
      %s71 = sphi 0, %s57
      %s75 = sphi 0, %s75
      %s77 = sphi 0, %s75
      %s78 = sphi 0, %s77
      %s92 = sphi 0, %s78
      %s96 = sphi 0, %s96
      %s98 = sphi 0, %s96
      %s99 = sphi 0, %s98
      %s113 = sphi 0, %s99
      %s117 = sphi 0, %s117
      %s119 = sphi 0, %s117
      %s120 = sphi 0, %s119
      %s134 = sphi 0, %s120
      %s138 = sphi 0, %s138
      %s140 = sphi 0, %s138
      %s141 = sphi 0, %s140
      %s155 = sphi 0, %s141
      %s159 = sphi 0, %s159
      %s161 = sphi 0, %s159
      %s162 = sphi 0, %s161
      %s176 = sphi 0, %s162
      %s180 = sphi 0, %s180
      %s182 = sphi 0, %s180
      %s183 = sphi 0, %s182
      %s197 = sphi 0, %s183
      %s201 = sphi 0, %s201
      %s203 = sphi 0, %s201
      %s204 = sphi 0, %s203
      %s218 = sphi 0, %s204
      %s224 = sphi 0, %s226
      %s227 = sphi 0, %s224
      %s228 = sphi 0, %s227
      %s244 = sphi 0, %s228
    $region4: #{simple_cnn5_forward.7} parent=1 // loop_header_branch
      %23 = sbr.rel (%p21) target = $region8
    $region5: #{simple_cnn5_forward.7} parent=1 // loop_body
      %s25 = ssub.s32 %s20, 1
      %s26 = ssub.s32 %s20, 2
      %s27 = sadd.s32 %s20, 1
      %s28 = ssub.s32 %s20, %s27
      %p29 = scmp.eq.s32.totalorder %s28, 0
      %s31 = sadd.s32 %s30, 1
      %s32 = scalar_select %p29, %s30, %s31
      %p35 = pneg %p29
      %p36 = scmp.eq.s32.totalorder %s20, 1
      %p37 = por %p35, %p36
      %p38 = scmp.ne.s32.totalorder %s30, %s33
      %p39 = scmp.eq.s32.totalorder %s20, 0
      %p40 = por %p38, %p39
      %p41 = scmp.ne.s32.totalorder %s30, %s33
      %p42 = scmp.eq.s32.totalorder %s25, 1
      %p43 = por %p41, %p42
      %p44 = scmp.ne.s32.totalorder %s33, %s34
      %p45 = scmp.eq.s32.totalorder %s25, 0
      %p46 = por %p44, %p45
      %p47 = scmp.ne.s32.totalorder %s33, %s34
      %p48 = scmp.eq.s32.totalorder %s26, 1
      %p49 = por %p47, %p48
      %p51 = scmp.ne.s32.totalorder %s34, %s50
      %p52 = scmp.eq.s32.totalorder %s26, 0
      %p53 = por %p51, %p52
      %s55 = sadd.s32 %s54, 1
      %p58 = scmp.eq.s32.totalorder %s20, 1
      %p59 = scmp.ne.s32.totalorder %s54, %s56
      %p60 = scmp.eq.s32.totalorder %s20, 0
      %p61 = por %p59, %p60
      %p62 = scmp.ne.s32.totalorder %s54, %s56
      %p63 = scmp.eq.s32.totalorder %s25, 1
      %p64 = por %p62, %p63
      %p65 = scmp.ne.s32.totalorder %s56, %s57
      %p66 = scmp.eq.s32.totalorder %s25, 0
      %p67 = por %p65, %p66
      %p68 = scmp.ne.s32.totalorder %s56, %s57
      %p69 = scmp.eq.s32.totalorder %s26, 1
      %p70 = por %p68, %p69
      %p72 = scmp.ne.s32.totalorder %s57, %s71
      %p73 = scmp.eq.s32.totalorder %s26, 0
      %p74 = por %p72, %p73
      %s76 = sadd.s32 %s75, 1
      %p79 = scmp.eq.s32.totalorder %s20, 1
      %p80 = scmp.ne.s32.totalorder %s75, %s77
      %p81 = scmp.eq.s32.totalorder %s20, 0
      %p82 = por %p80, %p81
      %p83 = scmp.ne.s32.totalorder %s75, %s77
      %p84 = scmp.eq.s32.totalorder %s25, 1
      %p85 = por %p83, %p84
      %p86 = scmp.ne.s32.totalorder %s77, %s78
      %p87 = scmp.eq.s32.totalorder %s25, 0
      %p88 = por %p86, %p87
      %p89 = scmp.ne.s32.totalorder %s77, %s78
      %p90 = scmp.eq.s32.totalorder %s26, 1
      %p91 = por %p89, %p90
      %p93 = scmp.ne.s32.totalorder %s78, %s92
      %p94 = scmp.eq.s32.totalorder %s26, 0
      %p95 = por %p93, %p94
      %s97 = sadd.s32 %s96, 1
      %p100 = scmp.eq.s32.totalorder %s20, 1
      %p101 = scmp.ne.s32.totalorder %s96, %s98
      %p102 = scmp.eq.s32.totalorder %s20, 0
      %p103 = por %p101, %p102
      %p104 = scmp.ne.s32.totalorder %s96, %s98
      %p105 = scmp.eq.s32.totalorder %s25, 1
      %p106 = por %p104, %p105
      %p107 = scmp.ne.s32.totalorder %s98, %s99
      %p108 = scmp.eq.s32.totalorder %s25, 0
      %p109 = por %p107, %p108
      %p110 = scmp.ne.s32.totalorder %s98, %s99
      %p111 = scmp.eq.s32.totalorder %s26, 1
      %p112 = por %p110, %p111
      %p114 = scmp.ne.s32.totalorder %s99, %s113
      %p115 = scmp.eq.s32.totalorder %s26, 0
      %p116 = por %p114, %p115
      %s118 = sadd.s32 %s117, 1
      %p121 = scmp.eq.s32.totalorder %s20, 1
      %p122 = scmp.ne.s32.totalorder %s117, %s119
      %p123 = scmp.eq.s32.totalorder %s20, 0
      %p124 = por %p122, %p123
      %p125 = scmp.ne.s32.totalorder %s117, %s119
      %p126 = scmp.eq.s32.totalorder %s25, 1
      %p127 = por %p125, %p126
      %p128 = scmp.ne.s32.totalorder %s119, %s120
      %p129 = scmp.eq.s32.totalorder %s25, 0
      %p130 = por %p128, %p129
      %p131 = scmp.ne.s32.totalorder %s119, %s120
      %p132 = scmp.eq.s32.totalorder %s26, 1
      %p133 = por %p131, %p132
      %p135 = scmp.ne.s32.totalorder %s120, %s134
      %p136 = scmp.eq.s32.totalorder %s26, 0
      %p137 = por %p135, %p136
      %s139 = sadd.s32 %s138, 1
      %p142 = scmp.eq.s32.totalorder %s20, 1
      %p143 = scmp.ne.s32.totalorder %s138, %s140
      %p144 = scmp.eq.s32.totalorder %s20, 0
      %p145 = por %p143, %p144
      %p146 = scmp.ne.s32.totalorder %s138, %s140
      %p147 = scmp.eq.s32.totalorder %s25, 1
      %p148 = por %p146, %p147
      %p149 = scmp.ne.s32.totalorder %s140, %s141
      %p150 = scmp.eq.s32.totalorder %s25, 0
      %p151 = por %p149, %p150
      %p152 = scmp.ne.s32.totalorder %s140, %s141
      %p153 = scmp.eq.s32.totalorder %s26, 1
      %p154 = por %p152, %p153
      %p156 = scmp.ne.s32.totalorder %s141, %s155
      %p157 = scmp.eq.s32.totalorder %s26, 0
      %p158 = por %p156, %p157
      %s160 = sadd.s32 %s159, 1
      %p163 = scmp.eq.s32.totalorder %s20, 1
      %p164 = scmp.ne.s32.totalorder %s159, %s161
      %p165 = scmp.eq.s32.totalorder %s20, 0
      %p166 = por %p164, %p165
      %p167 = scmp.ne.s32.totalorder %s159, %s161
      %p168 = scmp.eq.s32.totalorder %s25, 1
      %p169 = por %p167, %p168
      %p170 = scmp.ne.s32.totalorder %s161, %s162
      %p171 = scmp.eq.s32.totalorder %s25, 0
      %p172 = por %p170, %p171
      %p173 = scmp.ne.s32.totalorder %s161, %s162
      %p174 = scmp.eq.s32.totalorder %s26, 1
      %p175 = por %p173, %p174
      %p177 = scmp.ne.s32.totalorder %s162, %s176
      %p178 = scmp.eq.s32.totalorder %s26, 0
      %p179 = por %p177, %p178
      %s181 = sadd.s32 %s180, 1
      %p184 = scmp.eq.s32.totalorder %s20, 1
      %p185 = scmp.ne.s32.totalorder %s180, %s182
      %p186 = scmp.eq.s32.totalorder %s20, 0
      %p187 = por %p185, %p186
      %p188 = scmp.ne.s32.totalorder %s180, %s182
      %p189 = scmp.eq.s32.totalorder %s25, 1
      %p190 = por %p188, %p189
      %p191 = scmp.ne.s32.totalorder %s182, %s183
      %p192 = scmp.eq.s32.totalorder %s25, 0
      %p193 = por %p191, %p192
      %p194 = scmp.ne.s32.totalorder %s182, %s183
      %p195 = scmp.eq.s32.totalorder %s26, 1
      %p196 = por %p194, %p195
      %p198 = scmp.ne.s32.totalorder %s183, %s197
      %p199 = scmp.eq.s32.totalorder %s26, 0
      %p200 = por %p198, %p199
      %s202 = sadd.s32 %s201, 1
      %p205 = scmp.eq.s32.totalorder %s20, 1
      %p206 = scmp.ne.s32.totalorder %s201, %s203
      %p207 = scmp.eq.s32.totalorder %s20, 0
      %p208 = por %p206, %p207
      %p209 = scmp.ne.s32.totalorder %s201, %s203
      %p210 = scmp.eq.s32.totalorder %s25, 1
      %p211 = por %p209, %p210
      %p212 = scmp.ne.s32.totalorder %s203, %s204
      %p213 = scmp.eq.s32.totalorder %s25, 0
      %p214 = por %p212, %p213
      %p215 = scmp.ne.s32.totalorder %s203, %s204
      %p216 = scmp.eq.s32.totalorder %s26, 1
      %p217 = por %p215, %p216
      %p219 = scmp.ne.s32.totalorder %s204, %s218
      %p220 = scmp.eq.s32.totalorder %s26, 0
      %p221 = por %p219, %p220
      %s222 = ssub.s32 %s20, %s27
      %p223 = scmp.eq.s32.totalorder %s222, 0
      %s225 = sadd.s32 %s224, 1
      %s226 = scalar_select %p223, %s224, %s225
      %p229 = pneg %p223
      %p230 = scmp.eq.s32.totalorder %s20, 1
      %p231 = por %p229, %p230
      %p232 = scmp.ne.s32.totalorder %s224, %s227
      %p233 = scmp.eq.s32.totalorder %s20, 0
      %p234 = por %p232, %p233
      %p235 = scmp.ne.s32.totalorder %s224, %s227
      %p236 = scmp.eq.s32.totalorder %s25, 1
      %p237 = por %p235, %p236
      %p238 = scmp.ne.s32.totalorder %s227, %s228
      %p239 = scmp.eq.s32.totalorder %s25, 0
      %p240 = por %p238, %p239
      %p241 = scmp.ne.s32.totalorder %s227, %s228
      %p242 = scmp.eq.s32.totalorder %s26, 1
      %p243 = por %p241, %p242
      %p245 = scmp.ne.s32.totalorder %s228, %s244
      %p246 = scmp.eq.s32.totalorder %s26, 0
      %p247 = por %p245, %p246
      %p248 = scmp.le.s32.totalorder 1, %s20
      %p249 = scmp.lt.s32.totalorder %s20, 3
      %p250 = pnand %p248, %p249
      %p251 = pneg %p250
      // Predicated region
      $region9: #{simple_cnn5_forward.7} parent=5 // pred_check
        _
      $region10: #{simple_cnn5_forward.7} parent=5 // pred_check_branch
        %253 = sbr.rel (%p250) target = $region12
      $region11: #{simple_cnn5_forward.7} parent=5 // pred_region
        %s254 = ssub.s32 %s20, 1
        // Predicated region
        $region13: #{simple_cnn5_forward.7} parent=11 // pred_check
          %p255 = pneg %p67
        $region14: #{simple_cnn5_forward.7} parent=11 // pred_check_branch
          %257 = sbr.rel (%p255) target = $region16
        $region15: #{simple_cnn5_forward.7} parent=11 // pred_region
          _
        $region16: #{simple_cnn5_forward.7} parent=11 // pred_fallthru
          _
        // Predicated region
        $region17: #{simple_cnn5_forward.7} parent=11 // pred_check
          %p258 = pneg %p88
        $region18: #{simple_cnn5_forward.7} parent=11 // pred_check_branch
          %260 = sbr.rel (%p258) target = $region20
        $region19: #{simple_cnn5_forward.7} parent=11 // pred_region
          _
        $region20: #{simple_cnn5_forward.7} parent=11 // pred_fallthru
          _
        // Predicated region
        $region21: #{simple_cnn5_forward.7} parent=11 // pred_check
          %p261 = pneg %p109
        $region22: #{simple_cnn5_forward.7} parent=11 // pred_check_branch
          %263 = sbr.rel (%p261) target = $region24
        $region23: #{simple_cnn5_forward.7} parent=11 // pred_region
          _
        $region24: #{simple_cnn5_forward.7} parent=11 // pred_fallthru
          _
        // Predicated region
        $region25: #{simple_cnn5_forward.7} parent=11 // pred_check
          %p264 = pneg %p130
        $region26: #{simple_cnn5_forward.7} parent=11 // pred_check_branch
          %266 = sbr.rel (%p264) target = $region28
        $region27: #{simple_cnn5_forward.7} parent=11 // pred_region
          _
        $region28: #{simple_cnn5_forward.7} parent=11 // pred_fallthru
          _
        // Predicated region
        $region29: #{simple_cnn5_forward.7} parent=11 // pred_check
          %p267 = pneg %p151
        $region30: #{simple_cnn5_forward.7} parent=11 // pred_check_branch
          %269 = sbr.rel (%p267) target = $region32
        $region31: #{simple_cnn5_forward.7} parent=11 // pred_region
          _
        $region32: #{simple_cnn5_forward.7} parent=11 // pred_fallthru
          _
        // Predicated region
        $region33: #{simple_cnn5_forward.7} parent=11 // pred_check
          %p270 = pneg %p172
        $region34: #{simple_cnn5_forward.7} parent=11 // pred_check_branch
          %272 = sbr.rel (%p270) target = $region36
        $region35: #{simple_cnn5_forward.7} parent=11 // pred_region
          _
        $region36: #{simple_cnn5_forward.7} parent=11 // pred_fallthru
          _
        // Predicated region
        $region37: #{simple_cnn5_forward.7} parent=11 // pred_check
          %p273 = pneg %p193
        $region38: #{simple_cnn5_forward.7} parent=11 // pred_check_branch
          %275 = sbr.rel (%p273) target = $region40
        $region39: #{simple_cnn5_forward.7} parent=11 // pred_region
          _
        $region40: #{simple_cnn5_forward.7} parent=11 // pred_fallthru
          _
        // Predicated region
        $region41: #{simple_cnn5_forward.7} parent=11 // pred_check
          %p276 = pneg %p214
        $region42: #{simple_cnn5_forward.7} parent=11 // pred_check_branch
          %278 = sbr.rel (%p276) target = $region44
        $region43: #{simple_cnn5_forward.7} parent=11 // pred_region
          _
        $region44: #{simple_cnn5_forward.7} parent=11 // pred_fallthru
          _
      $region12: #{simple_cnn5_forward.7} parent=5 // pred_fallthru
        _
      %p279 = scmp.lt.s32.totalorder %s20, 2
      // Predicated region
      $region45: #{simple_cnn5_forward.7} parent=5 // pred_check
        %p280 = pneg %p279
      $region46: #{simple_cnn5_forward.7} parent=5 // pred_check_branch
        %282 = sbr.rel (%p280) target = $region48
      $region47: #{simple_cnn5_forward.7} parent=5 // pred_region
        // Predicated region
        $region49: #{simple_cnn5_forward.7} parent=47 // pred_check
          %p283 = pneg %p40
        $region50: #{simple_cnn5_forward.7} parent=47 // pred_check_branch
          %285 = sbr.rel (%p283) target = $region52
        $region51: #{simple_cnn5_forward.7} parent=47 // pred_region
          %p286 = scmp.lt.s32.totalorder %s20, 1
          %s287 = scalar_select %p286, %s20, 1
          %s288 = smul.addr %s287, 540
          %s289 = smul.addr %s288, 4
          %s290 = scalar_lea.vmem %s0, %s289
        $region52: #{simple_cnn5_forward.7} parent=47 // pred_fallthru
          _
      $region48: #{simple_cnn5_forward.7} parent=5 // pred_fallthru
        _
      %p291 = scmp.le.s32.totalorder 1, %s20
      %p292 = scmp.lt.s32.totalorder %s20, 3
      %p293 = pnand %p291, %p292
      %p294 = pneg %p293
      // Predicated region
      $region53: #{simple_cnn5_forward.7} parent=5 // pred_check
        _
      $region54: #{simple_cnn5_forward.7} parent=5 // pred_check_branch
        %296 = sbr.rel (%p293) target = $region56
      $region55: #{simple_cnn5_forward.7} parent=5 // pred_region
        %s297 = ssub.s32 %s20, 1
        %p298 = scmp.lt.s32.totalorder %s25, 1
        %s299 = scalar_select %p298, %s25, 1
        %s300 = smul.addr %s299, 540
        %s301 = smul.addr %s300, 4
        %s302 = scalar_lea.vmem %s0, %s301
        %p303 = pneg %p46
        %p304 = pneg %p43
        %p305 = pneg %p67
        %p306 = pneg %p64
        %p307 = pneg %p88
        %p308 = pneg %p85
        %p309 = pneg %p109
        %p310 = pneg %p106
        %p311 = pneg %p130
        %p312 = pneg %p127
        %p313 = pneg %p151
        %p314 = pneg %p148
        %p315 = pneg %p172
        %p316 = pneg %p169
        %p317 = pneg %p193
        %p318 = pneg %p190
        %p319 = pneg %p214
        %p320 = pneg %p211
        %p321 = pneg %p240
        %p322 = pneg %p237
        %s323 = sand.u32 %s227, 1
        %s324 = scalar_lea.sflag [#allocation4], %s323
        %s325 = sand.u32 %s227, 1
        %s326 = scalar_lea.vmem [#allocation3], %s325
        %p327 = scmp.lt.s32.totalorder %s25, 1
        %s328 = scalar_select %p327, %s25, 1
        %s329 = smul.addr %s328, 540
        %s330 = smul.addr %s329, 4
        %s331 = scalar_lea.vmem %s0, %s330
        %v333 = vld [vmem:[%s1] sm:$0xff]
        %v334 = vld [vmem:[%s1 + $0x8] sm:$0x33]
        %v335 = vld [vmem:[%s2] sm:$0xff]
        %v336 = vld [vmem:[%s2 + $0x8] sm:$0xf]
        %338 = vset.pattern.permute.xlu0 0
        %339 = vperm.xlu0 %338, %v335
        %v340 = vpop.permute.xlu0 %339
        %343 = vset.pattern.permute.xlu0 0
        %344 = vperm.xlu0 %343, %v336
        %v345 = vpop.permute.xlu0 %344
        %v347 = vld [vmem:[%s3] sm:$0x1]
        %v348 = vld [vmem:[%s331] sm:$0xff]
        %v349 = vld [vmem:[%s331 + $0x8] sm:$0xff]
        %v350 = vld [vmem:[%s331 + $0x10] sm:$0xf]
        %v351 = vld [vmem:[%s331 + $0x14] sm:$0xff]
        %v352 = vld [vmem:[%s331 + $0x1c] sm:$0xff]
        %v353 = vld [vmem:[%s331 + $0x24] sm:$0xf]
        %v354 = vld [vmem:[%s331 + $0x28] sm:$0xff]
        %v355 = vld [vmem:[%s331 + $0x30] sm:$0xff]
        %v356 = vld [vmem:[%s331 + $0x38] sm:$0xf]
        %v357 = vld [vmem:[%s331 + $0x3c] sm:$0xff]
        %v358 = vld [vmem:[%s331 + $0x44] sm:$0xff]
        %v359 = vld [vmem:[%s331 + $0x4c] sm:$0xf]
        %v360 = vld [vmem:[%s331 + $0x50] sm:$0xff]
        %v361 = vld [vmem:[%s331 + $0x58] sm:$0xff]
        %v362 = vld [vmem:[%s331 + $0x60] sm:$0xf]
        %v363 = vld [vmem:[%s331 + $0x64] sm:$0xff]
        %v364 = vld [vmem:[%s331 + $0x6c] sm:$0xff]
        %v365 = vld [vmem:[%s331 + $0x74] sm:$0xf]
        %v366 = vld [vmem:[%s331 + $0x78] sm:$0xff]
        %v367 = vld [vmem:[%s331 + $0x80] sm:$0xff]
        %v368 = vld [vmem:[%s331 + $0x88] sm:$0xf]
        %v369 = vld [vmem:[%s331 + $0x8c] sm:$0xff]
        %v370 = vld [vmem:[%s331 + $0x94] sm:$0xff]
        %v371 = vld [vmem:[%s331 + $0x9c] sm:$0xf]
        %v372 = vld [vmem:[%s331 + $0xa0] sm:$0xff]
        %v373 = vld [vmem:[%s331 + $0xa8] sm:$0xff]
        %v374 = vld [vmem:[%s331 + $0xb0] sm:$0xf]
        %v375 = vld [vmem:[%s331 + $0xb4] sm:$0xff]
        %v376 = vld [vmem:[%s331 + $0xbc] sm:$0xff]
        %v377 = vld [vmem:[%s331 + $0xc4] sm:$0xf]
        %v378 = vld [vmem:[%s331 + $0xc8] sm:$0xff]
        %v379 = vld [vmem:[%s331 + $0xd0] sm:$0xff]
        %v380 = vld [vmem:[%s331 + $0xd8] sm:$0xf]
        %v381 = vld [vmem:[%s331 + $0xdc] sm:$0xff]
        %v382 = vld [vmem:[%s331 + $0xe4] sm:$0xff]
        %v383 = vld [vmem:[%s331 + $0xec] sm:$0xf]
        %v384 = vld [vmem:[%s331 + $0xf0] sm:$0xff]
        %v385 = vld [vmem:[%s331 + $0xf8] sm:$0xff]
        %v386 = vld [vmem:[%s331 + $0x100] sm:$0xf]
        %v387 = vld [vmem:[%s331 + $0x104] sm:$0xff]
        %v388 = vld [vmem:[%s331 + $0x10c] sm:$0xff]
        %v389 = vld [vmem:[%s331 + $0x114] sm:$0xf]
        %v390 = vld [vmem:[%s331 + $0x118] sm:$0xff]
        %v391 = vld [vmem:[%s331 + $0x120] sm:$0xff]
        %v392 = vld [vmem:[%s331 + $0x128] sm:$0xf]
        %v393 = vld [vmem:[%s331 + $0x12c] sm:$0xff]
        %v394 = vld [vmem:[%s331 + $0x134] sm:$0xff]
        %v395 = vld [vmem:[%s331 + $0x13c] sm:$0xf]
        %v396 = vld [vmem:[%s331 + $0x140] sm:$0xff]
        %v397 = vld [vmem:[%s331 + $0x148] sm:$0xff]
        %v398 = vld [vmem:[%s331 + $0x150] sm:$0xf]
        %v399 = vld [vmem:[%s331 + $0x154] sm:$0xff]
        %v400 = vld [vmem:[%s331 + $0x15c] sm:$0xff]
        %v401 = vld [vmem:[%s331 + $0x164] sm:$0xf]
        %v402 = vld [vmem:[%s331 + $0x168] sm:$0xff]
        %v403 = vld [vmem:[%s331 + $0x170] sm:$0xff]
        %v404 = vld [vmem:[%s331 + $0x178] sm:$0xf]
        %v405 = vld [vmem:[%s331 + $0x17c] sm:$0xff]
        %v406 = vld [vmem:[%s331 + $0x184] sm:$0xff]
        %v407 = vld [vmem:[%s331 + $0x18c] sm:$0xf]
        %v408 = vld [vmem:[%s331 + $0x190] sm:$0xff]
        %v409 = vld [vmem:[%s331 + $0x198] sm:$0xff]
        %v410 = vld [vmem:[%s331 + $0x1a0] sm:$0xf]
        %v411 = vld [vmem:[%s331 + $0x1a4] sm:$0xff]
        %v412 = vld [vmem:[%s331 + $0x1ac] sm:$0xff]
        %v413 = vld [vmem:[%s331 + $0x1b4] sm:$0xf]
        %v414 = vld [vmem:[%s331 + $0x1b8] sm:$0xff]
        %v415 = vld [vmem:[%s331 + $0x1c0] sm:$0xff]
        %v416 = vld [vmem:[%s331 + $0x1c8] sm:$0xf]
        %v417 = vld [vmem:[%s331 + $0x1cc] sm:$0xff]
        %v418 = vld [vmem:[%s331 + $0x1d4] sm:$0xff]
        %v419 = vld [vmem:[%s331 + $0x1dc] sm:$0xf]
        %v420 = vld [vmem:[%s331 + $0x1e0] sm:$0xff]
        %v421 = vld [vmem:[%s331 + $0x1e8] sm:$0xff]
        %v422 = vld [vmem:[%s331 + $0x1f0] sm:$0xf]
        %v423 = vld [vmem:[%s331 + $0x1f4] sm:$0xff]
        %v424 = vld [vmem:[%s331 + $0x1fc] sm:$0xff]
        %v425 = vld [vmem:[%s331 + $0x204] sm:$0xf]
        %v426 = vld [vmem:[%s331 + $0x208] sm:$0xff]
        %v427 = vld [vmem:[%s331 + $0x210] sm:$0xff]
        %v428 = vld [vmem:[%s331 + $0x218] sm:$0xf]
        %v431 = vunpack.c.l.b16 %v333
        %v432 = vunpack.c.h.b16 %v333
        %v433 = vunpack.c.l.b16 %v334
        %v434 = vunpack.c.h.b16 %v334
        %v435 = vpack.c.b16 %v433, %v431
        %v436 = vpack.c.b16 %v434, %v432
        %v519 = vunpack.c.l.b16 %v348
        %v520 = vunpack.c.h.b16 %v348
        %v521 = vunpack.c.l.b16 %v349
        %v522 = vunpack.c.h.b16 %v349
        %v523 = vunpack.c.l.b16 %v350
        %v524 = vunpack.c.l.b16 %v351
        %v525 = vunpack.c.h.b16 %v351
        %v526 = vunpack.c.l.b16 %v352
        %v527 = vunpack.c.h.b16 %v352
        %v528 = vunpack.c.l.b16 %v353
        %v529 = vunpack.c.l.b16 %v354
        %v530 = vunpack.c.h.b16 %v354
        %v531 = vunpack.c.l.b16 %v355
        %v532 = vunpack.c.h.b16 %v355
        %v533 = vunpack.c.l.b16 %v356
        %v534 = vunpack.c.l.b16 %v357
        %v535 = vunpack.c.h.b16 %v357
        %v536 = vunpack.c.l.b16 %v358
        %v537 = vunpack.c.h.b16 %v358
        %v538 = vunpack.c.l.b16 %v359
        %v539 = vunpack.c.l.b16 %v360
        %v540 = vunpack.c.h.b16 %v360
        %v541 = vunpack.c.l.b16 %v361
        %v542 = vunpack.c.h.b16 %v361
        %v543 = vunpack.c.l.b16 %v362
        %v544 = vunpack.c.l.b16 %v363
        %v545 = vunpack.c.h.b16 %v363
        %v546 = vunpack.c.l.b16 %v364
        %v547 = vunpack.c.h.b16 %v364
        %v548 = vunpack.c.l.b16 %v365
        %v549 = vunpack.c.l.b16 %v366
        %v550 = vunpack.c.h.b16 %v366
        %v551 = vunpack.c.l.b16 %v367
        %v552 = vunpack.c.h.b16 %v367
        %v553 = vunpack.c.l.b16 %v368
        %v554 = vunpack.c.l.b16 %v369
        %v555 = vunpack.c.h.b16 %v369
        %v556 = vunpack.c.l.b16 %v370
        %v557 = vunpack.c.h.b16 %v370
        %v558 = vunpack.c.l.b16 %v371
        %v559 = vunpack.c.l.b16 %v372
        %v560 = vunpack.c.h.b16 %v372
        %v561 = vunpack.c.l.b16 %v373
        %v562 = vunpack.c.h.b16 %v373
        %v563 = vunpack.c.l.b16 %v374
        %v564 = vunpack.c.l.b16 %v375
        %v565 = vunpack.c.h.b16 %v375
        %v566 = vunpack.c.l.b16 %v376
        %v567 = vunpack.c.h.b16 %v376
        %v568 = vunpack.c.l.b16 %v377
        %v569 = vunpack.c.l.b16 %v378
        %v570 = vunpack.c.h.b16 %v378
        %v571 = vunpack.c.l.b16 %v379
        %v572 = vunpack.c.h.b16 %v379
        %v573 = vunpack.c.l.b16 %v380
        %v574 = vunpack.c.l.b16 %v381
        %v575 = vunpack.c.h.b16 %v381
        %v576 = vunpack.c.l.b16 %v382
        %v577 = vunpack.c.h.b16 %v382
        %v578 = vunpack.c.l.b16 %v383
        %v579 = vunpack.c.l.b16 %v384
        %v580 = vunpack.c.h.b16 %v384
        %v581 = vunpack.c.l.b16 %v385
        %v582 = vunpack.c.h.b16 %v385
        %v583 = vunpack.c.l.b16 %v386
        %v584 = vunpack.c.l.b16 %v387
        %v585 = vunpack.c.h.b16 %v387
        %v586 = vunpack.c.l.b16 %v388
        %v587 = vunpack.c.h.b16 %v388
        %v588 = vunpack.c.l.b16 %v389
        %v589 = vunpack.c.l.b16 %v390
        %v590 = vunpack.c.h.b16 %v390
        %v591 = vunpack.c.l.b16 %v391
        %v592 = vunpack.c.h.b16 %v391
        %v593 = vunpack.c.l.b16 %v392
        %v594 = vunpack.c.l.b16 %v393
        %v595 = vunpack.c.h.b16 %v393
        %v596 = vunpack.c.l.b16 %v394
        %v597 = vunpack.c.h.b16 %v394
        %v598 = vunpack.c.l.b16 %v395
        %v599 = vunpack.c.l.b16 %v396
        %v600 = vunpack.c.h.b16 %v396
        %v601 = vunpack.c.l.b16 %v397
        %v602 = vunpack.c.h.b16 %v397
        %v603 = vunpack.c.l.b16 %v398
        %v604 = vunpack.c.l.b16 %v399
        %v605 = vunpack.c.h.b16 %v399
        %v606 = vunpack.c.l.b16 %v400
        %v607 = vunpack.c.h.b16 %v400
        %v608 = vunpack.c.l.b16 %v401
        %v609 = vunpack.c.l.b16 %v402
        %v610 = vunpack.c.h.b16 %v402
        %v611 = vunpack.c.l.b16 %v403
        %v612 = vunpack.c.h.b16 %v403
        %v613 = vunpack.c.l.b16 %v404
        %v614 = vunpack.c.l.b16 %v405
        %v615 = vunpack.c.h.b16 %v405
        %v616 = vunpack.c.l.b16 %v406
        %v617 = vunpack.c.h.b16 %v406
        %v618 = vunpack.c.l.b16 %v407
        %v619 = vunpack.c.l.b16 %v408
        %v620 = vunpack.c.h.b16 %v408
        %v621 = vunpack.c.l.b16 %v409
        %v622 = vunpack.c.h.b16 %v409
        %v623 = vunpack.c.l.b16 %v410
        %v624 = vunpack.c.l.b16 %v411
        %v625 = vunpack.c.h.b16 %v411
        %v626 = vunpack.c.l.b16 %v412
        %v627 = vunpack.c.h.b16 %v412
        %v628 = vunpack.c.l.b16 %v413
        %v629 = vunpack.c.l.b16 %v414
        %v630 = vunpack.c.h.b16 %v414
        %v631 = vunpack.c.l.b16 %v415
        %v632 = vunpack.c.h.b16 %v415
        %v633 = vunpack.c.l.b16 %v416
        %v634 = vunpack.c.l.b16 %v417
        %v635 = vunpack.c.h.b16 %v417
        %v636 = vunpack.c.l.b16 %v418
        %v637 = vunpack.c.h.b16 %v418
        %v638 = vunpack.c.l.b16 %v419
        %v639 = vunpack.c.l.b16 %v420
        %v640 = vunpack.c.h.b16 %v420
        %v641 = vunpack.c.l.b16 %v421
        %v642 = vunpack.c.h.b16 %v421
        %v643 = vunpack.c.l.b16 %v422
        %v644 = vunpack.c.l.b16 %v423
        %v645 = vunpack.c.h.b16 %v423
        %v646 = vunpack.c.l.b16 %v424
        %v647 = vunpack.c.h.b16 %v424
        %v648 = vunpack.c.l.b16 %v425
        %v649 = vunpack.c.l.b16 %v426
        %v650 = vunpack.c.h.b16 %v426
        %v651 = vunpack.c.l.b16 %v427
        %v652 = vunpack.c.h.b16 %v427
        %v653 = vunpack.c.l.b16 %v428
        %v654 = vpack.c.b16 %v524, %v519
        %v655 = vpack.c.b16 %v525, %v520
        %v656 = vpack.c.b16 %v526, %v521
        %v657 = vpack.c.b16 %v527, %v522
        %v658 = vpack.c.b16 %v528, %v523
        %v659 = vpack.c.b16 %v534, %v529
        %v660 = vpack.c.b16 %v535, %v530
        %v661 = vpack.c.b16 %v536, %v531
        %v662 = vpack.c.b16 %v537, %v532
        %v663 = vpack.c.b16 %v538, %v533
        %v664 = vpack.c.b16 %v544, %v539
        %v665 = vpack.c.b16 %v545, %v540
        %v666 = vpack.c.b16 %v546, %v541
        %v667 = vpack.c.b16 %v547, %v542
        %v668 = vpack.c.b16 %v548, %v543
        %v669 = vpack.c.b16 %v554, %v549
        %v670 = vpack.c.b16 %v555, %v550
        %v671 = vpack.c.b16 %v556, %v551
        %v672 = vpack.c.b16 %v557, %v552
        %v673 = vpack.c.b16 %v558, %v553
        %v674 = vpack.c.b16 %v564, %v559
        %v675 = vpack.c.b16 %v565, %v560
        %v676 = vpack.c.b16 %v566, %v561
        %v677 = vpack.c.b16 %v567, %v562
        %v678 = vpack.c.b16 %v568, %v563
        %v679 = vpack.c.b16 %v574, %v569
        %v680 = vpack.c.b16 %v575, %v570
        %v681 = vpack.c.b16 %v576, %v571
        %v682 = vpack.c.b16 %v577, %v572
        %v683 = vpack.c.b16 %v578, %v573
        %v684 = vpack.c.b16 %v584, %v579
        %v685 = vpack.c.b16 %v585, %v580
        %v686 = vpack.c.b16 %v586, %v581
        %v687 = vpack.c.b16 %v587, %v582
        %v688 = vpack.c.b16 %v588, %v583
        %v689 = vpack.c.b16 %v594, %v589
        %v690 = vpack.c.b16 %v595, %v590
        %v691 = vpack.c.b16 %v596, %v591
        %v692 = vpack.c.b16 %v597, %v592
        %v693 = vpack.c.b16 %v598, %v593
        %v694 = vpack.c.b16 %v604, %v599
        %v695 = vpack.c.b16 %v605, %v600
        %v696 = vpack.c.b16 %v606, %v601
        %v697 = vpack.c.b16 %v607, %v602
        %v698 = vpack.c.b16 %v608, %v603
        %v699 = vpack.c.b16 %v614, %v609
        %v700 = vpack.c.b16 %v615, %v610
        %v701 = vpack.c.b16 %v616, %v611
        %v702 = vpack.c.b16 %v617, %v612
        %v703 = vpack.c.b16 %v618, %v613
        %v704 = vpack.c.b16 %v624, %v619
        %v705 = vpack.c.b16 %v625, %v620
        %v706 = vpack.c.b16 %v626, %v621
        %v707 = vpack.c.b16 %v627, %v622
        %v708 = vpack.c.b16 %v628, %v623
        %v709 = vpack.c.b16 %v634, %v629
        %v710 = vpack.c.b16 %v635, %v630
        %v711 = vpack.c.b16 %v636, %v631
        %v712 = vpack.c.b16 %v637, %v632
        %v713 = vpack.c.b16 %v638, %v633
        %v714 = vpack.c.b16 %v644, %v639
        %v715 = vpack.c.b16 %v645, %v640
        %v716 = vpack.c.b16 %v646, %v641
        %v717 = vpack.c.b16 %v647, %v642
        %v718 = vpack.c.b16 %v648, %v643
        %v719 = vpack.c.b16 %v649, %v649
        %v720 = vpack.c.b16 %v650, %v650
        %v721 = vpack.c.b16 %v651, %v651
        %v722 = vpack.c.b16 %v652, %v652
        %v723 = vpack.c.b16 %v653, %v653
        %vm789 = vcmask 719872
        %v791 = vsel %vm789, %v436, 0
        %vm793 = vcmask 1043456
        %v795 = vsel %vm793, %v719, 0
        %v798 = vsel %vm793, %v720, 0
        %v801 = vsel %vm793, %v721, 0
        %v804 = vsel %vm793, %v722, 0
        %v807 = vsel %vm793, %v723, 0
        %809 = vmatprep.subr.bf16.mxu0 %v690
        %810 = vmatpush1.bf16.msra.mxu0 %v689
        %811 = vmatprep.subr.bf16.mxu0 %v685
        %812 = vmatpush1.bf16.msra.mxu0 %v684
        %813 = vmatprep.subr.bf16.mxu0 %v680
        %814 = vmatpush1.bf16.msra.mxu0 %v679
        %815 = vmatprep.subr.bf16.mxu0 %v675
        %816 = vmatpush1.bf16.msra.mxu0 %v674
        %817 = vmatprep.subr.bf16.mxu0 %v670
        %818 = vmatpush1.bf16.msra.mxu0 %v669
        %819 = vmatprep.subr.bf16.mxu0 %v665
        %820 = vmatpush1.bf16.msra.mxu0 %v664
        %821 = vmatprep.subr.bf16.mxu0 %v660
        %822 = vmatpush1.bf16.msra.mxu0 %v659
        %823 = vmatprep.subr.bf16.mxu0 %v655
        %824 = vmatpush1.bf16.msra.mxu0 %v654
        %825 = vmatprep.subr.bf16.mxu0 0
        %826 = vmatpush2.bf16.msra.mxu0 0
        %827 = vmatprep.subr.bf16.mxu0 0
        %828 = vmatpush2.bf16.msra.mxu0 0
        %829 = vmatprep.subr.bf16.mxu0 %v798
        %830 = vmatpush2.bf16.msra.mxu0 %v795
        %831 = vmatprep.subr.bf16.mxu0 %v715
        %832 = vmatpush2.bf16.msra.mxu0 %v714
        %833 = vmatprep.subr.bf16.mxu0 %v710
        %834 = vmatpush2.bf16.msra.mxu0 %v709
        %835 = vmatprep.subr.bf16.mxu0 %v705
        %836 = vmatpush2.bf16.msra.mxu0 %v704
        %837 = vmatprep.subr.bf16.mxu0 %v700
        %838 = vmatpush2.bf16.msra.mxu0 %v699
        %839 = vmatprep.subr.bf16.mxu0 %v695
        %840 = vmatpush2.bf16.msra.mxu0 %v694
        %841 = vmatprep.mubr.bf16.mxu0 %v791
        %842 = vmatmul.mubr.bf16.gmra.mxu0 %v435
        %v843 = vpop.f32.mrf.mxu0
        %v844 = vadd.f32 %v340, %v843
        %v845 = vpop.f32.mrf.mxu0
        %v846 = vadd.f32 %v340, %v845
        %v847 = vpop.f32.mrf.mxu0
        %v848 = vadd.f32 %v345, %v847
        %v849 = vpop.f32.mrf.mxu0
        %v850 = vadd.f32 %v345, %v849
        %851 = vdwg.mxu0
        %852 = vmatprep.subr.bf16.mxu0 %v692
        %853 = vmatpush1.bf16.msra.mxu0 %v691
        %854 = vmatprep.subr.bf16.mxu0 %v687
        %855 = vmatpush1.bf16.msra.mxu0 %v686
        %856 = vmatprep.subr.bf16.mxu0 %v682
        %857 = vmatpush1.bf16.msra.mxu0 %v681
        %858 = vmatprep.subr.bf16.mxu0 %v677
        %859 = vmatpush1.bf16.msra.mxu0 %v676
        %860 = vmatprep.subr.bf16.mxu0 %v672
        %861 = vmatpush1.bf16.msra.mxu0 %v671
        %862 = vmatprep.subr.bf16.mxu0 %v667
        %863 = vmatpush1.bf16.msra.mxu0 %v666
        %864 = vmatprep.subr.bf16.mxu0 %v662
        %865 = vmatpush1.bf16.msra.mxu0 %v661
        %866 = vmatprep.subr.bf16.mxu0 %v657
        %867 = vmatpush1.bf16.msra.mxu0 %v656
        %868 = vmatprep.subr.bf16.mxu0 0
        %869 = vmatpush2.bf16.msra.mxu0 0
        %870 = vmatprep.subr.bf16.mxu0 0
        %871 = vmatpush2.bf16.msra.mxu0 0
        %872 = vmatprep.subr.bf16.mxu0 %v804
        %873 = vmatpush2.bf16.msra.mxu0 %v801
        %874 = vmatprep.subr.bf16.mxu0 %v717
        %875 = vmatpush2.bf16.msra.mxu0 %v716
        %876 = vmatprep.subr.bf16.mxu0 %v712
        %877 = vmatpush2.bf16.msra.mxu0 %v711
        %878 = vmatprep.subr.bf16.mxu0 %v707
        %879 = vmatpush2.bf16.msra.mxu0 %v706
        %880 = vmatprep.subr.bf16.mxu0 %v702
        %881 = vmatpush2.bf16.msra.mxu0 %v701
        %882 = vmatprep.subr.bf16.mxu0 %v697
        %883 = vmatpush2.bf16.msra.mxu0 %v696
        %884 = vmatprep.mubr.bf16.mxu0 %v791
        %885 = vmatmul.mubr.bf16.gmra.mxu0 %v435
        %v886 = vpop.f32.mrf.mxu0
        %v887 = vadd.f32 %v340, %v886
        %v888 = vpop.f32.mrf.mxu0
        %v889 = vadd.f32 %v340, %v888
        %v890 = vpop.f32.mrf.mxu0
        %v891 = vadd.f32 %v345, %v890
        %v892 = vpop.f32.mrf.mxu0
        %v893 = vadd.f32 %v345, %v892
        %894 = vdwg.mxu0
        %895 = vmatprep.subr.bf16.mxu0 0
        %896 = vmatpush1.bf16.msra.mxu0 %v693
        %897 = vmatprep.subr.bf16.mxu0 0
        %898 = vmatpush1.bf16.msra.mxu0 %v688
        %899 = vmatprep.subr.bf16.mxu0 0
        %900 = vmatpush1.bf16.msra.mxu0 %v683
        %901 = vmatprep.subr.bf16.mxu0 0
        %902 = vmatpush1.bf16.msra.mxu0 %v678
        %903 = vmatprep.subr.bf16.mxu0 0
        %904 = vmatpush1.bf16.msra.mxu0 %v673
        %905 = vmatprep.subr.bf16.mxu0 0
        %906 = vmatpush1.bf16.msra.mxu0 %v668
        %907 = vmatprep.subr.bf16.mxu0 0
        %908 = vmatpush1.bf16.msra.mxu0 %v663
        %909 = vmatprep.subr.bf16.mxu0 0
        %910 = vmatpush1.bf16.msra.mxu0 %v658
        %911 = vmatprep.subr.bf16.mxu0 0
        %912 = vmatpush2.bf16.msra.mxu0 0
        %913 = vmatprep.subr.bf16.mxu0 0
        %914 = vmatpush2.bf16.msra.mxu0 0
        %915 = vmatprep.subr.bf16.mxu0 0
        %916 = vmatpush2.bf16.msra.mxu0 %v807
        %917 = vmatprep.subr.bf16.mxu0 0
        %918 = vmatpush2.bf16.msra.mxu0 %v718
        %919 = vmatprep.subr.bf16.mxu0 0
        %920 = vmatpush2.bf16.msra.mxu0 %v713
        %921 = vmatprep.subr.bf16.mxu0 0
        %922 = vmatpush2.bf16.msra.mxu0 %v708
        %923 = vmatprep.subr.bf16.mxu0 0
        %924 = vmatpush2.bf16.msra.mxu0 %v703
        %925 = vmatprep.subr.bf16.mxu0 0
        %926 = vmatpush2.bf16.msra.mxu0 %v698
        %927 = vmatprep.mubr.bf16.mxu0 %v791
        %928 = vmatmul.mubr.bf16.gmra.mxu0 %v435
        %v929 = vpop.f32.mrf.mxu0
        %v930 = vadd.f32 %v340, %v929
        %v931 = vpop.f32.mrf.mxu0
        %v932 = vpop.f32.mrf.mxu0
        %v933 = vadd.f32 %v345, %v932
        %v934 = vpop.f32.mrf.mxu0
        %935 = vdwg.mxu0
        %v936 = vmax.f32 %v844, 0.0
        %v937 = vmax.f32 %v846, 0.0
        %v938 = vmax.f32 %v887, 0.0
        %v939 = vmax.f32 %v889, 0.0
        %v940 = vmax.f32 %v930, 0.0
        %v941 = vmax.f32 %v848, 0.0
        %v942 = vmax.f32 %v850, 0.0
        %v943 = vmax.f32 %v891, 0.0
        %v944 = vmax.f32 %v893, 0.0
        %v945 = vmax.f32 %v933, 0.0
        %vm946 = vcmask 97280
        %v948 = vsel %vm946, %v347, 0
        %v951 = vsel %vm793, %v941, 0
        %v954 = vsel %vm793, %v942, 0
        %v957 = vsel %vm793, %v943, 0
        %v960 = vsel %vm793, %v944, 0
        %v963 = vsel %vm793, %v945, 0
        %965 = vmatprep.subr.mxu0 0.0
        %966 = vmatpush1.msra.mxu0 0.0
        %967 = vmatprep.subr.mxu0 0.0
        %968 = vmatpush1.msra.mxu0 0.0
        %969 = vmatprep.subr.mxu0 0.0
        %970 = vmatpush1.msra.mxu0 0.0
        %971 = vmatprep.subr.mxu0 0.0
        %972 = vmatpush1.msra.mxu0 0.0
        %973 = vmatprep.subr.mxu0 0.0
        %974 = vmatpush1.msra.mxu0 0.0
        %975 = vmatprep.subr.mxu0 0.0
        %976 = vmatpush1.msra.mxu0 0.0
        %977 = vmatprep.subr.mxu0 0.0
        %978 = vmatpush1.msra.mxu0 0.0
        %979 = vmatprep.subr.mxu0 0.0
        %980 = vmatpush1.msra.mxu0 0.0
        %981 = vmatprep.subr.mxu0 0.0
        %982 = vmatpush1.msra.mxu0 0.0
        %983 = vmatprep.subr.mxu0 0.0
        %984 = vmatpush1.msra.mxu0 0.0
        %985 = vmatprep.subr.mxu0 0.0
        %986 = vmatpush1.msra.mxu0 0.0
        %987 = vmatprep.subr.mxu0 0.0
        %988 = vmatpush1.msra.mxu0 0.0
        %989 = vmatprep.subr.mxu0 0.0
        %990 = vmatpush1.msra.mxu0 0.0
        %991 = vmatprep.subr.mxu0 0.0
        %992 = vmatpush1.msra.mxu0 0.0
        %993 = vmatprep.subr.mxu0 %v954
        %994 = vmatpush1.msra.mxu0 %v951
        %995 = vmatprep.subr.mxu0 %v937
        %996 = vmatpush1.msra.mxu0 %v936
        %997 = vmatprep.subr.mxu0 0.0
        %998 = vmatpush2.msra.mxu0 0.0
        %999 = vmatprep.subr.mxu0 0.0
        %1000 = vmatpush2.msra.mxu0 0.0
        %1001 = vmatprep.subr.mxu0 0.0
        %1002 = vmatpush2.msra.mxu0 0.0
        %1003 = vmatprep.subr.mxu0 0.0
        %1004 = vmatpush2.msra.mxu0 0.0
        %1005 = vmatprep.subr.mxu0 0.0
        %1006 = vmatpush2.msra.mxu0 0.0
        %1007 = vmatprep.subr.mxu0 0.0
        %1008 = vmatpush2.msra.mxu0 0.0
        %1009 = vmatprep.subr.mxu0 0.0
        %1010 = vmatpush2.msra.mxu0 0.0
        %1011 = vmatprep.subr.mxu0 0.0
        %1012 = vmatpush2.msra.mxu0 0.0
        %1013 = vmatprep.subr.mxu0 0.0
        %1014 = vmatpush2.msra.mxu0 0.0
        %1015 = vmatprep.subr.mxu0 0.0
        %1016 = vmatpush2.msra.mxu0 0.0
        %1017 = vmatprep.subr.mxu0 0.0
        %1018 = vmatpush2.msra.mxu0 0.0
        %1019 = vmatprep.subr.mxu0 0.0
        %1020 = vmatpush2.msra.mxu0 0.0
        %1021 = vmatprep.subr.mxu0 0.0
        %1022 = vmatpush2.msra.mxu0 0.0
        %1023 = vmatprep.subr.mxu0 0.0
        %1024 = vmatpush2.msra.mxu0 0.0
        %1025 = vmatprep.subr.mxu0 0.0
        %1026 = vmatpush2.msra.mxu0 0.0
        %1027 = vmatprep.subr.mxu0 0.0
        %1028 = vmatpush2.msra.mxu0 0.0
        %1029 = vmatprep.mubr.f32.mxu0 0.0
        %1030 = vmatmul.mubr.f32.gmra.mxu0 %v948
        %v1031 = vpop.f32.mrf.mxu0
        %v1032 = vadd.f32 0.0, %v1031
        %v1033 = vpop.f32.mrf.mxu0
        %v1034 = vadd.f32 0.0, %v1033
        %1035 = vdwg.mxu0
        %1036 = vmatprep.subr.mxu0 0.0
        %1037 = vmatpush1.msra.mxu0 0.0
        %1038 = vmatprep.subr.mxu0 0.0
        %1039 = vmatpush1.msra.mxu0 0.0
        %1040 = vmatprep.subr.mxu0 0.0
        %1041 = vmatpush1.msra.mxu0 0.0
        %1042 = vmatprep.subr.mxu0 0.0
        %1043 = vmatpush1.msra.mxu0 0.0
        %1044 = vmatprep.subr.mxu0 0.0
        %1045 = vmatpush1.msra.mxu0 0.0
        %1046 = vmatprep.subr.mxu0 0.0
        %1047 = vmatpush1.msra.mxu0 0.0
        %1048 = vmatprep.subr.mxu0 0.0
        %1049 = vmatpush1.msra.mxu0 0.0
        %1050 = vmatprep.subr.mxu0 0.0
        %1051 = vmatpush1.msra.mxu0 0.0
        %1052 = vmatprep.subr.mxu0 0.0
        %1053 = vmatpush1.msra.mxu0 0.0
        %1054 = vmatprep.subr.mxu0 0.0
        %1055 = vmatpush1.msra.mxu0 0.0
        %1056 = vmatprep.subr.mxu0 0.0
        %1057 = vmatpush1.msra.mxu0 0.0
        %1058 = vmatprep.subr.mxu0 0.0
        %1059 = vmatpush1.msra.mxu0 0.0
        %1060 = vmatprep.subr.mxu0 0.0
        %1061 = vmatpush1.msra.mxu0 0.0
        %1062 = vmatprep.subr.mxu0 0.0
        %1063 = vmatpush1.msra.mxu0 0.0
        %1064 = vmatprep.subr.mxu0 %v960
        %1065 = vmatpush1.msra.mxu0 %v957
        %1066 = vmatprep.subr.mxu0 %v939
        %1067 = vmatpush1.msra.mxu0 %v938
        %1068 = vmatprep.subr.mxu0 0.0
        %1069 = vmatpush2.msra.mxu0 0.0
        %1070 = vmatprep.subr.mxu0 0.0
        %1071 = vmatpush2.msra.mxu0 0.0
        %1072 = vmatprep.subr.mxu0 0.0
        %1073 = vmatpush2.msra.mxu0 0.0
        %1074 = vmatprep.subr.mxu0 0.0
        %1075 = vmatpush2.msra.mxu0 0.0
        %1076 = vmatprep.subr.mxu0 0.0
        %1077 = vmatpush2.msra.mxu0 0.0
        %1078 = vmatprep.subr.mxu0 0.0
        %1079 = vmatpush2.msra.mxu0 0.0
        %1080 = vmatprep.subr.mxu0 0.0
        %1081 = vmatpush2.msra.mxu0 0.0
        %1082 = vmatprep.subr.mxu0 0.0
        %1083 = vmatpush2.msra.mxu0 0.0
        %1084 = vmatprep.subr.mxu0 0.0
        %1085 = vmatpush2.msra.mxu0 0.0
        %1086 = vmatprep.subr.mxu0 0.0
        %1087 = vmatpush2.msra.mxu0 0.0
        %1088 = vmatprep.subr.mxu0 0.0
        %1089 = vmatpush2.msra.mxu0 0.0
        %1090 = vmatprep.subr.mxu0 0.0
        %1091 = vmatpush2.msra.mxu0 0.0
        %1092 = vmatprep.subr.mxu0 0.0
        %1093 = vmatpush2.msra.mxu0 0.0
        %1094 = vmatprep.subr.mxu0 0.0
        %1095 = vmatpush2.msra.mxu0 0.0
        %1096 = vmatprep.subr.mxu0 0.0
        %1097 = vmatpush2.msra.mxu0 0.0
        %1098 = vmatprep.subr.mxu0 0.0
        %1099 = vmatpush2.msra.mxu0 0.0
        %1100 = vmatprep.mubr.f32.mxu0 0.0
        %1101 = vmatmul.mubr.f32.gmra.mxu0 %v948
        %v1102 = vpop.f32.mrf.mxu0
        %v1103 = vadd.f32 0.0, %v1102
        %v1104 = vpop.f32.mrf.mxu0
        %v1105 = vadd.f32 0.0, %v1104
        %1106 = vdwg.mxu0
        %1107 = vmatprep.subr.mxu0 0.0
        %1108 = vmatpush1.msra.mxu0 0.0
        %1109 = vmatprep.subr.mxu0 0.0
        %1110 = vmatpush1.msra.mxu0 0.0
        %1111 = vmatprep.subr.mxu0 0.0
        %1112 = vmatpush1.msra.mxu0 0.0
        %1113 = vmatprep.subr.mxu0 0.0
        %1114 = vmatpush1.msra.mxu0 0.0
        %1115 = vmatprep.subr.mxu0 0.0
        %1116 = vmatpush1.msra.mxu0 0.0
        %1117 = vmatprep.subr.mxu0 0.0
        %1118 = vmatpush1.msra.mxu0 0.0
        %1119 = vmatprep.subr.mxu0 0.0
        %1120 = vmatpush1.msra.mxu0 0.0
        %1121 = vmatprep.subr.mxu0 0.0
        %1122 = vmatpush1.msra.mxu0 0.0
        %1123 = vmatprep.subr.mxu0 0.0
        %1124 = vmatpush1.msra.mxu0 0.0
        %1125 = vmatprep.subr.mxu0 0.0
        %1126 = vmatpush1.msra.mxu0 0.0
        %1127 = vmatprep.subr.mxu0 0.0
        %1128 = vmatpush1.msra.mxu0 0.0
        %1129 = vmatprep.subr.mxu0 0.0
        %1130 = vmatpush1.msra.mxu0 0.0
        %1131 = vmatprep.subr.mxu0 0.0
        %1132 = vmatpush1.msra.mxu0 0.0
        %1133 = vmatprep.subr.mxu0 0.0
        %1134 = vmatpush1.msra.mxu0 0.0
        %1135 = vmatprep.subr.mxu0 0.0
        %1136 = vmatpush1.msra.mxu0 %v963
        %1137 = vmatprep.subr.mxu0 0.0
        %1138 = vmatpush1.msra.mxu0 %v940
        %1139 = vmatprep.subr.mxu0 0.0
        %1140 = vmatpush2.msra.mxu0 0.0
        %1141 = vmatprep.subr.mxu0 0.0
        %1142 = vmatpush2.msra.mxu0 0.0
        %1143 = vmatprep.subr.mxu0 0.0
        %1144 = vmatpush2.msra.mxu0 0.0
        %1145 = vmatprep.subr.mxu0 0.0
        %1146 = vmatpush2.msra.mxu0 0.0
        %1147 = vmatprep.subr.mxu0 0.0
        %1148 = vmatpush2.msra.mxu0 0.0
        %1149 = vmatprep.subr.mxu0 0.0
        %1150 = vmatpush2.msra.mxu0 0.0
        %1151 = vmatprep.subr.mxu0 0.0
        %1152 = vmatpush2.msra.mxu0 0.0
        %1153 = vmatprep.subr.mxu0 0.0
        %1154 = vmatpush2.msra.mxu0 0.0
        %1155 = vmatprep.subr.mxu0 0.0
        %1156 = vmatpush2.msra.mxu0 0.0
        %1157 = vmatprep.subr.mxu0 0.0
        %1158 = vmatpush2.msra.mxu0 0.0
        %1159 = vmatprep.subr.mxu0 0.0
        %1160 = vmatpush2.msra.mxu0 0.0
        %1161 = vmatprep.subr.mxu0 0.0
        %1162 = vmatpush2.msra.mxu0 0.0
        %1163 = vmatprep.subr.mxu0 0.0
        %1164 = vmatpush2.msra.mxu0 0.0
        %1165 = vmatprep.subr.mxu0 0.0
        %1166 = vmatpush2.msra.mxu0 0.0
        %1167 = vmatprep.subr.mxu0 0.0
        %1168 = vmatpush2.msra.mxu0 0.0
        %1169 = vmatprep.subr.mxu0 0.0
        %1170 = vmatpush2.msra.mxu0 0.0
        %1171 = vmatprep.mubr.f32.mxu0 0.0
        %1172 = vmatmul.mubr.f32.gmra.mxu0 %v948
        %v1173 = vpop.f32.mrf.mxu0
        %v1174 = vadd.f32 0.0, %v1173
        %v1175 = vpop.f32.mrf.mxu0
        %1176 = vdwg.mxu0
        %s1177 = scalar_lea.vmem %s331, 540
        %v1178 = vld [vmem:[%s1177] sm:$0xff]
        %v1179 = vld [vmem:[%s1177 + $0x8] sm:$0xff]
        %v1180 = vld [vmem:[%s1177 + $0x10] sm:$0xf]
        %v1181 = vld [vmem:[%s1177 + $0x14] sm:$0xff]
        %v1182 = vld [vmem:[%s1177 + $0x1c] sm:$0xff]
        %v1183 = vld [vmem:[%s1177 + $0x24] sm:$0xf]
        %v1184 = vld [vmem:[%s1177 + $0x28] sm:$0xff]
        %v1185 = vld [vmem:[%s1177 + $0x30] sm:$0xff]
        %v1186 = vld [vmem:[%s1177 + $0x38] sm:$0xf]
        %v1187 = vld [vmem:[%s1177 + $0x3c] sm:$0xff]
        %v1188 = vld [vmem:[%s1177 + $0x44] sm:$0xff]
        %v1189 = vld [vmem:[%s1177 + $0x4c] sm:$0xf]
        %v1190 = vld [vmem:[%s1177 + $0x50] sm:$0xff]
        %v1191 = vld [vmem:[%s1177 + $0x58] sm:$0xff]
        %v1192 = vld [vmem:[%s1177 + $0x60] sm:$0xf]
        %v1193 = vld [vmem:[%s1177 + $0x64] sm:$0xff]
        %v1194 = vld [vmem:[%s1177 + $0x6c] sm:$0xff]
        %v1195 = vld [vmem:[%s1177 + $0x74] sm:$0xf]
        %v1196 = vld [vmem:[%s1177 + $0x78] sm:$0xff]
        %v1197 = vld [vmem:[%s1177 + $0x80] sm:$0xff]
        %v1198 = vld [vmem:[%s1177 + $0x88] sm:$0xf]
        %v1199 = vld [vmem:[%s1177 + $0x8c] sm:$0xff]
        %v1200 = vld [vmem:[%s1177 + $0x94] sm:$0xff]
        %v1201 = vld [vmem:[%s1177 + $0x9c] sm:$0xf]
        %v1202 = vld [vmem:[%s1177 + $0xa0] sm:$0xff]
        %v1203 = vld [vmem:[%s1177 + $0xa8] sm:$0xff]
        %v1204 = vld [vmem:[%s1177 + $0xb0] sm:$0xf]
        %v1205 = vld [vmem:[%s1177 + $0xb4] sm:$0xff]
        %v1206 = vld [vmem:[%s1177 + $0xbc] sm:$0xff]
        %v1207 = vld [vmem:[%s1177 + $0xc4] sm:$0xf]
        %v1208 = vld [vmem:[%s1177 + $0xc8] sm:$0xff]
        %v1209 = vld [vmem:[%s1177 + $0xd0] sm:$0xff]
        %v1210 = vld [vmem:[%s1177 + $0xd8] sm:$0xf]
        %v1211 = vld [vmem:[%s1177 + $0xdc] sm:$0xff]
        %v1212 = vld [vmem:[%s1177 + $0xe4] sm:$0xff]
        %v1213 = vld [vmem:[%s1177 + $0xec] sm:$0xf]
        %v1214 = vld [vmem:[%s1177 + $0xf0] sm:$0xff]
        %v1215 = vld [vmem:[%s1177 + $0xf8] sm:$0xff]
        %v1216 = vld [vmem:[%s1177 + $0x100] sm:$0xf]
        %v1217 = vld [vmem:[%s1177 + $0x104] sm:$0xff]
        %v1218 = vld [vmem:[%s1177 + $0x10c] sm:$0xff]
        %v1219 = vld [vmem:[%s1177 + $0x114] sm:$0xf]
        %v1220 = vld [vmem:[%s1177 + $0x118] sm:$0xff]
        %v1221 = vld [vmem:[%s1177 + $0x120] sm:$0xff]
        %v1222 = vld [vmem:[%s1177 + $0x128] sm:$0xf]
        %v1223 = vld [vmem:[%s1177 + $0x12c] sm:$0xff]
        %v1224 = vld [vmem:[%s1177 + $0x134] sm:$0xff]
        %v1225 = vld [vmem:[%s1177 + $0x13c] sm:$0xf]
        %v1226 = vld [vmem:[%s1177 + $0x140] sm:$0xff]
        %v1227 = vld [vmem:[%s1177 + $0x148] sm:$0xff]
        %v1228 = vld [vmem:[%s1177 + $0x150] sm:$0xf]
        %v1229 = vld [vmem:[%s1177 + $0x154] sm:$0xff]
        %v1230 = vld [vmem:[%s1177 + $0x15c] sm:$0xff]
        %v1231 = vld [vmem:[%s1177 + $0x164] sm:$0xf]
        %v1232 = vld [vmem:[%s1177 + $0x168] sm:$0xff]
        %v1233 = vld [vmem:[%s1177 + $0x170] sm:$0xff]
        %v1234 = vld [vmem:[%s1177 + $0x178] sm:$0xf]
        %v1235 = vld [vmem:[%s1177 + $0x17c] sm:$0xff]
        %v1236 = vld [vmem:[%s1177 + $0x184] sm:$0xff]
        %v1237 = vld [vmem:[%s1177 + $0x18c] sm:$0xf]
        %v1238 = vld [vmem:[%s1177 + $0x190] sm:$0xff]
        %v1239 = vld [vmem:[%s1177 + $0x198] sm:$0xff]
        %v1240 = vld [vmem:[%s1177 + $0x1a0] sm:$0xf]
        %v1241 = vld [vmem:[%s1177 + $0x1a4] sm:$0xff]
        %v1242 = vld [vmem:[%s1177 + $0x1ac] sm:$0xff]
        %v1243 = vld [vmem:[%s1177 + $0x1b4] sm:$0xf]
        %v1244 = vld [vmem:[%s1177 + $0x1b8] sm:$0xff]
        %v1245 = vld [vmem:[%s1177 + $0x1c0] sm:$0xff]
        %v1246 = vld [vmem:[%s1177 + $0x1c8] sm:$0xf]
        %v1247 = vld [vmem:[%s1177 + $0x1cc] sm:$0xff]
        %v1248 = vld [vmem:[%s1177 + $0x1d4] sm:$0xff]
        %v1249 = vld [vmem:[%s1177 + $0x1dc] sm:$0xf]
        %v1250 = vld [vmem:[%s1177 + $0x1e0] sm:$0xff]
        %v1251 = vld [vmem:[%s1177 + $0x1e8] sm:$0xff]
        %v1252 = vld [vmem:[%s1177 + $0x1f0] sm:$0xf]
        %v1253 = vld [vmem:[%s1177 + $0x1f4] sm:$0xff]
        %v1254 = vld [vmem:[%s1177 + $0x1fc] sm:$0xff]
        %v1255 = vld [vmem:[%s1177 + $0x204] sm:$0xf]
        %v1256 = vld [vmem:[%s1177 + $0x208] sm:$0xff]
        %v1257 = vld [vmem:[%s1177 + $0x210] sm:$0xff]
        %v1258 = vld [vmem:[%s1177 + $0x218] sm:$0xf]
        %v1340 = vunpack.c.l.b16 %v1178
        %v1341 = vunpack.c.h.b16 %v1178
        %v1342 = vunpack.c.l.b16 %v1179
        %v1343 = vunpack.c.h.b16 %v1179
        %v1344 = vunpack.c.l.b16 %v1180
        %v1345 = vunpack.c.l.b16 %v1181
        %v1346 = vunpack.c.h.b16 %v1181
        %v1347 = vunpack.c.l.b16 %v1182
        %v1348 = vunpack.c.h.b16 %v1182
        %v1349 = vunpack.c.l.b16 %v1183
        %v1350 = vunpack.c.l.b16 %v1184
        %v1351 = vunpack.c.h.b16 %v1184
        %v1352 = vunpack.c.l.b16 %v1185
        %v1353 = vunpack.c.h.b16 %v1185
        %v1354 = vunpack.c.l.b16 %v1186
        %v1355 = vunpack.c.l.b16 %v1187
        %v1356 = vunpack.c.h.b16 %v1187
        %v1357 = vunpack.c.l.b16 %v1188
        %v1358 = vunpack.c.h.b16 %v1188
        %v1359 = vunpack.c.l.b16 %v1189
        %v1360 = vunpack.c.l.b16 %v1190
        %v1361 = vunpack.c.h.b16 %v1190
        %v1362 = vunpack.c.l.b16 %v1191
        %v1363 = vunpack.c.h.b16 %v1191
        %v1364 = vunpack.c.l.b16 %v1192
        %v1365 = vunpack.c.l.b16 %v1193
        %v1366 = vunpack.c.h.b16 %v1193
        %v1367 = vunpack.c.l.b16 %v1194
        %v1368 = vunpack.c.h.b16 %v1194
        %v1369 = vunpack.c.l.b16 %v1195
        %v1370 = vunpack.c.l.b16 %v1196
        %v1371 = vunpack.c.h.b16 %v1196
        %v1372 = vunpack.c.l.b16 %v1197
        %v1373 = vunpack.c.h.b16 %v1197
        %v1374 = vunpack.c.l.b16 %v1198
        %v1375 = vunpack.c.l.b16 %v1199
        %v1376 = vunpack.c.h.b16 %v1199
        %v1377 = vunpack.c.l.b16 %v1200
        %v1378 = vunpack.c.h.b16 %v1200
        %v1379 = vunpack.c.l.b16 %v1201
        %v1380 = vunpack.c.l.b16 %v1202
        %v1381 = vunpack.c.h.b16 %v1202
        %v1382 = vunpack.c.l.b16 %v1203
        %v1383 = vunpack.c.h.b16 %v1203
        %v1384 = vunpack.c.l.b16 %v1204
        %v1385 = vunpack.c.l.b16 %v1205
        %v1386 = vunpack.c.h.b16 %v1205
        %v1387 = vunpack.c.l.b16 %v1206
        %v1388 = vunpack.c.h.b16 %v1206
        %v1389 = vunpack.c.l.b16 %v1207
        %v1390 = vunpack.c.l.b16 %v1208
        %v1391 = vunpack.c.h.b16 %v1208
        %v1392 = vunpack.c.l.b16 %v1209
        %v1393 = vunpack.c.h.b16 %v1209
        %v1394 = vunpack.c.l.b16 %v1210
        %v1395 = vunpack.c.l.b16 %v1211
        %v1396 = vunpack.c.h.b16 %v1211
        %v1397 = vunpack.c.l.b16 %v1212
        %v1398 = vunpack.c.h.b16 %v1212
        %v1399 = vunpack.c.l.b16 %v1213
        %v1400 = vunpack.c.l.b16 %v1214
        %v1401 = vunpack.c.h.b16 %v1214
        %v1402 = vunpack.c.l.b16 %v1215
        %v1403 = vunpack.c.h.b16 %v1215
        %v1404 = vunpack.c.l.b16 %v1216
        %v1405 = vunpack.c.l.b16 %v1217
        %v1406 = vunpack.c.h.b16 %v1217
        %v1407 = vunpack.c.l.b16 %v1218
        %v1408 = vunpack.c.h.b16 %v1218
        %v1409 = vunpack.c.l.b16 %v1219
        %v1410 = vunpack.c.l.b16 %v1220
        %v1411 = vunpack.c.h.b16 %v1220
        %v1412 = vunpack.c.l.b16 %v1221
        %v1413 = vunpack.c.h.b16 %v1221
        %v1414 = vunpack.c.l.b16 %v1222
        %v1415 = vunpack.c.l.b16 %v1223
        %v1416 = vunpack.c.h.b16 %v1223
        %v1417 = vunpack.c.l.b16 %v1224
        %v1418 = vunpack.c.h.b16 %v1224
        %v1419 = vunpack.c.l.b16 %v1225
        %v1420 = vunpack.c.l.b16 %v1226
        %v1421 = vunpack.c.h.b16 %v1226
        %v1422 = vunpack.c.l.b16 %v1227
        %v1423 = vunpack.c.h.b16 %v1227
        %v1424 = vunpack.c.l.b16 %v1228
        %v1425 = vunpack.c.l.b16 %v1229
        %v1426 = vunpack.c.h.b16 %v1229
        %v1427 = vunpack.c.l.b16 %v1230
        %v1428 = vunpack.c.h.b16 %v1230
        %v1429 = vunpack.c.l.b16 %v1231
        %v1430 = vunpack.c.l.b16 %v1232
        %v1431 = vunpack.c.h.b16 %v1232
        %v1432 = vunpack.c.l.b16 %v1233
        %v1433 = vunpack.c.h.b16 %v1233
        %v1434 = vunpack.c.l.b16 %v1234
        %v1435 = vunpack.c.l.b16 %v1235
        %v1436 = vunpack.c.h.b16 %v1235
        %v1437 = vunpack.c.l.b16 %v1236
        %v1438 = vunpack.c.h.b16 %v1236
        %v1439 = vunpack.c.l.b16 %v1237
        %v1440 = vunpack.c.l.b16 %v1238
        %v1441 = vunpack.c.h.b16 %v1238
        %v1442 = vunpack.c.l.b16 %v1239
        %v1443 = vunpack.c.h.b16 %v1239
        %v1444 = vunpack.c.l.b16 %v1240
        %v1445 = vunpack.c.l.b16 %v1241
        %v1446 = vunpack.c.h.b16 %v1241
        %v1447 = vunpack.c.l.b16 %v1242
        %v1448 = vunpack.c.h.b16 %v1242
        %v1449 = vunpack.c.l.b16 %v1243
        %v1450 = vunpack.c.l.b16 %v1244
        %v1451 = vunpack.c.h.b16 %v1244
        %v1452 = vunpack.c.l.b16 %v1245
        %v1453 = vunpack.c.h.b16 %v1245
        %v1454 = vunpack.c.l.b16 %v1246
        %v1455 = vunpack.c.l.b16 %v1247
        %v1456 = vunpack.c.h.b16 %v1247
        %v1457 = vunpack.c.l.b16 %v1248
        %v1458 = vunpack.c.h.b16 %v1248
        %v1459 = vunpack.c.l.b16 %v1249
        %v1460 = vunpack.c.l.b16 %v1250
        %v1461 = vunpack.c.h.b16 %v1250
        %v1462 = vunpack.c.l.b16 %v1251
        %v1463 = vunpack.c.h.b16 %v1251
        %v1464 = vunpack.c.l.b16 %v1252
        %v1465 = vunpack.c.l.b16 %v1253
        %v1466 = vunpack.c.h.b16 %v1253
        %v1467 = vunpack.c.l.b16 %v1254
        %v1468 = vunpack.c.h.b16 %v1254
        %v1469 = vunpack.c.l.b16 %v1255
        %v1470 = vunpack.c.l.b16 %v1256
        %v1471 = vunpack.c.h.b16 %v1256
        %v1472 = vunpack.c.l.b16 %v1257
        %v1473 = vunpack.c.h.b16 %v1257
        %v1474 = vunpack.c.l.b16 %v1258
        %v1475 = vpack.c.b16 %v1345, %v1340
        %v1476 = vpack.c.b16 %v1346, %v1341
        %v1477 = vpack.c.b16 %v1347, %v1342
        %v1478 = vpack.c.b16 %v1348, %v1343
        %v1479 = vpack.c.b16 %v1349, %v1344
        %v1480 = vpack.c.b16 %v1355, %v1350
        %v1481 = vpack.c.b16 %v1356, %v1351
        %v1482 = vpack.c.b16 %v1357, %v1352
        %v1483 = vpack.c.b16 %v1358, %v1353
        %v1484 = vpack.c.b16 %v1359, %v1354
        %v1485 = vpack.c.b16 %v1365, %v1360
        %v1486 = vpack.c.b16 %v1366, %v1361
        %v1487 = vpack.c.b16 %v1367, %v1362
        %v1488 = vpack.c.b16 %v1368, %v1363
        %v1489 = vpack.c.b16 %v1369, %v1364
        %v1490 = vpack.c.b16 %v1375, %v1370
        %v1491 = vpack.c.b16 %v1376, %v1371
        %v1492 = vpack.c.b16 %v1377, %v1372
        %v1493 = vpack.c.b16 %v1378, %v1373
        %v1494 = vpack.c.b16 %v1379, %v1374
        %v1495 = vpack.c.b16 %v1385, %v1380
        %v1496 = vpack.c.b16 %v1386, %v1381
        %v1497 = vpack.c.b16 %v1387, %v1382
        %v1498 = vpack.c.b16 %v1388, %v1383
        %v1499 = vpack.c.b16 %v1389, %v1384
        %v1500 = vpack.c.b16 %v1395, %v1390
        %v1501 = vpack.c.b16 %v1396, %v1391
        %v1502 = vpack.c.b16 %v1397, %v1392
        %v1503 = vpack.c.b16 %v1398, %v1393
        %v1504 = vpack.c.b16 %v1399, %v1394
        %v1505 = vpack.c.b16 %v1405, %v1400
        %v1506 = vpack.c.b16 %v1406, %v1401
        %v1507 = vpack.c.b16 %v1407, %v1402
        %v1508 = vpack.c.b16 %v1408, %v1403
        %v1509 = vpack.c.b16 %v1409, %v1404
        %v1510 = vpack.c.b16 %v1415, %v1410
        %v1511 = vpack.c.b16 %v1416, %v1411
        %v1512 = vpack.c.b16 %v1417, %v1412
        %v1513 = vpack.c.b16 %v1418, %v1413
        %v1514 = vpack.c.b16 %v1419, %v1414
        %v1515 = vpack.c.b16 %v1425, %v1420
        %v1516 = vpack.c.b16 %v1426, %v1421
        %v1517 = vpack.c.b16 %v1427, %v1422
        %v1518 = vpack.c.b16 %v1428, %v1423
        %v1519 = vpack.c.b16 %v1429, %v1424
        %v1520 = vpack.c.b16 %v1435, %v1430
        %v1521 = vpack.c.b16 %v1436, %v1431
        %v1522 = vpack.c.b16 %v1437, %v1432
        %v1523 = vpack.c.b16 %v1438, %v1433
        %v1524 = vpack.c.b16 %v1439, %v1434
        %v1525 = vpack.c.b16 %v1445, %v1440
        %v1526 = vpack.c.b16 %v1446, %v1441
        %v1527 = vpack.c.b16 %v1447, %v1442
        %v1528 = vpack.c.b16 %v1448, %v1443
        %v1529 = vpack.c.b16 %v1449, %v1444
        %v1530 = vpack.c.b16 %v1455, %v1450
        %v1531 = vpack.c.b16 %v1456, %v1451
        %v1532 = vpack.c.b16 %v1457, %v1452
        %v1533 = vpack.c.b16 %v1458, %v1453
        %v1534 = vpack.c.b16 %v1459, %v1454
        %v1535 = vpack.c.b16 %v1465, %v1460
        %v1536 = vpack.c.b16 %v1466, %v1461
        %v1537 = vpack.c.b16 %v1467, %v1462
        %v1538 = vpack.c.b16 %v1468, %v1463
        %v1539 = vpack.c.b16 %v1469, %v1464
        %v1540 = vpack.c.b16 %v1470, %v1470
        %v1541 = vpack.c.b16 %v1471, %v1471
        %v1542 = vpack.c.b16 %v1472, %v1472
        %v1543 = vpack.c.b16 %v1473, %v1473
        %v1544 = vpack.c.b16 %v1474, %v1474
        %v1611 = vsel %vm793, %v1540, 0
        %v1614 = vsel %vm793, %v1541, 0
        %v1617 = vsel %vm793, %v1542, 0
        %v1620 = vsel %vm793, %v1543, 0
        %v1623 = vsel %vm793, %v1544, 0
        %1625 = vmatprep.subr.bf16.mxu0 %v1511
        %1626 = vmatpush1.bf16.msra.mxu0 %v1510
        %1627 = vmatprep.subr.bf16.mxu0 %v1506
        %1628 = vmatpush1.bf16.msra.mxu0 %v1505
        %1629 = vmatprep.subr.bf16.mxu0 %v1501
        %1630 = vmatpush1.bf16.msra.mxu0 %v1500
        %1631 = vmatprep.subr.bf16.mxu0 %v1496
        %1632 = vmatpush1.bf16.msra.mxu0 %v1495
        %1633 = vmatprep.subr.bf16.mxu0 %v1491
        %1634 = vmatpush1.bf16.msra.mxu0 %v1490
        %1635 = vmatprep.subr.bf16.mxu0 %v1486
        %1636 = vmatpush1.bf16.msra.mxu0 %v1485
        %1637 = vmatprep.subr.bf16.mxu0 %v1481
        %1638 = vmatpush1.bf16.msra.mxu0 %v1480
        %1639 = vmatprep.subr.bf16.mxu0 %v1476
        %1640 = vmatpush1.bf16.msra.mxu0 %v1475
        %1641 = vmatprep.subr.bf16.mxu0 0
        %1642 = vmatpush2.bf16.msra.mxu0 0
        %1643 = vmatprep.subr.bf16.mxu0 0
        %1644 = vmatpush2.bf16.msra.mxu0 0
        %1645 = vmatprep.subr.bf16.mxu0 %v1614
        %1646 = vmatpush2.bf16.msra.mxu0 %v1611
        %1647 = vmatprep.subr.bf16.mxu0 %v1536
        %1648 = vmatpush2.bf16.msra.mxu0 %v1535
        %1649 = vmatprep.subr.bf16.mxu0 %v1531
        %1650 = vmatpush2.bf16.msra.mxu0 %v1530
        %1651 = vmatprep.subr.bf16.mxu0 %v1526
        %1652 = vmatpush2.bf16.msra.mxu0 %v1525
        %1653 = vmatprep.subr.bf16.mxu0 %v1521
        %1654 = vmatpush2.bf16.msra.mxu0 %v1520
        %1655 = vmatprep.subr.bf16.mxu0 %v1516
        %1656 = vmatpush2.bf16.msra.mxu0 %v1515
        %1657 = vmatprep.mubr.bf16.mxu0 %v791
        %1658 = vmatmul.mubr.bf16.gmra.mxu0 %v435
        %v1659 = vpop.f32.mrf.mxu0
        %v1660 = vadd.f32 %v340, %v1659
        %v1661 = vpop.f32.mrf.mxu0
        %v1662 = vadd.f32 %v340, %v1661
        %v1663 = vpop.f32.mrf.mxu0
        %v1664 = vadd.f32 %v345, %v1663
        %v1665 = vpop.f32.mrf.mxu0
        %v1666 = vadd.f32 %v345, %v1665
        %1667 = vdwg.mxu0
        %1668 = vmatprep.subr.bf16.mxu0 %v1513
        %1669 = vmatpush1.bf16.msra.mxu0 %v1512
        %1670 = vmatprep.subr.bf16.mxu0 %v1508
        %1671 = vmatpush1.bf16.msra.mxu0 %v1507
        %1672 = vmatprep.subr.bf16.mxu0 %v1503
        %1673 = vmatpush1.bf16.msra.mxu0 %v1502
        %1674 = vmatprep.subr.bf16.mxu0 %v1498
        %1675 = vmatpush1.bf16.msra.mxu0 %v1497
        %1676 = vmatprep.subr.bf16.mxu0 %v1493
        %1677 = vmatpush1.bf16.msra.mxu0 %v1492
        %1678 = vmatprep.subr.bf16.mxu0 %v1488
        %1679 = vmatpush1.bf16.msra.mxu0 %v1487
        %1680 = vmatprep.subr.bf16.mxu0 %v1483
        %1681 = vmatpush1.bf16.msra.mxu0 %v1482
        %1682 = vmatprep.subr.bf16.mxu0 %v1478
        %1683 = vmatpush1.bf16.msra.mxu0 %v1477
        %1684 = vmatprep.subr.bf16.mxu0 0
        %1685 = vmatpush2.bf16.msra.mxu0 0
        %1686 = vmatprep.subr.bf16.mxu0 0
        %1687 = vmatpush2.bf16.msra.mxu0 0
        %1688 = vmatprep.subr.bf16.mxu0 %v1620
        %1689 = vmatpush2.bf16.msra.mxu0 %v1617
        %1690 = vmatprep.subr.bf16.mxu0 %v1538
        %1691 = vmatpush2.bf16.msra.mxu0 %v1537
        %1692 = vmatprep.subr.bf16.mxu0 %v1533
        %1693 = vmatpush2.bf16.msra.mxu0 %v1532
        %1694 = vmatprep.subr.bf16.mxu0 %v1528
        %1695 = vmatpush2.bf16.msra.mxu0 %v1527
        %1696 = vmatprep.subr.bf16.mxu0 %v1523
        %1697 = vmatpush2.bf16.msra.mxu0 %v1522
        %1698 = vmatprep.subr.bf16.mxu0 %v1518
        %1699 = vmatpush2.bf16.msra.mxu0 %v1517
        %1700 = vmatprep.mubr.bf16.mxu0 %v791
        %1701 = vmatmul.mubr.bf16.gmra.mxu0 %v435
        %v1702 = vpop.f32.mrf.mxu0
        %v1703 = vadd.f32 %v340, %v1702
        %v1704 = vpop.f32.mrf.mxu0
        %v1705 = vadd.f32 %v340, %v1704
        %v1706 = vpop.f32.mrf.mxu0
        %v1707 = vadd.f32 %v345, %v1706
        %v1708 = vpop.f32.mrf.mxu0
        %v1709 = vadd.f32 %v345, %v1708
        %1710 = vdwg.mxu0
        %1711 = vmatprep.subr.bf16.mxu0 0
        %1712 = vmatpush1.bf16.msra.mxu0 %v1514
        %1713 = vmatprep.subr.bf16.mxu0 0
        %1714 = vmatpush1.bf16.msra.mxu0 %v1509
        %1715 = vmatprep.subr.bf16.mxu0 0
        %1716 = vmatpush1.bf16.msra.mxu0 %v1504
        %1717 = vmatprep.subr.bf16.mxu0 0
        %1718 = vmatpush1.bf16.msra.mxu0 %v1499
        %1719 = vmatprep.subr.bf16.mxu0 0
        %1720 = vmatpush1.bf16.msra.mxu0 %v1494
        %1721 = vmatprep.subr.bf16.mxu0 0
        %1722 = vmatpush1.bf16.msra.mxu0 %v1489
        %1723 = vmatprep.subr.bf16.mxu0 0
        %1724 = vmatpush1.bf16.msra.mxu0 %v1484
        %1725 = vmatprep.subr.bf16.mxu0 0
        %1726 = vmatpush1.bf16.msra.mxu0 %v1479
        %1727 = vmatprep.subr.bf16.mxu0 0
        %1728 = vmatpush2.bf16.msra.mxu0 0
        %1729 = vmatprep.subr.bf16.mxu0 0
        %1730 = vmatpush2.bf16.msra.mxu0 0
        %1731 = vmatprep.subr.bf16.mxu0 0
        %1732 = vmatpush2.bf16.msra.mxu0 %v1623
        %1733 = vmatprep.subr.bf16.mxu0 0
        %1734 = vmatpush2.bf16.msra.mxu0 %v1539
        %1735 = vmatprep.subr.bf16.mxu0 0
        %1736 = vmatpush2.bf16.msra.mxu0 %v1534
        %1737 = vmatprep.subr.bf16.mxu0 0
        %1738 = vmatpush2.bf16.msra.mxu0 %v1529
        %1739 = vmatprep.subr.bf16.mxu0 0
        %1740 = vmatpush2.bf16.msra.mxu0 %v1524
        %1741 = vmatprep.subr.bf16.mxu0 0
        %1742 = vmatpush2.bf16.msra.mxu0 %v1519
        %1743 = vmatprep.mubr.bf16.mxu0 %v791
        %1744 = vmatmul.mubr.bf16.gmra.mxu0 %v435
        %v1745 = vpop.f32.mrf.mxu0
        %v1746 = vadd.f32 %v340, %v1745
        %v1747 = vpop.f32.mrf.mxu0
        %v1748 = vpop.f32.mrf.mxu0
        %v1749 = vadd.f32 %v345, %v1748
        %v1750 = vpop.f32.mrf.mxu0
        %1751 = vdwg.mxu0
        %v1752 = vmax.f32 %v1660, 0.0
        %v1753 = vmax.f32 %v1662, 0.0
        %v1754 = vmax.f32 %v1703, 0.0
        %v1755 = vmax.f32 %v1705, 0.0
        %v1756 = vmax.f32 %v1746, 0.0
        %v1757 = vmax.f32 %v1664, 0.0
        %v1758 = vmax.f32 %v1666, 0.0
        %v1759 = vmax.f32 %v1707, 0.0
        %v1760 = vmax.f32 %v1709, 0.0
        %v1761 = vmax.f32 %v1749, 0.0
        %v1763 = vsel %vm793, %v1757, 0
        %v1766 = vsel %vm793, %v1758, 0
        %v1769 = vsel %vm793, %v1759, 0
        %v1772 = vsel %vm793, %v1760, 0
        %v1775 = vsel %vm793, %v1761, 0
        %1777 = vmatprep.subr.mxu0 0.0
        %1778 = vmatpush1.msra.mxu0 0.0
        %1779 = vmatprep.subr.mxu0 0.0
        %1780 = vmatpush1.msra.mxu0 0.0
        %1781 = vmatprep.subr.mxu0 0.0
        %1782 = vmatpush1.msra.mxu0 0.0
        %1783 = vmatprep.subr.mxu0 0.0
        %1784 = vmatpush1.msra.mxu0 0.0
        %1785 = vmatprep.subr.mxu0 0.0
        %1786 = vmatpush1.msra.mxu0 0.0
        %1787 = vmatprep.subr.mxu0 0.0
        %1788 = vmatpush1.msra.mxu0 0.0
        %1789 = vmatprep.subr.mxu0 0.0
        %1790 = vmatpush1.msra.mxu0 0.0
        %1791 = vmatprep.subr.mxu0 0.0
        %1792 = vmatpush1.msra.mxu0 0.0
        %1793 = vmatprep.subr.mxu0 0.0
        %1794 = vmatpush1.msra.mxu0 0.0
        %1795 = vmatprep.subr.mxu0 0.0
        %1796 = vmatpush1.msra.mxu0 0.0
        %1797 = vmatprep.subr.mxu0 0.0
        %1798 = vmatpush1.msra.mxu0 0.0
        %1799 = vmatprep.subr.mxu0 0.0
        %1800 = vmatpush1.msra.mxu0 0.0
        %1801 = vmatprep.subr.mxu0 0.0
        %1802 = vmatpush1.msra.mxu0 0.0
        %1803 = vmatprep.subr.mxu0 0.0
        %1804 = vmatpush1.msra.mxu0 0.0
        %1805 = vmatprep.subr.mxu0 %v1766
        %1806 = vmatpush1.msra.mxu0 %v1763
        %1807 = vmatprep.subr.mxu0 %v1753
        %1808 = vmatpush1.msra.mxu0 %v1752
        %1809 = vmatprep.subr.mxu0 0.0
        %1810 = vmatpush2.msra.mxu0 0.0
        %1811 = vmatprep.subr.mxu0 0.0
        %1812 = vmatpush2.msra.mxu0 0.0
        %1813 = vmatprep.subr.mxu0 0.0
        %1814 = vmatpush2.msra.mxu0 0.0
        %1815 = vmatprep.subr.mxu0 0.0
        %1816 = vmatpush2.msra.mxu0 0.0
        %1817 = vmatprep.subr.mxu0 0.0
        %1818 = vmatpush2.msra.mxu0 0.0
        %1819 = vmatprep.subr.mxu0 0.0
        %1820 = vmatpush2.msra.mxu0 0.0
        %1821 = vmatprep.subr.mxu0 0.0
        %1822 = vmatpush2.msra.mxu0 0.0
        %1823 = vmatprep.subr.mxu0 0.0
        %1824 = vmatpush2.msra.mxu0 0.0
        %1825 = vmatprep.subr.mxu0 0.0
        %1826 = vmatpush2.msra.mxu0 0.0
        %1827 = vmatprep.subr.mxu0 0.0
        %1828 = vmatpush2.msra.mxu0 0.0
        %1829 = vmatprep.subr.mxu0 0.0
        %1830 = vmatpush2.msra.mxu0 0.0
        %1831 = vmatprep.subr.mxu0 0.0
        %1832 = vmatpush2.msra.mxu0 0.0
        %1833 = vmatprep.subr.mxu0 0.0
        %1834 = vmatpush2.msra.mxu0 0.0
        %1835 = vmatprep.subr.mxu0 0.0
        %1836 = vmatpush2.msra.mxu0 0.0
        %1837 = vmatprep.subr.mxu0 0.0
        %1838 = vmatpush2.msra.mxu0 0.0
        %1839 = vmatprep.subr.mxu0 0.0
        %1840 = vmatpush2.msra.mxu0 0.0
        %1841 = vmatprep.mubr.f32.mxu0 0.0
        %1842 = vmatmul.mubr.f32.gmra.mxu0 %v948
        %v1843 = vpop.f32.mrf.mxu0
        %v1844 = vadd.f32 0.0, %v1843
        %v1845 = vpop.f32.mrf.mxu0
        %v1846 = vadd.f32 0.0, %v1845
        %1847 = vdwg.mxu0
        %1848 = vmatprep.subr.mxu0 0.0
        %1849 = vmatpush1.msra.mxu0 0.0
        %1850 = vmatprep.subr.mxu0 0.0
        %1851 = vmatpush1.msra.mxu0 0.0
        %1852 = vmatprep.subr.mxu0 0.0
        %1853 = vmatpush1.msra.mxu0 0.0
        %1854 = vmatprep.subr.mxu0 0.0
        %1855 = vmatpush1.msra.mxu0 0.0
        %1856 = vmatprep.subr.mxu0 0.0
        %1857 = vmatpush1.msra.mxu0 0.0
        %1858 = vmatprep.subr.mxu0 0.0
        %1859 = vmatpush1.msra.mxu0 0.0
        %1860 = vmatprep.subr.mxu0 0.0
        %1861 = vmatpush1.msra.mxu0 0.0
        %1862 = vmatprep.subr.mxu0 0.0
        %1863 = vmatpush1.msra.mxu0 0.0
        %1864 = vmatprep.subr.mxu0 0.0
        %1865 = vmatpush1.msra.mxu0 0.0
        %1866 = vmatprep.subr.mxu0 0.0
        %1867 = vmatpush1.msra.mxu0 0.0
        %1868 = vmatprep.subr.mxu0 0.0
        %1869 = vmatpush1.msra.mxu0 0.0
        %1870 = vmatprep.subr.mxu0 0.0
        %1871 = vmatpush1.msra.mxu0 0.0
        %1872 = vmatprep.subr.mxu0 0.0
        %1873 = vmatpush1.msra.mxu0 0.0
        %1874 = vmatprep.subr.mxu0 0.0
        %1875 = vmatpush1.msra.mxu0 0.0
        %1876 = vmatprep.subr.mxu0 %v1772
        %1877 = vmatpush1.msra.mxu0 %v1769
        %1878 = vmatprep.subr.mxu0 %v1755
        %1879 = vmatpush1.msra.mxu0 %v1754
        %1880 = vmatprep.subr.mxu0 0.0
        %1881 = vmatpush2.msra.mxu0 0.0
        %1882 = vmatprep.subr.mxu0 0.0
        %1883 = vmatpush2.msra.mxu0 0.0
        %1884 = vmatprep.subr.mxu0 0.0
        %1885 = vmatpush2.msra.mxu0 0.0
        %1886 = vmatprep.subr.mxu0 0.0
        %1887 = vmatpush2.msra.mxu0 0.0
        %1888 = vmatprep.subr.mxu0 0.0
        %1889 = vmatpush2.msra.mxu0 0.0
        %1890 = vmatprep.subr.mxu0 0.0
        %1891 = vmatpush2.msra.mxu0 0.0
        %1892 = vmatprep.subr.mxu0 0.0
        %1893 = vmatpush2.msra.mxu0 0.0
        %1894 = vmatprep.subr.mxu0 0.0
        %1895 = vmatpush2.msra.mxu0 0.0
        %1896 = vmatprep.subr.mxu0 0.0
        %1897 = vmatpush2.msra.mxu0 0.0
        %1898 = vmatprep.subr.mxu0 0.0
        %1899 = vmatpush2.msra.mxu0 0.0
        %1900 = vmatprep.subr.mxu0 0.0
        %1901 = vmatpush2.msra.mxu0 0.0
        %1902 = vmatprep.subr.mxu0 0.0
        %1903 = vmatpush2.msra.mxu0 0.0
        %1904 = vmatprep.subr.mxu0 0.0
        %1905 = vmatpush2.msra.mxu0 0.0
        %1906 = vmatprep.subr.mxu0 0.0
        %1907 = vmatpush2.msra.mxu0 0.0
        %1908 = vmatprep.subr.mxu0 0.0
        %1909 = vmatpush2.msra.mxu0 0.0
        %1910 = vmatprep.subr.mxu0 0.0
        %1911 = vmatpush2.msra.mxu0 0.0
        %1912 = vmatprep.mubr.f32.mxu0 0.0
        %1913 = vmatmul.mubr.f32.gmra.mxu0 %v948
        %v1914 = vpop.f32.mrf.mxu0
        %v1915 = vadd.f32 0.0, %v1914
        %v1916 = vpop.f32.mrf.mxu0
        %v1917 = vadd.f32 0.0, %v1916
        %1918 = vdwg.mxu0
        %1919 = vmatprep.subr.mxu0 0.0
        %1920 = vmatpush1.msra.mxu0 0.0
        %1921 = vmatprep.subr.mxu0 0.0
        %1922 = vmatpush1.msra.mxu0 0.0
        %1923 = vmatprep.subr.mxu0 0.0
        %1924 = vmatpush1.msra.mxu0 0.0
        %1925 = vmatprep.subr.mxu0 0.0
        %1926 = vmatpush1.msra.mxu0 0.0
        %1927 = vmatprep.subr.mxu0 0.0
        %1928 = vmatpush1.msra.mxu0 0.0
        %1929 = vmatprep.subr.mxu0 0.0
        %1930 = vmatpush1.msra.mxu0 0.0
        %1931 = vmatprep.subr.mxu0 0.0
        %1932 = vmatpush1.msra.mxu0 0.0
        %1933 = vmatprep.subr.mxu0 0.0
        %1934 = vmatpush1.msra.mxu0 0.0
        %1935 = vmatprep.subr.mxu0 0.0
        %1936 = vmatpush1.msra.mxu0 0.0
        %1937 = vmatprep.subr.mxu0 0.0
        %1938 = vmatpush1.msra.mxu0 0.0
        %1939 = vmatprep.subr.mxu0 0.0
        %1940 = vmatpush1.msra.mxu0 0.0
        %1941 = vmatprep.subr.mxu0 0.0
        %1942 = vmatpush1.msra.mxu0 0.0
        %1943 = vmatprep.subr.mxu0 0.0
        %1944 = vmatpush1.msra.mxu0 0.0
        %1945 = vmatprep.subr.mxu0 0.0
        %1946 = vmatpush1.msra.mxu0 0.0
        %1947 = vmatprep.subr.mxu0 0.0
        %1948 = vmatpush1.msra.mxu0 %v1775
        %1949 = vmatprep.subr.mxu0 0.0
        %1950 = vmatpush1.msra.mxu0 %v1756
        %1951 = vmatprep.subr.mxu0 0.0
        %1952 = vmatpush2.msra.mxu0 0.0
        %1953 = vmatprep.subr.mxu0 0.0
        %1954 = vmatpush2.msra.mxu0 0.0
        %1955 = vmatprep.subr.mxu0 0.0
        %1956 = vmatpush2.msra.mxu0 0.0
        %1957 = vmatprep.subr.mxu0 0.0
        %1958 = vmatpush2.msra.mxu0 0.0
        %1959 = vmatprep.subr.mxu0 0.0
        %1960 = vmatpush2.msra.mxu0 0.0
        %1961 = vmatprep.subr.mxu0 0.0
        %1962 = vmatpush2.msra.mxu0 0.0
        %1963 = vmatprep.subr.mxu0 0.0
        %1964 = vmatpush2.msra.mxu0 0.0
        %1965 = vmatprep.subr.mxu0 0.0
        %1966 = vmatpush2.msra.mxu0 0.0
        %1967 = vmatprep.subr.mxu0 0.0
        %1968 = vmatpush2.msra.mxu0 0.0
        %1969 = vmatprep.subr.mxu0 0.0
        %1970 = vmatpush2.msra.mxu0 0.0
        %1971 = vmatprep.subr.mxu0 0.0
        %1972 = vmatpush2.msra.mxu0 0.0
        %1973 = vmatprep.subr.mxu0 0.0
        %1974 = vmatpush2.msra.mxu0 0.0
        %1975 = vmatprep.subr.mxu0 0.0
        %1976 = vmatpush2.msra.mxu0 0.0
        %1977 = vmatprep.subr.mxu0 0.0
        %1978 = vmatpush2.msra.mxu0 0.0
        %1979 = vmatprep.subr.mxu0 0.0
        %1980 = vmatpush2.msra.mxu0 0.0
        %1981 = vmatprep.subr.mxu0 0.0
        %1982 = vmatpush2.msra.mxu0 0.0
        %1983 = vmatprep.mubr.f32.mxu0 0.0
        %1984 = vmatmul.mubr.f32.gmra.mxu0 %v948
        %v1985 = vpop.f32.mrf.mxu0
        %v1986 = vadd.f32 0.0, %v1985
        %v1987 = vpop.f32.mrf.mxu0
        %1988 = vdwg.mxu0
        %v1989 = vmax.f32 %v1032, %v1844
        %v1990 = vmax.f32 %v1034, %v1846
        %v1991 = vmax.f32 %v1103, %v1915
        %v1992 = vmax.f32 %v1105, %v1917
        %v1993 = vmax.f32 %v1174, %v1986
        %s1994 = scalar_lea.vmem %s331, 1080
        %v1995 = vld [vmem:[%s1994] sm:$0xff]
        %v1996 = vld [vmem:[%s1994 + $0x8] sm:$0xff]
        %v1997 = vld [vmem:[%s1994 + $0x10] sm:$0xf]
        %v1998 = vld [vmem:[%s1994 + $0x14] sm:$0xff]
        %v1999 = vld [vmem:[%s1994 + $0x1c] sm:$0xff]
        %v2000 = vld [vmem:[%s1994 + $0x24] sm:$0xf]
        %v2001 = vld [vmem:[%s1994 + $0x28] sm:$0xff]
        %v2002 = vld [vmem:[%s1994 + $0x30] sm:$0xff]
        %v2003 = vld [vmem:[%s1994 + $0x38] sm:$0xf]
        %v2004 = vld [vmem:[%s1994 + $0x3c] sm:$0xff]
        %v2005 = vld [vmem:[%s1994 + $0x44] sm:$0xff]
        %v2006 = vld [vmem:[%s1994 + $0x4c] sm:$0xf]
        %v2007 = vld [vmem:[%s1994 + $0x50] sm:$0xff]
        %v2008 = vld [vmem:[%s1994 + $0x58] sm:$0xff]
        %v2009 = vld [vmem:[%s1994 + $0x60] sm:$0xf]
        %v2010 = vld [vmem:[%s1994 + $0x64] sm:$0xff]
        %v2011 = vld [vmem:[%s1994 + $0x6c] sm:$0xff]
        %v2012 = vld [vmem:[%s1994 + $0x74] sm:$0xf]
        %v2013 = vld [vmem:[%s1994 + $0x78] sm:$0xff]
        %v2014 = vld [vmem:[%s1994 + $0x80] sm:$0xff]
        %v2015 = vld [vmem:[%s1994 + $0x88] sm:$0xf]
        %v2016 = vld [vmem:[%s1994 + $0x8c] sm:$0xff]
        %v2017 = vld [vmem:[%s1994 + $0x94] sm:$0xff]
        %v2018 = vld [vmem:[%s1994 + $0x9c] sm:$0xf]
        %v2019 = vld [vmem:[%s1994 + $0xa0] sm:$0xff]
        %v2020 = vld [vmem:[%s1994 + $0xa8] sm:$0xff]
        %v2021 = vld [vmem:[%s1994 + $0xb0] sm:$0xf]
        %v2022 = vld [vmem:[%s1994 + $0xb4] sm:$0xff]
        %v2023 = vld [vmem:[%s1994 + $0xbc] sm:$0xff]
        %v2024 = vld [vmem:[%s1994 + $0xc4] sm:$0xf]
        %v2025 = vld [vmem:[%s1994 + $0xc8] sm:$0xff]
        %v2026 = vld [vmem:[%s1994 + $0xd0] sm:$0xff]
        %v2027 = vld [vmem:[%s1994 + $0xd8] sm:$0xf]
        %v2028 = vld [vmem:[%s1994 + $0xdc] sm:$0xff]
        %v2029 = vld [vmem:[%s1994 + $0xe4] sm:$0xff]
        %v2030 = vld [vmem:[%s1994 + $0xec] sm:$0xf]
        %v2031 = vld [vmem:[%s1994 + $0xf0] sm:$0xff]
        %v2032 = vld [vmem:[%s1994 + $0xf8] sm:$0xff]
        %v2033 = vld [vmem:[%s1994 + $0x100] sm:$0xf]
        %v2034 = vld [vmem:[%s1994 + $0x104] sm:$0xff]
        %v2035 = vld [vmem:[%s1994 + $0x10c] sm:$0xff]
        %v2036 = vld [vmem:[%s1994 + $0x114] sm:$0xf]
        %v2037 = vld [vmem:[%s1994 + $0x118] sm:$0xff]
        %v2038 = vld [vmem:[%s1994 + $0x120] sm:$0xff]
        %v2039 = vld [vmem:[%s1994 + $0x128] sm:$0xf]
        %v2040 = vld [vmem:[%s1994 + $0x12c] sm:$0xff]
        %v2041 = vld [vmem:[%s1994 + $0x134] sm:$0xff]
        %v2042 = vld [vmem:[%s1994 + $0x13c] sm:$0xf]
        %v2043 = vld [vmem:[%s1994 + $0x140] sm:$0xff]
        %v2044 = vld [vmem:[%s1994 + $0x148] sm:$0xff]
        %v2045 = vld [vmem:[%s1994 + $0x150] sm:$0xf]
        %v2046 = vld [vmem:[%s1994 + $0x154] sm:$0xff]
        %v2047 = vld [vmem:[%s1994 + $0x15c] sm:$0xff]
        %v2048 = vld [vmem:[%s1994 + $0x164] sm:$0xf]
        %v2049 = vld [vmem:[%s1994 + $0x168] sm:$0xff]
        %v2050 = vld [vmem:[%s1994 + $0x170] sm:$0xff]
        %v2051 = vld [vmem:[%s1994 + $0x178] sm:$0xf]
        %v2052 = vld [vmem:[%s1994 + $0x17c] sm:$0xff]
        %v2053 = vld [vmem:[%s1994 + $0x184] sm:$0xff]
        %v2054 = vld [vmem:[%s1994 + $0x18c] sm:$0xf]
        %v2055 = vld [vmem:[%s1994 + $0x190] sm:$0xff]
        %v2056 = vld [vmem:[%s1994 + $0x198] sm:$0xff]
        %v2057 = vld [vmem:[%s1994 + $0x1a0] sm:$0xf]
        %v2058 = vld [vmem:[%s1994 + $0x1a4] sm:$0xff]
        %v2059 = vld [vmem:[%s1994 + $0x1ac] sm:$0xff]
        %v2060 = vld [vmem:[%s1994 + $0x1b4] sm:$0xf]
        %v2061 = vld [vmem:[%s1994 + $0x1b8] sm:$0xff]
        %v2062 = vld [vmem:[%s1994 + $0x1c0] sm:$0xff]
        %v2063 = vld [vmem:[%s1994 + $0x1c8] sm:$0xf]
        %v2064 = vld [vmem:[%s1994 + $0x1cc] sm:$0xff]
        %v2065 = vld [vmem:[%s1994 + $0x1d4] sm:$0xff]
        %v2066 = vld [vmem:[%s1994 + $0x1dc] sm:$0xf]
        %v2067 = vld [vmem:[%s1994 + $0x1e0] sm:$0xff]
        %v2068 = vld [vmem:[%s1994 + $0x1e8] sm:$0xff]
        %v2069 = vld [vmem:[%s1994 + $0x1f0] sm:$0xf]
        %v2070 = vld [vmem:[%s1994 + $0x1f4] sm:$0xff]
        %v2071 = vld [vmem:[%s1994 + $0x1fc] sm:$0xff]
        %v2072 = vld [vmem:[%s1994 + $0x204] sm:$0xf]
        %v2073 = vld [vmem:[%s1994 + $0x208] sm:$0xff]
        %v2074 = vld [vmem:[%s1994 + $0x210] sm:$0xff]
        %v2075 = vld [vmem:[%s1994 + $0x218] sm:$0xf]
        %v2157 = vunpack.c.l.b16 %v1995
        %v2158 = vunpack.c.h.b16 %v1995
        %v2159 = vunpack.c.l.b16 %v1996
        %v2160 = vunpack.c.h.b16 %v1996
        %v2161 = vunpack.c.l.b16 %v1997
        %v2162 = vunpack.c.l.b16 %v1998
        %v2163 = vunpack.c.h.b16 %v1998
        %v2164 = vunpack.c.l.b16 %v1999
        %v2165 = vunpack.c.h.b16 %v1999
        %v2166 = vunpack.c.l.b16 %v2000
        %v2167 = vunpack.c.l.b16 %v2001
        %v2168 = vunpack.c.h.b16 %v2001
        %v2169 = vunpack.c.l.b16 %v2002
        %v2170 = vunpack.c.h.b16 %v2002
        %v2171 = vunpack.c.l.b16 %v2003
        %v2172 = vunpack.c.l.b16 %v2004
        %v2173 = vunpack.c.h.b16 %v2004
        %v2174 = vunpack.c.l.b16 %v2005
        %v2175 = vunpack.c.h.b16 %v2005
        %v2176 = vunpack.c.l.b16 %v2006
        %v2177 = vunpack.c.l.b16 %v2007
        %v2178 = vunpack.c.h.b16 %v2007
        %v2179 = vunpack.c.l.b16 %v2008
        %v2180 = vunpack.c.h.b16 %v2008
        %v2181 = vunpack.c.l.b16 %v2009
        %v2182 = vunpack.c.l.b16 %v2010
        %v2183 = vunpack.c.h.b16 %v2010
        %v2184 = vunpack.c.l.b16 %v2011
        %v2185 = vunpack.c.h.b16 %v2011
        %v2186 = vunpack.c.l.b16 %v2012
        %v2187 = vunpack.c.l.b16 %v2013
        %v2188 = vunpack.c.h.b16 %v2013
        %v2189 = vunpack.c.l.b16 %v2014
        %v2190 = vunpack.c.h.b16 %v2014
        %v2191 = vunpack.c.l.b16 %v2015
        %v2192 = vunpack.c.l.b16 %v2016
        %v2193 = vunpack.c.h.b16 %v2016
        %v2194 = vunpack.c.l.b16 %v2017
        %v2195 = vunpack.c.h.b16 %v2017
        %v2196 = vunpack.c.l.b16 %v2018
        %v2197 = vunpack.c.l.b16 %v2019
        %v2198 = vunpack.c.h.b16 %v2019
        %v2199 = vunpack.c.l.b16 %v2020
        %v2200 = vunpack.c.h.b16 %v2020
        %v2201 = vunpack.c.l.b16 %v2021
        %v2202 = vunpack.c.l.b16 %v2022
        %v2203 = vunpack.c.h.b16 %v2022
        %v2204 = vunpack.c.l.b16 %v2023
        %v2205 = vunpack.c.h.b16 %v2023
        %v2206 = vunpack.c.l.b16 %v2024
        %v2207 = vunpack.c.l.b16 %v2025
        %v2208 = vunpack.c.h.b16 %v2025
        %v2209 = vunpack.c.l.b16 %v2026
        %v2210 = vunpack.c.h.b16 %v2026
        %v2211 = vunpack.c.l.b16 %v2027
        %v2212 = vunpack.c.l.b16 %v2028
        %v2213 = vunpack.c.h.b16 %v2028
        %v2214 = vunpack.c.l.b16 %v2029
        %v2215 = vunpack.c.h.b16 %v2029
        %v2216 = vunpack.c.l.b16 %v2030
        %v2217 = vunpack.c.l.b16 %v2031
        %v2218 = vunpack.c.h.b16 %v2031
        %v2219 = vunpack.c.l.b16 %v2032
        %v2220 = vunpack.c.h.b16 %v2032
        %v2221 = vunpack.c.l.b16 %v2033
        %v2222 = vunpack.c.l.b16 %v2034
        %v2223 = vunpack.c.h.b16 %v2034
        %v2224 = vunpack.c.l.b16 %v2035
        %v2225 = vunpack.c.h.b16 %v2035
        %v2226 = vunpack.c.l.b16 %v2036
        %v2227 = vunpack.c.l.b16 %v2037
        %v2228 = vunpack.c.h.b16 %v2037
        %v2229 = vunpack.c.l.b16 %v2038
        %v2230 = vunpack.c.h.b16 %v2038
        %v2231 = vunpack.c.l.b16 %v2039
        %v2232 = vunpack.c.l.b16 %v2040
        %v2233 = vunpack.c.h.b16 %v2040
        %v2234 = vunpack.c.l.b16 %v2041
        %v2235 = vunpack.c.h.b16 %v2041
        %v2236 = vunpack.c.l.b16 %v2042
        %v2237 = vunpack.c.l.b16 %v2043
        %v2238 = vunpack.c.h.b16 %v2043
        %v2239 = vunpack.c.l.b16 %v2044
        %v2240 = vunpack.c.h.b16 %v2044
        %v2241 = vunpack.c.l.b16 %v2045
        %v2242 = vunpack.c.l.b16 %v2046
        %v2243 = vunpack.c.h.b16 %v2046
        %v2244 = vunpack.c.l.b16 %v2047
        %v2245 = vunpack.c.h.b16 %v2047
        %v2246 = vunpack.c.l.b16 %v2048
        %v2247 = vunpack.c.l.b16 %v2049
        %v2248 = vunpack.c.h.b16 %v2049
        %v2249 = vunpack.c.l.b16 %v2050
        %v2250 = vunpack.c.h.b16 %v2050
        %v2251 = vunpack.c.l.b16 %v2051
        %v2252 = vunpack.c.l.b16 %v2052
        %v2253 = vunpack.c.h.b16 %v2052
        %v2254 = vunpack.c.l.b16 %v2053
        %v2255 = vunpack.c.h.b16 %v2053
        %v2256 = vunpack.c.l.b16 %v2054
        %v2257 = vunpack.c.l.b16 %v2055
        %v2258 = vunpack.c.h.b16 %v2055
        %v2259 = vunpack.c.l.b16 %v2056
        %v2260 = vunpack.c.h.b16 %v2056
        %v2261 = vunpack.c.l.b16 %v2057
        %v2262 = vunpack.c.l.b16 %v2058
        %v2263 = vunpack.c.h.b16 %v2058
        %v2264 = vunpack.c.l.b16 %v2059
        %v2265 = vunpack.c.h.b16 %v2059
        %v2266 = vunpack.c.l.b16 %v2060
        %v2267 = vunpack.c.l.b16 %v2061
        %v2268 = vunpack.c.h.b16 %v2061
        %v2269 = vunpack.c.l.b16 %v2062
        %v2270 = vunpack.c.h.b16 %v2062
        %v2271 = vunpack.c.l.b16 %v2063
        %v2272 = vunpack.c.l.b16 %v2064
        %v2273 = vunpack.c.h.b16 %v2064
        %v2274 = vunpack.c.l.b16 %v2065
        %v2275 = vunpack.c.h.b16 %v2065
        %v2276 = vunpack.c.l.b16 %v2066
        %v2277 = vunpack.c.l.b16 %v2067
        %v2278 = vunpack.c.h.b16 %v2067
        %v2279 = vunpack.c.l.b16 %v2068
        %v2280 = vunpack.c.h.b16 %v2068
        %v2281 = vunpack.c.l.b16 %v2069
        %v2282 = vunpack.c.l.b16 %v2070
        %v2283 = vunpack.c.h.b16 %v2070
        %v2284 = vunpack.c.l.b16 %v2071
        %v2285 = vunpack.c.h.b16 %v2071
        %v2286 = vunpack.c.l.b16 %v2072
        %v2287 = vunpack.c.l.b16 %v2073
        %v2288 = vunpack.c.h.b16 %v2073
        %v2289 = vunpack.c.l.b16 %v2074
        %v2290 = vunpack.c.h.b16 %v2074
        %v2291 = vunpack.c.l.b16 %v2075
        %v2292 = vpack.c.b16 %v2162, %v2157
        %v2293 = vpack.c.b16 %v2163, %v2158
        %v2294 = vpack.c.b16 %v2164, %v2159
        %v2295 = vpack.c.b16 %v2165, %v2160
        %v2296 = vpack.c.b16 %v2166, %v2161
        %v2297 = vpack.c.b16 %v2172, %v2167
        %v2298 = vpack.c.b16 %v2173, %v2168
        %v2299 = vpack.c.b16 %v2174, %v2169
        %v2300 = vpack.c.b16 %v2175, %v2170
        %v2301 = vpack.c.b16 %v2176, %v2171
        %v2302 = vpack.c.b16 %v2182, %v2177
        %v2303 = vpack.c.b16 %v2183, %v2178
        %v2304 = vpack.c.b16 %v2184, %v2179
        %v2305 = vpack.c.b16 %v2185, %v2180
        %v2306 = vpack.c.b16 %v2186, %v2181
        %v2307 = vpack.c.b16 %v2192, %v2187
        %v2308 = vpack.c.b16 %v2193, %v2188
        %v2309 = vpack.c.b16 %v2194, %v2189
        %v2310 = vpack.c.b16 %v2195, %v2190
        %v2311 = vpack.c.b16 %v2196, %v2191
        %v2312 = vpack.c.b16 %v2202, %v2197
        %v2313 = vpack.c.b16 %v2203, %v2198
        %v2314 = vpack.c.b16 %v2204, %v2199
        %v2315 = vpack.c.b16 %v2205, %v2200
        %v2316 = vpack.c.b16 %v2206, %v2201
        %v2317 = vpack.c.b16 %v2212, %v2207
        %v2318 = vpack.c.b16 %v2213, %v2208
        %v2319 = vpack.c.b16 %v2214, %v2209
        %v2320 = vpack.c.b16 %v2215, %v2210
        %v2321 = vpack.c.b16 %v2216, %v2211
        %v2322 = vpack.c.b16 %v2222, %v2217
        %v2323 = vpack.c.b16 %v2223, %v2218
        %v2324 = vpack.c.b16 %v2224, %v2219
        %v2325 = vpack.c.b16 %v2225, %v2220
        %v2326 = vpack.c.b16 %v2226, %v2221
        %v2327 = vpack.c.b16 %v2232, %v2227
        %v2328 = vpack.c.b16 %v2233, %v2228
        %v2329 = vpack.c.b16 %v2234, %v2229
        %v2330 = vpack.c.b16 %v2235, %v2230
        %v2331 = vpack.c.b16 %v2236, %v2231
        %v2332 = vpack.c.b16 %v2242, %v2237
        %v2333 = vpack.c.b16 %v2243, %v2238
        %v2334 = vpack.c.b16 %v2244, %v2239
        %v2335 = vpack.c.b16 %v2245, %v2240
        %v2336 = vpack.c.b16 %v2246, %v2241
        %v2337 = vpack.c.b16 %v2252, %v2247
        %v2338 = vpack.c.b16 %v2253, %v2248
        %v2339 = vpack.c.b16 %v2254, %v2249
        %v2340 = vpack.c.b16 %v2255, %v2250
        %v2341 = vpack.c.b16 %v2256, %v2251
        %v2342 = vpack.c.b16 %v2262, %v2257
        %v2343 = vpack.c.b16 %v2263, %v2258
        %v2344 = vpack.c.b16 %v2264, %v2259
        %v2345 = vpack.c.b16 %v2265, %v2260
        %v2346 = vpack.c.b16 %v2266, %v2261
        %v2347 = vpack.c.b16 %v2272, %v2267
        %v2348 = vpack.c.b16 %v2273, %v2268
        %v2349 = vpack.c.b16 %v2274, %v2269
        %v2350 = vpack.c.b16 %v2275, %v2270
        %v2351 = vpack.c.b16 %v2276, %v2271
        %v2352 = vpack.c.b16 %v2282, %v2277
        %v2353 = vpack.c.b16 %v2283, %v2278
        %v2354 = vpack.c.b16 %v2284, %v2279
        %v2355 = vpack.c.b16 %v2285, %v2280
        %v2356 = vpack.c.b16 %v2286, %v2281
        %v2357 = vpack.c.b16 %v2287, %v2287
        %v2358 = vpack.c.b16 %v2288, %v2288
        %v2359 = vpack.c.b16 %v2289, %v2289
        %v2360 = vpack.c.b16 %v2290, %v2290
        %v2361 = vpack.c.b16 %v2291, %v2291
        %v2428 = vsel %vm793, %v2357, 0
        %v2431 = vsel %vm793, %v2358, 0
        %v2434 = vsel %vm793, %v2359, 0
        %v2437 = vsel %vm793, %v2360, 0
        %v2440 = vsel %vm793, %v2361, 0
        %2442 = vmatprep.subr.bf16.mxu0 %v2328
        %2443 = vmatpush1.bf16.msra.mxu0 %v2327
        %2444 = vmatprep.subr.bf16.mxu0 %v2323
        %2445 = vmatpush1.bf16.msra.mxu0 %v2322
        %2446 = vmatprep.subr.bf16.mxu0 %v2318
        %2447 = vmatpush1.bf16.msra.mxu0 %v2317
        %2448 = vmatprep.subr.bf16.mxu0 %v2313
        %2449 = vmatpush1.bf16.msra.mxu0 %v2312
        %2450 = vmatprep.subr.bf16.mxu0 %v2308
        %2451 = vmatpush1.bf16.msra.mxu0 %v2307
        %2452 = vmatprep.subr.bf16.mxu0 %v2303
        %2453 = vmatpush1.bf16.msra.mxu0 %v2302
        %2454 = vmatprep.subr.bf16.mxu0 %v2298
        %2455 = vmatpush1.bf16.msra.mxu0 %v2297
        %2456 = vmatprep.subr.bf16.mxu0 %v2293
        %2457 = vmatpush1.bf16.msra.mxu0 %v2292
        %2458 = vmatprep.subr.bf16.mxu0 0
        %2459 = vmatpush2.bf16.msra.mxu0 0
        %2460 = vmatprep.subr.bf16.mxu0 0
        %2461 = vmatpush2.bf16.msra.mxu0 0
        %2462 = vmatprep.subr.bf16.mxu0 %v2431
        %2463 = vmatpush2.bf16.msra.mxu0 %v2428
        %2464 = vmatprep.subr.bf16.mxu0 %v2353
        %2465 = vmatpush2.bf16.msra.mxu0 %v2352
        %2466 = vmatprep.subr.bf16.mxu0 %v2348
        %2467 = vmatpush2.bf16.msra.mxu0 %v2347
        %2468 = vmatprep.subr.bf16.mxu0 %v2343
        %2469 = vmatpush2.bf16.msra.mxu0 %v2342
        %2470 = vmatprep.subr.bf16.mxu0 %v2338
        %2471 = vmatpush2.bf16.msra.mxu0 %v2337
        %2472 = vmatprep.subr.bf16.mxu0 %v2333
        %2473 = vmatpush2.bf16.msra.mxu0 %v2332
        %2474 = vmatprep.mubr.bf16.mxu0 %v791
        %2475 = vmatmul.mubr.bf16.gmra.mxu0 %v435
        %v2476 = vpop.f32.mrf.mxu0
        %v2477 = vadd.f32 %v340, %v2476
        %v2478 = vpop.f32.mrf.mxu0
        %v2479 = vadd.f32 %v340, %v2478
        %v2480 = vpop.f32.mrf.mxu0
        %v2481 = vadd.f32 %v345, %v2480
        %v2482 = vpop.f32.mrf.mxu0
        %v2483 = vadd.f32 %v345, %v2482
        %2484 = vdwg.mxu0
        %2485 = vmatprep.subr.bf16.mxu0 %v2330
        %2486 = vmatpush1.bf16.msra.mxu0 %v2329
        %2487 = vmatprep.subr.bf16.mxu0 %v2325
        %2488 = vmatpush1.bf16.msra.mxu0 %v2324
        %2489 = vmatprep.subr.bf16.mxu0 %v2320
        %2490 = vmatpush1.bf16.msra.mxu0 %v2319
        %2491 = vmatprep.subr.bf16.mxu0 %v2315
        %2492 = vmatpush1.bf16.msra.mxu0 %v2314
        %2493 = vmatprep.subr.bf16.mxu0 %v2310
        %2494 = vmatpush1.bf16.msra.mxu0 %v2309
        %2495 = vmatprep.subr.bf16.mxu0 %v2305
        %2496 = vmatpush1.bf16.msra.mxu0 %v2304
        %2497 = vmatprep.subr.bf16.mxu0 %v2300
        %2498 = vmatpush1.bf16.msra.mxu0 %v2299
        %2499 = vmatprep.subr.bf16.mxu0 %v2295
        %2500 = vmatpush1.bf16.msra.mxu0 %v2294
        %2501 = vmatprep.subr.bf16.mxu0 0
        %2502 = vmatpush2.bf16.msra.mxu0 0
        %2503 = vmatprep.subr.bf16.mxu0 0
        %2504 = vmatpush2.bf16.msra.mxu0 0
        %2505 = vmatprep.subr.bf16.mxu0 %v2437
        %2506 = vmatpush2.bf16.msra.mxu0 %v2434
        %2507 = vmatprep.subr.bf16.mxu0 %v2355
        %2508 = vmatpush2.bf16.msra.mxu0 %v2354
        %2509 = vmatprep.subr.bf16.mxu0 %v2350
        %2510 = vmatpush2.bf16.msra.mxu0 %v2349
        %2511 = vmatprep.subr.bf16.mxu0 %v2345
        %2512 = vmatpush2.bf16.msra.mxu0 %v2344
        %2513 = vmatprep.subr.bf16.mxu0 %v2340
        %2514 = vmatpush2.bf16.msra.mxu0 %v2339
        %2515 = vmatprep.subr.bf16.mxu0 %v2335
        %2516 = vmatpush2.bf16.msra.mxu0 %v2334
        %2517 = vmatprep.mubr.bf16.mxu0 %v791
        %2518 = vmatmul.mubr.bf16.gmra.mxu0 %v435
        %v2519 = vpop.f32.mrf.mxu0
        %v2520 = vadd.f32 %v340, %v2519
        %v2521 = vpop.f32.mrf.mxu0
        %v2522 = vadd.f32 %v340, %v2521
        %v2523 = vpop.f32.mrf.mxu0
        %v2524 = vadd.f32 %v345, %v2523
        %v2525 = vpop.f32.mrf.mxu0
        %v2526 = vadd.f32 %v345, %v2525
        %2527 = vdwg.mxu0
        %2528 = vmatprep.subr.bf16.mxu0 0
        %2529 = vmatpush1.bf16.msra.mxu0 %v2331
        %2530 = vmatprep.subr.bf16.mxu0 0
        %2531 = vmatpush1.bf16.msra.mxu0 %v2326
        %2532 = vmatprep.subr.bf16.mxu0 0
        %2533 = vmatpush1.bf16.msra.mxu0 %v2321
        %2534 = vmatprep.subr.bf16.mxu0 0
        %2535 = vmatpush1.bf16.msra.mxu0 %v2316
        %2536 = vmatprep.subr.bf16.mxu0 0
        %2537 = vmatpush1.bf16.msra.mxu0 %v2311
        %2538 = vmatprep.subr.bf16.mxu0 0
        %2539 = vmatpush1.bf16.msra.mxu0 %v2306
        %2540 = vmatprep.subr.bf16.mxu0 0
        %2541 = vmatpush1.bf16.msra.mxu0 %v2301
        %2542 = vmatprep.subr.bf16.mxu0 0
        %2543 = vmatpush1.bf16.msra.mxu0 %v2296
        %2544 = vmatprep.subr.bf16.mxu0 0
        %2545 = vmatpush2.bf16.msra.mxu0 0
        %2546 = vmatprep.subr.bf16.mxu0 0
        %2547 = vmatpush2.bf16.msra.mxu0 0
        %2548 = vmatprep.subr.bf16.mxu0 0
        %2549 = vmatpush2.bf16.msra.mxu0 %v2440
        %2550 = vmatprep.subr.bf16.mxu0 0
        %2551 = vmatpush2.bf16.msra.mxu0 %v2356
        %2552 = vmatprep.subr.bf16.mxu0 0
        %2553 = vmatpush2.bf16.msra.mxu0 %v2351
        %2554 = vmatprep.subr.bf16.mxu0 0
        %2555 = vmatpush2.bf16.msra.mxu0 %v2346
        %2556 = vmatprep.subr.bf16.mxu0 0
        %2557 = vmatpush2.bf16.msra.mxu0 %v2341
        %2558 = vmatprep.subr.bf16.mxu0 0
        %2559 = vmatpush2.bf16.msra.mxu0 %v2336
        %2560 = vmatprep.mubr.bf16.mxu0 %v791
        %2561 = vmatmul.mubr.bf16.gmra.mxu0 %v435
        %v2562 = vpop.f32.mrf.mxu0
        %v2563 = vadd.f32 %v340, %v2562
        %v2564 = vpop.f32.mrf.mxu0
        %v2565 = vpop.f32.mrf.mxu0
        %v2566 = vadd.f32 %v345, %v2565
        %v2567 = vpop.f32.mrf.mxu0
        %2568 = vdwg.mxu0
        %v2569 = vmax.f32 %v2477, 0.0
        %v2570 = vmax.f32 %v2479, 0.0
        %v2571 = vmax.f32 %v2520, 0.0
        %v2572 = vmax.f32 %v2522, 0.0
        %v2573 = vmax.f32 %v2563, 0.0
        %v2574 = vmax.f32 %v2481, 0.0
        %v2575 = vmax.f32 %v2483, 0.0
        %v2576 = vmax.f32 %v2524, 0.0
        %v2577 = vmax.f32 %v2526, 0.0
        %v2578 = vmax.f32 %v2566, 0.0
        %v2580 = vsel %vm793, %v2574, 0
        %v2583 = vsel %vm793, %v2575, 0
        %v2586 = vsel %vm793, %v2576, 0
        %v2589 = vsel %vm793, %v2577, 0
        %v2592 = vsel %vm793, %v2578, 0
        %2594 = vmatprep.subr.mxu0 0.0
        %2595 = vmatpush1.msra.mxu0 0.0
        %2596 = vmatprep.subr.mxu0 0.0
        %2597 = vmatpush1.msra.mxu0 0.0
        %2598 = vmatprep.subr.mxu0 0.0
        %2599 = vmatpush1.msra.mxu0 0.0
        %2600 = vmatprep.subr.mxu0 0.0
        %2601 = vmatpush1.msra.mxu0 0.0
        %2602 = vmatprep.subr.mxu0 0.0
        %2603 = vmatpush1.msra.mxu0 0.0
        %2604 = vmatprep.subr.mxu0 0.0
        %2605 = vmatpush1.msra.mxu0 0.0
        %2606 = vmatprep.subr.mxu0 0.0
        %2607 = vmatpush1.msra.mxu0 0.0
        %2608 = vmatprep.subr.mxu0 0.0
        %2609 = vmatpush1.msra.mxu0 0.0
        %2610 = vmatprep.subr.mxu0 0.0
        %2611 = vmatpush1.msra.mxu0 0.0
        %2612 = vmatprep.subr.mxu0 0.0
        %2613 = vmatpush1.msra.mxu0 0.0
        %2614 = vmatprep.subr.mxu0 0.0
        %2615 = vmatpush1.msra.mxu0 0.0
        %2616 = vmatprep.subr.mxu0 0.0
        %2617 = vmatpush1.msra.mxu0 0.0
        %2618 = vmatprep.subr.mxu0 0.0
        %2619 = vmatpush1.msra.mxu0 0.0
        %2620 = vmatprep.subr.mxu0 0.0
        %2621 = vmatpush1.msra.mxu0 0.0
        %2622 = vmatprep.subr.mxu0 %v2583
        %2623 = vmatpush1.msra.mxu0 %v2580
        %2624 = vmatprep.subr.mxu0 %v2570
        %2625 = vmatpush1.msra.mxu0 %v2569
        %2626 = vmatprep.subr.mxu0 0.0
        %2627 = vmatpush2.msra.mxu0 0.0
        %2628 = vmatprep.subr.mxu0 0.0
        %2629 = vmatpush2.msra.mxu0 0.0
        %2630 = vmatprep.subr.mxu0 0.0
        %2631 = vmatpush2.msra.mxu0 0.0
        %2632 = vmatprep.subr.mxu0 0.0
        %2633 = vmatpush2.msra.mxu0 0.0
        %2634 = vmatprep.subr.mxu0 0.0
        %2635 = vmatpush2.msra.mxu0 0.0
        %2636 = vmatprep.subr.mxu0 0.0
        %2637 = vmatpush2.msra.mxu0 0.0
        %2638 = vmatprep.subr.mxu0 0.0
        %2639 = vmatpush2.msra.mxu0 0.0
        %2640 = vmatprep.subr.mxu0 0.0
        %2641 = vmatpush2.msra.mxu0 0.0
        %2642 = vmatprep.subr.mxu0 0.0
        %2643 = vmatpush2.msra.mxu0 0.0
        %2644 = vmatprep.subr.mxu0 0.0
        %2645 = vmatpush2.msra.mxu0 0.0
        %2646 = vmatprep.subr.mxu0 0.0
        %2647 = vmatpush2.msra.mxu0 0.0
        %2648 = vmatprep.subr.mxu0 0.0
        %2649 = vmatpush2.msra.mxu0 0.0
        %2650 = vmatprep.subr.mxu0 0.0
        %2651 = vmatpush2.msra.mxu0 0.0
        %2652 = vmatprep.subr.mxu0 0.0
        %2653 = vmatpush2.msra.mxu0 0.0
        %2654 = vmatprep.subr.mxu0 0.0
        %2655 = vmatpush2.msra.mxu0 0.0
        %2656 = vmatprep.subr.mxu0 0.0
        %2657 = vmatpush2.msra.mxu0 0.0
        %2658 = vmatprep.mubr.f32.mxu0 0.0
        %2659 = vmatmul.mubr.f32.gmra.mxu0 %v948
        %v2660 = vpop.f32.mrf.mxu0
        %v2661 = vadd.f32 0.0, %v2660
        %v2662 = vpop.f32.mrf.mxu0
        %v2663 = vadd.f32 0.0, %v2662
        %2664 = vdwg.mxu0
        %2665 = vmatprep.subr.mxu0 0.0
        %2666 = vmatpush1.msra.mxu0 0.0
        %2667 = vmatprep.subr.mxu0 0.0
        %2668 = vmatpush1.msra.mxu0 0.0
        %2669 = vmatprep.subr.mxu0 0.0
        %2670 = vmatpush1.msra.mxu0 0.0
        %2671 = vmatprep.subr.mxu0 0.0
        %2672 = vmatpush1.msra.mxu0 0.0
        %2673 = vmatprep.subr.mxu0 0.0
        %2674 = vmatpush1.msra.mxu0 0.0
        %2675 = vmatprep.subr.mxu0 0.0
        %2676 = vmatpush1.msra.mxu0 0.0
        %2677 = vmatprep.subr.mxu0 0.0
        %2678 = vmatpush1.msra.mxu0 0.0
        %2679 = vmatprep.subr.mxu0 0.0
        %2680 = vmatpush1.msra.mxu0 0.0
        %2681 = vmatprep.subr.mxu0 0.0
        %2682 = vmatpush1.msra.mxu0 0.0
        %2683 = vmatprep.subr.mxu0 0.0
        %2684 = vmatpush1.msra.mxu0 0.0
        %2685 = vmatprep.subr.mxu0 0.0
        %2686 = vmatpush1.msra.mxu0 0.0
        %2687 = vmatprep.subr.mxu0 0.0
        %2688 = vmatpush1.msra.mxu0 0.0
        %2689 = vmatprep.subr.mxu0 0.0
        %2690 = vmatpush1.msra.mxu0 0.0
        %2691 = vmatprep.subr.mxu0 0.0
        %2692 = vmatpush1.msra.mxu0 0.0
        %2693 = vmatprep.subr.mxu0 %v2589
        %2694 = vmatpush1.msra.mxu0 %v2586
        %2695 = vmatprep.subr.mxu0 %v2572
        %2696 = vmatpush1.msra.mxu0 %v2571
        %2697 = vmatprep.subr.mxu0 0.0
        %2698 = vmatpush2.msra.mxu0 0.0
        %2699 = vmatprep.subr.mxu0 0.0
        %2700 = vmatpush2.msra.mxu0 0.0
        %2701 = vmatprep.subr.mxu0 0.0
        %2702 = vmatpush2.msra.mxu0 0.0
        %2703 = vmatprep.subr.mxu0 0.0
        %2704 = vmatpush2.msra.mxu0 0.0
        %2705 = vmatprep.subr.mxu0 0.0
        %2706 = vmatpush2.msra.mxu0 0.0
        %2707 = vmatprep.subr.mxu0 0.0
        %2708 = vmatpush2.msra.mxu0 0.0
        %2709 = vmatprep.subr.mxu0 0.0
        %2710 = vmatpush2.msra.mxu0 0.0
        %2711 = vmatprep.subr.mxu0 0.0
        %2712 = vmatpush2.msra.mxu0 0.0
        %2713 = vmatprep.subr.mxu0 0.0
        %2714 = vmatpush2.msra.mxu0 0.0
        %2715 = vmatprep.subr.mxu0 0.0
        %2716 = vmatpush2.msra.mxu0 0.0
        %2717 = vmatprep.subr.mxu0 0.0
        %2718 = vmatpush2.msra.mxu0 0.0
        %2719 = vmatprep.subr.mxu0 0.0
        %2720 = vmatpush2.msra.mxu0 0.0
        %2721 = vmatprep.subr.mxu0 0.0
        %2722 = vmatpush2.msra.mxu0 0.0
        %2723 = vmatprep.subr.mxu0 0.0
        %2724 = vmatpush2.msra.mxu0 0.0
        %2725 = vmatprep.subr.mxu0 0.0
        %2726 = vmatpush2.msra.mxu0 0.0
        %2727 = vmatprep.subr.mxu0 0.0
        %2728 = vmatpush2.msra.mxu0 0.0
        %2729 = vmatprep.mubr.f32.mxu0 0.0
        %2730 = vmatmul.mubr.f32.gmra.mxu0 %v948
        %v2731 = vpop.f32.mrf.mxu0
        %v2732 = vadd.f32 0.0, %v2731
        %v2733 = vpop.f32.mrf.mxu0
        %v2734 = vadd.f32 0.0, %v2733
        %2735 = vdwg.mxu0
        %2736 = vmatprep.subr.mxu0 0.0
        %2737 = vmatpush1.msra.mxu0 0.0
        %2738 = vmatprep.subr.mxu0 0.0
        %2739 = vmatpush1.msra.mxu0 0.0
        %2740 = vmatprep.subr.mxu0 0.0
        %2741 = vmatpush1.msra.mxu0 0.0
        %2742 = vmatprep.subr.mxu0 0.0
        %2743 = vmatpush1.msra.mxu0 0.0
        %2744 = vmatprep.subr.mxu0 0.0
        %2745 = vmatpush1.msra.mxu0 0.0
        %2746 = vmatprep.subr.mxu0 0.0
        %2747 = vmatpush1.msra.mxu0 0.0
        %2748 = vmatprep.subr.mxu0 0.0
        %2749 = vmatpush1.msra.mxu0 0.0
        %2750 = vmatprep.subr.mxu0 0.0
        %2751 = vmatpush1.msra.mxu0 0.0
        %2752 = vmatprep.subr.mxu0 0.0
        %2753 = vmatpush1.msra.mxu0 0.0
        %2754 = vmatprep.subr.mxu0 0.0
        %2755 = vmatpush1.msra.mxu0 0.0
        %2756 = vmatprep.subr.mxu0 0.0
        %2757 = vmatpush1.msra.mxu0 0.0
        %2758 = vmatprep.subr.mxu0 0.0
        %2759 = vmatpush1.msra.mxu0 0.0
        %2760 = vmatprep.subr.mxu0 0.0
        %2761 = vmatpush1.msra.mxu0 0.0
        %2762 = vmatprep.subr.mxu0 0.0
        %2763 = vmatpush1.msra.mxu0 0.0
        %2764 = vmatprep.subr.mxu0 0.0
        %2765 = vmatpush1.msra.mxu0 %v2592
        %2766 = vmatprep.subr.mxu0 0.0
        %2767 = vmatpush1.msra.mxu0 %v2573
        %2768 = vmatprep.subr.mxu0 0.0
        %2769 = vmatpush2.msra.mxu0 0.0
        %2770 = vmatprep.subr.mxu0 0.0
        %2771 = vmatpush2.msra.mxu0 0.0
        %2772 = vmatprep.subr.mxu0 0.0
        %2773 = vmatpush2.msra.mxu0 0.0
        %2774 = vmatprep.subr.mxu0 0.0
        %2775 = vmatpush2.msra.mxu0 0.0
        %2776 = vmatprep.subr.mxu0 0.0
        %2777 = vmatpush2.msra.mxu0 0.0
        %2778 = vmatprep.subr.mxu0 0.0
        %2779 = vmatpush2.msra.mxu0 0.0
        %2780 = vmatprep.subr.mxu0 0.0
        %2781 = vmatpush2.msra.mxu0 0.0
        %2782 = vmatprep.subr.mxu0 0.0
        %2783 = vmatpush2.msra.mxu0 0.0
        %2784 = vmatprep.subr.mxu0 0.0
        %2785 = vmatpush2.msra.mxu0 0.0
        %2786 = vmatprep.subr.mxu0 0.0
        %2787 = vmatpush2.msra.mxu0 0.0
        %2788 = vmatprep.subr.mxu0 0.0
        %2789 = vmatpush2.msra.mxu0 0.0
        %2790 = vmatprep.subr.mxu0 0.0
        %2791 = vmatpush2.msra.mxu0 0.0
        %2792 = vmatprep.subr.mxu0 0.0
        %2793 = vmatpush2.msra.mxu0 0.0
        %2794 = vmatprep.subr.mxu0 0.0
        %2795 = vmatpush2.msra.mxu0 0.0
        %2796 = vmatprep.subr.mxu0 0.0
        %2797 = vmatpush2.msra.mxu0 0.0
        %2798 = vmatprep.subr.mxu0 0.0
        %2799 = vmatpush2.msra.mxu0 0.0
        %2800 = vmatprep.mubr.f32.mxu0 0.0
        %2801 = vmatmul.mubr.f32.gmra.mxu0 %v948
        %v2802 = vpop.f32.mrf.mxu0
        %v2803 = vadd.f32 0.0, %v2802
        %v2804 = vpop.f32.mrf.mxu0
        %2805 = vdwg.mxu0
        %v2806 = vmax.f32 %v1989, %v2661
        %v2807 = vmax.f32 %v1990, %v2663
        %v2808 = vmax.f32 %v1991, %v2732
        %v2809 = vmax.f32 %v1992, %v2734
        %v2810 = vmax.f32 %v1993, %v2803
        %s2811 = scalar_lea.vmem %s331, 1620
        %v2812 = vld [vmem:[%s2811] sm:$0xff]
        %v2813 = vld [vmem:[%s2811 + $0x8] sm:$0xff]
        %v2814 = vld [vmem:[%s2811 + $0x10] sm:$0xf]
        %v2815 = vld [vmem:[%s2811 + $0x14] sm:$0xff]
        %v2816 = vld [vmem:[%s2811 + $0x1c] sm:$0xff]
        %v2817 = vld [vmem:[%s2811 + $0x24] sm:$0xf]
        %v2818 = vld [vmem:[%s2811 + $0x28] sm:$0xff]
        %v2819 = vld [vmem:[%s2811 + $0x30] sm:$0xff]
        %v2820 = vld [vmem:[%s2811 + $0x38] sm:$0xf]
        %v2821 = vld [vmem:[%s2811 + $0x3c] sm:$0xff]
        %v2822 = vld [vmem:[%s2811 + $0x44] sm:$0xff]
        %v2823 = vld [vmem:[%s2811 + $0x4c] sm:$0xf]
        %v2824 = vld [vmem:[%s2811 + $0x50] sm:$0xff]
        %v2825 = vld [vmem:[%s2811 + $0x58] sm:$0xff]
        %v2826 = vld [vmem:[%s2811 + $0x60] sm:$0xf]
        %v2827 = vld [vmem:[%s2811 + $0x64] sm:$0xff]
        %v2828 = vld [vmem:[%s2811 + $0x6c] sm:$0xff]
        %v2829 = vld [vmem:[%s2811 + $0x74] sm:$0xf]
        %v2830 = vld [vmem:[%s2811 + $0x78] sm:$0xff]
        %v2831 = vld [vmem:[%s2811 + $0x80] sm:$0xff]
        %v2832 = vld [vmem:[%s2811 + $0x88] sm:$0xf]
        %v2833 = vld [vmem:[%s2811 + $0x8c] sm:$0xff]
        %v2834 = vld [vmem:[%s2811 + $0x94] sm:$0xff]
        %v2835 = vld [vmem:[%s2811 + $0x9c] sm:$0xf]
        %v2836 = vld [vmem:[%s2811 + $0xa0] sm:$0xff]
        %v2837 = vld [vmem:[%s2811 + $0xa8] sm:$0xff]
        %v2838 = vld [vmem:[%s2811 + $0xb0] sm:$0xf]
        %v2839 = vld [vmem:[%s2811 + $0xb4] sm:$0xff]
        %v2840 = vld [vmem:[%s2811 + $0xbc] sm:$0xff]
        %v2841 = vld [vmem:[%s2811 + $0xc4] sm:$0xf]
        %v2842 = vld [vmem:[%s2811 + $0xc8] sm:$0xff]
        %v2843 = vld [vmem:[%s2811 + $0xd0] sm:$0xff]
        %v2844 = vld [vmem:[%s2811 + $0xd8] sm:$0xf]
        %v2845 = vld [vmem:[%s2811 + $0xdc] sm:$0xff]
        %v2846 = vld [vmem:[%s2811 + $0xe4] sm:$0xff]
        %v2847 = vld [vmem:[%s2811 + $0xec] sm:$0xf]
        %v2848 = vld [vmem:[%s2811 + $0xf0] sm:$0xff]
        %v2849 = vld [vmem:[%s2811 + $0xf8] sm:$0xff]
        %v2850 = vld [vmem:[%s2811 + $0x100] sm:$0xf]
        %v2851 = vld [vmem:[%s2811 + $0x104] sm:$0xff]
        %v2852 = vld [vmem:[%s2811 + $0x10c] sm:$0xff]
        %v2853 = vld [vmem:[%s2811 + $0x114] sm:$0xf]
        %v2854 = vld [vmem:[%s2811 + $0x118] sm:$0xff]
        %v2855 = vld [vmem:[%s2811 + $0x120] sm:$0xff]
        %v2856 = vld [vmem:[%s2811 + $0x128] sm:$0xf]
        %v2857 = vld [vmem:[%s2811 + $0x12c] sm:$0xff]
        %v2858 = vld [vmem:[%s2811 + $0x134] sm:$0xff]
        %v2859 = vld [vmem:[%s2811 + $0x13c] sm:$0xf]
        %v2860 = vld [vmem:[%s2811 + $0x140] sm:$0xff]
        %v2861 = vld [vmem:[%s2811 + $0x148] sm:$0xff]
        %v2862 = vld [vmem:[%s2811 + $0x150] sm:$0xf]
        %v2863 = vld [vmem:[%s2811 + $0x154] sm:$0xff]
        %v2864 = vld [vmem:[%s2811 + $0x15c] sm:$0xff]
        %v2865 = vld [vmem:[%s2811 + $0x164] sm:$0xf]
        %v2866 = vld [vmem:[%s2811 + $0x168] sm:$0xff]
        %v2867 = vld [vmem:[%s2811 + $0x170] sm:$0xff]
        %v2868 = vld [vmem:[%s2811 + $0x178] sm:$0xf]
        %v2869 = vld [vmem:[%s2811 + $0x17c] sm:$0xff]
        %v2870 = vld [vmem:[%s2811 + $0x184] sm:$0xff]
        %v2871 = vld [vmem:[%s2811 + $0x18c] sm:$0xf]
        %v2872 = vld [vmem:[%s2811 + $0x190] sm:$0xff]
        %v2873 = vld [vmem:[%s2811 + $0x198] sm:$0xff]
        %v2874 = vld [vmem:[%s2811 + $0x1a0] sm:$0xf]
        %v2875 = vld [vmem:[%s2811 + $0x1a4] sm:$0xff]
        %v2876 = vld [vmem:[%s2811 + $0x1ac] sm:$0xff]
        %v2877 = vld [vmem:[%s2811 + $0x1b4] sm:$0xf]
        %v2878 = vld [vmem:[%s2811 + $0x1b8] sm:$0xff]
        %v2879 = vld [vmem:[%s2811 + $0x1c0] sm:$0xff]
        %v2880 = vld [vmem:[%s2811 + $0x1c8] sm:$0xf]
        %v2881 = vld [vmem:[%s2811 + $0x1cc] sm:$0xff]
        %v2882 = vld [vmem:[%s2811 + $0x1d4] sm:$0xff]
        %v2883 = vld [vmem:[%s2811 + $0x1dc] sm:$0xf]
        %v2884 = vld [vmem:[%s2811 + $0x1e0] sm:$0xff]
        %v2885 = vld [vmem:[%s2811 + $0x1e8] sm:$0xff]
        %v2886 = vld [vmem:[%s2811 + $0x1f0] sm:$0xf]
        %v2887 = vld [vmem:[%s2811 + $0x1f4] sm:$0xff]
        %v2888 = vld [vmem:[%s2811 + $0x1fc] sm:$0xff]
        %v2889 = vld [vmem:[%s2811 + $0x204] sm:$0xf]
        %v2890 = vld [vmem:[%s2811 + $0x208] sm:$0xff]
        %v2891 = vld [vmem:[%s2811 + $0x210] sm:$0xff]
        %v2892 = vld [vmem:[%s2811 + $0x218] sm:$0xf]
        %v2974 = vunpack.c.l.b16 %v2812
        %v2975 = vunpack.c.h.b16 %v2812
        %v2976 = vunpack.c.l.b16 %v2813
        %v2977 = vunpack.c.h.b16 %v2813
        %v2978 = vunpack.c.l.b16 %v2814
        %v2979 = vunpack.c.l.b16 %v2815
        %v2980 = vunpack.c.h.b16 %v2815
        %v2981 = vunpack.c.l.b16 %v2816
        %v2982 = vunpack.c.h.b16 %v2816
        %v2983 = vunpack.c.l.b16 %v2817
        %v2984 = vunpack.c.l.b16 %v2818
        %v2985 = vunpack.c.h.b16 %v2818
        %v2986 = vunpack.c.l.b16 %v2819
        %v2987 = vunpack.c.h.b16 %v2819
        %v2988 = vunpack.c.l.b16 %v2820
        %v2989 = vunpack.c.l.b16 %v2821
        %v2990 = vunpack.c.h.b16 %v2821
        %v2991 = vunpack.c.l.b16 %v2822
        %v2992 = vunpack.c.h.b16 %v2822
        %v2993 = vunpack.c.l.b16 %v2823
        %v2994 = vunpack.c.l.b16 %v2824
        %v2995 = vunpack.c.h.b16 %v2824
        %v2996 = vunpack.c.l.b16 %v2825
        %v2997 = vunpack.c.h.b16 %v2825
        %v2998 = vunpack.c.l.b16 %v2826
        %v2999 = vunpack.c.l.b16 %v2827
        %v3000 = vunpack.c.h.b16 %v2827
        %v3001 = vunpack.c.l.b16 %v2828
        %v3002 = vunpack.c.h.b16 %v2828
        %v3003 = vunpack.c.l.b16 %v2829
        %v3004 = vunpack.c.l.b16 %v2830
        %v3005 = vunpack.c.h.b16 %v2830
        %v3006 = vunpack.c.l.b16 %v2831
        %v3007 = vunpack.c.h.b16 %v2831
        %v3008 = vunpack.c.l.b16 %v2832
        %v3009 = vunpack.c.l.b16 %v2833
        %v3010 = vunpack.c.h.b16 %v2833
        %v3011 = vunpack.c.l.b16 %v2834
        %v3012 = vunpack.c.h.b16 %v2834
        %v3013 = vunpack.c.l.b16 %v2835
        %v3014 = vunpack.c.l.b16 %v2836
        %v3015 = vunpack.c.h.b16 %v2836
        %v3016 = vunpack.c.l.b16 %v2837
        %v3017 = vunpack.c.h.b16 %v2837
        %v3018 = vunpack.c.l.b16 %v2838
        %v3019 = vunpack.c.l.b16 %v2839
        %v3020 = vunpack.c.h.b16 %v2839
        %v3021 = vunpack.c.l.b16 %v2840
        %v3022 = vunpack.c.h.b16 %v2840
        %v3023 = vunpack.c.l.b16 %v2841
        %v3024 = vunpack.c.l.b16 %v2842
        %v3025 = vunpack.c.h.b16 %v2842
        %v3026 = vunpack.c.l.b16 %v2843
        %v3027 = vunpack.c.h.b16 %v2843
        %v3028 = vunpack.c.l.b16 %v2844
        %v3029 = vunpack.c.l.b16 %v2845
        %v3030 = vunpack.c.h.b16 %v2845
        %v3031 = vunpack.c.l.b16 %v2846
        %v3032 = vunpack.c.h.b16 %v2846
        %v3033 = vunpack.c.l.b16 %v2847
        %v3034 = vunpack.c.l.b16 %v2848
        %v3035 = vunpack.c.h.b16 %v2848
        %v3036 = vunpack.c.l.b16 %v2849
        %v3037 = vunpack.c.h.b16 %v2849
        %v3038 = vunpack.c.l.b16 %v2850
        %v3039 = vunpack.c.l.b16 %v2851
        %v3040 = vunpack.c.h.b16 %v2851
        %v3041 = vunpack.c.l.b16 %v2852
        %v3042 = vunpack.c.h.b16 %v2852
        %v3043 = vunpack.c.l.b16 %v2853
        %v3044 = vunpack.c.l.b16 %v2854
        %v3045 = vunpack.c.h.b16 %v2854
        %v3046 = vunpack.c.l.b16 %v2855
        %v3047 = vunpack.c.h.b16 %v2855
        %v3048 = vunpack.c.l.b16 %v2856
        %v3049 = vunpack.c.l.b16 %v2857
        %v3050 = vunpack.c.h.b16 %v2857
        %v3051 = vunpack.c.l.b16 %v2858
        %v3052 = vunpack.c.h.b16 %v2858
        %v3053 = vunpack.c.l.b16 %v2859
        %v3054 = vunpack.c.l.b16 %v2860
        %v3055 = vunpack.c.h.b16 %v2860
        %v3056 = vunpack.c.l.b16 %v2861
        %v3057 = vunpack.c.h.b16 %v2861
        %v3058 = vunpack.c.l.b16 %v2862
        %v3059 = vunpack.c.l.b16 %v2863
        %v3060 = vunpack.c.h.b16 %v2863
        %v3061 = vunpack.c.l.b16 %v2864
        %v3062 = vunpack.c.h.b16 %v2864
        %v3063 = vunpack.c.l.b16 %v2865
        %v3064 = vunpack.c.l.b16 %v2866
        %v3065 = vunpack.c.h.b16 %v2866
        %v3066 = vunpack.c.l.b16 %v2867
        %v3067 = vunpack.c.h.b16 %v2867
        %v3068 = vunpack.c.l.b16 %v2868
        %v3069 = vunpack.c.l.b16 %v2869
        %v3070 = vunpack.c.h.b16 %v2869
        %v3071 = vunpack.c.l.b16 %v2870
        %v3072 = vunpack.c.h.b16 %v2870
        %v3073 = vunpack.c.l.b16 %v2871
        %v3074 = vunpack.c.l.b16 %v2872
        %v3075 = vunpack.c.h.b16 %v2872
        %v3076 = vunpack.c.l.b16 %v2873
        %v3077 = vunpack.c.h.b16 %v2873
        %v3078 = vunpack.c.l.b16 %v2874
        %v3079 = vunpack.c.l.b16 %v2875
        %v3080 = vunpack.c.h.b16 %v2875
        %v3081 = vunpack.c.l.b16 %v2876
        %v3082 = vunpack.c.h.b16 %v2876
        %v3083 = vunpack.c.l.b16 %v2877
        %v3084 = vunpack.c.l.b16 %v2878
        %v3085 = vunpack.c.h.b16 %v2878
        %v3086 = vunpack.c.l.b16 %v2879
        %v3087 = vunpack.c.h.b16 %v2879
        %v3088 = vunpack.c.l.b16 %v2880
        %v3089 = vunpack.c.l.b16 %v2881
        %v3090 = vunpack.c.h.b16 %v2881
        %v3091 = vunpack.c.l.b16 %v2882
        %v3092 = vunpack.c.h.b16 %v2882
        %v3093 = vunpack.c.l.b16 %v2883
        %v3094 = vunpack.c.l.b16 %v2884
        %v3095 = vunpack.c.h.b16 %v2884
        %v3096 = vunpack.c.l.b16 %v2885
        %v3097 = vunpack.c.h.b16 %v2885
        %v3098 = vunpack.c.l.b16 %v2886
        %v3099 = vunpack.c.l.b16 %v2887
        %v3100 = vunpack.c.h.b16 %v2887
        %v3101 = vunpack.c.l.b16 %v2888
        %v3102 = vunpack.c.h.b16 %v2888
        %v3103 = vunpack.c.l.b16 %v2889
        %v3104 = vunpack.c.l.b16 %v2890
        %v3105 = vunpack.c.h.b16 %v2890
        %v3106 = vunpack.c.l.b16 %v2891
        %v3107 = vunpack.c.h.b16 %v2891
        %v3108 = vunpack.c.l.b16 %v2892
        %v3109 = vpack.c.b16 %v2979, %v2974
        %v3110 = vpack.c.b16 %v2980, %v2975
        %v3111 = vpack.c.b16 %v2981, %v2976
        %v3112 = vpack.c.b16 %v2982, %v2977
        %v3113 = vpack.c.b16 %v2983, %v2978
        %v3114 = vpack.c.b16 %v2989, %v2984
        %v3115 = vpack.c.b16 %v2990, %v2985
        %v3116 = vpack.c.b16 %v2991, %v2986
        %v3117 = vpack.c.b16 %v2992, %v2987
        %v3118 = vpack.c.b16 %v2993, %v2988
        %v3119 = vpack.c.b16 %v2999, %v2994
        %v3120 = vpack.c.b16 %v3000, %v2995
        %v3121 = vpack.c.b16 %v3001, %v2996
        %v3122 = vpack.c.b16 %v3002, %v2997
        %v3123 = vpack.c.b16 %v3003, %v2998
        %v3124 = vpack.c.b16 %v3009, %v3004
        %v3125 = vpack.c.b16 %v3010, %v3005
        %v3126 = vpack.c.b16 %v3011, %v3006
        %v3127 = vpack.c.b16 %v3012, %v3007
        %v3128 = vpack.c.b16 %v3013, %v3008
        %v3129 = vpack.c.b16 %v3019, %v3014
        %v3130 = vpack.c.b16 %v3020, %v3015
        %v3131 = vpack.c.b16 %v3021, %v3016
        %v3132 = vpack.c.b16 %v3022, %v3017
        %v3133 = vpack.c.b16 %v3023, %v3018
        %v3134 = vpack.c.b16 %v3029, %v3024
        %v3135 = vpack.c.b16 %v3030, %v3025
        %v3136 = vpack.c.b16 %v3031, %v3026
        %v3137 = vpack.c.b16 %v3032, %v3027
        %v3138 = vpack.c.b16 %v3033, %v3028
        %v3139 = vpack.c.b16 %v3039, %v3034
        %v3140 = vpack.c.b16 %v3040, %v3035
        %v3141 = vpack.c.b16 %v3041, %v3036
        %v3142 = vpack.c.b16 %v3042, %v3037
        %v3143 = vpack.c.b16 %v3043, %v3038
        %v3144 = vpack.c.b16 %v3049, %v3044
        %v3145 = vpack.c.b16 %v3050, %v3045
        %v3146 = vpack.c.b16 %v3051, %v3046
        %v3147 = vpack.c.b16 %v3052, %v3047
        %v3148 = vpack.c.b16 %v3053, %v3048
        %v3149 = vpack.c.b16 %v3059, %v3054
        %v3150 = vpack.c.b16 %v3060, %v3055
        %v3151 = vpack.c.b16 %v3061, %v3056
        %v3152 = vpack.c.b16 %v3062, %v3057
        %v3153 = vpack.c.b16 %v3063, %v3058
        %v3154 = vpack.c.b16 %v3069, %v3064
        %v3155 = vpack.c.b16 %v3070, %v3065
        %v3156 = vpack.c.b16 %v3071, %v3066
        %v3157 = vpack.c.b16 %v3072, %v3067
        %v3158 = vpack.c.b16 %v3073, %v3068
        %v3159 = vpack.c.b16 %v3079, %v3074
        %v3160 = vpack.c.b16 %v3080, %v3075
        %v3161 = vpack.c.b16 %v3081, %v3076
        %v3162 = vpack.c.b16 %v3082, %v3077
        %v3163 = vpack.c.b16 %v3083, %v3078
        %v3164 = vpack.c.b16 %v3089, %v3084
        %v3165 = vpack.c.b16 %v3090, %v3085
        %v3166 = vpack.c.b16 %v3091, %v3086
        %v3167 = vpack.c.b16 %v3092, %v3087
        %v3168 = vpack.c.b16 %v3093, %v3088
        %v3169 = vpack.c.b16 %v3099, %v3094
        %v3170 = vpack.c.b16 %v3100, %v3095
        %v3171 = vpack.c.b16 %v3101, %v3096
        %v3172 = vpack.c.b16 %v3102, %v3097
        %v3173 = vpack.c.b16 %v3103, %v3098
        %v3174 = vpack.c.b16 %v3104, %v3104
        %v3175 = vpack.c.b16 %v3105, %v3105
        %v3176 = vpack.c.b16 %v3106, %v3106
        %v3177 = vpack.c.b16 %v3107, %v3107
        %v3178 = vpack.c.b16 %v3108, %v3108
        %v3245 = vsel %vm793, %v3174, 0
        %v3248 = vsel %vm793, %v3175, 0
        %v3251 = vsel %vm793, %v3176, 0
        %v3254 = vsel %vm793, %v3177, 0
        %v3257 = vsel %vm793, %v3178, 0
        %3259 = vmatprep.subr.bf16.mxu0 %v3145
        %3260 = vmatpush1.bf16.msra.mxu0 %v3144
        %3261 = vmatprep.subr.bf16.mxu0 %v3140
        %3262 = vmatpush1.bf16.msra.mxu0 %v3139
        %3263 = vmatprep.subr.bf16.mxu0 %v3135
        %3264 = vmatpush1.bf16.msra.mxu0 %v3134
        %3265 = vmatprep.subr.bf16.mxu0 %v3130
        %3266 = vmatpush1.bf16.msra.mxu0 %v3129
        %3267 = vmatprep.subr.bf16.mxu0 %v3125
        %3268 = vmatpush1.bf16.msra.mxu0 %v3124
        %3269 = vmatprep.subr.bf16.mxu0 %v3120
        %3270 = vmatpush1.bf16.msra.mxu0 %v3119
        %3271 = vmatprep.subr.bf16.mxu0 %v3115
        %3272 = vmatpush1.bf16.msra.mxu0 %v3114
        %3273 = vmatprep.subr.bf16.mxu0 %v3110
        %3274 = vmatpush1.bf16.msra.mxu0 %v3109
        %3275 = vmatprep.subr.bf16.mxu0 0
        %3276 = vmatpush2.bf16.msra.mxu0 0
        %3277 = vmatprep.subr.bf16.mxu0 0
        %3278 = vmatpush2.bf16.msra.mxu0 0
        %3279 = vmatprep.subr.bf16.mxu0 %v3248
        %3280 = vmatpush2.bf16.msra.mxu0 %v3245
        %3281 = vmatprep.subr.bf16.mxu0 %v3170
        %3282 = vmatpush2.bf16.msra.mxu0 %v3169
        %3283 = vmatprep.subr.bf16.mxu0 %v3165
        %3284 = vmatpush2.bf16.msra.mxu0 %v3164
        %3285 = vmatprep.subr.bf16.mxu0 %v3160
        %3286 = vmatpush2.bf16.msra.mxu0 %v3159
        %3287 = vmatprep.subr.bf16.mxu0 %v3155
        %3288 = vmatpush2.bf16.msra.mxu0 %v3154
        %3289 = vmatprep.subr.bf16.mxu0 %v3150
        %3290 = vmatpush2.bf16.msra.mxu0 %v3149
        %3291 = vmatprep.mubr.bf16.mxu0 %v791
        %3292 = vmatmul.mubr.bf16.gmra.mxu0 %v435
        %v3293 = vpop.f32.mrf.mxu0
        %v3294 = vadd.f32 %v340, %v3293
        %v3295 = vpop.f32.mrf.mxu0
        %v3296 = vadd.f32 %v340, %v3295
        %v3297 = vpop.f32.mrf.mxu0
        %v3298 = vadd.f32 %v345, %v3297
        %v3299 = vpop.f32.mrf.mxu0
        %v3300 = vadd.f32 %v345, %v3299
        %3301 = vdwg.mxu0
        %3302 = vmatprep.subr.bf16.mxu0 %v3147
        %3303 = vmatpush1.bf16.msra.mxu0 %v3146
        %3304 = vmatprep.subr.bf16.mxu0 %v3142
        %3305 = vmatpush1.bf16.msra.mxu0 %v3141
        %3306 = vmatprep.subr.bf16.mxu0 %v3137
        %3307 = vmatpush1.bf16.msra.mxu0 %v3136
        %3308 = vmatprep.subr.bf16.mxu0 %v3132
        %3309 = vmatpush1.bf16.msra.mxu0 %v3131
        %3310 = vmatprep.subr.bf16.mxu0 %v3127
        %3311 = vmatpush1.bf16.msra.mxu0 %v3126
        %3312 = vmatprep.subr.bf16.mxu0 %v3122
        %3313 = vmatpush1.bf16.msra.mxu0 %v3121
        %3314 = vmatprep.subr.bf16.mxu0 %v3117
        %3315 = vmatpush1.bf16.msra.mxu0 %v3116
        %3316 = vmatprep.subr.bf16.mxu0 %v3112
        %3317 = vmatpush1.bf16.msra.mxu0 %v3111
        %3318 = vmatprep.subr.bf16.mxu0 0
        %3319 = vmatpush2.bf16.msra.mxu0 0
        %3320 = vmatprep.subr.bf16.mxu0 0
        %3321 = vmatpush2.bf16.msra.mxu0 0
        %3322 = vmatprep.subr.bf16.mxu0 %v3254
        %3323 = vmatpush2.bf16.msra.mxu0 %v3251
        %3324 = vmatprep.subr.bf16.mxu0 %v3172
        %3325 = vmatpush2.bf16.msra.mxu0 %v3171
        %3326 = vmatprep.subr.bf16.mxu0 %v3167
        %3327 = vmatpush2.bf16.msra.mxu0 %v3166
        %3328 = vmatprep.subr.bf16.mxu0 %v3162
        %3329 = vmatpush2.bf16.msra.mxu0 %v3161
        %3330 = vmatprep.subr.bf16.mxu0 %v3157
        %3331 = vmatpush2.bf16.msra.mxu0 %v3156
        %3332 = vmatprep.subr.bf16.mxu0 %v3152
        %3333 = vmatpush2.bf16.msra.mxu0 %v3151
        %3334 = vmatprep.mubr.bf16.mxu0 %v791
        %3335 = vmatmul.mubr.bf16.gmra.mxu0 %v435
        %v3336 = vpop.f32.mrf.mxu0
        %v3337 = vadd.f32 %v340, %v3336
        %v3338 = vpop.f32.mrf.mxu0
        %v3339 = vadd.f32 %v340, %v3338
        %v3340 = vpop.f32.mrf.mxu0
        %v3341 = vadd.f32 %v345, %v3340
        %v3342 = vpop.f32.mrf.mxu0
        %v3343 = vadd.f32 %v345, %v3342
        %3344 = vdwg.mxu0
        %3345 = vmatprep.subr.bf16.mxu0 0
        %3346 = vmatpush1.bf16.msra.mxu0 %v3148
        %3347 = vmatprep.subr.bf16.mxu0 0
        %3348 = vmatpush1.bf16.msra.mxu0 %v3143
        %3349 = vmatprep.subr.bf16.mxu0 0
        %3350 = vmatpush1.bf16.msra.mxu0 %v3138
        %3351 = vmatprep.subr.bf16.mxu0 0
        %3352 = vmatpush1.bf16.msra.mxu0 %v3133
        %3353 = vmatprep.subr.bf16.mxu0 0
        %3354 = vmatpush1.bf16.msra.mxu0 %v3128
        %3355 = vmatprep.subr.bf16.mxu0 0
        %3356 = vmatpush1.bf16.msra.mxu0 %v3123
        %3357 = vmatprep.subr.bf16.mxu0 0
        %3358 = vmatpush1.bf16.msra.mxu0 %v3118
        %3359 = vmatprep.subr.bf16.mxu0 0
        %3360 = vmatpush1.bf16.msra.mxu0 %v3113
        %3361 = vmatprep.subr.bf16.mxu0 0
        %3362 = vmatpush2.bf16.msra.mxu0 0
        %3363 = vmatprep.subr.bf16.mxu0 0
        %3364 = vmatpush2.bf16.msra.mxu0 0
        %3365 = vmatprep.subr.bf16.mxu0 0
        %3366 = vmatpush2.bf16.msra.mxu0 %v3257
        %3367 = vmatprep.subr.bf16.mxu0 0
        %3368 = vmatpush2.bf16.msra.mxu0 %v3173
        %3369 = vmatprep.subr.bf16.mxu0 0
        %3370 = vmatpush2.bf16.msra.mxu0 %v3168
        %3371 = vmatprep.subr.bf16.mxu0 0
        %3372 = vmatpush2.bf16.msra.mxu0 %v3163
        %3373 = vmatprep.subr.bf16.mxu0 0
        %3374 = vmatpush2.bf16.msra.mxu0 %v3158
        %3375 = vmatprep.subr.bf16.mxu0 0
        %3376 = vmatpush2.bf16.msra.mxu0 %v3153
        %3377 = vmatprep.mubr.bf16.mxu0 %v791
        %3378 = vmatmul.mubr.bf16.gmra.mxu0 %v435
        %v3379 = vpop.f32.mrf.mxu0
        %v3380 = vadd.f32 %v340, %v3379
        %v3381 = vpop.f32.mrf.mxu0
        %v3382 = vpop.f32.mrf.mxu0
        %v3383 = vadd.f32 %v345, %v3382
        %v3384 = vpop.f32.mrf.mxu0
        %3385 = vdwg.mxu0
        %v3386 = vmax.f32 %v3294, 0.0
        %v3387 = vmax.f32 %v3296, 0.0
        %v3388 = vmax.f32 %v3337, 0.0
        %v3389 = vmax.f32 %v3339, 0.0
        %v3390 = vmax.f32 %v3380, 0.0
        %v3391 = vmax.f32 %v3298, 0.0
        %v3392 = vmax.f32 %v3300, 0.0
        %v3393 = vmax.f32 %v3341, 0.0
        %v3394 = vmax.f32 %v3343, 0.0
        %v3395 = vmax.f32 %v3383, 0.0
        %v3397 = vsel %vm793, %v3391, 0
        %v3400 = vsel %vm793, %v3392, 0
        %v3403 = vsel %vm793, %v3393, 0
        %v3406 = vsel %vm793, %v3394, 0
        %v3409 = vsel %vm793, %v3395, 0
        %3411 = vmatprep.subr.mxu0 0.0
        %3412 = vmatpush1.msra.mxu0 0.0
        %3413 = vmatprep.subr.mxu0 0.0
        %3414 = vmatpush1.msra.mxu0 0.0
        %3415 = vmatprep.subr.mxu0 0.0
        %3416 = vmatpush1.msra.mxu0 0.0
        %3417 = vmatprep.subr.mxu0 0.0
        %3418 = vmatpush1.msra.mxu0 0.0
        %3419 = vmatprep.subr.mxu0 0.0
        %3420 = vmatpush1.msra.mxu0 0.0
        %3421 = vmatprep.subr.mxu0 0.0
        %3422 = vmatpush1.msra.mxu0 0.0
        %3423 = vmatprep.subr.mxu0 0.0
        %3424 = vmatpush1.msra.mxu0 0.0
        %3425 = vmatprep.subr.mxu0 0.0
        %3426 = vmatpush1.msra.mxu0 0.0
        %3427 = vmatprep.subr.mxu0 0.0
        %3428 = vmatpush1.msra.mxu0 0.0
        %3429 = vmatprep.subr.mxu0 0.0
        %3430 = vmatpush1.msra.mxu0 0.0
        %3431 = vmatprep.subr.mxu0 0.0
        %3432 = vmatpush1.msra.mxu0 0.0
        %3433 = vmatprep.subr.mxu0 0.0
        %3434 = vmatpush1.msra.mxu0 0.0
        %3435 = vmatprep.subr.mxu0 0.0
        %3436 = vmatpush1.msra.mxu0 0.0
        %3437 = vmatprep.subr.mxu0 0.0
        %3438 = vmatpush1.msra.mxu0 0.0
        %3439 = vmatprep.subr.mxu0 %v3400
        %3440 = vmatpush1.msra.mxu0 %v3397
        %3441 = vmatprep.subr.mxu0 %v3387
        %3442 = vmatpush1.msra.mxu0 %v3386
        %3443 = vmatprep.subr.mxu0 0.0
        %3444 = vmatpush2.msra.mxu0 0.0
        %3445 = vmatprep.subr.mxu0 0.0
        %3446 = vmatpush2.msra.mxu0 0.0
        %3447 = vmatprep.subr.mxu0 0.0
        %3448 = vmatpush2.msra.mxu0 0.0
        %3449 = vmatprep.subr.mxu0 0.0
        %3450 = vmatpush2.msra.mxu0 0.0
        %3451 = vmatprep.subr.mxu0 0.0
        %3452 = vmatpush2.msra.mxu0 0.0
        %3453 = vmatprep.subr.mxu0 0.0
        %3454 = vmatpush2.msra.mxu0 0.0
        %3455 = vmatprep.subr.mxu0 0.0
        %3456 = vmatpush2.msra.mxu0 0.0
        %3457 = vmatprep.subr.mxu0 0.0
        %3458 = vmatpush2.msra.mxu0 0.0
        %3459 = vmatprep.subr.mxu0 0.0
        %3460 = vmatpush2.msra.mxu0 0.0
        %3461 = vmatprep.subr.mxu0 0.0
        %3462 = vmatpush2.msra.mxu0 0.0
        %3463 = vmatprep.subr.mxu0 0.0
        %3464 = vmatpush2.msra.mxu0 0.0
        %3465 = vmatprep.subr.mxu0 0.0
        %3466 = vmatpush2.msra.mxu0 0.0
        %3467 = vmatprep.subr.mxu0 0.0
        %3468 = vmatpush2.msra.mxu0 0.0
        %3469 = vmatprep.subr.mxu0 0.0
        %3470 = vmatpush2.msra.mxu0 0.0
        %3471 = vmatprep.subr.mxu0 0.0
        %3472 = vmatpush2.msra.mxu0 0.0
        %3473 = vmatprep.subr.mxu0 0.0
        %3474 = vmatpush2.msra.mxu0 0.0
        %3475 = vmatprep.mubr.f32.mxu0 0.0
        %3476 = vmatmul.mubr.f32.gmra.mxu0 %v948
        %v3477 = vpop.f32.mrf.mxu0
        %v3478 = vadd.f32 0.0, %v3477
        %v3479 = vpop.f32.mrf.mxu0
        %v3480 = vadd.f32 0.0, %v3479
        %3481 = vdwg.mxu0
        %3482 = vmatprep.subr.mxu0 0.0
        %3483 = vmatpush1.msra.mxu0 0.0
        %3484 = vmatprep.subr.mxu0 0.0
        %3485 = vmatpush1.msra.mxu0 0.0
        %3486 = vmatprep.subr.mxu0 0.0
        %3487 = vmatpush1.msra.mxu0 0.0
        %3488 = vmatprep.subr.mxu0 0.0
        %3489 = vmatpush1.msra.mxu0 0.0
        %3490 = vmatprep.subr.mxu0 0.0
        %3491 = vmatpush1.msra.mxu0 0.0
        %3492 = vmatprep.subr.mxu0 0.0
        %3493 = vmatpush1.msra.mxu0 0.0
        %3494 = vmatprep.subr.mxu0 0.0
        %3495 = vmatpush1.msra.mxu0 0.0
        %3496 = vmatprep.subr.mxu0 0.0
        %3497 = vmatpush1.msra.mxu0 0.0
        %3498 = vmatprep.subr.mxu0 0.0
        %3499 = vmatpush1.msra.mxu0 0.0
        %3500 = vmatprep.subr.mxu0 0.0
        %3501 = vmatpush1.msra.mxu0 0.0
        %3502 = vmatprep.subr.mxu0 0.0
        %3503 = vmatpush1.msra.mxu0 0.0
        %3504 = vmatprep.subr.mxu0 0.0
        %3505 = vmatpush1.msra.mxu0 0.0
        %3506 = vmatprep.subr.mxu0 0.0
        %3507 = vmatpush1.msra.mxu0 0.0
        %3508 = vmatprep.subr.mxu0 0.0
        %3509 = vmatpush1.msra.mxu0 0.0
        %3510 = vmatprep.subr.mxu0 %v3406
        %3511 = vmatpush1.msra.mxu0 %v3403
        %3512 = vmatprep.subr.mxu0 %v3389
        %3513 = vmatpush1.msra.mxu0 %v3388
        %3514 = vmatprep.subr.mxu0 0.0
        %3515 = vmatpush2.msra.mxu0 0.0
        %3516 = vmatprep.subr.mxu0 0.0
        %3517 = vmatpush2.msra.mxu0 0.0
        %3518 = vmatprep.subr.mxu0 0.0
        %3519 = vmatpush2.msra.mxu0 0.0
        %3520 = vmatprep.subr.mxu0 0.0
        %3521 = vmatpush2.msra.mxu0 0.0
        %3522 = vmatprep.subr.mxu0 0.0
        %3523 = vmatpush2.msra.mxu0 0.0
        %3524 = vmatprep.subr.mxu0 0.0
        %3525 = vmatpush2.msra.mxu0 0.0
        %3526 = vmatprep.subr.mxu0 0.0
        %3527 = vmatpush2.msra.mxu0 0.0
        %3528 = vmatprep.subr.mxu0 0.0
        %3529 = vmatpush2.msra.mxu0 0.0
        %3530 = vmatprep.subr.mxu0 0.0
        %3531 = vmatpush2.msra.mxu0 0.0
        %3532 = vmatprep.subr.mxu0 0.0
        %3533 = vmatpush2.msra.mxu0 0.0
        %3534 = vmatprep.subr.mxu0 0.0
        %3535 = vmatpush2.msra.mxu0 0.0
        %3536 = vmatprep.subr.mxu0 0.0
        %3537 = vmatpush2.msra.mxu0 0.0
        %3538 = vmatprep.subr.mxu0 0.0
        %3539 = vmatpush2.msra.mxu0 0.0
        %3540 = vmatprep.subr.mxu0 0.0
        %3541 = vmatpush2.msra.mxu0 0.0
        %3542 = vmatprep.subr.mxu0 0.0
        %3543 = vmatpush2.msra.mxu0 0.0
        %3544 = vmatprep.subr.mxu0 0.0
        %3545 = vmatpush2.msra.mxu0 0.0
        %3546 = vmatprep.mubr.f32.mxu0 0.0
        %3547 = vmatmul.mubr.f32.gmra.mxu0 %v948
        %v3548 = vpop.f32.mrf.mxu0
        %v3549 = vadd.f32 0.0, %v3548
        %v3550 = vpop.f32.mrf.mxu0
        %v3551 = vadd.f32 0.0, %v3550
        %3552 = vdwg.mxu0
        %3553 = vmatprep.subr.mxu0 0.0
        %3554 = vmatpush1.msra.mxu0 0.0
        %3555 = vmatprep.subr.mxu0 0.0
        %3556 = vmatpush1.msra.mxu0 0.0
        %3557 = vmatprep.subr.mxu0 0.0
        %3558 = vmatpush1.msra.mxu0 0.0
        %3559 = vmatprep.subr.mxu0 0.0
        %3560 = vmatpush1.msra.mxu0 0.0
        %3561 = vmatprep.subr.mxu0 0.0
        %3562 = vmatpush1.msra.mxu0 0.0
        %3563 = vmatprep.subr.mxu0 0.0
        %3564 = vmatpush1.msra.mxu0 0.0
        %3565 = vmatprep.subr.mxu0 0.0
        %3566 = vmatpush1.msra.mxu0 0.0
        %3567 = vmatprep.subr.mxu0 0.0
        %3568 = vmatpush1.msra.mxu0 0.0
        %3569 = vmatprep.subr.mxu0 0.0
        %3570 = vmatpush1.msra.mxu0 0.0
        %3571 = vmatprep.subr.mxu0 0.0
        %3572 = vmatpush1.msra.mxu0 0.0
        %3573 = vmatprep.subr.mxu0 0.0
        %3574 = vmatpush1.msra.mxu0 0.0
        %3575 = vmatprep.subr.mxu0 0.0
        %3576 = vmatpush1.msra.mxu0 0.0
        %3577 = vmatprep.subr.mxu0 0.0
        %3578 = vmatpush1.msra.mxu0 0.0
        %3579 = vmatprep.subr.mxu0 0.0
        %3580 = vmatpush1.msra.mxu0 0.0
        %3581 = vmatprep.subr.mxu0 0.0
        %3582 = vmatpush1.msra.mxu0 %v3409
        %3583 = vmatprep.subr.mxu0 0.0
        %3584 = vmatpush1.msra.mxu0 %v3390
        %3585 = vmatprep.subr.mxu0 0.0
        %3586 = vmatpush2.msra.mxu0 0.0
        %3587 = vmatprep.subr.mxu0 0.0
        %3588 = vmatpush2.msra.mxu0 0.0
        %3589 = vmatprep.subr.mxu0 0.0
        %3590 = vmatpush2.msra.mxu0 0.0
        %3591 = vmatprep.subr.mxu0 0.0
        %3592 = vmatpush2.msra.mxu0 0.0
        %3593 = vmatprep.subr.mxu0 0.0
        %3594 = vmatpush2.msra.mxu0 0.0
        %3595 = vmatprep.subr.mxu0 0.0
        %3596 = vmatpush2.msra.mxu0 0.0
        %3597 = vmatprep.subr.mxu0 0.0
        %3598 = vmatpush2.msra.mxu0 0.0
        %3599 = vmatprep.subr.mxu0 0.0
        %3600 = vmatpush2.msra.mxu0 0.0
        %3601 = vmatprep.subr.mxu0 0.0
        %3602 = vmatpush2.msra.mxu0 0.0
        %3603 = vmatprep.subr.mxu0 0.0
        %3604 = vmatpush2.msra.mxu0 0.0
        %3605 = vmatprep.subr.mxu0 0.0
        %3606 = vmatpush2.msra.mxu0 0.0
        %3607 = vmatprep.subr.mxu0 0.0
        %3608 = vmatpush2.msra.mxu0 0.0
        %3609 = vmatprep.subr.mxu0 0.0
        %3610 = vmatpush2.msra.mxu0 0.0
        %3611 = vmatprep.subr.mxu0 0.0
        %3612 = vmatpush2.msra.mxu0 0.0
        %3613 = vmatprep.subr.mxu0 0.0
        %3614 = vmatpush2.msra.mxu0 0.0
        %3615 = vmatprep.subr.mxu0 0.0
        %3616 = vmatpush2.msra.mxu0 0.0
        %3617 = vmatprep.mubr.f32.mxu0 0.0
        %3618 = vmatmul.mubr.f32.gmra.mxu0 %v948
        %v3619 = vpop.f32.mrf.mxu0
        %v3620 = vadd.f32 0.0, %v3619
        %v3621 = vpop.f32.mrf.mxu0
        %3622 = vdwg.mxu0
        %v3623 = vmax.f32 %v2806, %v3478
        %v3624 = vmax.f32 %v2807, %v3480
        %v3625 = vmax.f32 %v2808, %v3549
        %v3626 = vmax.f32 %v2809, %v3551
        %v3627 = vmax.f32 %v2810, %v3620
        %v3628 = vld [vmem:[#allocation2] sm:$0x1]
        %3630 = vset.pattern.permute.xlu0 0
        %3631 = vperm.xlu0 %3630, %v3628
        %v3632 = vpop.permute.xlu0 %3631
        %v3634 = vlaneseq
        %v3635 = vshrl.u32 %v3634, 7
        %v3636 = vsub.s32 0, %v3635
        %v3637 = vrot.slane %v3632, %v3636
        %v3638 = vadd.f32 %v3623, %v3637
        %v3639 = vadd.f32 %v3624, %v3637
        %v3640 = vadd.f32 %v3625, %v3637
        %v3641 = vadd.f32 %v3626, %v3637
        %v3642 = vadd.f32 %v3627, %v3637
        %v3643 = vmax.f32 %v3638, 0.0
        %v3644 = vmax.f32 %v3639, 0.0
        %v3645 = vmax.f32 %v3640, 0.0
        %v3646 = vmax.f32 %v3641, 0.0
        %v3647 = vmax.f32 %v3642, 0.0
        %v3648 = vpack.c.bf16 %v3643, %v3643
        %v3649 = vpack.c.bf16 %v3644, %v3644
        %v3650 = vpack.c.bf16 %v3645, %v3645
        %v3651 = vpack.c.bf16 %v3646, %v3646
        %v3652 = vpack.c.bf16 %v3647, %v3647
        %v3653 = vld [vmem:[%s5] sm:$0xff]
        %v3654 = vld [vmem:[%s5 + $0x8] sm:$0xff]
        %v3655 = vld [vmem:[%s5 + $0x10] sm:$0xff]
        %v3656 = vld [vmem:[%s5 + $0x18] sm:$0xff]
        %v3657 = vld [vmem:[%s5 + $0x20] sm:$0xff]
        %v3658 = vld [vmem:[%s5 + $0x28] sm:$0xff]
        %v3659 = vld [vmem:[%s5 + $0x30] sm:$0xff]
        %v3660 = vld [vmem:[%s5 + $0x38] sm:$0xff]
        %v3661 = vld [vmem:[%s5 + $0x40] sm:$0xff]
        %v3662 = vld [vmem:[%s5 + $0x48] sm:$0xff]
        %v3663 = vld [vmem:[%s5 + $0x50] sm:$0xff]
        %v3664 = vld [vmem:[%s5 + $0x58] sm:$0xff]
        %v3665 = vld [vmem:[%s5 + $0x60] sm:$0xff]
        %v3666 = vld [vmem:[%s5 + $0x68] sm:$0xff]
        %v3667 = vld [vmem:[%s5 + $0x70] sm:$0xff]
        %v3668 = vld [vmem:[%s5 + $0x78] sm:$0xff]
        %v3669 = vld [vmem:[%s5 + $0x80] sm:$0xff]
        %v3670 = vld [vmem:[%s5 + $0x88] sm:$0xff]
        %v3671 = vld [vmem:[%s5 + $0x90] sm:$0xff]
        %v3672 = vld [vmem:[%s5 + $0x98] sm:$0xff]
        %v3673 = vld [vmem:[%s5 + $0xa0] sm:$0xff]
        %v3674 = vld [vmem:[%s5 + $0xa8] sm:$0xff]
        %v3675 = vld [vmem:[%s5 + $0xb0] sm:$0xff]
        %v3676 = vld [vmem:[%s5 + $0xb8] sm:$0xff]
        %v3677 = vld [vmem:[%s5 + $0xc0] sm:$0xff]
        %v3678 = vld [vmem:[%s5 + $0xc8] sm:$0xff]
        %v3679 = vld [vmem:[%s5 + $0xd0] sm:$0xff]
        %v3680 = vld [vmem:[%s5 + $0xd8] sm:$0xff]
        %v3681 = vld [vmem:[%s5 + $0xe0] sm:$0xff]
        %v3682 = vld [vmem:[%s5 + $0xe8] sm:$0xff]
        %v3683 = vld [vmem:[%s5 + $0xf0] sm:$0xff]
        %v3684 = vld [vmem:[%s5 + $0xf8] sm:$0xff]
        %v3685 = vld [vmem:[%s5 + $0x100] sm:$0xff]
        %v3686 = vld [vmem:[%s5 + $0x108] sm:$0xff]
        %v3687 = vld [vmem:[%s5 + $0x110] sm:$0xff]
        %v3688 = vld [vmem:[%s5 + $0x118] sm:$0xff]
        %v3689 = vld [vmem:[%s5 + $0x120] sm:$0xff]
        %v3690 = vld [vmem:[%s5 + $0x128] sm:$0xff]
        %v3691 = vld [vmem:[%s5 + $0x130] sm:$0xff]
        %v3692 = vld [vmem:[%s5 + $0x138] sm:$0xff]
        %v3693 = vld [vmem:[%s5 + $0x140] sm:$0xff]
        %v3694 = vld [vmem:[%s5 + $0x148] sm:$0xff]
        %v3695 = vld [vmem:[%s5 + $0x150] sm:$0xff]
        %v3696 = vld [vmem:[%s5 + $0x158] sm:$0xff]
        %v3697 = vld [vmem:[%s5 + $0x160] sm:$0xff]
        %v3698 = vld [vmem:[%s5 + $0x168] sm:$0xff]
        %v3699 = vld [vmem:[%s5 + $0x170] sm:$0xff]
        %v3700 = vld [vmem:[%s5 + $0x178] sm:$0xff]
        %v3701 = vld [vmem:[%s5 + $0x180] sm:$0xff]
        %v3702 = vld [vmem:[%s5 + $0x188] sm:$0xff]
        %v3703 = vld [vmem:[%s5 + $0x190] sm:$0xff]
        %v3704 = vld [vmem:[%s5 + $0x198] sm:$0xff]
        %v3705 = vld [vmem:[%s5 + $0x1a0] sm:$0xff]
        %v3706 = vld [vmem:[%s5 + $0x1a8] sm:$0xff]
        %v3707 = vld [vmem:[%s5 + $0x1b0] sm:$0xff]
        %v3708 = vld [vmem:[%s5 + $0x1b8] sm:$0xff]
        %v3709 = vld [vmem:[%s5 + $0x1c0] sm:$0xff]
        %v3710 = vld [vmem:[%s5 + $0x1c8] sm:$0xff]
        %v3711 = vld [vmem:[%s5 + $0x1d0] sm:$0xff]
        %v3712 = vld [vmem:[%s5 + $0x1d8] sm:$0xff]
        %v3713 = vld [vmem:[%s5 + $0x1e0] sm:$0xff]
        %v3714 = vld [vmem:[%s5 + $0x1e8] sm:$0xff]
        %v3715 = vld [vmem:[%s5 + $0x1f0] sm:$0xff]
        %v3716 = vld [vmem:[%s5 + $0x1f8] sm:$0xff]
        %v3717 = vld [vmem:[%s5 + $0x200] sm:$0xff]
        %v3718 = vld [vmem:[%s5 + $0x208] sm:$0xff]
        %v3719 = vld [vmem:[%s5 + $0x210] sm:$0xff]
        %v3720 = vld [vmem:[%s5 + $0x218] sm:$0xff]
        %v3721 = vld [vmem:[%s5 + $0x220] sm:$0xff]
        %v3722 = vld [vmem:[%s5 + $0x228] sm:$0xff]
        %v3723 = vld [vmem:[%s5 + $0x230] sm:$0xff]
        %v3724 = vld [vmem:[%s5 + $0x238] sm:$0xff]
        %v3725 = vld [vmem:[%s5 + $0x240] sm:$0xff]
        %v3726 = vld [vmem:[%s5 + $0x248] sm:$0xff]
        %v3727 = vld [vmem:[%s5 + $0x250] sm:$0xff]
        %v3728 = vld [vmem:[%s5 + $0x258] sm:$0xff]
        %v3729 = vld [vmem:[%s5 + $0x260] sm:$0xff]
        %v3730 = vld [vmem:[%s5 + $0x268] sm:$0xff]
        %v3731 = vld [vmem:[%s5 + $0x270] sm:$0xff]
        %v3732 = vld [vmem:[%s5 + $0x278] sm:$0xff]
        %v3733 = vld [vmem:[%s5 + $0x280] sm:$0xff]
        %v3734 = vld [vmem:[%s5 + $0x288] sm:$0xff]
        %v3735 = vld [vmem:[%s5 + $0x290] sm:$0xff]
        %v3736 = vld [vmem:[%s5 + $0x298] sm:$0xff]
        %v3737 = vld [vmem:[%s5 + $0x2a0] sm:$0xff]
        %v3738 = vld [vmem:[%s5 + $0x2a8] sm:$0xff]
        %v3739 = vld [vmem:[%s5 + $0x2b0] sm:$0xff]
        %v3740 = vld [vmem:[%s5 + $0x2b8] sm:$0xff]
        %v3741 = vld [vmem:[%s5 + $0x2c0] sm:$0xff]
        %v3742 = vld [vmem:[%s5 + $0x2c8] sm:$0xff]
        %v3743 = vld [vmem:[%s5 + $0x2d0] sm:$0xff]
        %v3744 = vld [vmem:[%s5 + $0x2d8] sm:$0xff]
        %v3745 = vld [vmem:[%s5 + $0x2e0] sm:$0xff]
        %v3746 = vld [vmem:[%s5 + $0x2e8] sm:$0xff]
        %v3747 = vld [vmem:[%s5 + $0x2f0] sm:$0xff]
        %v3748 = vld [vmem:[%s5 + $0x2f8] sm:$0xff]
        %v3749 = vld [vmem:[%s5 + $0x300] sm:$0xff]
        %v3750 = vld [vmem:[%s5 + $0x308] sm:$0xff]
        %v3751 = vld [vmem:[%s5 + $0x310] sm:$0xff]
        %v3752 = vld [vmem:[%s5 + $0x318] sm:$0xff]
        %v3753 = vld [vmem:[%s5 + $0x320] sm:$0xff]
        %v3754 = vld [vmem:[%s5 + $0x328] sm:$0xff]
        %v3755 = vld [vmem:[%s5 + $0x330] sm:$0xff]
        %v3756 = vld [vmem:[%s5 + $0x338] sm:$0xff]
        %v3757 = vld [vmem:[%s5 + $0x340] sm:$0xff]
        %v3758 = vld [vmem:[%s5 + $0x348] sm:$0xff]
        %v3759 = vld [vmem:[%s5 + $0x350] sm:$0xff]
        %v3760 = vld [vmem:[%s5 + $0x358] sm:$0xff]
        %v3761 = vld [vmem:[%s5 + $0x360] sm:$0xff]
        %v3762 = vld [vmem:[%s5 + $0x368] sm:$0xff]
        %v3763 = vld [vmem:[%s5 + $0x370] sm:$0xff]
        %v3764 = vld [vmem:[%s5 + $0x378] sm:$0xff]
        %v3765 = vld [vmem:[%s5 + $0x380] sm:$0xff]
        %v3766 = vld [vmem:[%s5 + $0x388] sm:$0xff]
        %v3767 = vld [vmem:[%s5 + $0x390] sm:$0xff]
        %v3768 = vld [vmem:[%s5 + $0x398] sm:$0xff]
        %v3769 = vld [vmem:[%s5 + $0x3a0] sm:$0xff]
        %v3770 = vld [vmem:[%s5 + $0x3a8] sm:$0xff]
        %v3771 = vld [vmem:[%s5 + $0x3b0] sm:$0xff]
        %v3772 = vld [vmem:[%s5 + $0x3b8] sm:$0xff]
        %v3773 = vld [vmem:[%s5 + $0x3c0] sm:$0xff]
        %v3774 = vld [vmem:[%s5 + $0x3c8] sm:$0xff]
        %v3775 = vld [vmem:[%s5 + $0x3d0] sm:$0xff]
        %v3776 = vld [vmem:[%s5 + $0x3d8] sm:$0xff]
        %v3777 = vld [vmem:[%s5 + $0x3e0] sm:$0xff]
        %v3778 = vld [vmem:[%s5 + $0x3e8] sm:$0xff]
        %v3779 = vld [vmem:[%s5 + $0x3f0] sm:$0xff]
        %v3780 = vld [vmem:[%s5 + $0x3f8] sm:$0xff]
        %v3781 = vld [vmem:[%s5 + $0x400] sm:$0xff]
        %v3782 = vld [vmem:[%s5 + $0x408] sm:$0xff]
        %v3783 = vld [vmem:[%s5 + $0x410] sm:$0xff]
        %v3784 = vld [vmem:[%s5 + $0x418] sm:$0xff]
        %v3785 = vld [vmem:[%s5 + $0x420] sm:$0xff]
        %v3786 = vld [vmem:[%s5 + $0x428] sm:$0xff]
        %v3787 = vld [vmem:[%s5 + $0x430] sm:$0xff]
        %v3788 = vld [vmem:[%s5 + $0x438] sm:$0xff]
        %v3789 = vld [vmem:[%s5 + $0x440] sm:$0xff]
        %v3790 = vld [vmem:[%s5 + $0x448] sm:$0xff]
        %v3791 = vld [vmem:[%s5 + $0x450] sm:$0xff]
        %v3792 = vld [vmem:[%s5 + $0x458] sm:$0xff]
        %v3793 = vld [vmem:[%s5 + $0x460] sm:$0xff]
        %v3794 = vld [vmem:[%s5 + $0x468] sm:$0xff]
        %v3795 = vld [vmem:[%s5 + $0x470] sm:$0xff]
        %v3796 = vld [vmem:[%s5 + $0x478] sm:$0xff]
        %v3797 = vld [vmem:[%s5 + $0x480] sm:$0xff]
        %v3798 = vld [vmem:[%s5 + $0x488] sm:$0xff]
        %v3799 = vld [vmem:[%s5 + $0x490] sm:$0xff]
        %v3800 = vld [vmem:[%s5 + $0x498] sm:$0xff]
        %v3801 = vld [vmem:[%s5 + $0x4a0] sm:$0xff]
        %v3802 = vld [vmem:[%s5 + $0x4a8] sm:$0xff]
        %v3803 = vld [vmem:[%s5 + $0x4b0] sm:$0xff]
        %v3804 = vld [vmem:[%s5 + $0x4b8] sm:$0xff]
        %v3805 = vld [vmem:[%s5 + $0x4c0] sm:$0xff]
        %v3806 = vld [vmem:[%s5 + $0x4c8] sm:$0xff]
        %v3807 = vld [vmem:[%s5 + $0x4d0] sm:$0xff]
        %v3808 = vld [vmem:[%s5 + $0x4d8] sm:$0xff]
        %v3809 = vld [vmem:[%s5 + $0x4e0] sm:$0xff]
        %v3810 = vld [vmem:[%s5 + $0x4e8] sm:$0xff]
        %v3811 = vld [vmem:[%s5 + $0x4f0] sm:$0xff]
        %v3812 = vld [vmem:[%s5 + $0x4f8] sm:$0xff]
        %v3813 = vld [vmem:[%s6] sm:$0xf]
        %v3974 = vunpack.c.l.b16 %v3653
        %v3975 = vunpack.c.h.b16 %v3653
        %v3976 = vunpack.c.l.b16 %v3654
        %v3977 = vunpack.c.h.b16 %v3654
        %v3978 = vunpack.c.l.b16 %v3655
        %v3979 = vunpack.c.h.b16 %v3655
        %v3980 = vunpack.c.l.b16 %v3656
        %v3981 = vunpack.c.h.b16 %v3656
        %v3982 = vunpack.c.l.b16 %v3657
        %v3983 = vunpack.c.h.b16 %v3657
        %v3984 = vunpack.c.l.b16 %v3658
        %v3985 = vunpack.c.h.b16 %v3658
        %v3986 = vunpack.c.l.b16 %v3659
        %v3987 = vunpack.c.h.b16 %v3659
        %v3988 = vunpack.c.l.b16 %v3660
        %v3989 = vunpack.c.h.b16 %v3660
        %v3990 = vunpack.c.l.b16 %v3661
        %v3991 = vunpack.c.h.b16 %v3661
        %v3992 = vunpack.c.l.b16 %v3662
        %v3993 = vunpack.c.h.b16 %v3662
        %v3994 = vunpack.c.l.b16 %v3663
        %v3995 = vunpack.c.h.b16 %v3663
        %v3996 = vunpack.c.l.b16 %v3664
        %v3997 = vunpack.c.h.b16 %v3664
        %v3998 = vunpack.c.l.b16 %v3665
        %v3999 = vunpack.c.h.b16 %v3665
        %v4000 = vunpack.c.l.b16 %v3666
        %v4001 = vunpack.c.h.b16 %v3666
        %v4002 = vunpack.c.l.b16 %v3667
        %v4003 = vunpack.c.h.b16 %v3667
        %v4004 = vunpack.c.l.b16 %v3668
        %v4005 = vunpack.c.h.b16 %v3668
        %v4006 = vunpack.c.l.b16 %v3669
        %v4007 = vunpack.c.h.b16 %v3669
        %v4008 = vunpack.c.l.b16 %v3670
        %v4009 = vunpack.c.h.b16 %v3670
        %v4010 = vunpack.c.l.b16 %v3671
        %v4011 = vunpack.c.h.b16 %v3671
        %v4012 = vunpack.c.l.b16 %v3672
        %v4013 = vunpack.c.h.b16 %v3672
        %v4014 = vunpack.c.l.b16 %v3673
        %v4015 = vunpack.c.h.b16 %v3673
        %v4016 = vunpack.c.l.b16 %v3674
        %v4017 = vunpack.c.h.b16 %v3674
        %v4018 = vunpack.c.l.b16 %v3675
        %v4019 = vunpack.c.h.b16 %v3675
        %v4020 = vunpack.c.l.b16 %v3676
        %v4021 = vunpack.c.h.b16 %v3676
        %v4022 = vunpack.c.l.b16 %v3677
        %v4023 = vunpack.c.h.b16 %v3677
        %v4024 = vunpack.c.l.b16 %v3678
        %v4025 = vunpack.c.h.b16 %v3678
        %v4026 = vunpack.c.l.b16 %v3679
        %v4027 = vunpack.c.h.b16 %v3679
        %v4028 = vunpack.c.l.b16 %v3680
        %v4029 = vunpack.c.h.b16 %v3680
        %v4030 = vunpack.c.l.b16 %v3681
        %v4031 = vunpack.c.h.b16 %v3681
        %v4032 = vunpack.c.l.b16 %v3682
        %v4033 = vunpack.c.h.b16 %v3682
        %v4034 = vunpack.c.l.b16 %v3683
        %v4035 = vunpack.c.h.b16 %v3683
        %v4036 = vunpack.c.l.b16 %v3684
        %v4037 = vunpack.c.h.b16 %v3684
        %v4038 = vunpack.c.l.b16 %v3685
        %v4039 = vunpack.c.h.b16 %v3685
        %v4040 = vunpack.c.l.b16 %v3686
        %v4041 = vunpack.c.h.b16 %v3686
        %v4042 = vunpack.c.l.b16 %v3687
        %v4043 = vunpack.c.h.b16 %v3687
        %v4044 = vunpack.c.l.b16 %v3688
        %v4045 = vunpack.c.h.b16 %v3688
        %v4046 = vunpack.c.l.b16 %v3689
        %v4047 = vunpack.c.h.b16 %v3689
        %v4048 = vunpack.c.l.b16 %v3690
        %v4049 = vunpack.c.h.b16 %v3690
        %v4050 = vunpack.c.l.b16 %v3691
        %v4051 = vunpack.c.h.b16 %v3691
        %v4052 = vunpack.c.l.b16 %v3692
        %v4053 = vunpack.c.h.b16 %v3692
        %v4054 = vunpack.c.l.b16 %v3693
        %v4055 = vunpack.c.h.b16 %v3693
        %v4056 = vunpack.c.l.b16 %v3694
        %v4057 = vunpack.c.h.b16 %v3694
        %v4058 = vunpack.c.l.b16 %v3695
        %v4059 = vunpack.c.h.b16 %v3695
        %v4060 = vunpack.c.l.b16 %v3696
        %v4061 = vunpack.c.h.b16 %v3696
        %v4062 = vunpack.c.l.b16 %v3697
        %v4063 = vunpack.c.h.b16 %v3697
        %v4064 = vunpack.c.l.b16 %v3698
        %v4065 = vunpack.c.h.b16 %v3698
        %v4066 = vunpack.c.l.b16 %v3699
        %v4067 = vunpack.c.h.b16 %v3699
        %v4068 = vunpack.c.l.b16 %v3700
        %v4069 = vunpack.c.h.b16 %v3700
        %v4070 = vunpack.c.l.b16 %v3701
        %v4071 = vunpack.c.h.b16 %v3701
        %v4072 = vunpack.c.l.b16 %v3702
        %v4073 = vunpack.c.h.b16 %v3702
        %v4074 = vunpack.c.l.b16 %v3703
        %v4075 = vunpack.c.h.b16 %v3703
        %v4076 = vunpack.c.l.b16 %v3704
        %v4077 = vunpack.c.h.b16 %v3704
        %v4078 = vunpack.c.l.b16 %v3705
        %v4079 = vunpack.c.h.b16 %v3705
        %v4080 = vunpack.c.l.b16 %v3706
        %v4081 = vunpack.c.h.b16 %v3706
        %v4082 = vunpack.c.l.b16 %v3707
        %v4083 = vunpack.c.h.b16 %v3707
        %v4084 = vunpack.c.l.b16 %v3708
        %v4085 = vunpack.c.h.b16 %v3708
        %v4086 = vunpack.c.l.b16 %v3709
        %v4087 = vunpack.c.h.b16 %v3709
        %v4088 = vunpack.c.l.b16 %v3710
        %v4089 = vunpack.c.h.b16 %v3710
        %v4090 = vunpack.c.l.b16 %v3711
        %v4091 = vunpack.c.h.b16 %v3711
        %v4092 = vunpack.c.l.b16 %v3712
        %v4093 = vunpack.c.h.b16 %v3712
        %v4094 = vunpack.c.l.b16 %v3713
        %v4095 = vunpack.c.h.b16 %v3713
        %v4096 = vunpack.c.l.b16 %v3714
        %v4097 = vunpack.c.h.b16 %v3714
        %v4098 = vunpack.c.l.b16 %v3715
        %v4099 = vunpack.c.h.b16 %v3715
        %v4100 = vunpack.c.l.b16 %v3716
        %v4101 = vunpack.c.h.b16 %v3716
        %v4102 = vunpack.c.l.b16 %v3717
        %v4103 = vunpack.c.h.b16 %v3717
        %v4104 = vunpack.c.l.b16 %v3718
        %v4105 = vunpack.c.h.b16 %v3718
        %v4106 = vunpack.c.l.b16 %v3719
        %v4107 = vunpack.c.h.b16 %v3719
        %v4108 = vunpack.c.l.b16 %v3720
        %v4109 = vunpack.c.h.b16 %v3720
        %v4110 = vunpack.c.l.b16 %v3721
        %v4111 = vunpack.c.h.b16 %v3721
        %v4112 = vunpack.c.l.b16 %v3722
        %v4113 = vunpack.c.h.b16 %v3722
        %v4114 = vunpack.c.l.b16 %v3723
        %v4115 = vunpack.c.h.b16 %v3723
        %v4116 = vunpack.c.l.b16 %v3724
        %v4117 = vunpack.c.h.b16 %v3724
        %v4118 = vunpack.c.l.b16 %v3725
        %v4119 = vunpack.c.h.b16 %v3725
        %v4120 = vunpack.c.l.b16 %v3726
        %v4121 = vunpack.c.h.b16 %v3726
        %v4122 = vunpack.c.l.b16 %v3727
        %v4123 = vunpack.c.h.b16 %v3727
        %v4124 = vunpack.c.l.b16 %v3728
        %v4125 = vunpack.c.h.b16 %v3728
        %v4126 = vunpack.c.l.b16 %v3729
        %v4127 = vunpack.c.h.b16 %v3729
        %v4128 = vunpack.c.l.b16 %v3730
        %v4129 = vunpack.c.h.b16 %v3730
        %v4130 = vunpack.c.l.b16 %v3731
        %v4131 = vunpack.c.h.b16 %v3731
        %v4132 = vunpack.c.l.b16 %v3732
        %v4133 = vunpack.c.h.b16 %v3732
        %v4134 = vunpack.c.l.b16 %v3733
        %v4135 = vunpack.c.h.b16 %v3733
        %v4136 = vunpack.c.l.b16 %v3734
        %v4137 = vunpack.c.h.b16 %v3734
        %v4138 = vunpack.c.l.b16 %v3735
        %v4139 = vunpack.c.h.b16 %v3735
        %v4140 = vunpack.c.l.b16 %v3736
        %v4141 = vunpack.c.h.b16 %v3736
        %v4142 = vunpack.c.l.b16 %v3737
        %v4143 = vunpack.c.h.b16 %v3737
        %v4144 = vunpack.c.l.b16 %v3738
        %v4145 = vunpack.c.h.b16 %v3738
        %v4146 = vunpack.c.l.b16 %v3739
        %v4147 = vunpack.c.h.b16 %v3739
        %v4148 = vunpack.c.l.b16 %v3740
        %v4149 = vunpack.c.h.b16 %v3740
        %v4150 = vunpack.c.l.b16 %v3741
        %v4151 = vunpack.c.h.b16 %v3741
        %v4152 = vunpack.c.l.b16 %v3742
        %v4153 = vunpack.c.h.b16 %v3742
        %v4154 = vunpack.c.l.b16 %v3743
        %v4155 = vunpack.c.h.b16 %v3743
        %v4156 = vunpack.c.l.b16 %v3744
        %v4157 = vunpack.c.h.b16 %v3744
        %v4158 = vunpack.c.l.b16 %v3745
        %v4159 = vunpack.c.h.b16 %v3745
        %v4160 = vunpack.c.l.b16 %v3746
        %v4161 = vunpack.c.h.b16 %v3746
        %v4162 = vunpack.c.l.b16 %v3747
        %v4163 = vunpack.c.h.b16 %v3747
        %v4164 = vunpack.c.l.b16 %v3748
        %v4165 = vunpack.c.h.b16 %v3748
        %v4166 = vunpack.c.l.b16 %v3749
        %v4167 = vunpack.c.h.b16 %v3749
        %v4168 = vunpack.c.l.b16 %v3750
        %v4169 = vunpack.c.h.b16 %v3750
        %v4170 = vunpack.c.l.b16 %v3751
        %v4171 = vunpack.c.h.b16 %v3751
        %v4172 = vunpack.c.l.b16 %v3752
        %v4173 = vunpack.c.h.b16 %v3752
        %v4174 = vunpack.c.l.b16 %v3753
        %v4175 = vunpack.c.h.b16 %v3753
        %v4176 = vunpack.c.l.b16 %v3754
        %v4177 = vunpack.c.h.b16 %v3754
        %v4178 = vunpack.c.l.b16 %v3755
        %v4179 = vunpack.c.h.b16 %v3755
        %v4180 = vunpack.c.l.b16 %v3756
        %v4181 = vunpack.c.h.b16 %v3756
        %v4182 = vunpack.c.l.b16 %v3757
        %v4183 = vunpack.c.h.b16 %v3757
        %v4184 = vunpack.c.l.b16 %v3758
        %v4185 = vunpack.c.h.b16 %v3758
        %v4186 = vunpack.c.l.b16 %v3759
        %v4187 = vunpack.c.h.b16 %v3759
        %v4188 = vunpack.c.l.b16 %v3760
        %v4189 = vunpack.c.h.b16 %v3760
        %v4190 = vunpack.c.l.b16 %v3761
        %v4191 = vunpack.c.h.b16 %v3761
        %v4192 = vunpack.c.l.b16 %v3762
        %v4193 = vunpack.c.h.b16 %v3762
        %v4194 = vunpack.c.l.b16 %v3763
        %v4195 = vunpack.c.h.b16 %v3763
        %v4196 = vunpack.c.l.b16 %v3764
        %v4197 = vunpack.c.h.b16 %v3764
        %v4198 = vunpack.c.l.b16 %v3765
        %v4199 = vunpack.c.h.b16 %v3765
        %v4200 = vunpack.c.l.b16 %v3766
        %v4201 = vunpack.c.h.b16 %v3766
        %v4202 = vunpack.c.l.b16 %v3767
        %v4203 = vunpack.c.h.b16 %v3767
        %v4204 = vunpack.c.l.b16 %v3768
        %v4205 = vunpack.c.h.b16 %v3768
        %v4206 = vunpack.c.l.b16 %v3769
        %v4207 = vunpack.c.h.b16 %v3769
        %v4208 = vunpack.c.l.b16 %v3770
        %v4209 = vunpack.c.h.b16 %v3770
        %v4210 = vunpack.c.l.b16 %v3771
        %v4211 = vunpack.c.h.b16 %v3771
        %v4212 = vunpack.c.l.b16 %v3772
        %v4213 = vunpack.c.h.b16 %v3772
        %v4214 = vunpack.c.l.b16 %v3773
        %v4215 = vunpack.c.h.b16 %v3773
        %v4216 = vunpack.c.l.b16 %v3774
        %v4217 = vunpack.c.h.b16 %v3774
        %v4218 = vunpack.c.l.b16 %v3775
        %v4219 = vunpack.c.h.b16 %v3775
        %v4220 = vunpack.c.l.b16 %v3776
        %v4221 = vunpack.c.h.b16 %v3776
        %v4222 = vunpack.c.l.b16 %v3777
        %v4223 = vunpack.c.h.b16 %v3777
        %v4224 = vunpack.c.l.b16 %v3778
        %v4225 = vunpack.c.h.b16 %v3778
        %v4226 = vunpack.c.l.b16 %v3779
        %v4227 = vunpack.c.h.b16 %v3779
        %v4228 = vunpack.c.l.b16 %v3780
        %v4229 = vunpack.c.h.b16 %v3780
        %v4230 = vunpack.c.l.b16 %v3781
        %v4231 = vunpack.c.h.b16 %v3781
        %v4232 = vunpack.c.l.b16 %v3782
        %v4233 = vunpack.c.h.b16 %v3782
        %v4234 = vunpack.c.l.b16 %v3783
        %v4235 = vunpack.c.h.b16 %v3783
        %v4236 = vunpack.c.l.b16 %v3784
        %v4237 = vunpack.c.h.b16 %v3784
        %v4238 = vunpack.c.l.b16 %v3785
        %v4239 = vunpack.c.h.b16 %v3785
        %v4240 = vunpack.c.l.b16 %v3786
        %v4241 = vunpack.c.h.b16 %v3786
        %v4242 = vunpack.c.l.b16 %v3787
        %v4243 = vunpack.c.h.b16 %v3787
        %v4244 = vunpack.c.l.b16 %v3788
        %v4245 = vunpack.c.h.b16 %v3788
        %v4246 = vunpack.c.l.b16 %v3789
        %v4247 = vunpack.c.h.b16 %v3789
        %v4248 = vunpack.c.l.b16 %v3790
        %v4249 = vunpack.c.h.b16 %v3790
        %v4250 = vunpack.c.l.b16 %v3791
        %v4251 = vunpack.c.h.b16 %v3791
        %v4252 = vunpack.c.l.b16 %v3792
        %v4253 = vunpack.c.h.b16 %v3792
        %v4254 = vunpack.c.l.b16 %v3793
        %v4255 = vunpack.c.h.b16 %v3793
        %v4256 = vunpack.c.l.b16 %v3794
        %v4257 = vunpack.c.h.b16 %v3794
        %v4258 = vunpack.c.l.b16 %v3795
        %v4259 = vunpack.c.h.b16 %v3795
        %v4260 = vunpack.c.l.b16 %v3796
        %v4261 = vunpack.c.h.b16 %v3796
        %v4262 = vunpack.c.l.b16 %v3797
        %v4263 = vunpack.c.h.b16 %v3797
        %v4264 = vunpack.c.l.b16 %v3798
        %v4265 = vunpack.c.h.b16 %v3798
        %v4266 = vunpack.c.l.b16 %v3799
        %v4267 = vunpack.c.h.b16 %v3799
        %v4268 = vunpack.c.l.b16 %v3800
        %v4269 = vunpack.c.h.b16 %v3800
        %v4270 = vunpack.c.l.b16 %v3801
        %v4271 = vunpack.c.h.b16 %v3801
        %v4272 = vunpack.c.l.b16 %v3802
        %v4273 = vunpack.c.h.b16 %v3802
        %v4274 = vunpack.c.l.b16 %v3803
        %v4275 = vunpack.c.h.b16 %v3803
        %v4276 = vunpack.c.l.b16 %v3804
        %v4277 = vunpack.c.h.b16 %v3804
        %v4278 = vunpack.c.l.b16 %v3805
        %v4279 = vunpack.c.h.b16 %v3805
        %v4280 = vunpack.c.l.b16 %v3806
        %v4281 = vunpack.c.h.b16 %v3806
        %v4282 = vunpack.c.l.b16 %v3807
        %v4283 = vunpack.c.h.b16 %v3807
        %v4284 = vunpack.c.l.b16 %v3808
        %v4285 = vunpack.c.h.b16 %v3808
        %v4286 = vunpack.c.l.b16 %v3809
        %v4287 = vunpack.c.h.b16 %v3809
        %v4288 = vunpack.c.l.b16 %v3810
        %v4289 = vunpack.c.h.b16 %v3810
        %v4290 = vunpack.c.l.b16 %v3811
        %v4291 = vunpack.c.h.b16 %v3811
        %v4292 = vunpack.c.l.b16 %v3812
        %v4293 = vunpack.c.h.b16 %v3812
        %v4294 = vpack.c.b16 %v3978, %v3974
        %v4295 = vpack.c.b16 %v3979, %v3975
        %v4296 = vpack.c.b16 %v3980, %v3976
        %v4297 = vpack.c.b16 %v3981, %v3977
        %v4298 = vpack.c.b16 %v3986, %v3982
        %v4299 = vpack.c.b16 %v3987, %v3983
        %v4300 = vpack.c.b16 %v3988, %v3984
        %v4301 = vpack.c.b16 %v3989, %v3985
        %v4302 = vpack.c.b16 %v3994, %v3990
        %v4303 = vpack.c.b16 %v3995, %v3991
        %v4304 = vpack.c.b16 %v3996, %v3992
        %v4305 = vpack.c.b16 %v3997, %v3993
        %v4306 = vpack.c.b16 %v4002, %v3998
        %v4307 = vpack.c.b16 %v4003, %v3999
        %v4308 = vpack.c.b16 %v4004, %v4000
        %v4309 = vpack.c.b16 %v4005, %v4001
        %v4310 = vpack.c.b16 %v4010, %v4006
        %v4311 = vpack.c.b16 %v4011, %v4007
        %v4312 = vpack.c.b16 %v4012, %v4008
        %v4313 = vpack.c.b16 %v4013, %v4009
        %v4314 = vpack.c.b16 %v4018, %v4014
        %v4315 = vpack.c.b16 %v4019, %v4015
        %v4316 = vpack.c.b16 %v4020, %v4016
        %v4317 = vpack.c.b16 %v4021, %v4017
        %v4318 = vpack.c.b16 %v4026, %v4022
        %v4319 = vpack.c.b16 %v4027, %v4023
        %v4320 = vpack.c.b16 %v4028, %v4024
        %v4321 = vpack.c.b16 %v4029, %v4025
        %v4322 = vpack.c.b16 %v4034, %v4030
        %v4323 = vpack.c.b16 %v4035, %v4031
        %v4324 = vpack.c.b16 %v4036, %v4032
        %v4325 = vpack.c.b16 %v4037, %v4033
        %v4326 = vpack.c.b16 %v4042, %v4038
        %v4327 = vpack.c.b16 %v4043, %v4039
        %v4328 = vpack.c.b16 %v4044, %v4040
        %v4329 = vpack.c.b16 %v4045, %v4041
        %v4330 = vpack.c.b16 %v4050, %v4046
        %v4331 = vpack.c.b16 %v4051, %v4047
        %v4332 = vpack.c.b16 %v4052, %v4048
        %v4333 = vpack.c.b16 %v4053, %v4049
        %v4334 = vpack.c.b16 %v4058, %v4054
        %v4335 = vpack.c.b16 %v4059, %v4055
        %v4336 = vpack.c.b16 %v4060, %v4056
        %v4337 = vpack.c.b16 %v4061, %v4057
        %v4338 = vpack.c.b16 %v4066, %v4062
        %v4339 = vpack.c.b16 %v4067, %v4063
        %v4340 = vpack.c.b16 %v4068, %v4064
        %v4341 = vpack.c.b16 %v4069, %v4065
        %v4342 = vpack.c.b16 %v4074, %v4070
        %v4343 = vpack.c.b16 %v4075, %v4071
        %v4344 = vpack.c.b16 %v4076, %v4072
        %v4345 = vpack.c.b16 %v4077, %v4073
        %v4346 = vpack.c.b16 %v4082, %v4078
        %v4347 = vpack.c.b16 %v4083, %v4079
        %v4348 = vpack.c.b16 %v4084, %v4080
        %v4349 = vpack.c.b16 %v4085, %v4081
        %v4350 = vpack.c.b16 %v4090, %v4086
        %v4351 = vpack.c.b16 %v4091, %v4087
        %v4352 = vpack.c.b16 %v4092, %v4088
        %v4353 = vpack.c.b16 %v4093, %v4089
        %v4354 = vpack.c.b16 %v4098, %v4094
        %v4355 = vpack.c.b16 %v4099, %v4095
        %v4356 = vpack.c.b16 %v4100, %v4096
        %v4357 = vpack.c.b16 %v4101, %v4097
        %v4358 = vpack.c.b16 %v4106, %v4102
        %v4359 = vpack.c.b16 %v4107, %v4103
        %v4360 = vpack.c.b16 %v4108, %v4104
        %v4361 = vpack.c.b16 %v4109, %v4105
        %v4362 = vpack.c.b16 %v4114, %v4110
        %v4363 = vpack.c.b16 %v4115, %v4111
        %v4364 = vpack.c.b16 %v4116, %v4112
        %v4365 = vpack.c.b16 %v4117, %v4113
        %v4366 = vpack.c.b16 %v4122, %v4118
        %v4367 = vpack.c.b16 %v4123, %v4119
        %v4368 = vpack.c.b16 %v4124, %v4120
        %v4369 = vpack.c.b16 %v4125, %v4121
        %v4370 = vpack.c.b16 %v4130, %v4126
        %v4371 = vpack.c.b16 %v4131, %v4127
        %v4372 = vpack.c.b16 %v4132, %v4128
        %v4373 = vpack.c.b16 %v4133, %v4129
        %v4374 = vpack.c.b16 %v4138, %v4134
        %v4375 = vpack.c.b16 %v4139, %v4135
        %v4376 = vpack.c.b16 %v4140, %v4136
        %v4377 = vpack.c.b16 %v4141, %v4137
        %v4378 = vpack.c.b16 %v4146, %v4142
        %v4379 = vpack.c.b16 %v4147, %v4143
        %v4380 = vpack.c.b16 %v4148, %v4144
        %v4381 = vpack.c.b16 %v4149, %v4145
        %v4382 = vpack.c.b16 %v4154, %v4150
        %v4383 = vpack.c.b16 %v4155, %v4151
        %v4384 = vpack.c.b16 %v4156, %v4152
        %v4385 = vpack.c.b16 %v4157, %v4153
        %v4386 = vpack.c.b16 %v4162, %v4158
        %v4387 = vpack.c.b16 %v4163, %v4159
        %v4388 = vpack.c.b16 %v4164, %v4160
        %v4389 = vpack.c.b16 %v4165, %v4161
        %v4390 = vpack.c.b16 %v4170, %v4166
        %v4391 = vpack.c.b16 %v4171, %v4167
        %v4392 = vpack.c.b16 %v4172, %v4168
        %v4393 = vpack.c.b16 %v4173, %v4169
        %v4394 = vpack.c.b16 %v4178, %v4174
        %v4395 = vpack.c.b16 %v4179, %v4175
        %v4396 = vpack.c.b16 %v4180, %v4176
        %v4397 = vpack.c.b16 %v4181, %v4177
        %v4398 = vpack.c.b16 %v4186, %v4182
        %v4399 = vpack.c.b16 %v4187, %v4183
        %v4400 = vpack.c.b16 %v4188, %v4184
        %v4401 = vpack.c.b16 %v4189, %v4185
        %v4402 = vpack.c.b16 %v4194, %v4190
        %v4403 = vpack.c.b16 %v4195, %v4191
        %v4404 = vpack.c.b16 %v4196, %v4192
        %v4405 = vpack.c.b16 %v4197, %v4193
        %v4406 = vpack.c.b16 %v4202, %v4198
        %v4407 = vpack.c.b16 %v4203, %v4199
        %v4408 = vpack.c.b16 %v4204, %v4200
        %v4409 = vpack.c.b16 %v4205, %v4201
        %v4410 = vpack.c.b16 %v4210, %v4206
        %v4411 = vpack.c.b16 %v4211, %v4207
        %v4412 = vpack.c.b16 %v4212, %v4208
        %v4413 = vpack.c.b16 %v4213, %v4209
        %v4414 = vpack.c.b16 %v4218, %v4214
        %v4415 = vpack.c.b16 %v4219, %v4215
        %v4416 = vpack.c.b16 %v4220, %v4216
        %v4417 = vpack.c.b16 %v4221, %v4217
        %v4418 = vpack.c.b16 %v4226, %v4222
        %v4419 = vpack.c.b16 %v4227, %v4223
        %v4420 = vpack.c.b16 %v4228, %v4224
        %v4421 = vpack.c.b16 %v4229, %v4225
        %v4422 = vpack.c.b16 %v4234, %v4230
        %v4423 = vpack.c.b16 %v4235, %v4231
        %v4424 = vpack.c.b16 %v4236, %v4232
        %v4425 = vpack.c.b16 %v4237, %v4233
        %v4426 = vpack.c.b16 %v4242, %v4238
        %v4427 = vpack.c.b16 %v4243, %v4239
        %v4428 = vpack.c.b16 %v4244, %v4240
        %v4429 = vpack.c.b16 %v4245, %v4241
        %v4430 = vpack.c.b16 %v4250, %v4246
        %v4431 = vpack.c.b16 %v4251, %v4247
        %v4432 = vpack.c.b16 %v4252, %v4248
        %v4433 = vpack.c.b16 %v4253, %v4249
        %v4434 = vpack.c.b16 %v4258, %v4254
        %v4435 = vpack.c.b16 %v4259, %v4255
        %v4436 = vpack.c.b16 %v4260, %v4256
        %v4437 = vpack.c.b16 %v4261, %v4257
        %v4438 = vpack.c.b16 %v4266, %v4262
        %v4439 = vpack.c.b16 %v4267, %v4263
        %v4440 = vpack.c.b16 %v4268, %v4264
        %v4441 = vpack.c.b16 %v4269, %v4265
        %v4442 = vpack.c.b16 %v4274, %v4270
        %v4443 = vpack.c.b16 %v4275, %v4271
        %v4444 = vpack.c.b16 %v4276, %v4272
        %v4445 = vpack.c.b16 %v4277, %v4273
        %v4446 = vpack.c.b16 %v4282, %v4278
        %v4447 = vpack.c.b16 %v4283, %v4279
        %v4448 = vpack.c.b16 %v4284, %v4280
        %v4449 = vpack.c.b16 %v4285, %v4281
        %v4450 = vpack.c.b16 %v4290, %v4286
        %v4451 = vpack.c.b16 %v4291, %v4287
        %v4452 = vpack.c.b16 %v4292, %v4288
        %v4453 = vpack.c.b16 %v4293, %v4289
        %v4615 = vlaneseq
        %v4616 = vshrl.u32 %v4615, 7
        %v4617 = vsub.s32 0, %v4616
        %v4618 = vrot.slane %v3813, %v4617
        %v4619 = vlaneseq
        %v4620 = vshrl.u32 %v4619, 7
        %v4621 = vsub.s32 1, %v4620
        %v4622 = vrot.slane %v3813, %v4621
        %v4623 = vlaneseq
        %v4624 = vshrl.u32 %v4623, 7
        %v4625 = vsub.s32 2, %v4624
        %v4626 = vrot.slane %v3813, %v4625
        %v4627 = vlaneseq
        %v4628 = vshrl.u32 %v4627, 7
        %v4629 = vsub.s32 3, %v4628
        %v4630 = vrot.slane %v3813, %v4629
        %4635 = vmatprep.subr.bf16.mxu0 %v4323
        %4636 = vmatpush1.bf16.msra.mxu0 %v4322
        %4637 = vmatprep.subr.bf16.mxu0 %v4319
        %4638 = vmatpush1.bf16.msra.mxu0 %v4318
        %4639 = vmatprep.subr.bf16.mxu0 %v4315
        %4640 = vmatpush1.bf16.msra.mxu0 %v4314
        %4641 = vmatprep.subr.bf16.mxu0 %v4311
        %4642 = vmatpush1.bf16.msra.mxu0 %v4310
        %4643 = vmatprep.subr.bf16.mxu0 %v4307
        %4644 = vmatpush1.bf16.msra.mxu0 %v4306
        %4645 = vmatprep.subr.bf16.mxu0 %v4303
        %4646 = vmatpush1.bf16.msra.mxu0 %v4302
        %4647 = vmatprep.subr.bf16.mxu0 %v4299
        %4648 = vmatpush1.bf16.msra.mxu0 %v4298
        %4649 = vmatprep.subr.bf16.mxu0 %v4295
        %4650 = vmatpush1.bf16.msra.mxu0 %v4294
        %4651 = vmatprep.subr.bf16.mxu0 %v4355
        %4652 = vmatpush2.bf16.msra.mxu0 %v4354
        %4653 = vmatprep.subr.bf16.mxu0 %v4351
        %4654 = vmatpush2.bf16.msra.mxu0 %v4350
        %4655 = vmatprep.subr.bf16.mxu0 %v4347
        %4656 = vmatpush2.bf16.msra.mxu0 %v4346
        %4657 = vmatprep.subr.bf16.mxu0 %v4343
        %4658 = vmatpush2.bf16.msra.mxu0 %v4342
        %4659 = vmatprep.subr.bf16.mxu0 %v4339
        %4660 = vmatpush2.bf16.msra.mxu0 %v4338
        %4661 = vmatprep.subr.bf16.mxu0 %v4335
        %4662 = vmatpush2.bf16.msra.mxu0 %v4334
        %4663 = vmatprep.subr.bf16.mxu0 %v4331
        %4664 = vmatpush2.bf16.msra.mxu0 %v4330
        %4665 = vmatprep.subr.bf16.mxu0 %v4327
        %4666 = vmatpush2.bf16.msra.mxu0 %v4326
        %4667 = vmatprep.mubr.bf16.mxu0 %v3649
        %4668 = vmatmul.mubr.bf16.gmra.mxu0 %v3648
        %v4669 = vpop.f32.mrf.mxu0
        %v4670 = vadd.f32 %v4618, %v4669
        %v4671 = vpop.f32.mrf.mxu0
        %v4672 = vadd.f32 %v4622, %v4671
        %v4673 = vpop.f32.mrf.mxu0
        %v4674 = vpop.f32.mrf.mxu0
        %4675 = vdwg.mxu0
        %4676 = vmatprep.subr.bf16.mxu0 %v4387
        %4677 = vmatpush1.bf16.msra.mxu0 %v4386
        %4678 = vmatprep.subr.bf16.mxu0 %v4383
        %4679 = vmatpush1.bf16.msra.mxu0 %v4382
        %4680 = vmatprep.subr.bf16.mxu0 %v4379
        %4681 = vmatpush1.bf16.msra.mxu0 %v4378
        %4682 = vmatprep.subr.bf16.mxu0 %v4375
        %4683 = vmatpush1.bf16.msra.mxu0 %v4374
        %4684 = vmatprep.subr.bf16.mxu0 %v4371
        %4685 = vmatpush1.bf16.msra.mxu0 %v4370
        %4686 = vmatprep.subr.bf16.mxu0 %v4367
        %4687 = vmatpush1.bf16.msra.mxu0 %v4366
        %4688 = vmatprep.subr.bf16.mxu0 %v4363
        %4689 = vmatpush1.bf16.msra.mxu0 %v4362
        %4690 = vmatprep.subr.bf16.mxu0 %v4359
        %4691 = vmatpush1.bf16.msra.mxu0 %v4358
        %4692 = vmatprep.subr.bf16.mxu0 %v4419
        %4693 = vmatpush2.bf16.msra.mxu0 %v4418
        %4694 = vmatprep.subr.bf16.mxu0 %v4415
        %4695 = vmatpush2.bf16.msra.mxu0 %v4414
        %4696 = vmatprep.subr.bf16.mxu0 %v4411
        %4697 = vmatpush2.bf16.msra.mxu0 %v4410
        %4698 = vmatprep.subr.bf16.mxu0 %v4407
        %4699 = vmatpush2.bf16.msra.mxu0 %v4406
        %4700 = vmatprep.subr.bf16.mxu0 %v4403
        %4701 = vmatpush2.bf16.msra.mxu0 %v4402
        %4702 = vmatprep.subr.bf16.mxu0 %v4399
        %4703 = vmatpush2.bf16.msra.mxu0 %v4398
        %4704 = vmatprep.subr.bf16.mxu0 %v4395
        %4705 = vmatpush2.bf16.msra.mxu0 %v4394
        %4706 = vmatprep.subr.bf16.mxu0 %v4391
        %4707 = vmatpush2.bf16.msra.mxu0 %v4390
        %4708 = vmatprep.mubr.bf16.mxu0 %v3651
        %4709 = vmatmul.mubr.bf16.gmra.mxu0 %v3650
        %v4710 = vpop.f32.mrf.mxu0
        %v4711 = vadd.f32 %v4670, %v4710
        %v4712 = vpop.f32.mrf.mxu0
        %v4713 = vadd.f32 %v4672, %v4712
        %v4714 = vpop.f32.mrf.mxu0
        %v4715 = vpop.f32.mrf.mxu0
        %4716 = vdwg.mxu0
        %4717 = vmatprep.subr.bf16.mxu0 %v4451
        %4718 = vmatpush1.bf16.msra.mxu0 %v4450
        %4719 = vmatprep.subr.bf16.mxu0 %v4447
        %4720 = vmatpush1.bf16.msra.mxu0 %v4446
        %4721 = vmatprep.subr.bf16.mxu0 %v4443
        %4722 = vmatpush1.bf16.msra.mxu0 %v4442
        %4723 = vmatprep.subr.bf16.mxu0 %v4439
        %4724 = vmatpush1.bf16.msra.mxu0 %v4438
        %4725 = vmatprep.subr.bf16.mxu0 %v4435
        %4726 = vmatpush1.bf16.msra.mxu0 %v4434
        %4727 = vmatprep.subr.bf16.mxu0 %v4431
        %4728 = vmatpush1.bf16.msra.mxu0 %v4430
        %4729 = vmatprep.subr.bf16.mxu0 %v4427
        %4730 = vmatpush1.bf16.msra.mxu0 %v4426
        %4731 = vmatprep.subr.bf16.mxu0 %v4423
        %4732 = vmatpush1.bf16.msra.mxu0 %v4422
        %4733 = vmatprep.subr.bf16.mxu0 0
        %4734 = vmatpush2.bf16.msra.mxu0 0
        %4735 = vmatprep.subr.bf16.mxu0 0
        %4736 = vmatpush2.bf16.msra.mxu0 0
        %4737 = vmatprep.subr.bf16.mxu0 0
        %4738 = vmatpush2.bf16.msra.mxu0 0
        %4739 = vmatprep.subr.bf16.mxu0 0
        %4740 = vmatpush2.bf16.msra.mxu0 0
        %4741 = vmatprep.subr.bf16.mxu0 0
        %4742 = vmatpush2.bf16.msra.mxu0 0
        %4743 = vmatprep.subr.bf16.mxu0 0
        %4744 = vmatpush2.bf16.msra.mxu0 0
        %4745 = vmatprep.subr.bf16.mxu0 0
        %4746 = vmatpush2.bf16.msra.mxu0 0
        %4747 = vmatprep.subr.bf16.mxu0 0
        %4748 = vmatpush2.bf16.msra.mxu0 0
        %4749 = vmatprep.mubr.bf16.mxu0 0
        %4750 = vmatmul.mubr.bf16.gmra.mxu0 %v3652
        %v4751 = vpop.f32.mrf.mxu0
        %v4752 = vadd.f32 %v4711, %v4751
        %v4753 = vpop.f32.mrf.mxu0
        %v4754 = vadd.f32 %v4713, %v4753
        %v4755 = vpop.f32.mrf.mxu0
        %v4756 = vpop.f32.mrf.mxu0
        %4757 = vdwg.mxu0
        %4758 = vmatprep.subr.bf16.mxu0 %v4325
        %4759 = vmatpush1.bf16.msra.mxu0 %v4324
        %4760 = vmatprep.subr.bf16.mxu0 %v4321
        %4761 = vmatpush1.bf16.msra.mxu0 %v4320
        %4762 = vmatprep.subr.bf16.mxu0 %v4317
        %4763 = vmatpush1.bf16.msra.mxu0 %v4316
        %4764 = vmatprep.subr.bf16.mxu0 %v4313
        %4765 = vmatpush1.bf16.msra.mxu0 %v4312
        %4766 = vmatprep.subr.bf16.mxu0 %v4309
        %4767 = vmatpush1.bf16.msra.mxu0 %v4308
        %4768 = vmatprep.subr.bf16.mxu0 %v4305
        %4769 = vmatpush1.bf16.msra.mxu0 %v4304
        %4770 = vmatprep.subr.bf16.mxu0 %v4301
        %4771 = vmatpush1.bf16.msra.mxu0 %v4300
        %4772 = vmatprep.subr.bf16.mxu0 %v4297
        %4773 = vmatpush1.bf16.msra.mxu0 %v4296
        %4774 = vmatprep.subr.bf16.mxu0 %v4357
        %4775 = vmatpush2.bf16.msra.mxu0 %v4356
        %4776 = vmatprep.subr.bf16.mxu0 %v4353
        %4777 = vmatpush2.bf16.msra.mxu0 %v4352
        %4778 = vmatprep.subr.bf16.mxu0 %v4349
        %4779 = vmatpush2.bf16.msra.mxu0 %v4348
        %4780 = vmatprep.subr.bf16.mxu0 %v4345
        %4781 = vmatpush2.bf16.msra.mxu0 %v4344
        %4782 = vmatprep.subr.bf16.mxu0 %v4341
        %4783 = vmatpush2.bf16.msra.mxu0 %v4340
        %4784 = vmatprep.subr.bf16.mxu0 %v4337
        %4785 = vmatpush2.bf16.msra.mxu0 %v4336
        %4786 = vmatprep.subr.bf16.mxu0 %v4333
        %4787 = vmatpush2.bf16.msra.mxu0 %v4332
        %4788 = vmatprep.subr.bf16.mxu0 %v4329
        %4789 = vmatpush2.bf16.msra.mxu0 %v4328
        %4790 = vmatprep.mubr.bf16.mxu0 %v3649
        %4791 = vmatmul.mubr.bf16.gmra.mxu0 %v3648
        %v4792 = vpop.f32.mrf.mxu0
        %v4793 = vadd.f32 %v4626, %v4792
        %v4794 = vpop.f32.mrf.mxu0
        %v4795 = vadd.f32 %v4630, %v4794
        %v4796 = vpop.f32.mrf.mxu0
        %v4797 = vpop.f32.mrf.mxu0
        %4798 = vdwg.mxu0
        %4799 = vmatprep.subr.bf16.mxu0 %v4389
        %4800 = vmatpush1.bf16.msra.mxu0 %v4388
        %4801 = vmatprep.subr.bf16.mxu0 %v4385
        %4802 = vmatpush1.bf16.msra.mxu0 %v4384
        %4803 = vmatprep.subr.bf16.mxu0 %v4381
        %4804 = vmatpush1.bf16.msra.mxu0 %v4380
        %4805 = vmatprep.subr.bf16.mxu0 %v4377
        %4806 = vmatpush1.bf16.msra.mxu0 %v4376
        %4807 = vmatprep.subr.bf16.mxu0 %v4373
        %4808 = vmatpush1.bf16.msra.mxu0 %v4372
        %4809 = vmatprep.subr.bf16.mxu0 %v4369
        %4810 = vmatpush1.bf16.msra.mxu0 %v4368
        %4811 = vmatprep.subr.bf16.mxu0 %v4365
        %4812 = vmatpush1.bf16.msra.mxu0 %v4364
        %4813 = vmatprep.subr.bf16.mxu0 %v4361
        %4814 = vmatpush1.bf16.msra.mxu0 %v4360
        %4815 = vmatprep.subr.bf16.mxu0 %v4421
        %4816 = vmatpush2.bf16.msra.mxu0 %v4420
        %4817 = vmatprep.subr.bf16.mxu0 %v4417
        %4818 = vmatpush2.bf16.msra.mxu0 %v4416
        %4819 = vmatprep.subr.bf16.mxu0 %v4413
        %4820 = vmatpush2.bf16.msra.mxu0 %v4412
        %4821 = vmatprep.subr.bf16.mxu0 %v4409
        %4822 = vmatpush2.bf16.msra.mxu0 %v4408
        %4823 = vmatprep.subr.bf16.mxu0 %v4405
        %4824 = vmatpush2.bf16.msra.mxu0 %v4404
        %4825 = vmatprep.subr.bf16.mxu0 %v4401
        %4826 = vmatpush2.bf16.msra.mxu0 %v4400
        %4827 = vmatprep.subr.bf16.mxu0 %v4397
        %4828 = vmatpush2.bf16.msra.mxu0 %v4396
        %4829 = vmatprep.subr.bf16.mxu0 %v4393
        %4830 = vmatpush2.bf16.msra.mxu0 %v4392
        %4831 = vmatprep.mubr.bf16.mxu0 %v3651
        %4832 = vmatmul.mubr.bf16.gmra.mxu0 %v3650
        %v4833 = vpop.f32.mrf.mxu0
        %v4834 = vadd.f32 %v4793, %v4833
        %v4835 = vpop.f32.mrf.mxu0
        %v4836 = vadd.f32 %v4795, %v4835
        %v4837 = vpop.f32.mrf.mxu0
        %v4838 = vpop.f32.mrf.mxu0
        %4839 = vdwg.mxu0
        %4840 = vmatprep.subr.bf16.mxu0 %v4453
        %4841 = vmatpush1.bf16.msra.mxu0 %v4452
        %4842 = vmatprep.subr.bf16.mxu0 %v4449
        %4843 = vmatpush1.bf16.msra.mxu0 %v4448
        %4844 = vmatprep.subr.bf16.mxu0 %v4445
        %4845 = vmatpush1.bf16.msra.mxu0 %v4444
        %4846 = vmatprep.subr.bf16.mxu0 %v4441
        %4847 = vmatpush1.bf16.msra.mxu0 %v4440
        %4848 = vmatprep.subr.bf16.mxu0 %v4437
        %4849 = vmatpush1.bf16.msra.mxu0 %v4436
        %4850 = vmatprep.subr.bf16.mxu0 %v4433
        %4851 = vmatpush1.bf16.msra.mxu0 %v4432
        %4852 = vmatprep.subr.bf16.mxu0 %v4429
        %4853 = vmatpush1.bf16.msra.mxu0 %v4428
        %4854 = vmatprep.subr.bf16.mxu0 %v4425
        %4855 = vmatpush1.bf16.msra.mxu0 %v4424
        %4856 = vmatprep.subr.bf16.mxu0 0
        %4857 = vmatpush2.bf16.msra.mxu0 0
        %4858 = vmatprep.subr.bf16.mxu0 0
        %4859 = vmatpush2.bf16.msra.mxu0 0
        %4860 = vmatprep.subr.bf16.mxu0 0
        %4861 = vmatpush2.bf16.msra.mxu0 0
        %4862 = vmatprep.subr.bf16.mxu0 0
        %4863 = vmatpush2.bf16.msra.mxu0 0
        %4864 = vmatprep.subr.bf16.mxu0 0
        %4865 = vmatpush2.bf16.msra.mxu0 0
        %4866 = vmatprep.subr.bf16.mxu0 0
        %4867 = vmatpush2.bf16.msra.mxu0 0
        %4868 = vmatprep.subr.bf16.mxu0 0
        %4869 = vmatpush2.bf16.msra.mxu0 0
        %4870 = vmatprep.subr.bf16.mxu0 0
        %4871 = vmatpush2.bf16.msra.mxu0 0
        %4872 = vmatprep.mubr.bf16.mxu0 0
        %4873 = vmatmul.mubr.bf16.gmra.mxu0 %v3652
        %v4874 = vpop.f32.mrf.mxu0
        %v4875 = vadd.f32 %v4834, %v4874
        %v4876 = vpop.f32.mrf.mxu0
        %v4877 = vadd.f32 %v4836, %v4876
        %v4878 = vpop.f32.mrf.mxu0
        %v4879 = vpop.f32.mrf.mxu0
        %4880 = vdwg.mxu0
        %v4881 = vpack.c.bf16 %v4752, %v4752
        %v4882 = vpack.c.bf16 %v4754, %v4754
        %v4883 = vpack.c.bf16 %v4875, %v4875
        %v4884 = vpack.c.bf16 %v4877, %v4877
        %v4885 = vld [vmem:[%s7] sm:$0xf]
        %v4886 = vld [vmem:[%s7 + $0x4] sm:$0xf]
        %v4887 = vld [vmem:[%s7 + $0x8] sm:$0xf]
        %v4888 = vld [vmem:[%s7 + $0xc] sm:$0xf]
        %v4889 = vld [vmem:[%s7 + $0x10] sm:$0xf]
        %v4890 = vld [vmem:[%s7 + $0x14] sm:$0xf]
        %v4891 = vld [vmem:[%s7 + $0x18] sm:$0xf]
        %v4892 = vld [vmem:[%s7 + $0x1c] sm:$0xf]
        %v4893 = vld [vmem:[%s7 + $0x20] sm:$0xf]
        %v4894 = vld [vmem:[%s7 + $0x24] sm:$0xf]
        %v4895 = vld [vmem:[%s7 + $0x28] sm:$0xf]
        %v4896 = vld [vmem:[%s7 + $0x2c] sm:$0xf]
        %v4897 = vld [vmem:[%s7 + $0x30] sm:$0xf]
        %v4898 = vld [vmem:[%s7 + $0x34] sm:$0xf]
        %v4899 = vld [vmem:[%s7 + $0x38] sm:$0xf]
        %v4900 = vld [vmem:[%s7 + $0x3c] sm:$0xf]
        %v4901 = vld [vmem:[%s7 + $0x40] sm:$0xf]
        %v4902 = vld [vmem:[%s7 + $0x44] sm:$0xf]
        %v4903 = vld [vmem:[%s7 + $0x48] sm:$0xf]
        %v4904 = vld [vmem:[%s7 + $0x4c] sm:$0xf]
        %v4905 = vld [vmem:[%s7 + $0x50] sm:$0xf]
        %v4906 = vld [vmem:[%s7 + $0x54] sm:$0xf]
        %v4907 = vld [vmem:[%s7 + $0x58] sm:$0xf]
        %v4908 = vld [vmem:[%s7 + $0x5c] sm:$0xf]
        %v4909 = vld [vmem:[%s7 + $0x60] sm:$0xf]
        %v4910 = vld [vmem:[%s7 + $0x64] sm:$0xf]
        %v4911 = vld [vmem:[%s7 + $0x68] sm:$0xf]
        %v4912 = vld [vmem:[%s7 + $0x6c] sm:$0xf]
        %v4913 = vld [vmem:[%s7 + $0x70] sm:$0xf]
        %v4914 = vld [vmem:[%s7 + $0x74] sm:$0xf]
        %v4915 = vld [vmem:[%s7 + $0x78] sm:$0xf]
        %v4916 = vld [vmem:[%s7 + $0x7c] sm:$0xf]
        %v4917 = vld [vmem:[%s7 + $0x80] sm:$0xf]
        %v4918 = vld [vmem:[%s7 + $0x84] sm:$0xf]
        %v4919 = vld [vmem:[%s7 + $0x88] sm:$0xf]
        %v4920 = vld [vmem:[%s7 + $0x8c] sm:$0xf]
        %v4921 = vld [vmem:[%s7 + $0x90] sm:$0xf]
        %v4922 = vld [vmem:[%s7 + $0x94] sm:$0xf]
        %v4923 = vld [vmem:[%s7 + $0x98] sm:$0xf]
        %v4924 = vld [vmem:[%s7 + $0x9c] sm:$0xf]
        %v4925 = vld [vmem:[%s7 + $0xa0] sm:$0xf]
        %v4926 = vld [vmem:[%s7 + $0xa4] sm:$0xf]
        %v4927 = vld [vmem:[%s7 + $0xa8] sm:$0xf]
        %v4928 = vld [vmem:[%s7 + $0xac] sm:$0xf]
        %v4929 = vld [vmem:[%s7 + $0xb0] sm:$0xf]
        %v4930 = vld [vmem:[%s7 + $0xb4] sm:$0xf]
        %v4931 = vld [vmem:[%s7 + $0xb8] sm:$0xf]
        %v4932 = vld [vmem:[%s7 + $0xbc] sm:$0xf]
        %v4933 = vld [vmem:[%s7 + $0xc0] sm:$0xf]
        %v4934 = vld [vmem:[%s7 + $0xc4] sm:$0xf]
        %v4935 = vld [vmem:[%s7 + $0xc8] sm:$0xf]
        %v4936 = vld [vmem:[%s7 + $0xcc] sm:$0xf]
        %v4937 = vld [vmem:[%s7 + $0xd0] sm:$0xf]
        %v4938 = vld [vmem:[%s7 + $0xd4] sm:$0xf]
        %v4939 = vld [vmem:[%s7 + $0xd8] sm:$0xf]
        %v4940 = vld [vmem:[%s7 + $0xdc] sm:$0xf]
        %v4941 = vld [vmem:[%s7 + $0xe0] sm:$0xf]
        %v4942 = vld [vmem:[%s7 + $0xe4] sm:$0xf]
        %v4943 = vld [vmem:[%s7 + $0xe8] sm:$0xf]
        %v4944 = vld [vmem:[%s7 + $0xec] sm:$0xf]
        %v4945 = vld [vmem:[%s7 + $0xf0] sm:$0xf]
        %v4946 = vld [vmem:[%s7 + $0xf4] sm:$0xf]
        %v4947 = vld [vmem:[%s7 + $0xf8] sm:$0xf]
        %v4948 = vld [vmem:[%s7 + $0xfc] sm:$0xf]
        %v4949 = vld [vmem:[%s8] sm:$0x1]
        %v5014 = vunpack.c.l.b16 %v4885
        %v5015 = vunpack.c.l.b16 %v4886
        %v5016 = vunpack.c.l.b16 %v4887
        %v5017 = vunpack.c.l.b16 %v4888
        %v5018 = vunpack.c.l.b16 %v4889
        %v5019 = vunpack.c.l.b16 %v4890
        %v5020 = vunpack.c.l.b16 %v4891
        %v5021 = vunpack.c.l.b16 %v4892
        %v5022 = vunpack.c.l.b16 %v4893
        %v5023 = vunpack.c.l.b16 %v4894
        %v5024 = vunpack.c.l.b16 %v4895
        %v5025 = vunpack.c.l.b16 %v4896
        %v5026 = vunpack.c.l.b16 %v4897
        %v5027 = vunpack.c.l.b16 %v4898
        %v5028 = vunpack.c.l.b16 %v4899
        %v5029 = vunpack.c.l.b16 %v4900
        %v5030 = vunpack.c.l.b16 %v4901
        %v5031 = vunpack.c.l.b16 %v4902
        %v5032 = vunpack.c.l.b16 %v4903
        %v5033 = vunpack.c.l.b16 %v4904
        %v5034 = vunpack.c.l.b16 %v4905
        %v5035 = vunpack.c.l.b16 %v4906
        %v5036 = vunpack.c.l.b16 %v4907
        %v5037 = vunpack.c.l.b16 %v4908
        %v5038 = vunpack.c.l.b16 %v4909
        %v5039 = vunpack.c.l.b16 %v4910
        %v5040 = vunpack.c.l.b16 %v4911
        %v5041 = vunpack.c.l.b16 %v4912
        %v5042 = vunpack.c.l.b16 %v4913
        %v5043 = vunpack.c.l.b16 %v4914
        %v5044 = vunpack.c.l.b16 %v4915
        %v5045 = vunpack.c.l.b16 %v4916
        %v5046 = vunpack.c.l.b16 %v4917
        %v5047 = vunpack.c.l.b16 %v4918
        %v5048 = vunpack.c.l.b16 %v4919
        %v5049 = vunpack.c.l.b16 %v4920
        %v5050 = vunpack.c.l.b16 %v4921
        %v5051 = vunpack.c.l.b16 %v4922
        %v5052 = vunpack.c.l.b16 %v4923
        %v5053 = vunpack.c.l.b16 %v4924
        %v5054 = vunpack.c.l.b16 %v4925
        %v5055 = vunpack.c.l.b16 %v4926
        %v5056 = vunpack.c.l.b16 %v4927
        %v5057 = vunpack.c.l.b16 %v4928
        %v5058 = vunpack.c.l.b16 %v4929
        %v5059 = vunpack.c.l.b16 %v4930
        %v5060 = vunpack.c.l.b16 %v4931
        %v5061 = vunpack.c.l.b16 %v4932
        %v5062 = vunpack.c.l.b16 %v4933
        %v5063 = vunpack.c.l.b16 %v4934
        %v5064 = vunpack.c.l.b16 %v4935
        %v5065 = vunpack.c.l.b16 %v4936
        %v5066 = vunpack.c.l.b16 %v4937
        %v5067 = vunpack.c.l.b16 %v4938
        %v5068 = vunpack.c.l.b16 %v4939
        %v5069 = vunpack.c.l.b16 %v4940
        %v5070 = vunpack.c.l.b16 %v4941
        %v5071 = vunpack.c.l.b16 %v4942
        %v5072 = vunpack.c.l.b16 %v4943
        %v5073 = vunpack.c.l.b16 %v4944
        %v5074 = vunpack.c.l.b16 %v4945
        %v5075 = vunpack.c.l.b16 %v4946
        %v5076 = vunpack.c.l.b16 %v4947
        %v5077 = vunpack.c.l.b16 %v4948
        %v5078 = vpack.c.b16 %v5015, %v5014
        %v5079 = vpack.c.b16 %v5017, %v5016
        %v5080 = vpack.c.b16 %v5019, %v5018
        %v5081 = vpack.c.b16 %v5021, %v5020
        %v5082 = vpack.c.b16 %v5023, %v5022
        %v5083 = vpack.c.b16 %v5025, %v5024
        %v5084 = vpack.c.b16 %v5027, %v5026
        %v5085 = vpack.c.b16 %v5029, %v5028
        %v5086 = vpack.c.b16 %v5031, %v5030
        %v5087 = vpack.c.b16 %v5033, %v5032
        %v5088 = vpack.c.b16 %v5035, %v5034
        %v5089 = vpack.c.b16 %v5037, %v5036
        %v5090 = vpack.c.b16 %v5039, %v5038
        %v5091 = vpack.c.b16 %v5041, %v5040
        %v5092 = vpack.c.b16 %v5043, %v5042
        %v5093 = vpack.c.b16 %v5045, %v5044
        %v5094 = vpack.c.b16 %v5047, %v5046
        %v5095 = vpack.c.b16 %v5049, %v5048
        %v5096 = vpack.c.b16 %v5051, %v5050
        %v5097 = vpack.c.b16 %v5053, %v5052
        %v5098 = vpack.c.b16 %v5055, %v5054
        %v5099 = vpack.c.b16 %v5057, %v5056
        %v5100 = vpack.c.b16 %v5059, %v5058
        %v5101 = vpack.c.b16 %v5061, %v5060
        %v5102 = vpack.c.b16 %v5063, %v5062
        %v5103 = vpack.c.b16 %v5065, %v5064
        %v5104 = vpack.c.b16 %v5067, %v5066
        %v5105 = vpack.c.b16 %v5069, %v5068
        %v5106 = vpack.c.b16 %v5071, %v5070
        %v5107 = vpack.c.b16 %v5073, %v5072
        %v5108 = vpack.c.b16 %v5075, %v5074
        %v5109 = vpack.c.b16 %v5077, %v5076
        %5142 = vmatprep.subr.bf16.mxu0 0
        %5143 = vmatpush1.bf16.msra.mxu0 %v5085
        %5144 = vmatprep.subr.bf16.mxu0 0
        %5145 = vmatpush1.bf16.msra.mxu0 %v5084
        %5146 = vmatprep.subr.bf16.mxu0 0
        %5147 = vmatpush1.bf16.msra.mxu0 %v5083
        %5148 = vmatprep.subr.bf16.mxu0 0
        %5149 = vmatpush1.bf16.msra.mxu0 %v5082
        %5150 = vmatprep.subr.bf16.mxu0 0
        %5151 = vmatpush1.bf16.msra.mxu0 %v5081
        %5152 = vmatprep.subr.bf16.mxu0 0
        %5153 = vmatpush1.bf16.msra.mxu0 %v5080
        %5154 = vmatprep.subr.bf16.mxu0 0
        %5155 = vmatpush1.bf16.msra.mxu0 %v5079
        %5156 = vmatprep.subr.bf16.mxu0 0
        %5157 = vmatpush1.bf16.msra.mxu0 %v5078
        %5158 = vmatprep.subr.bf16.mxu0 0
        %5159 = vmatpush2.bf16.msra.mxu0 %v5093
        %5160 = vmatprep.subr.bf16.mxu0 0
        %5161 = vmatpush2.bf16.msra.mxu0 %v5092
        %5162 = vmatprep.subr.bf16.mxu0 0
        %5163 = vmatpush2.bf16.msra.mxu0 %v5091
        %5164 = vmatprep.subr.bf16.mxu0 0
        %5165 = vmatpush2.bf16.msra.mxu0 %v5090
        %5166 = vmatprep.subr.bf16.mxu0 0
        %5167 = vmatpush2.bf16.msra.mxu0 %v5089
        %5168 = vmatprep.subr.bf16.mxu0 0
        %5169 = vmatpush2.bf16.msra.mxu0 %v5088
        %5170 = vmatprep.subr.bf16.mxu0 0
        %5171 = vmatpush2.bf16.msra.mxu0 %v5087
        %5172 = vmatprep.subr.bf16.mxu0 0
        %5173 = vmatpush2.bf16.msra.mxu0 %v5086
        %5174 = vmatprep.mubr.bf16.mxu0 %v4882
        %5175 = vmatmul.mubr.bf16.gmra.mxu0 %v4881
        %v5176 = vpop.f32.mrf.mxu0
        %v5177 = vadd.f32 %v4949, %v5176
        %v5178 = vpop.f32.mrf.mxu0
        %v5179 = vpop.f32.mrf.mxu0
        %v5180 = vpop.f32.mrf.mxu0
        %5181 = vdwg.mxu0
        %5182 = vmatprep.subr.bf16.mxu0 0
        %5183 = vmatpush1.bf16.msra.mxu0 %v5101
        %5184 = vmatprep.subr.bf16.mxu0 0
        %5185 = vmatpush1.bf16.msra.mxu0 %v5100
        %5186 = vmatprep.subr.bf16.mxu0 0
        %5187 = vmatpush1.bf16.msra.mxu0 %v5099
        %5188 = vmatprep.subr.bf16.mxu0 0
        %5189 = vmatpush1.bf16.msra.mxu0 %v5098
        %5190 = vmatprep.subr.bf16.mxu0 0
        %5191 = vmatpush1.bf16.msra.mxu0 %v5097
        %5192 = vmatprep.subr.bf16.mxu0 0
        %5193 = vmatpush1.bf16.msra.mxu0 %v5096
        %5194 = vmatprep.subr.bf16.mxu0 0
        %5195 = vmatpush1.bf16.msra.mxu0 %v5095
        %5196 = vmatprep.subr.bf16.mxu0 0
        %5197 = vmatpush1.bf16.msra.mxu0 %v5094
        %5198 = vmatprep.subr.bf16.mxu0 0
        %5199 = vmatpush2.bf16.msra.mxu0 %v5109
        %5200 = vmatprep.subr.bf16.mxu0 0
        %5201 = vmatpush2.bf16.msra.mxu0 %v5108
        %5202 = vmatprep.subr.bf16.mxu0 0
        %5203 = vmatpush2.bf16.msra.mxu0 %v5107
        %5204 = vmatprep.subr.bf16.mxu0 0
        %5205 = vmatpush2.bf16.msra.mxu0 %v5106
        %5206 = vmatprep.subr.bf16.mxu0 0
        %5207 = vmatpush2.bf16.msra.mxu0 %v5105
        %5208 = vmatprep.subr.bf16.mxu0 0
        %5209 = vmatpush2.bf16.msra.mxu0 %v5104
        %5210 = vmatprep.subr.bf16.mxu0 0
        %5211 = vmatpush2.bf16.msra.mxu0 %v5103
        %5212 = vmatprep.subr.bf16.mxu0 0
        %5213 = vmatpush2.bf16.msra.mxu0 %v5102
        %5214 = vmatprep.mubr.bf16.mxu0 %v4884
        %5215 = vmatmul.mubr.bf16.gmra.mxu0 %v4883
        %v5216 = vpop.f32.mrf.mxu0
        %v5217 = vadd.f32 %v5177, %v5216
        %v5218 = vpop.f32.mrf.mxu0
        %v5219 = vpop.f32.mrf.mxu0
        %v5220 = vpop.f32.mrf.mxu0
        %5221 = vdwg.mxu0
        %vm5222 = vcmask 16384
        %5223 = vst.msk [vmem:[%s326] sm:$0x1] %vm5222, %v5217
        %s5224 = sand.u32 %s227, 1
        %s5225 = scalar_lea.sflag [#allocation4], %s5224
        %s5226 = sand.u32 %s227, 1
        %s5227 = scalar_lea.vmem [#allocation3], %s5226
        // Predicated region
        $region57: #{simple_cnn5_forward.7} parent=55 // pred_check
          %p5228 = pneg %p237
        $region58: #{simple_cnn5_forward.7} parent=55 // pred_check_branch
          %5230 = sbr.rel (%p5228) target = $region60
        $region59: #{simple_cnn5_forward.7} parent=55 // pred_region
          %s5232 = ssub.s32 16, 16
          %5233 = vsyncadd %s5225, %s5232
          %s5234 = smul.addr %s25, 16
          %s5235 = scalar_lea.hbm %s9, %s5234
          %s5237 = sshll.u32 %s5227, 4
          %s5238 = int_to_ptr.vmem [resolvable:$true] %s5237
          %5240 = dma.vmem_to_hbm [thread:$0]  %s5238, 16, %s5235, %s5225
        $region60: #{simple_cnn5_forward.7} parent=55 // pred_fallthru
          _
      $region56: #{simple_cnn5_forward.7} parent=5 // pred_fallthru
        _
      %p5241 = scmp.le.s32.totalorder 2, %s20
      // Predicated region
      $region61: #{simple_cnn5_forward.7} parent=5 // pred_check
        %p5242 = pneg %p5241
      $region62: #{simple_cnn5_forward.7} parent=5 // pred_check_branch
        %5244 = sbr.rel (%p5242) target = $region64
      $region63: #{simple_cnn5_forward.7} parent=5 // pred_region
        %s5245 = ssub.s32 %s20, 2
        // Predicated region
        $region65: #{simple_cnn5_forward.7} parent=63 // pred_check
          %p5246 = pneg %p243
        $region66: #{simple_cnn5_forward.7} parent=63 // pred_check_branch
          %5248 = sbr.rel (%p5246) target = $region68
        $region67: #{simple_cnn5_forward.7} parent=63 // pred_region
          %s5249 = sand.u32 %s228, 1
          %s5250 = scalar_lea.sflag [#allocation4], %s5249
          %s5251 = sand.u32 %s228, 1
          %s5252 = scalar_lea.vmem [#allocation3], %s5251
          %5253 = dma.done %s5250, 16
        $region68: #{simple_cnn5_forward.7} parent=63 // pred_fallthru
          _
      $region64: #{simple_cnn5_forward.7} parent=5 // pred_fallthru
        _
    $region6: #{simple_cnn5_forward.7} parent=1 // loop_footer
      %s24 = sadd.s32 1, %s20
    $region7: #{simple_cnn5_forward.7} parent=1 // loop_footer_branch
      %19 = sbr.rel target = $region3
    $region8: #{simple_cnn5_forward.7} parent=1 // loop_exit
      _
    %5254 = vsyncpa [#allocation4], 1
    %s5255 = scalar_lea.sflag [#allocation4], 1
    %5256 = vsyncpa %s5255, 1

</llo_original>
